<compile_context>
chip_gen: v7x
topology: tpu7x:2x2x1
jax: 0.10.0
libtpu: 0.0.40
codegen_flags: <defaults>
</compile_context>

<pallas_src>
import math

import jax
import jax.numpy as jnp
from jax import lax
from jax.experimental import pallas as pl
from jax.experimental.pallas import tpu as pltpu

# ---- small config consistent with BottleneckSparse2D(in_channels, out_channels, kernel_size) ----
B = 2
H, W = 16, 16
C_IN = 32
C_OUT = 128          # output channels (multiple of 128 -> lane-dense stores)
C_MID = C_OUT // 4   # bottleneck width = 32
KS = 3               # kernel_size of the middle SubMConv2d
PAD = KS // 2
HP, WP = H + 2 * PAD, W + 2 * PAD
BHW = B * H * W
EPS_BN = 1e-5


# --------------------------------------------------------------------------------------
# Single fused kernel: conv path (1x1 -> BN -> ReLU -> kxk -> BN -> ReLU -> 1x1 -> BN),
# shortcut path (1x1 -> BN), sparse_add, final ReLU.
# --------------------------------------------------------------------------------------
def bottleneck_kernel(x_ref, m_ref,
                      w1_ref, b1_ref, g1_ref, be1_ref,
                      w2_ref, b2_ref, g2_ref, be2_ref,
                      w3_ref, b3_ref, g3_ref, be3_ref,
                      ws_ref, bs_ref, gs_ref, bes_ref,
                      o_ref, pad_ref):
    x = x_ref[...]                         # (BHW, C_IN)   zero at inactive sites
    m = m_ref[...]                         # (BHW, 1)      {0,1} active-site mask
    n_act = jnp.maximum(jnp.sum(m), 1.0)   # number of active voxels in the whole batch
    inv_n = 1.0 / n_act

    def bn(y, gamma, beta, relu):
        # BatchNorm1d over the active voxels (training-mode batch stats, biased variance).
        mu = jnp.sum(y * m, axis=0, keepdims=True) * inv_n
        var = jnp.sum(((y - mu) ** 2) * m, axis=0, keepdims=True) * inv_n
        yn = (y - mu) * lax.rsqrt(var + EPS_BN) * gamma + beta
        if relu:
            yn = jnp.maximum(yn, 0.0)
        return yn * m                      # keep inactive sites exactly zero (submanifold)

    # ---- conv path: SubMConv2d(C_IN, C_MID, 1) -> BN -> ReLU ----
    h1 = jnp.dot(x, w1_ref[...], preferred_element_type=jnp.float32) + b1_ref[...]
    h1 = bn(h1, g1_ref[...], be1_ref[...], relu=True)

    # ---- SubMConv2d(C_MID, C_MID, KS): zero-padded scratch + KS*KS shifted matmuls ----
    pad_ref[...] = jnp.zeros_like(pad_ref)
    pad_ref[:, PAD:PAD + H, PAD:PAD + W, :] = h1.reshape(B, H, W, C_MID)
    acc = jnp.zeros((BHW, C_MID), jnp.float32)
    for ky in range(KS):                   # static, fully unrolled
        for kx in range(KS):
            sh = pad_ref[:, ky:ky + H, kx:kx + W, :].reshape(BHW, C_MID)
            acc = acc + jnp.dot(sh, w2_ref[ky, kx],
                                preferred_element_type=jnp.float32)
    h2 = bn(acc + b2_ref[...], g2_ref[...], be2_ref[...], relu=True)

    # ---- SubMConv2d(C_MID, C_OUT, 1) -> BN ----
    h3 = jnp.dot(h2, w3_ref[...], preferred_element_type=jnp.float32) + b3_ref[...]
    h3 = bn(h3, g3_ref[...], be3_ref[...], relu=False)

    # ---- shortcut: SubMConv2d(C_IN, C_OUT, 1) -> BN ----
    s = jnp.dot(x, ws_ref[...], preferred_element_type=jnp.float32) + bs_ref[...]
    s = bn(s, gs_ref[...], bes_ref[...], relu=False)

    # ---- sparse_add (same indices on both branches) + ReLU ----
    o_ref[...] = jnp.maximum(h3 + s, 0.0)  # lane-dense (BHW, 128) store


# --------------------------------------------------------------------------------------
# Wrapper
# --------------------------------------------------------------------------------------
def bottleneck_sparse2d(x_dense, mask, params):
    """x_dense: (B, H, W, C_IN) channels-last, zeros at inactive sites.
       mask:    (B, H, W, 1) float {0,1} marking active sites of the sparse tensor."""
    x2d = x_dense.reshape(BHW, C_IN)       # free relayout-less flatten (channels stay minor)
    m2d = mask.reshape(BHW, 1)
    out2d = pl.pallas_call(
        bottleneck_kernel,
        out_shape=jax.ShapeDtypeStruct((BHW, C_OUT), jnp.float32),
        scratch_shapes=[pltpu.VMEM((B, HP, WP, C_MID), jnp.float32)],
    )(x2d, m2d,
      params['w1_t'], params['b1'], params['g1'], params['be1'],
      params['w2_t'], params['b2'], params['g2'], params['be2'],
      params['w3_t'], params['b3'], params['g3'], params['be3'],
      params['ws_t'], params['bs'], params['gs'], params['bes'])
    return out2d.reshape(B, H, W, C_OUT)   # densified sparse output (zeros at inactive sites)


# --------------------------------------------------------------------------------------
# Deterministic synthetic parameters (shapes implied by the module __init__; weights stored
# pre-transposed for channels-last matmuls; BN affine at default init gamma=1, beta=0).
# --------------------------------------------------------------------------------------
def init_params(key):
    ks = jax.random.split(key, 8)
    rnd = lambda k, shape, fan_in: jax.random.normal(k, shape, jnp.float32) / math.sqrt(fan_in)
    p = {}
    # conv path
    p['w1_t'] = rnd(ks[0], (C_IN, C_MID), C_IN)                      # SubMConv2d(C_IN, C_MID, 1)
    p['b1'] = rnd(ks[1], (1, C_MID), C_IN)
    p['w2_t'] = rnd(ks[2], (KS, KS, C_MID, C_MID), C_MID * KS * KS)  # SubMConv2d(C_MID, C_MID, KS)
    p['b2'] = rnd(ks[3], (1, C_MID), C_MID * KS * KS)
    p['w3_t'] = rnd(ks[4], (C_MID, C_OUT), C_MID)                    # SubMConv2d(C_MID, C_OUT, 1)
    p['b3'] = rnd(ks[5], (1, C_OUT), C_MID)
    # shortcut path
    p['ws_t'] = rnd(ks[6], (C_IN, C_OUT), C_IN)                      # SubMConv2d(C_IN, C_OUT, 1)
    p['bs'] = rnd(ks[7], (1, C_OUT), C_IN)
    # BatchNorm1d affine params (default init)
    p['g1'], p['be1'] = jnp.ones((1, C_MID), jnp.float32), jnp.zeros((1, C_MID), jnp.float32)
    p['g2'], p['be2'] = jnp.ones((1, C_MID), jnp.float32), jnp.zeros((1, C_MID), jnp.float32)
    p['g3'], p['be3'] = jnp.ones((1, C_OUT), jnp.float32), jnp.zeros((1, C_OUT), jnp.float32)
    p['gs'], p['bes'] = jnp.ones((1, C_OUT), jnp.float32), jnp.zeros((1, C_OUT), jnp.float32)
    return p


if __name__ == "__main__":
    key = jax.random.PRNGKey(0)
    k_feat, k_mask, k_par = jax.random.split(key, 3)
    # Build a synthetic sparse 2D tensor: ~60% of sites active, features zero elsewhere.
    mask = (jax.random.uniform(k_mask, (B, H, W, 1)) < 0.6).astype(jnp.float32)
    x_dense = jax.random.normal(k_feat, (B, H, W, C_IN), jnp.float32) * mask
    params = init_params(k_par)

    out = jax.jit(bottleneck_sparse2d)(x_dense, mask, params)
    out = jax.block_until_ready(out)
    assert out.shape == (B, H, W, C_OUT) and out.dtype == jnp.float32
    assert bool(jnp.all(jnp.isfinite(out)))
    print("KERNEL_OK")
</pallas_src>

<mosaic_0001>
module attributes {stable_mosaic.version = 11 : i64} {
  func.func @bottleneck_kernel(%arg0: memref<512x32xf32, #tpu.memory_space<vmem>>, %arg1: memref<512x1xf32, #tpu.memory_space<vmem>>, %arg2: memref<32x32xf32, #tpu.memory_space<vmem>>, %arg3: memref<1x32xf32, #tpu.memory_space<vmem>>, %arg4: memref<1x32xf32, #tpu.memory_space<vmem>>, %arg5: memref<1x32xf32, #tpu.memory_space<vmem>>, %arg6: memref<3x3x32x32xf32, #tpu.memory_space<vmem>>, %arg7: memref<1x32xf32, #tpu.memory_space<vmem>>, %arg8: memref<1x32xf32, #tpu.memory_space<vmem>>, %arg9: memref<1x32xf32, #tpu.memory_space<vmem>>, %arg10: memref<32x128xf32, #tpu.memory_space<vmem>>, %arg11: memref<1x128xf32, #tpu.memory_space<vmem>>, %arg12: memref<1x128xf32, #tpu.memory_space<vmem>>, %arg13: memref<1x128xf32, #tpu.memory_space<vmem>>, %arg14: memref<32x128xf32, #tpu.memory_space<vmem>>, %arg15: memref<1x128xf32, #tpu.memory_space<vmem>>, %arg16: memref<1x128xf32, #tpu.memory_space<vmem>>, %arg17: memref<1x128xf32, #tpu.memory_space<vmem>>, %arg18: memref<512x128xf32, #tpu.memory_space<vmem>>, %arg19: memref<2x18x18x32xf32, #tpu.memory_space<vmem>>) attributes {dimension_semantics = [], scalar_prefetch = 0 : i64, scratch_operands = 1 : i64, tpu.core_type = #tpu.core_type<tc>} {
    %c0 = arith.constant 0 : index
    %c0_0 = arith.constant 0 : index
    %0 = vector.load %arg0[%c0, %c0_0] : memref<512x32xf32, #tpu.memory_space<vmem>>, vector<512x32xf32>
    %c0_1 = arith.constant 0 : index
    %c0_2 = arith.constant 0 : index
    %1 = vector.load %arg1[%c0_1, %c0_2] : memref<512x1xf32, #tpu.memory_space<vmem>>, vector<512x1xf32>
    %2 = vector.shape_cast %1 : vector<512x1xf32> to vector<1x512x1xf32>
    %cst = arith.constant dense<0.000000e+00> : vector<1xf32>
    %3 = vector.multi_reduction <add>, %2, %cst [1, 2] : vector<1x512x1xf32> to vector<1xf32>
    %4 = vector.shape_cast %3 : vector<1xf32> to vector<1x1x1xf32>
    %5 = vector.extract %4[0, 0, 0] : f32 from vector<1x1x1xf32>
    %cst_3 = arith.constant 1.000000e+00 : f32
    %6 = arith.maximumf %5, %cst_3 : f32
    %cst_4 = arith.constant 1.000000e+00 : f32
    %7 = arith.divf %cst_4, %6 : f32
    %c0_5 = arith.constant 0 : index
    %c0_6 = arith.constant 0 : index
    %8 = vector.load %arg2[%c0_5, %c0_6] : memref<32x32xf32, #tpu.memory_space<vmem>>, vector<32x32xf32>
    %cst_7 = arith.constant dense<0.000000e+00> : vector<512x32xf32>
    %9 = tpu.matmul %0, %8, %cst_7 {dimension_numbers = #tpu.dot_dimension_numbers<[1], [0], [0], [1], [0, 0, 1, 1], [], []>} : vector<512x32xf32>, vector<32x32xf32>, vector<512x32xf32> -> vector<512x32xf32>
    %c0_8 = arith.constant 0 : index
    %c0_9 = arith.constant 0 : index
    %10 = vector.load %arg3[%c0_8, %c0_9] : memref<1x32xf32, #tpu.memory_space<vmem>>, vector<1x32xf32>
    %11 = vector.broadcast %10 : vector<1x32xf32> to vector<512x32xf32>
    %12 = arith.addf %9, %11 : vector<512x32xf32>
    %c0_10 = arith.constant 0 : index
    %c0_11 = arith.constant 0 : index
    %13 = vector.load %arg4[%c0_10, %c0_11] : memref<1x32xf32, #tpu.memory_space<vmem>>, vector<1x32xf32>
    %c0_12 = arith.constant 0 : index
    %c0_13 = arith.constant 0 : index
    %14 = vector.load %arg5[%c0_12, %c0_13] : memref<1x32xf32, #tpu.memory_space<vmem>>, vector<1x32xf32>
    %15 = vector.broadcast %1 : vector<512x1xf32> to vector<512x32xf32>
    %16 = arith.mulf %12, %15 : vector<512x32xf32>
    %cst_14 = arith.constant dense<0.000000e+00> : vector<32xf32>
    %17 = vector.multi_reduction <add>, %16, %cst_14 [0] : vector<512x32xf32> to vector<32xf32>
    %18 = vector.shape_cast %17 : vector<32xf32> to vector<1x32xf32>
    %19 = vector.broadcast %7 : f32 to vector<1x32xf32>
    %20 = arith.mulf %18, %19 : vector<1x32xf32>
    %21 = vector.broadcast %20 : vector<1x32xf32> to vector<512x32xf32>
    %22 = arith.subf %12, %21 : vector<512x32xf32>
    %23 = arith.mulf %22, %22 : vector<512x32xf32>
    %24 = vector.broadcast %1 : vector<512x1xf32> to vector<512x32xf32>
    %25 = arith.mulf %23, %24 : vector<512x32xf32>
    %cst_15 = arith.constant dense<0.000000e+00> : vector<32xf32>
    %26 = vector.multi_reduction <add>, %25, %cst_15 [0] : vector<512x32xf32> to vector<32xf32>
    %27 = vector.shape_cast %26 : vector<32xf32> to vector<1x32xf32>
    %28 = vector.broadcast %7 : f32 to vector<1x32xf32>
    %29 = arith.mulf %27, %28 : vector<1x32xf32>
    %30 = vector.broadcast %20 : vector<1x32xf32> to vector<512x32xf32>
    %31 = arith.subf %12, %30 : vector<512x32xf32>
    %cst_16 = arith.constant 9.99999974E-6 : f32
    %32 = vector.broadcast %cst_16 : f32 to vector<1x32xf32>
    %33 = arith.addf %29, %32 : vector<1x32xf32>
    %34 = math.rsqrt %33 : vector<1x32xf32>
    %35 = vector.broadcast %34 : vector<1x32xf32> to vector<512x32xf32>
    %36 = arith.mulf %31, %35 : vector<512x32xf32>
    %37 = vector.broadcast %13 : vector<1x32xf32> to vector<512x32xf32>
    %38 = arith.mulf %36, %37 : vector<512x32xf32>
    %39 = vector.broadcast %14 : vector<1x32xf32> to vector<512x32xf32>
    %40 = arith.addf %38, %39 : vector<512x32xf32>
    %cst_17 = arith.constant 0.000000e+00 : f32
    %41 = vector.broadcast %cst_17 : f32 to vector<512x32xf32>
    %42 = arith.maximumf %40, %41 : vector<512x32xf32>
    %43 = vector.broadcast %1 : vector<512x1xf32> to vector<512x32xf32>
    %44 = arith.mulf %42, %43 : vector<512x32xf32>
    %cst_18 = arith.constant 0.000000e+00 : f32
    %45 = vector.broadcast %cst_18 : f32 to vector<2x18x18x32xf32>
    %c0_19 = arith.constant 0 : index
    %c0_20 = arith.constant 0 : index
    %c0_21 = arith.constant 0 : index
    %c0_22 = arith.constant 0 : index
    %46 = vector.load %arg19[%c0_19, %c0_20, %c0_21, %c0_22] : memref<2x18x18x32xf32, #tpu.memory_space<vmem>>, vector<2x18x18x32xf32>
    tpu.vector_store %arg19[%c0_19, %c0_20, %c0_21, %c0_22], %45 {strides = array<i32>} : memref<2x18x18x32xf32, #tpu.memory_space<vmem>>, vector<2x18x18x32xf32>,
    %47 = vector.shape_cast %44 : vector<512x32xf32> to vector<2x16x16x32xf32>
    %c0_23 = arith.constant 0 : index
    %c1 = arith.constant 1 : index
    %c1_24 = arith.constant 1 : index
    %c0_25 = arith.constant 0 : index
    %48 = vector.load %arg19[%c0_23, %c1, %c1_24, %c0_25] : memref<2x18x18x32xf32, #tpu.memory_space<vmem>>, vector<2x16x16x32xf32>
    tpu.vector_store %arg19[%c0_23, %c1, %c1_24, %c0_25], %47 {strides = array<i32>} : memref<2x18x18x32xf32, #tpu.memory_space<vmem>>, vector<2x16x16x32xf32>,
    %cst_26 = arith.constant 0.000000e+00 : f32
    %49 = vector.broadcast %cst_26 : f32 to vector<512x32xf32>
    %c0_27 = arith.constant 0 : index
    %c0_28 = arith.constant 0 : index
    %c0_29 = arith.constant 0 : index
    %c0_30 = arith.constant 0 : index
    %50 = vector.load %arg19[%c0_27, %c0_28, %c0_29, %c0_30] : memref<2x18x18x32xf32, #tpu.memory_space<vmem>>, vector<2x16x16x32xf32>
    %51 = vector.shape_cast %50 : vector<2x16x16x32xf32> to vector<512x32xf32>
    %c0_31 = arith.constant 0 : index
    %c0_32 = arith.constant 0 : index
    %c0_33 = arith.constant 0 : index
    %c0_34 = arith.constant 0 : index
    %52 = vector.load %arg6[%c0_31, %c0_32, %c0_33, %c0_34] : memref<3x3x32x32xf32, #tpu.memory_space<vmem>>, vector<1x1x32x32xf32>
    %53 = vector.shape_cast %52 : vector<1x1x32x32xf32> to vector<32x32xf32>
    %cst_35 = arith.constant dense<0.000000e+00> : vector<512x32xf32>
    %54 = tpu.matmul %51, %53, %cst_35 {dimension_numbers = #tpu.dot_dimension_numbers<[1], [0], [0], [1], [0, 0, 1, 1], [], []>} : vector<512x32xf32>, vector<32x32xf32>, vector<512x32xf32> -> vector<512x32xf32>
    %55 = arith.addf %49, %54 : vector<512x32xf32>
    %c0_36 = arith.constant 0 : index
    %c0_37 = arith.constant 0 : index
    %c1_38 = arith.constant 1 : index
    %c0_39 = arith.constant 0 : index
    %56 = vector.load %arg19[%c0_36, %c0_37, %c1_38, %c0_39] : memref<2x18x18x32xf32, #tpu.memory_space<vmem>>, vector<2x16x16x32xf32>
    %57 = vector.shape_cast %56 : vector<2x16x16x32xf32> to vector<512x32xf32>
    %c0_40 = arith.constant 0 : index
    %c1_41 = arith.constant 1 : index
    %c0_42 = arith.constant 0 : index
    %c0_43 = arith.constant 0 : index
    %58 = vector.load %arg6[%c0_40, %c1_41, %c0_42, %c0_43] : memref<3x3x32x32xf32, #tpu.memory_space<vmem>>, vector<1x1x32x32xf32>
    %59 = vector.shape_cast %58 : vector<1x1x32x32xf32> to vector<32x32xf32>
    %cst_44 = arith.constant dense<0.000000e+00> : vector<512x32xf32>
    %60 = tpu.matmul %57, %59, %cst_44 {dimension_numbers = #tpu.dot_dimension_numbers<[1], [0], [0], [1], [0, 0, 1, 1], [], []>} : vector<512x32xf32>, vector<32x32xf32>, vector<512x32xf32> -> vector<512x32xf32>
    %61 = arith.addf %55, %60 : vector<512x32xf32>
    %c0_45 = arith.constant 0 : index
    %c0_46 = arith.constant 0 : index
    %c2 = arith.constant 2 : index
    %c0_47 = arith.constant 0 : index
    %62 = vector.load %arg19[%c0_45, %c0_46, %c2, %c0_47] : memref<2x18x18x32xf32, #tpu.memory_space<vmem>>, vector<2x16x16x32xf32>
    %63 = vector.shape_cast %62 : vector<2x16x16x32xf32> to vector<512x32xf32>
    %c0_48 = arith.constant 0 : index
    %c2_49 = arith.constant 2 : index
    %c0_50 = arith.constant 0 : index
    %c0_51 = arith.constant 0 : index
    %64 = vector.load %arg6[%c0_48, %c2_49, %c0_50, %c0_51] : memref<3x3x32x32xf32, #tpu.memory_space<vmem>>, vector<1x1x32x32xf32>
    %65 = vector.shape_cast %64 : vector<1x1x32x32xf32> to vector<32x32xf32>
    %cst_52 = arith.constant dense<0.000000e+00> : vector<512x32xf32>
    %66 = tpu.matmul %63, %65, %cst_52 {dimension_numbers = #tpu.dot_dimension_numbers<[1], [0], [0], [1], [0, 0, 1, 1], [], []>} : vector<512x32xf32>, vector<32x32xf32>, vector<512x32xf32> -> vector<512x32xf32>
    %67 = arith.addf %61, %66 : vector<512x32xf32>
    %c0_53 = arith.constant 0 : index
    %c1_54 = arith.constant 1 : index
    %c0_55 = arith.constant 0 : index
    %c0_56 = arith.constant 0 : index
    %68 = vector.load %arg19[%c0_53, %c1_54, %c0_55, %c0_56] : memref<2x18x18x32xf32, #tpu.memory_space<vmem>>, vector<2x16x16x32xf32>
    %69 = vector.shape_cast %68 : vector<2x16x16x32xf32> to vector<512x32xf32>
    %c1_57 = arith.constant 1 : index
    %c0_58 = arith.constant 0 : index
    %c0_59 = arith.constant 0 : index
    %c0_60 = arith.constant 0 : index
    %70 = vector.load %arg6[%c1_57, %c0_58, %c0_59, %c0_60] : memref<3x3x32x32xf32, #tpu.memory_space<vmem>>, vector<1x1x32x32xf32>
    %71 = vector.shape_cast %70 : vector<1x1x32x32xf32> to vector<32x32xf32>
    %cst_61 = arith.constant dense<0.000000e+00> : vector<512x32xf32>
    %72 = tpu.matmul %69, %71, %cst_61 {dimension_numbers = #tpu.dot_dimension_numbers<[1], [0], [0], [1], [0, 0, 1, 1], [], []>} : vector<512x32xf32>, vector<32x32xf32>, vector<512x32xf32> -> vector<512x32xf32>
    %73 = arith.addf %67, %72 : vector<512x32xf32>
    %c0_62 = arith.constant 0 : index
    %c1_63 = arith.constant 1 : index
    %c1_64 = arith.constant 1 : index
    %c0_65 = arith.constant 0 : index
    %74 = vector.load %arg19[%c0_62, %c1_63, %c1_64, %c0_65] : memref<2x18x18x32xf32, #tpu.memory_space<vmem>>, vector<2x16x16x32xf32>
    %75 = vector.shape_cast %74 : vector<2x16x16x32xf32> to vector<512x32xf32>
    %c1_66 = arith.constant 1 : index
    %c1_67 = arith.constant 1 : index
    %c0_68 = arith.constant 0 : index
    %c0_69 = arith.constant 0 : index
    %76 = vector.load %arg6[%c1_66, %c1_67, %c0_68, %c0_69] : memref<3x3x32x32xf32, #tpu.memory_space<vmem>>, vector<1x1x32x32xf32>
    %77 = vector.shape_cast %76 : vector<1x1x32x32xf32> to vector<32x32xf32>
    %cst_70 = arith.constant dense<0.000000e+00> : vector<512x32xf32>
    %78 = tpu.matmul %75, %77, %cst_70 {dimension_numbers = #tpu.dot_dimension_numbers<[1], [0], [0], [1], [0, 0, 1, 1], [], []>} : vector<512x32xf32>, vector<32x32xf32>, vector<512x32xf32> -> vector<512x32xf32>
    %79 = arith.addf %73, %78 : vector<512x32xf32>
    %c0_71 = arith.constant 0 : index
    %c1_72 = arith.constant 1 : index
    %c2_73 = arith.constant 2 : index
    %c0_74 = arith.constant 0 : index
    %80 = vector.load %arg19[%c0_71, %c1_72, %c2_73, %c0_74] : memref<2x18x18x32xf32, #tpu.memory_space<vmem>>, vector<2x16x16x32xf32>
    %81 = vector.shape_cast %80 : vector<2x16x16x32xf32> to vector<512x32xf32>
    %c1_75 = arith.constant 1 : index
    %c2_76 = arith.constant 2 : index
    %c0_77 = arith.constant 0 : index
    %c0_78 = arith.constant 0 : index
    %82 = vector.load %arg6[%c1_75, %c2_76, %c0_77, %c0_78] : memref<3x3x32x32xf32, #tpu.memory_space<vmem>>, vector<1x1x32x32xf32>
    %83 = vector.shape_cast %82 : vector<1x1x32x32xf32> to vector<32x32xf32>
    %cst_79 = arith.constant dense<0.000000e+00> : vector<512x32xf32>
    %84 = tpu.matmul %81, %83, %cst_79 {dimension_numbers = #tpu.dot_dimension_numbers<[1], [0], [0], [1], [0, 0, 1, 1], [], []>} : vector<512x32xf32>, vector<32x32xf32>, vector<512x32xf32> -> vector<512x32xf32>
    %85 = arith.addf %79, %84 : vector<512x32xf32>
    %c0_80 = arith.constant 0 : index
    %c2_81 = arith.constant 2 : index
    %c0_82 = arith.constant 0 : index
    %c0_83 = arith.constant 0 : index
    %86 = vector.load %arg19[%c0_80, %c2_81, %c0_82, %c0_83] : memref<2x18x18x32xf32, #tpu.memory_space<vmem>>, vector<2x16x16x32xf32>
    %87 = vector.shape_cast %86 : vector<2x16x16x32xf32> to vector<512x32xf32>
    %c2_84 = arith.constant 2 : index
    %c0_85 = arith.constant 0 : index
    %c0_86 = arith.constant 0 : index
    %c0_87 = arith.constant 0 : index
    %88 = vector.load %arg6[%c2_84, %c0_85, %c0_86, %c0_87] : memref<3x3x32x32xf32, #tpu.memory_space<vmem>>, vector<1x1x32x32xf32>
    %89 = vector.shape_cast %88 : vector<1x1x32x32xf32> to vector<32x32xf32>
    %cst_88 = arith.constant dense<0.000000e+00> : vector<512x32xf32>
    %90 = tpu.matmul %87, %89, %cst_88 {dimension_numbers = #tpu.dot_dimension_numbers<[1], [0], [0], [1], [0, 0, 1, 1], [], []>} : vector<512x32xf32>, vector<32x32xf32>, vector<512x32xf32> -> vector<512x32xf32>
    %91 = arith.addf %85, %90 : vector<512x32xf32>
    %c0_89 = arith.constant 0 : index
    %c2_90 = arith.constant 2 : index
    %c1_91 = arith.constant 1 : index
    %c0_92 = arith.constant 0 : index
    %92 = vector.load %arg19[%c0_89, %c2_90, %c1_91, %c0_92] : memref<2x18x18x32xf32, #tpu.memory_space<vmem>>, vector<2x16x16x32xf32>
    %93 = vector.shape_cast %92 : vector<2x16x16x32xf32> to vector<512x32xf32>
    %c2_93 = arith.constant 2 : index
    %c1_94 = arith.constant 1 : index
    %c0_95 = arith.constant 0 : index
    %c0_96 = arith.constant 0 : index
    %94 = vector.load %arg6[%c2_93, %c1_94, %c0_95, %c0_96] : memref<3x3x32x32xf32, #tpu.memory_space<vmem>>, vector<1x1x32x32xf32>
    %95 = vector.shape_cast %94 : vector<1x1x32x32xf32> to vector<32x32xf32>
    %cst_97 = arith.constant dense<0.000000e+00> : vector<512x32xf32>
    %96 = tpu.matmul %93, %95, %cst_97 {dimension_numbers = #tpu.dot_dimension_numbers<[1], [0], [0], [1], [0, 0, 1, 1], [], []>} : vector<512x32xf32>, vector<32x32xf32>, vector<512x32xf32> -> vector<512x32xf32>
    %97 = arith.addf %91, %96 : vector<512x32xf32>
    %c0_98 = arith.constant 0 : index
    %c2_99 = arith.constant 2 : index
    %c2_100 = arith.constant 2 : index
    %c0_101 = arith.constant 0 : index
    %98 = vector.load %arg19[%c0_98, %c2_99, %c2_100, %c0_101] : memref<2x18x18x32xf32, #tpu.memory_space<vmem>>, vector<2x16x16x32xf32>
    %99 = vector.shape_cast %98 : vector<2x16x16x32xf32> to vector<512x32xf32>
    %c2_102 = arith.constant 2 : index
    %c2_103 = arith.constant 2 : index
    %c0_104 = arith.constant 0 : index
    %c0_105 = arith.constant 0 : index
    %100 = vector.load %arg6[%c2_102, %c2_103, %c0_104, %c0_105] : memref<3x3x32x32xf32, #tpu.memory_space<vmem>>, vector<1x1x32x32xf32>
    %101 = vector.shape_cast %100 : vector<1x1x32x32xf32> to vector<32x32xf32>
    %cst_106 = arith.constant dense<0.000000e+00> : vector<512x32xf32>
    %102 = tpu.matmul %99, %101, %cst_106 {dimension_numbers = #tpu.dot_dimension_numbers<[1], [0], [0], [1], [0, 0, 1, 1], [], []>} : vector<512x32xf32>, vector<32x32xf32>, vector<512x32xf32> -> vector<512x32xf32>
    %103 = arith.addf %97, %102 : vector<512x32xf32>
    %c0_107 = arith.constant 0 : index
    %c0_108 = arith.constant 0 : index
    %104 = vector.load %arg7[%c0_107, %c0_108] : memref<1x32xf32, #tpu.memory_space<vmem>>, vector<1x32xf32>
    %105 = vector.broadcast %104 : vector<1x32xf32> to vector<512x32xf32>
    %106 = arith.addf %103, %105 : vector<512x32xf32>
    %c0_109 = arith.constant 0 : index
    %c0_110 = arith.constant 0 : index
    %107 = vector.load %arg8[%c0_109, %c0_110] : memref<1x32xf32, #tpu.memory_space<vmem>>, vector<1x32xf32>
    %c0_111 = arith.constant 0 : index
    %c0_112 = arith.constant 0 : index
    %108 = vector.load %arg9[%c0_111, %c0_112] : memref<1x32xf32, #tpu.memory_space<vmem>>, vector<1x32xf32>
    %109 = vector.broadcast %1 : vector<512x1xf32> to vector<512x32xf32>
    %110 = arith.mulf %106, %109 : vector<512x32xf32>
    %cst_113 = arith.constant dense<0.000000e+00> : vector<32xf32>
    %111 = vector.multi_reduction <add>, %110, %cst_113 [0] : vector<512x32xf32> to vector<32xf32>
    %112 = vector.shape_cast %111 : vector<32xf32> to vector<1x32xf32>
    %113 = vector.broadcast %7 : f32 to vector<1x32xf32>
    %114 = arith.mulf %112, %113 : vector<1x32xf32>
    %115 = vector.broadcast %114 : vector<1x32xf32> to vector<512x32xf32>
    %116 = arith.subf %106, %115 : vector<512x32xf32>
    %117 = arith.mulf %116, %116 : vector<512x32xf32>
    %118 = vector.broadcast %1 : vector<512x1xf32> to vector<512x32xf32>
    %119 = arith.mulf %117, %118 : vector<512x32xf32>
    %cst_114 = arith.constant dense<0.000000e+00> : vector<32xf32>
    %120 = vector.multi_reduction <add>, %119, %cst_114 [0] : vector<512x32xf32> to vector<32xf32>
    %121 = vector.shape_cast %120 : vector<32xf32> to vector<1x32xf32>
    %122 = vector.broadcast %7 : f32 to vector<1x32xf32>
    %123 = arith.mulf %121, %122 : vector<1x32xf32>
    %124 = vector.broadcast %114 : vector<1x32xf32> to vector<512x32xf32>
    %125 = arith.subf %106, %124 : vector<512x32xf32>
    %cst_115 = arith.constant 9.99999974E-6 : f32
    %126 = vector.broadcast %cst_115 : f32 to vector<1x32xf32>
    %127 = arith.addf %123, %126 : vector<1x32xf32>
    %128 = math.rsqrt %127 : vector<1x32xf32>
    %129 = vector.broadcast %128 : vector<1x32xf32> to vector<512x32xf32>
    %130 = arith.mulf %125, %129 : vector<512x32xf32>
    %131 = vector.broadcast %107 : vector<1x32xf32> to vector<512x32xf32>
    %132 = arith.mulf %130, %131 : vector<512x32xf32>
    %133 = vector.broadcast %108 : vector<1x32xf32> to vector<512x32xf32>
    %134 = arith.addf %132, %133 : vector<512x32xf32>
    %cst_116 = arith.constant 0.000000e+00 : f32
    %135 = vector.broadcast %cst_116 : f32 to vector<512x32xf32>
    %136 = arith.maximumf %134, %135 : vector<512x32xf32>
    %137 = vector.broadcast %1 : vector<512x1xf32> to vector<512x32xf32>
    %138 = arith.mulf %136, %137 : vector<512x32xf32>
    %c0_117 = arith.constant 0 : index
    %c0_118 = arith.constant 0 : index
    %139 = vector.load %arg10[%c0_117, %c0_118] : memref<32x128xf32, #tpu.memory_space<vmem>>, vector<32x128xf32>
    %cst_119 = arith.constant dense<0.000000e+00> : vector<512x128xf32>
    %140 = tpu.matmul %138, %139, %cst_119 {dimension_numbers = #tpu.dot_dimension_numbers<[1], [0], [0], [1], [0, 0, 1, 1], [], []>} : vector<512x32xf32>, vector<32x128xf32>, vector<512x128xf32> -> vector<512x128xf32>
    %c0_120 = arith.constant 0 : index
    %c0_121 = arith.constant 0 : index
    %141 = vector.load %arg11[%c0_120, %c0_121] : memref<1x128xf32, #tpu.memory_space<vmem>>, vector<1x128xf32>
    %142 = vector.broadcast %141 : vector<1x128xf32> to vector<512x128xf32>
    %143 = arith.addf %140, %142 : vector<512x128xf32>
    %c0_122 = arith.constant 0 : index
    %c0_123 = arith.constant 0 : index
    %144 = vector.load %arg12[%c0_122, %c0_123] : memref<1x128xf32, #tpu.memory_space<vmem>>, vector<1x128xf32>
    %c0_124 = arith.constant 0 : index
    %c0_125 = arith.constant 0 : index
    %145 = vector.load %arg13[%c0_124, %c0_125] : memref<1x128xf32, #tpu.memory_space<vmem>>, vector<1x128xf32>
    %146 = vector.broadcast %1 : vector<512x1xf32> to vector<512x128xf32>
    %147 = arith.mulf %143, %146 : vector<512x128xf32>
    %cst_126 = arith.constant dense<0.000000e+00> : vector<128xf32>
    %148 = vector.multi_reduction <add>, %147, %cst_126 [0] : vector<512x128xf32> to vector<128xf32>
    %149 = vector.shape_cast %148 : vector<128xf32> to vector<1x128xf32>
    %150 = vector.broadcast %7 : f32 to vector<1x128xf32>
    %151 = arith.mulf %149, %150 : vector<1x128xf32>
    %152 = vector.broadcast %151 : vector<1x128xf32> to vector<512x128xf32>
    %153 = arith.subf %143, %152 : vector<512x128xf32>
    %154 = arith.mulf %153, %153 : vector<512x128xf32>
    %155 = vector.broadcast %1 : vector<512x1xf32> to vector<512x128xf32>
    %156 = arith.mulf %154, %155 : vector<512x128xf32>
    %cst_127 = arith.constant dense<0.000000e+00> : vector<128xf32>
    %157 = vector.multi_reduction <add>, %156, %cst_127 [0] : vector<512x128xf32> to vector<128xf32>
    %158 = vector.shape_cast %157 : vector<128xf32> to vector<1x128xf32>
    %159 = vector.broadcast %7 : f32 to vector<1x128xf32>
    %160 = arith.mulf %158, %159 : vector<1x128xf32>
    %161 = vector.broadcast %151 : vector<1x128xf32> to vector<512x128xf32>
    %162 = arith.subf %143, %161 : vector<512x128xf32>
    %cst_128 = arith.constant 9.99999974E-6 : f32
    %163 = vector.broadcast %cst_128 : f32 to vector<1x128xf32>
    %164 = arith.addf %160, %163 : vector<1x128xf32>
    %165 = math.rsqrt %164 : vector<1x128xf32>
    %166 = vector.broadcast %165 : vector<1x128xf32> to vector<512x128xf32>
    %167 = arith.mulf %162, %166 : vector<512x128xf32>
    %168 = vector.broadcast %144 : vector<1x128xf32> to vector<512x128xf32>
    %169 = arith.mulf %167, %168 : vector<512x128xf32>
    %170 = vector.broadcast %145 : vector<1x128xf32> to vector<512x128xf32>
    %171 = arith.addf %169, %170 : vector<512x128xf32>
    %172 = vector.broadcast %1 : vector<512x1xf32> to vector<512x128xf32>
    %173 = arith.mulf %171, %172 : vector<512x128xf32>
    %c0_129 = arith.constant 0 : index
    %c0_130 = arith.constant 0 : index
    %174 = vector.load %arg14[%c0_129, %c0_130] : memref<32x128xf32, #tpu.memory_space<vmem>>, vector<32x128xf32>
    %cst_131 = arith.constant dense<0.000000e+00> : vector<512x128xf32>
    %175 = tpu.matmul %0, %174, %cst_131 {dimension_numbers = #tpu.dot_dimension_numbers<[1], [0], [0], [1], [0, 0, 1, 1], [], []>} : vector<512x32xf32>, vector<32x128xf32>, vector<512x128xf32> -> vector<512x128xf32>
    %c0_132 = arith.constant 0 : index
    %c0_133 = arith.constant 0 : index
    %176 = vector.load %arg15[%c0_132, %c0_133] : memref<1x128xf32, #tpu.memory_space<vmem>>, vector<1x128xf32>
    %177 = vector.broadcast %176 : vector<1x128xf32> to vector<512x128xf32>
    %178 = arith.addf %175, %177 : vector<512x128xf32>
    %c0_134 = arith.constant 0 : index
    %c0_135 = arith.constant 0 : index
    %179 = vector.load %arg16[%c0_134, %c0_135] : memref<1x128xf32, #tpu.memory_space<vmem>>, vector<1x128xf32>
    %c0_136 = arith.constant 0 : index
    %c0_137 = arith.constant 0 : index
    %180 = vector.load %arg17[%c0_136, %c0_137] : memref<1x128xf32, #tpu.memory_space<vmem>>, vector<1x128xf32>
    %181 = vector.broadcast %1 : vector<512x1xf32> to vector<512x128xf32>
    %182 = arith.mulf %178, %181 : vector<512x128xf32>
    %cst_138 = arith.constant dense<0.000000e+00> : vector<128xf32>
    %183 = vector.multi_reduction <add>, %182, %cst_138 [0] : vector<512x128xf32> to vector<128xf32>
    %184 = vector.shape_cast %183 : vector<128xf32> to vector<1x128xf32>
    %185 = vector.broadcast %7 : f32 to vector<1x128xf32>
    %186 = arith.mulf %184, %185 : vector<1x128xf32>
    %187 = vector.broadcast %186 : vector<1x128xf32> to vector<512x128xf32>
    %188 = arith.subf %178, %187 : vector<512x128xf32>
    %189 = arith.mulf %188, %188 : vector<512x128xf32>
    %190 = vector.broadcast %1 : vector<512x1xf32> to vector<512x128xf32>
    %191 = arith.mulf %189, %190 : vector<512x128xf32>
    %cst_139 = arith.constant dense<0.000000e+00> : vector<128xf32>
    %192 = vector.multi_reduction <add>, %191, %cst_139 [0] : vector<512x128xf32> to vector<128xf32>
    %193 = vector.shape_cast %192 : vector<128xf32> to vector<1x128xf32>
    %194 = vector.broadcast %7 : f32 to vector<1x128xf32>
    %195 = arith.mulf %193, %194 : vector<1x128xf32>
    %196 = vector.broadcast %186 : vector<1x128xf32> to vector<512x128xf32>
    %197 = arith.subf %178, %196 : vector<512x128xf32>
    %cst_140 = arith.constant 9.99999974E-6 : f32
    %198 = vector.broadcast %cst_140 : f32 to vector<1x128xf32>
    %199 = arith.addf %195, %198 : vector<1x128xf32>
    %200 = math.rsqrt %199 : vector<1x128xf32>
    %201 = vector.broadcast %200 : vector<1x128xf32> to vector<512x128xf32>
    %202 = arith.mulf %197, %201 : vector<512x128xf32>
    %203 = vector.broadcast %179 : vector<1x128xf32> to vector<512x128xf32>
    %204 = arith.mulf %202, %203 : vector<512x128xf32>
    %205 = vector.broadcast %180 : vector<1x128xf32> to vector<512x128xf32>
    %206 = arith.addf %204, %205 : vector<512x128xf32>
    %207 = vector.broadcast %1 : vector<512x1xf32> to vector<512x128xf32>
    %208 = arith.mulf %206, %207 : vector<512x128xf32>
    %209 = arith.addf %173, %208 : vector<512x128xf32>
    %cst_141 = arith.constant 0.000000e+00 : f32
    %210 = vector.broadcast %cst_141 : f32 to vector<512x128xf32>
    %211 = arith.maximumf %209, %210 : vector<512x128xf32>
    %c0_142 = arith.constant 0 : index
    %c0_143 = arith.constant 0 : index
    %212 = vector.load %arg18[%c0_142, %c0_143] : memref<512x128xf32, #tpu.memory_space<vmem>>, vector<512x128xf32>
    tpu.vector_store %arg18[%c0_142, %c0_143], %211 {strides = array<i32>} : memref<512x128xf32, #tpu.memory_space<vmem>>, vector<512x128xf32>,
    return
  }
}

</mosaic_0001>

<llo_original>
// kernel: bottleneck_sparse2d.1
$region0: #{bottleneck_sparse2d.1}
  #allocation0 [shape = 'u32[]', space=smem, size = 0x4, offset = 0x4, fixed_abs, tag = 'smem constant byte address 0x4 - core index']
  #allocation1 [shape = 'u32[144,128]{1,0:T(1,128)}', space=vmem, size = 0x12000, scoped, tag = 'internal scratch']
  #allocation2 [shape = 'f32[2,18,18,32]{3,2,1,0:T(8,128)}', space=vmem, size = 0x6c000, scoped, tag = 'scratch operand']
  %s0 = inlined_call_operand.vmem [shape: f32[512,32], index: 0, kind: input, shape index: {}]
  %s1 = inlined_call_operand.vmem [shape: f32[512,1], index: 1, kind: input, shape index: {}]
  %s2 = inlined_call_operand.vmem [shape: f32[32,32], index: 2, kind: input, shape index: {}]
  %s3 = inlined_call_operand.vmem [shape: f32[1,32], index: 3, kind: input, shape index: {}]
  %s4 = inlined_call_operand.vmem [shape: f32[1,32], index: 4, kind: input, shape index: {}]
  %s5 = inlined_call_operand.vmem [shape: f32[1,32], index: 5, kind: input, shape index: {}]
  %s6 = inlined_call_operand.hbm [shape: f32[3,3,32,32], index: 6, kind: input, shape index: {}]
  %s7 = inlined_call_operand.vmem [shape: f32[1,32], index: 7, kind: input, shape index: {}]
  %s8 = inlined_call_operand.vmem [shape: f32[1,32], index: 8, kind: input, shape index: {}]
  %s9 = inlined_call_operand.vmem [shape: f32[1,32], index: 9, kind: input, shape index: {}]
  %s10 = inlined_call_operand.vmem [shape: f32[32,128], index: 10, kind: input, shape index: {}]
  %s11 = inlined_call_operand.vmem [shape: f32[1,128], index: 11, kind: input, shape index: {}]
  %s12 = inlined_call_operand.vmem [shape: f32[1,128], index: 12, kind: input, shape index: {}]
  %s13 = inlined_call_operand.vmem [shape: f32[1,128], index: 13, kind: input, shape index: {}]
  %s14 = inlined_call_operand.vmem [shape: f32[32,128], index: 14, kind: input, shape index: {}]
  %s15 = inlined_call_operand.vmem [shape: f32[1,128], index: 15, kind: input, shape index: {}]
  %s16 = inlined_call_operand.vmem [shape: f32[1,128], index: 16, kind: input, shape index: {}]
  %s17 = inlined_call_operand.vmem [shape: f32[1,128], index: 17, kind: input, shape index: {}]
  %s18 = inlined_call_operand.hbm [shape: f32[512,128], index: 18, kind: output, shape index: {}]
  %s19 = sld [smem:[#allocation0]]
  $region86: #{bottleneck_sparse2d.1} parent=0
    _
  %s21 = ssub.s32 1, %s19
  %s22 = scalar_select 0, %s21, %s19
  $region1: #{bottleneck_sparse2d.1} parent=0
    #allocation3 [shape = 'u8[147456]{0}', space=vmem, size = 0x24000, scoped, tag = 'input window, operand 6, single buffered']
    #allocation4 [shape = 's32[1]{0}', space=sflag, size = 0x4, scoped, tag = 'scoped memory for bottleneck_sparse2d.1']
    #allocation5 [shape = 's32[1]{0}', space=sflag, size = 0x4, scoped, tag = 'scoped memory for bottleneck_sparse2d.1']
    #allocation6 [shape = 'u8[262144]{0}', space=vmem, size = 0x40000, scoped, tag = 'output window, operand 0, single buffered']
    %23 = vsyncpa [#allocation4], 0
    %24 = vsyncpa [#allocation5], 0
    // Predicated region
    $region2: #{bottleneck_sparse2d.1} parent=1 // pred_check
      _
    $region3: #{bottleneck_sparse2d.1} parent=1 // pred_check_branch
      %26 = sbr.rel (0) target = $region5
    $region4: #{bottleneck_sparse2d.1} parent=1 // pred_region
      _
    $region5: #{bottleneck_sparse2d.1} parent=1 // pred_fallthru
      _
    // Predicated region
    $region6: #{bottleneck_sparse2d.1} parent=1 // pred_check
      _
    $region7: #{bottleneck_sparse2d.1} parent=1 // pred_check_branch
      %28 = sbr.rel (0) target = $region9
    $region8: #{bottleneck_sparse2d.1} parent=1 // pred_region
      _
    $region9: #{bottleneck_sparse2d.1} parent=1 // pred_fallthru
      _
    // Predicated region
    $region10: #{bottleneck_sparse2d.1} parent=1 // pred_check
      _
    $region11: #{bottleneck_sparse2d.1} parent=1 // pred_check_branch
      %30 = sbr.rel (0) target = $region13
    $region12: #{bottleneck_sparse2d.1} parent=1 // pred_region
      _
    $region13: #{bottleneck_sparse2d.1} parent=1 // pred_fallthru
      _
    // Predicated region
    $region14: #{bottleneck_sparse2d.1} parent=1 // pred_check
      _
    $region15: #{bottleneck_sparse2d.1} parent=1 // pred_check_branch
      %32 = sbr.rel (0) target = $region17
    $region16: #{bottleneck_sparse2d.1} parent=1 // pred_region
      _
    $region17: #{bottleneck_sparse2d.1} parent=1 // pred_fallthru
      _
    // Predicated region
    $region18: #{bottleneck_sparse2d.1} parent=1 // pred_check
      _
    $region19: #{bottleneck_sparse2d.1} parent=1 // pred_check_branch
      %34 = sbr.rel (0) target = $region21
    $region20: #{bottleneck_sparse2d.1} parent=1 // pred_region
      _
    $region21: #{bottleneck_sparse2d.1} parent=1 // pred_fallthru
      _
    // Predicated region
    $region22: #{bottleneck_sparse2d.1} parent=1 // pred_check
      _
    $region23: #{bottleneck_sparse2d.1} parent=1 // pred_check_branch
      %36 = sbr.rel (0) target = $region25
    $region24: #{bottleneck_sparse2d.1} parent=1 // pred_region
      _
    $region25: #{bottleneck_sparse2d.1} parent=1 // pred_fallthru
      _
    // Predicated region
    $region26: #{bottleneck_sparse2d.1} parent=1 // pred_check
      _
    $region27: #{bottleneck_sparse2d.1} parent=1 // pred_check_branch
      %38 = sbr.rel (0) target = $region29
    $region28: #{bottleneck_sparse2d.1} parent=1 // pred_region
      %s40 = ssub.s32 4608, 4608
      %41 = vsyncadd [#allocation4], %s40
      %s42 = sshll.u32 [#allocation3], 4
      %s43 = int_to_ptr.vmem [resolvable:$true] %s42
      %48 = dma.hbm_to_vmem [thread:$0]  %s6, 4608, %s43, [#allocation4], 128, 128, 8
    $region29: #{bottleneck_sparse2d.1} parent=1 // pred_fallthru
      _
    // Predicated region
    $region30: #{bottleneck_sparse2d.1} parent=1 // pred_check
      _
    $region31: #{bottleneck_sparse2d.1} parent=1 // pred_check_branch
      %50 = sbr.rel (0) target = $region33
    $region32: #{bottleneck_sparse2d.1} parent=1 // pred_region
      _
    $region33: #{bottleneck_sparse2d.1} parent=1 // pred_fallthru
      _
    // Predicated region
    $region34: #{bottleneck_sparse2d.1} parent=1 // pred_check
      _
    $region35: #{bottleneck_sparse2d.1} parent=1 // pred_check_branch
      %52 = sbr.rel (0) target = $region37
    $region36: #{bottleneck_sparse2d.1} parent=1 // pred_region
      _
    $region37: #{bottleneck_sparse2d.1} parent=1 // pred_fallthru
      _
    // Predicated region
    $region38: #{bottleneck_sparse2d.1} parent=1 // pred_check
      _
    $region39: #{bottleneck_sparse2d.1} parent=1 // pred_check_branch
      %54 = sbr.rel (0) target = $region41
    $region40: #{bottleneck_sparse2d.1} parent=1 // pred_region
      _
    $region41: #{bottleneck_sparse2d.1} parent=1 // pred_fallthru
      _
    // Predicated region
    $region42: #{bottleneck_sparse2d.1} parent=1 // pred_check
      _
    $region43: #{bottleneck_sparse2d.1} parent=1 // pred_check_branch
      %56 = sbr.rel (0) target = $region45
    $region44: #{bottleneck_sparse2d.1} parent=1 // pred_region
      _
    $region45: #{bottleneck_sparse2d.1} parent=1 // pred_fallthru
      _
    // Predicated region
    $region46: #{bottleneck_sparse2d.1} parent=1 // pred_check
      _
    $region47: #{bottleneck_sparse2d.1} parent=1 // pred_check_branch
      %58 = sbr.rel (0) target = $region49
    $region48: #{bottleneck_sparse2d.1} parent=1 // pred_region
      _
    $region49: #{bottleneck_sparse2d.1} parent=1 // pred_fallthru
      _
    // Predicated region
    $region50: #{bottleneck_sparse2d.1} parent=1 // pred_check
      _
    $region51: #{bottleneck_sparse2d.1} parent=1 // pred_check_branch
      %60 = sbr.rel (0) target = $region53
    $region52: #{bottleneck_sparse2d.1} parent=1 // pred_region
      _
    $region53: #{bottleneck_sparse2d.1} parent=1 // pred_fallthru
      _
    // Predicated region
    $region54: #{bottleneck_sparse2d.1} parent=1 // pred_check
      _
    $region55: #{bottleneck_sparse2d.1} parent=1 // pred_check_branch
      %62 = sbr.rel (0) target = $region57
    $region56: #{bottleneck_sparse2d.1} parent=1 // pred_region
      _
    $region57: #{bottleneck_sparse2d.1} parent=1 // pred_fallthru
      _
    // Predicated region
    $region58: #{bottleneck_sparse2d.1} parent=1 // pred_check
      _
    $region59: #{bottleneck_sparse2d.1} parent=1 // pred_check_branch
      %64 = sbr.rel (0) target = $region61
    $region60: #{bottleneck_sparse2d.1} parent=1 // pred_region
      _
    $region61: #{bottleneck_sparse2d.1} parent=1 // pred_fallthru
      _
    // Predicated region
    $region62: #{bottleneck_sparse2d.1} parent=1 // pred_check
      _
    $region63: #{bottleneck_sparse2d.1} parent=1 // pred_check_branch
      %66 = sbr.rel (0) target = $region65
    $region64: #{bottleneck_sparse2d.1} parent=1 // pred_region
      _
    $region65: #{bottleneck_sparse2d.1} parent=1 // pred_fallthru
      _
    // Predicated region
    $region66: #{bottleneck_sparse2d.1} parent=1 // pred_check
      _
    $region67: #{bottleneck_sparse2d.1} parent=1 // pred_check_branch
      %68 = sbr.rel (0) target = $region69
    $region68: #{bottleneck_sparse2d.1} parent=1 // pred_region
      _
    $region69: #{bottleneck_sparse2d.1} parent=1 // pred_fallthru
      _
    // Predicated region
    $region70: #{bottleneck_sparse2d.1} parent=1 // pred_check
      _
    $region71: #{bottleneck_sparse2d.1} parent=1 // pred_check_branch
      %70 = sbr.rel (0) target = $region73
    $region72: #{bottleneck_sparse2d.1} parent=1 // pred_region
      _
    $region73: #{bottleneck_sparse2d.1} parent=1 // pred_fallthru
      _
    // Predicated region
    $region74: #{bottleneck_sparse2d.1} parent=1 // pred_check
      _
    $region75: #{bottleneck_sparse2d.1} parent=1 // pred_check_branch
      %72 = sbr.rel (0) target = $region77
    $region76: #{bottleneck_sparse2d.1} parent=1 // pred_region
      %73 = dma.done [#allocation4], 4608
    $region77: #{bottleneck_sparse2d.1} parent=1 // pred_fallthru
      _
    %v74 = vld [vmem:[%s0] sm:$0xff]
    %v75 = vld [vmem:[%s0 + $0x8] sm:$0xff]
    %v76 = vld [vmem:[%s0 + $0x10] sm:$0xff]
    %v77 = vld [vmem:[%s0 + $0x18] sm:$0xff]
    %v78 = vld [vmem:[%s0 + $0x20] sm:$0xff]
    %v79 = vld [vmem:[%s0 + $0x28] sm:$0xff]
    %v80 = vld [vmem:[%s0 + $0x30] sm:$0xff]
    %v81 = vld [vmem:[%s0 + $0x38] sm:$0xff]
    %v82 = vld [vmem:[%s0 + $0x40] sm:$0xff]
    %v83 = vld [vmem:[%s0 + $0x48] sm:$0xff]
    %v84 = vld [vmem:[%s0 + $0x50] sm:$0xff]
    %v85 = vld [vmem:[%s0 + $0x58] sm:$0xff]
    %v86 = vld [vmem:[%s0 + $0x60] sm:$0xff]
    %v87 = vld [vmem:[%s0 + $0x68] sm:$0xff]
    %v88 = vld [vmem:[%s0 + $0x70] sm:$0xff]
    %v89 = vld [vmem:[%s0 + $0x78] sm:$0xff]
    %v90 = vld [vmem:[%s0 + $0x80] sm:$0xff]
    %v91 = vld [vmem:[%s0 + $0x88] sm:$0xff]
    %v92 = vld [vmem:[%s0 + $0x90] sm:$0xff]
    %v93 = vld [vmem:[%s0 + $0x98] sm:$0xff]
    %v94 = vld [vmem:[%s0 + $0xa0] sm:$0xff]
    %v95 = vld [vmem:[%s0 + $0xa8] sm:$0xff]
    %v96 = vld [vmem:[%s0 + $0xb0] sm:$0xff]
    %v97 = vld [vmem:[%s0 + $0xb8] sm:$0xff]
    %v98 = vld [vmem:[%s0 + $0xc0] sm:$0xff]
    %v99 = vld [vmem:[%s0 + $0xc8] sm:$0xff]
    %v100 = vld [vmem:[%s0 + $0xd0] sm:$0xff]
    %v101 = vld [vmem:[%s0 + $0xd8] sm:$0xff]
    %v102 = vld [vmem:[%s0 + $0xe0] sm:$0xff]
    %v103 = vld [vmem:[%s0 + $0xe8] sm:$0xff]
    %v104 = vld [vmem:[%s0 + $0xf0] sm:$0xff]
    %v105 = vld [vmem:[%s0 + $0xf8] sm:$0xff]
    %v106 = vld [vmem:[%s0 + $0x100] sm:$0xff]
    %v107 = vld [vmem:[%s0 + $0x108] sm:$0xff]
    %v108 = vld [vmem:[%s0 + $0x110] sm:$0xff]
    %v109 = vld [vmem:[%s0 + $0x118] sm:$0xff]
    %v110 = vld [vmem:[%s0 + $0x120] sm:$0xff]
    %v111 = vld [vmem:[%s0 + $0x128] sm:$0xff]
    %v112 = vld [vmem:[%s0 + $0x130] sm:$0xff]
    %v113 = vld [vmem:[%s0 + $0x138] sm:$0xff]
    %v114 = vld [vmem:[%s0 + $0x140] sm:$0xff]
    %v115 = vld [vmem:[%s0 + $0x148] sm:$0xff]
    %v116 = vld [vmem:[%s0 + $0x150] sm:$0xff]
    %v117 = vld [vmem:[%s0 + $0x158] sm:$0xff]
    %v118 = vld [vmem:[%s0 + $0x160] sm:$0xff]
    %v119 = vld [vmem:[%s0 + $0x168] sm:$0xff]
    %v120 = vld [vmem:[%s0 + $0x170] sm:$0xff]
    %v121 = vld [vmem:[%s0 + $0x178] sm:$0xff]
    %v122 = vld [vmem:[%s0 + $0x180] sm:$0xff]
    %v123 = vld [vmem:[%s0 + $0x188] sm:$0xff]
    %v124 = vld [vmem:[%s0 + $0x190] sm:$0xff]
    %v125 = vld [vmem:[%s0 + $0x198] sm:$0xff]
    %v126 = vld [vmem:[%s0 + $0x1a0] sm:$0xff]
    %v127 = vld [vmem:[%s0 + $0x1a8] sm:$0xff]
    %v128 = vld [vmem:[%s0 + $0x1b0] sm:$0xff]
    %v129 = vld [vmem:[%s0 + $0x1b8] sm:$0xff]
    %v130 = vld [vmem:[%s0 + $0x1c0] sm:$0xff]
    %v131 = vld [vmem:[%s0 + $0x1c8] sm:$0xff]
    %v132 = vld [vmem:[%s0 + $0x1d0] sm:$0xff]
    %v133 = vld [vmem:[%s0 + $0x1d8] sm:$0xff]
    %v134 = vld [vmem:[%s0 + $0x1e0] sm:$0xff]
    %v135 = vld [vmem:[%s0 + $0x1e8] sm:$0xff]
    %v136 = vld [vmem:[%s0 + $0x1f0] sm:$0xff]
    %v137 = vld [vmem:[%s0 + $0x1f8] sm:$0xff]
    %v138 = vld [vmem:[%s1] sm:$0xff]
    %v139 = vld [vmem:[%s1 + $0x8] sm:$0xff]
    %v140 = vld [vmem:[%s1 + $0x10] sm:$0xff]
    %v141 = vld [vmem:[%s1 + $0x18] sm:$0xff]
    %v142 = vld [vmem:[%s1 + $0x20] sm:$0xff]
    %v143 = vld [vmem:[%s1 + $0x28] sm:$0xff]
    %v144 = vld [vmem:[%s1 + $0x30] sm:$0xff]
    %v145 = vld [vmem:[%s1 + $0x38] sm:$0xff]
    %v146 = vld [vmem:[%s1 + $0x40] sm:$0xff]
    %v147 = vld [vmem:[%s1 + $0x48] sm:$0xff]
    %v148 = vld [vmem:[%s1 + $0x50] sm:$0xff]
    %v149 = vld [vmem:[%s1 + $0x58] sm:$0xff]
    %v150 = vld [vmem:[%s1 + $0x60] sm:$0xff]
    %v151 = vld [vmem:[%s1 + $0x68] sm:$0xff]
    %v152 = vld [vmem:[%s1 + $0x70] sm:$0xff]
    %v153 = vld [vmem:[%s1 + $0x78] sm:$0xff]
    %v154 = vld [vmem:[%s1 + $0x80] sm:$0xff]
    %v155 = vld [vmem:[%s1 + $0x88] sm:$0xff]
    %v156 = vld [vmem:[%s1 + $0x90] sm:$0xff]
    %v157 = vld [vmem:[%s1 + $0x98] sm:$0xff]
    %v158 = vld [vmem:[%s1 + $0xa0] sm:$0xff]
    %v159 = vld [vmem:[%s1 + $0xa8] sm:$0xff]
    %v160 = vld [vmem:[%s1 + $0xb0] sm:$0xff]
    %v161 = vld [vmem:[%s1 + $0xb8] sm:$0xff]
    %v162 = vld [vmem:[%s1 + $0xc0] sm:$0xff]
    %v163 = vld [vmem:[%s1 + $0xc8] sm:$0xff]
    %v164 = vld [vmem:[%s1 + $0xd0] sm:$0xff]
    %v165 = vld [vmem:[%s1 + $0xd8] sm:$0xff]
    %v166 = vld [vmem:[%s1 + $0xe0] sm:$0xff]
    %v167 = vld [vmem:[%s1 + $0xe8] sm:$0xff]
    %v168 = vld [vmem:[%s1 + $0xf0] sm:$0xff]
    %v169 = vld [vmem:[%s1 + $0xf8] sm:$0xff]
    %v170 = vld [vmem:[%s1 + $0x100] sm:$0xff]
    %v171 = vld [vmem:[%s1 + $0x108] sm:$0xff]
    %v172 = vld [vmem:[%s1 + $0x110] sm:$0xff]
    %v173 = vld [vmem:[%s1 + $0x118] sm:$0xff]
    %v174 = vld [vmem:[%s1 + $0x120] sm:$0xff]
    %v175 = vld [vmem:[%s1 + $0x128] sm:$0xff]
    %v176 = vld [vmem:[%s1 + $0x130] sm:$0xff]
    %v177 = vld [vmem:[%s1 + $0x138] sm:$0xff]
    %v178 = vld [vmem:[%s1 + $0x140] sm:$0xff]
    %v179 = vld [vmem:[%s1 + $0x148] sm:$0xff]
    %v180 = vld [vmem:[%s1 + $0x150] sm:$0xff]
    %v181 = vld [vmem:[%s1 + $0x158] sm:$0xff]
    %v182 = vld [vmem:[%s1 + $0x160] sm:$0xff]
    %v183 = vld [vmem:[%s1 + $0x168] sm:$0xff]
    %v184 = vld [vmem:[%s1 + $0x170] sm:$0xff]
    %v185 = vld [vmem:[%s1 + $0x178] sm:$0xff]
    %v186 = vld [vmem:[%s1 + $0x180] sm:$0xff]
    %v187 = vld [vmem:[%s1 + $0x188] sm:$0xff]
    %v188 = vld [vmem:[%s1 + $0x190] sm:$0xff]
    %v189 = vld [vmem:[%s1 + $0x198] sm:$0xff]
    %v190 = vld [vmem:[%s1 + $0x1a0] sm:$0xff]
    %v191 = vld [vmem:[%s1 + $0x1a8] sm:$0xff]
    %v192 = vld [vmem:[%s1 + $0x1b0] sm:$0xff]
    %v193 = vld [vmem:[%s1 + $0x1b8] sm:$0xff]
    %v194 = vld [vmem:[%s1 + $0x1c0] sm:$0xff]
    %v195 = vld [vmem:[%s1 + $0x1c8] sm:$0xff]
    %v196 = vld [vmem:[%s1 + $0x1d0] sm:$0xff]
    %v197 = vld [vmem:[%s1 + $0x1d8] sm:$0xff]
    %v198 = vld [vmem:[%s1 + $0x1e0] sm:$0xff]
    %v199 = vld [vmem:[%s1 + $0x1e8] sm:$0xff]
    %v200 = vld [vmem:[%s1 + $0x1f0] sm:$0xff]
    %v201 = vld [vmem:[%s1 + $0x1f8] sm:$0xff]
    %vm202 = vcmask 7168
    %v203 = vsel %vm202, %v138, 0.0
    %v204 = vsel %vm202, %v139, 0.0
    %v205 = vadd.f32 %v203, %v204
    %v206 = vsel %vm202, %v140, 0.0
    %v207 = vadd.f32 %v205, %v206
    %v208 = vsel %vm202, %v141, 0.0
    %v209 = vadd.f32 %v207, %v208
    %v210 = vsel %vm202, %v142, 0.0
    %v211 = vadd.f32 %v209, %v210
    %v212 = vsel %vm202, %v143, 0.0
    %v213 = vadd.f32 %v211, %v212
    %v214 = vsel %vm202, %v144, 0.0
    %v215 = vadd.f32 %v213, %v214
    %v216 = vsel %vm202, %v145, 0.0
    %v217 = vadd.f32 %v215, %v216
    %v218 = vsel %vm202, %v146, 0.0
    %v219 = vadd.f32 %v217, %v218
    %v220 = vsel %vm202, %v147, 0.0
    %v221 = vadd.f32 %v219, %v220
    %v222 = vsel %vm202, %v148, 0.0
    %v223 = vadd.f32 %v221, %v222
    %v224 = vsel %vm202, %v149, 0.0
    %v225 = vadd.f32 %v223, %v224
    %v226 = vsel %vm202, %v150, 0.0
    %v227 = vadd.f32 %v225, %v226
    %v228 = vsel %vm202, %v151, 0.0
    %v229 = vadd.f32 %v227, %v228
    %v230 = vsel %vm202, %v152, 0.0
    %v231 = vadd.f32 %v229, %v230
    %v232 = vsel %vm202, %v153, 0.0
    %v233 = vadd.f32 %v231, %v232
    %v234 = vsel %vm202, %v154, 0.0
    %v235 = vadd.f32 %v233, %v234
    %v236 = vsel %vm202, %v155, 0.0
    %v237 = vadd.f32 %v235, %v236
    %v238 = vsel %vm202, %v156, 0.0
    %v239 = vadd.f32 %v237, %v238
    %v240 = vsel %vm202, %v157, 0.0
    %v241 = vadd.f32 %v239, %v240
    %v242 = vsel %vm202, %v158, 0.0
    %v243 = vadd.f32 %v241, %v242
    %v244 = vsel %vm202, %v159, 0.0
    %v245 = vadd.f32 %v243, %v244
    %v246 = vsel %vm202, %v160, 0.0
    %v247 = vadd.f32 %v245, %v246
    %v248 = vsel %vm202, %v161, 0.0
    %v249 = vadd.f32 %v247, %v248
    %v250 = vsel %vm202, %v162, 0.0
    %v251 = vadd.f32 %v249, %v250
    %v252 = vsel %vm202, %v163, 0.0
    %v253 = vadd.f32 %v251, %v252
    %v254 = vsel %vm202, %v164, 0.0
    %v255 = vadd.f32 %v253, %v254
    %v256 = vsel %vm202, %v165, 0.0
    %v257 = vadd.f32 %v255, %v256
    %v258 = vsel %vm202, %v166, 0.0
    %v259 = vadd.f32 %v257, %v258
    %v260 = vsel %vm202, %v167, 0.0
    %v261 = vadd.f32 %v259, %v260
    %v262 = vsel %vm202, %v168, 0.0
    %v263 = vadd.f32 %v261, %v262
    %v264 = vsel %vm202, %v169, 0.0
    %v265 = vadd.f32 %v263, %v264
    %v266 = vsel %vm202, %v170, 0.0
    %v267 = vadd.f32 %v265, %v266
    %v268 = vsel %vm202, %v171, 0.0
    %v269 = vadd.f32 %v267, %v268
    %v270 = vsel %vm202, %v172, 0.0
    %v271 = vadd.f32 %v269, %v270
    %v272 = vsel %vm202, %v173, 0.0
    %v273 = vadd.f32 %v271, %v272
    %v274 = vsel %vm202, %v174, 0.0
    %v275 = vadd.f32 %v273, %v274
    %v276 = vsel %vm202, %v175, 0.0
    %v277 = vadd.f32 %v275, %v276
    %v278 = vsel %vm202, %v176, 0.0
    %v279 = vadd.f32 %v277, %v278
    %v280 = vsel %vm202, %v177, 0.0
    %v281 = vadd.f32 %v279, %v280
    %v282 = vsel %vm202, %v178, 0.0
    %v283 = vadd.f32 %v281, %v282
    %v284 = vsel %vm202, %v179, 0.0
    %v285 = vadd.f32 %v283, %v284
    %v286 = vsel %vm202, %v180, 0.0
    %v287 = vadd.f32 %v285, %v286
    %v288 = vsel %vm202, %v181, 0.0
    %v289 = vadd.f32 %v287, %v288
    %v290 = vsel %vm202, %v182, 0.0
    %v291 = vadd.f32 %v289, %v290
    %v292 = vsel %vm202, %v183, 0.0
    %v293 = vadd.f32 %v291, %v292
    %v294 = vsel %vm202, %v184, 0.0
    %v295 = vadd.f32 %v293, %v294
    %v296 = vsel %vm202, %v185, 0.0
    %v297 = vadd.f32 %v295, %v296
    %v298 = vsel %vm202, %v186, 0.0
    %v299 = vadd.f32 %v297, %v298
    %v300 = vsel %vm202, %v187, 0.0
    %v301 = vadd.f32 %v299, %v300
    %v302 = vsel %vm202, %v188, 0.0
    %v303 = vadd.f32 %v301, %v302
    %v304 = vsel %vm202, %v189, 0.0
    %v305 = vadd.f32 %v303, %v304
    %v306 = vsel %vm202, %v190, 0.0
    %v307 = vadd.f32 %v305, %v306
    %v308 = vsel %vm202, %v191, 0.0
    %v309 = vadd.f32 %v307, %v308
    %v310 = vsel %vm202, %v192, 0.0
    %v311 = vadd.f32 %v309, %v310
    %v312 = vsel %vm202, %v193, 0.0
    %v313 = vadd.f32 %v311, %v312
    %v314 = vsel %vm202, %v194, 0.0
    %v315 = vadd.f32 %v313, %v314
    %v316 = vsel %vm202, %v195, 0.0
    %v317 = vadd.f32 %v315, %v316
    %v318 = vsel %vm202, %v196, 0.0
    %v319 = vadd.f32 %v317, %v318
    %v320 = vsel %vm202, %v197, 0.0
    %v321 = vadd.f32 %v319, %v320
    %v322 = vsel %vm202, %v198, 0.0
    %v323 = vadd.f32 %v321, %v322
    %v324 = vsel %vm202, %v199, 0.0
    %v325 = vadd.f32 %v323, %v324
    %v326 = vsel %vm202, %v200, 0.0
    %v327 = vadd.f32 %v325, %v326
    %v328 = vsel %vm202, %v201, 0.0
    %v329 = vadd.f32 %v327, %v328
    %330 = vadd.xlane.f32.xlu0 %v329
    %v331 = vpop.xlane.xlu0 %330
    %v332 = vrot.slane %v331, 4
    %v333 = vadd.f32 %v331, %v332
    %v334 = vrot.slane %v333, 2
    %v335 = vadd.f32 %v333, %v334
    %v336 = vrot.slane %v335, 1
    %v337 = vadd.f32 %v335, %v336
    %s338 = vtos %v337
    %s339 = smax.f32 %s338, 1.0
    %v340 = vstv %s339
    %v341 = vrcp.pop %v340
    %s342 = vtos %v341
    %v343 = vld [vmem:[%s2] sm:$0xff]
    %v344 = vld [vmem:[%s2 + $0x8] sm:$0xff]
    %v345 = vld [vmem:[%s2 + $0x10] sm:$0xff]
    %v346 = vld [vmem:[%s2 + $0x18] sm:$0xff]
    %v347 = vld [vmem:[%s3] sm:$0x1]
    %v349 = vlaneseq
    %v350 = vshrl.u32 %v349, 7
    %v351 = vsub.s32 0, %v350
    %v352 = vrot.slane %v347, %v351
    %vm354 = vcmask 261120
    %v356 = vsel %vm354, %v74, 0
    %v359 = vsel %vm354, %v75, 0
    %v362 = vsel %vm354, %v76, 0
    %v365 = vsel %vm354, %v77, 0
    %v368 = vsel %vm354, %v78, 0
    %v371 = vsel %vm354, %v79, 0
    %v374 = vsel %vm354, %v80, 0
    %v377 = vsel %vm354, %v81, 0
    %v380 = vsel %vm354, %v82, 0
    %v383 = vsel %vm354, %v83, 0
    %v386 = vsel %vm354, %v84, 0
    %v389 = vsel %vm354, %v85, 0
    %v392 = vsel %vm354, %v86, 0
    %v395 = vsel %vm354, %v87, 0
    %v398 = vsel %vm354, %v88, 0
    %v401 = vsel %vm354, %v89, 0
    %v404 = vsel %vm354, %v90, 0
    %v407 = vsel %vm354, %v91, 0
    %v410 = vsel %vm354, %v92, 0
    %v413 = vsel %vm354, %v93, 0
    %v416 = vsel %vm354, %v94, 0
    %v419 = vsel %vm354, %v95, 0
    %v422 = vsel %vm354, %v96, 0
    %v425 = vsel %vm354, %v97, 0
    %v428 = vsel %vm354, %v98, 0
    %v431 = vsel %vm354, %v99, 0
    %v434 = vsel %vm354, %v100, 0
    %v437 = vsel %vm354, %v101, 0
    %v440 = vsel %vm354, %v102, 0
    %v443 = vsel %vm354, %v103, 0
    %v446 = vsel %vm354, %v104, 0
    %v449 = vsel %vm354, %v105, 0
    %v452 = vsel %vm354, %v106, 0
    %v455 = vsel %vm354, %v107, 0
    %v458 = vsel %vm354, %v108, 0
    %v461 = vsel %vm354, %v109, 0
    %v464 = vsel %vm354, %v110, 0
    %v467 = vsel %vm354, %v111, 0
    %v470 = vsel %vm354, %v112, 0
    %v473 = vsel %vm354, %v113, 0
    %v476 = vsel %vm354, %v114, 0
    %v479 = vsel %vm354, %v115, 0
    %v482 = vsel %vm354, %v116, 0
    %v485 = vsel %vm354, %v117, 0
    %v488 = vsel %vm354, %v118, 0
    %v491 = vsel %vm354, %v119, 0
    %v494 = vsel %vm354, %v120, 0
    %v497 = vsel %vm354, %v121, 0
    %v500 = vsel %vm354, %v122, 0
    %v503 = vsel %vm354, %v123, 0
    %v506 = vsel %vm354, %v124, 0
    %v509 = vsel %vm354, %v125, 0
    %v512 = vsel %vm354, %v126, 0
    %v515 = vsel %vm354, %v127, 0
    %v518 = vsel %vm354, %v128, 0
    %v521 = vsel %vm354, %v129, 0
    %v524 = vsel %vm354, %v130, 0
    %v527 = vsel %vm354, %v131, 0
    %v530 = vsel %vm354, %v132, 0
    %v533 = vsel %vm354, %v133, 0
    %v536 = vsel %vm354, %v134, 0
    %v539 = vsel %vm354, %v135, 0
    %v542 = vsel %vm354, %v136, 0
    %v545 = vsel %vm354, %v137, 0
    %547 = vmatprep.subr.mxu0 0.0
    %548 = vmatpush1.msra.mxu0 %v343
    %549 = vmatprep.subr.mxu0 0.0
    %550 = vmatpush1.msra.mxu0 %v344
    %551 = vmatprep.subr.mxu0 0.0
    %552 = vmatpush1.msra.mxu0 %v345
    %553 = vmatprep.subr.mxu0 0.0
    %554 = vmatpush1.msra.mxu0 %v346
    %555 = vmatprep.subr.mxu0 0.0
    %556 = vmatpush1.msra.mxu0 0.0
    %557 = vmatprep.subr.mxu0 0.0
    %558 = vmatpush1.msra.mxu0 0.0
    %559 = vmatprep.subr.mxu0 0.0
    %560 = vmatpush1.msra.mxu0 0.0
    %561 = vmatprep.subr.mxu0 0.0
    %562 = vmatpush1.msra.mxu0 0.0
    %563 = vmatprep.subr.mxu0 0.0
    %564 = vmatpush1.msra.mxu0 0.0
    %565 = vmatprep.subr.mxu0 0.0
    %566 = vmatpush1.msra.mxu0 0.0
    %567 = vmatprep.subr.mxu0 0.0
    %568 = vmatpush1.msra.mxu0 0.0
    %569 = vmatprep.subr.mxu0 0.0
    %570 = vmatpush1.msra.mxu0 0.0
    %571 = vmatprep.subr.mxu0 0.0
    %572 = vmatpush1.msra.mxu0 0.0
    %573 = vmatprep.subr.mxu0 0.0
    %574 = vmatpush1.msra.mxu0 0.0
    %575 = vmatprep.subr.mxu0 0.0
    %576 = vmatpush1.msra.mxu0 0.0
    %577 = vmatprep.subr.mxu0 0.0
    %578 = vmatpush1.msra.mxu0 0.0
    %579 = vmatprep.subr.mxu0 0.0
    %580 = vmatpush1.msra.mxu0 0.0
    %581 = vmatprep.subr.mxu0 0.0
    %582 = vmatpush1.msra.mxu0 0.0
    %583 = vmatprep.subr.mxu0 0.0
    %584 = vmatpush1.msra.mxu0 0.0
    %585 = vmatprep.subr.mxu0 0.0
    %586 = vmatpush1.msra.mxu0 0.0
    %587 = vmatprep.subr.mxu0 0.0
    %588 = vmatpush1.msra.mxu0 0.0
    %589 = vmatprep.subr.mxu0 0.0
    %590 = vmatpush1.msra.mxu0 0.0
    %591 = vmatprep.subr.mxu0 0.0
    %592 = vmatpush1.msra.mxu0 0.0
    %593 = vmatprep.subr.mxu0 0.0
    %594 = vmatpush1.msra.mxu0 0.0
    %595 = vmatprep.subr.mxu0 0.0
    %596 = vmatpush1.msra.mxu0 0.0
    %597 = vmatprep.subr.mxu0 0.0
    %598 = vmatpush1.msra.mxu0 0.0
    %599 = vmatprep.subr.mxu0 0.0
    %600 = vmatpush1.msra.mxu0 0.0
    %601 = vmatprep.subr.mxu0 0.0
    %602 = vmatpush1.msra.mxu0 0.0
    %603 = vmatprep.subr.mxu0 0.0
    %604 = vmatpush1.msra.mxu0 0.0
    %605 = vmatprep.subr.mxu0 0.0
    %606 = vmatpush1.msra.mxu0 0.0
    %607 = vmatprep.subr.mxu0 0.0
    %608 = vmatpush1.msra.mxu0 0.0
    %609 = vmatprep.subr.mxu0 0.0
    %610 = vmatpush1.msra.mxu0 0.0
    %611 = vmatprep.mubr.f32.mxu0 0.0
    %612 = vmatmul.mubr.f32.gmra.mrb[0].mxu0 %v356
    %v613 = vpop.f32.mrb[0].mxu0
    %v614 = vadd.f32 %v352, %v613
    %v615 = vpop.f32.mrb[0].mxu0
    %616 = vmatprep.mubr.f32.mxu0 0.0
    %617 = vmatmul.mubr.f32.gmra.mrb[0].mxu0 %v359
    %v618 = vpop.f32.mrb[0].mxu0
    %v619 = vadd.f32 %v352, %v618
    %v620 = vpop.f32.mrb[0].mxu0
    %621 = vmatprep.mubr.f32.mxu0 0.0
    %622 = vmatmul.mubr.f32.gmra.mrb[0].mxu0 %v362
    %v623 = vpop.f32.mrb[0].mxu0
    %v624 = vadd.f32 %v352, %v623
    %v625 = vpop.f32.mrb[0].mxu0
    %626 = vmatprep.mubr.f32.mxu0 0.0
    %627 = vmatmul.mubr.f32.gmra.mrb[0].mxu0 %v365
    %v628 = vpop.f32.mrb[0].mxu0
    %v629 = vadd.f32 %v352, %v628
    %v630 = vpop.f32.mrb[0].mxu0
    %631 = vmatprep.mubr.f32.mxu0 0.0
    %632 = vmatmul.mubr.f32.gmra.mrb[0].mxu0 %v368
    %v633 = vpop.f32.mrb[0].mxu0
    %v634 = vadd.f32 %v352, %v633
    %v635 = vpop.f32.mrb[0].mxu0
    %636 = vmatprep.mubr.f32.mxu0 0.0
    %637 = vmatmul.mubr.f32.gmra.mrb[0].mxu0 %v371
    %v638 = vpop.f32.mrb[0].mxu0
    %v639 = vadd.f32 %v352, %v638
    %v640 = vpop.f32.mrb[0].mxu0
    %641 = vmatprep.mubr.f32.mxu0 0.0
    %642 = vmatmul.mubr.f32.gmra.mrb[0].mxu0 %v374
    %v643 = vpop.f32.mrb[0].mxu0
    %v644 = vadd.f32 %v352, %v643
    %v645 = vpop.f32.mrb[0].mxu0
    %646 = vmatprep.mubr.f32.mxu0 0.0
    %647 = vmatmul.mubr.f32.gmra.mrb[0].mxu0 %v377
    %v648 = vpop.f32.mrb[0].mxu0
    %v649 = vadd.f32 %v352, %v648
    %v650 = vpop.f32.mrb[0].mxu0
    %651 = vmatprep.mubr.f32.mxu0 0.0
    %652 = vmatmul.mubr.f32.gmra.mrb[0].mxu0 %v380
    %v653 = vpop.f32.mrb[0].mxu0
    %v654 = vadd.f32 %v352, %v653
    %v655 = vpop.f32.mrb[0].mxu0
    %656 = vmatprep.mubr.f32.mxu0 0.0
    %657 = vmatmul.mubr.f32.gmra.mrb[0].mxu0 %v383
    %v658 = vpop.f32.mrb[0].mxu0
    %v659 = vadd.f32 %v352, %v658
    %v660 = vpop.f32.mrb[0].mxu0
    %661 = vmatprep.mubr.f32.mxu0 0.0
    %662 = vmatmul.mubr.f32.gmra.mrb[0].mxu0 %v386
    %v663 = vpop.f32.mrb[0].mxu0
    %v664 = vadd.f32 %v352, %v663
    %v665 = vpop.f32.mrb[0].mxu0
    %666 = vmatprep.mubr.f32.mxu0 0.0
    %667 = vmatmul.mubr.f32.gmra.mrb[0].mxu0 %v389
    %v668 = vpop.f32.mrb[0].mxu0
    %v669 = vadd.f32 %v352, %v668
    %v670 = vpop.f32.mrb[0].mxu0
    %671 = vmatprep.mubr.f32.mxu0 0.0
    %672 = vmatmul.mubr.f32.gmra.mrb[0].mxu0 %v392
    %v673 = vpop.f32.mrb[0].mxu0
    %v674 = vadd.f32 %v352, %v673
    %v675 = vpop.f32.mrb[0].mxu0
    %676 = vmatprep.mubr.f32.mxu0 0.0
    %677 = vmatmul.mubr.f32.gmra.mrb[0].mxu0 %v395
    %v678 = vpop.f32.mrb[0].mxu0
    %v679 = vadd.f32 %v352, %v678
    %v680 = vpop.f32.mrb[0].mxu0
    %681 = vmatprep.mubr.f32.mxu0 0.0
    %682 = vmatmul.mubr.f32.gmra.mrb[0].mxu0 %v398
    %v683 = vpop.f32.mrb[0].mxu0
    %v684 = vadd.f32 %v352, %v683
    %v685 = vpop.f32.mrb[0].mxu0
    %686 = vmatprep.mubr.f32.mxu0 0.0
    %687 = vmatmul.mubr.f32.gmra.mrb[0].mxu0 %v401
    %v688 = vpop.f32.mrb[0].mxu0
    %v689 = vadd.f32 %v352, %v688
    %v690 = vpop.f32.mrb[0].mxu0
    %691 = vmatprep.mubr.f32.mxu0 0.0
    %692 = vmatmul.mubr.f32.gmra.mrb[0].mxu0 %v404
    %v693 = vpop.f32.mrb[0].mxu0
    %v694 = vadd.f32 %v352, %v693
    %v695 = vpop.f32.mrb[0].mxu0
    %696 = vmatprep.mubr.f32.mxu0 0.0
    %697 = vmatmul.mubr.f32.gmra.mrb[0].mxu0 %v407
    %v698 = vpop.f32.mrb[0].mxu0
    %v699 = vadd.f32 %v352, %v698
    %v700 = vpop.f32.mrb[0].mxu0
    %701 = vmatprep.mubr.f32.mxu0 0.0
    %702 = vmatmul.mubr.f32.gmra.mrb[0].mxu0 %v410
    %v703 = vpop.f32.mrb[0].mxu0
    %v704 = vadd.f32 %v352, %v703
    %v705 = vpop.f32.mrb[0].mxu0
    %706 = vmatprep.mubr.f32.mxu0 0.0
    %707 = vmatmul.mubr.f32.gmra.mrb[0].mxu0 %v413
    %v708 = vpop.f32.mrb[0].mxu0
    %v709 = vadd.f32 %v352, %v708
    %v710 = vpop.f32.mrb[0].mxu0
    %711 = vmatprep.mubr.f32.mxu0 0.0
    %712 = vmatmul.mubr.f32.gmra.mrb[0].mxu0 %v416
    %v713 = vpop.f32.mrb[0].mxu0
    %v714 = vadd.f32 %v352, %v713
    %v715 = vpop.f32.mrb[0].mxu0
    %716 = vmatprep.mubr.f32.mxu0 0.0
    %717 = vmatmul.mubr.f32.gmra.mrb[0].mxu0 %v419
    %v718 = vpop.f32.mrb[0].mxu0
    %v719 = vadd.f32 %v352, %v718
    %v720 = vpop.f32.mrb[0].mxu0
    %721 = vmatprep.mubr.f32.mxu0 0.0
    %722 = vmatmul.mubr.f32.gmra.mrb[0].mxu0 %v422
    %v723 = vpop.f32.mrb[0].mxu0
    %v724 = vadd.f32 %v352, %v723
    %v725 = vpop.f32.mrb[0].mxu0
    %726 = vmatprep.mubr.f32.mxu0 0.0
    %727 = vmatmul.mubr.f32.gmra.mrb[0].mxu0 %v425
    %v728 = vpop.f32.mrb[0].mxu0
    %v729 = vadd.f32 %v352, %v728
    %v730 = vpop.f32.mrb[0].mxu0
    %731 = vmatprep.mubr.f32.mxu0 0.0
    %732 = vmatmul.mubr.f32.gmra.mrb[0].mxu0 %v428
    %v733 = vpop.f32.mrb[0].mxu0
    %v734 = vadd.f32 %v352, %v733
    %v735 = vpop.f32.mrb[0].mxu0
    %736 = vmatprep.mubr.f32.mxu0 0.0
    %737 = vmatmul.mubr.f32.gmra.mrb[0].mxu0 %v431
    %v738 = vpop.f32.mrb[0].mxu0
    %v739 = vadd.f32 %v352, %v738
    %v740 = vpop.f32.mrb[0].mxu0
    %741 = vmatprep.mubr.f32.mxu0 0.0
    %742 = vmatmul.mubr.f32.gmra.mrb[0].mxu0 %v434
    %v743 = vpop.f32.mrb[0].mxu0
    %v744 = vadd.f32 %v352, %v743
    %v745 = vpop.f32.mrb[0].mxu0
    %746 = vmatprep.mubr.f32.mxu0 0.0
    %747 = vmatmul.mubr.f32.gmra.mrb[0].mxu0 %v437
    %v748 = vpop.f32.mrb[0].mxu0
    %v749 = vadd.f32 %v352, %v748
    %v750 = vpop.f32.mrb[0].mxu0
    %751 = vmatprep.mubr.f32.mxu0 0.0
    %752 = vmatmul.mubr.f32.gmra.mrb[0].mxu0 %v440
    %v753 = vpop.f32.mrb[0].mxu0
    %v754 = vadd.f32 %v352, %v753
    %v755 = vpop.f32.mrb[0].mxu0
    %756 = vmatprep.mubr.f32.mxu0 0.0
    %757 = vmatmul.mubr.f32.gmra.mrb[0].mxu0 %v443
    %v758 = vpop.f32.mrb[0].mxu0
    %v759 = vadd.f32 %v352, %v758
    %v760 = vpop.f32.mrb[0].mxu0
    %761 = vmatprep.mubr.f32.mxu0 0.0
    %762 = vmatmul.mubr.f32.gmra.mrb[0].mxu0 %v446
    %v763 = vpop.f32.mrb[0].mxu0
    %v764 = vadd.f32 %v352, %v763
    %v765 = vpop.f32.mrb[0].mxu0
    %766 = vmatprep.mubr.f32.mxu0 0.0
    %767 = vmatmul.mubr.f32.gmra.mrb[0].mxu0 %v449
    %v768 = vpop.f32.mrb[0].mxu0
    %v769 = vadd.f32 %v352, %v768
    %v770 = vpop.f32.mrb[0].mxu0
    %771 = vmatprep.mubr.f32.mxu0 0.0
    %772 = vmatmul.mubr.f32.gmra.mrb[0].mxu0 %v452
    %v773 = vpop.f32.mrb[0].mxu0
    %v774 = vadd.f32 %v352, %v773
    %v775 = vpop.f32.mrb[0].mxu0
    %776 = vmatprep.mubr.f32.mxu0 0.0
    %777 = vmatmul.mubr.f32.gmra.mrb[0].mxu0 %v455
    %v778 = vpop.f32.mrb[0].mxu0
    %v779 = vadd.f32 %v352, %v778
    %v780 = vpop.f32.mrb[0].mxu0
    %781 = vmatprep.mubr.f32.mxu0 0.0
    %782 = vmatmul.mubr.f32.gmra.mrb[0].mxu0 %v458
    %v783 = vpop.f32.mrb[0].mxu0
    %v784 = vadd.f32 %v352, %v783
    %v785 = vpop.f32.mrb[0].mxu0
    %786 = vmatprep.mubr.f32.mxu0 0.0
    %787 = vmatmul.mubr.f32.gmra.mrb[0].mxu0 %v461
    %v788 = vpop.f32.mrb[0].mxu0
    %v789 = vadd.f32 %v352, %v788
    %v790 = vpop.f32.mrb[0].mxu0
    %791 = vmatprep.mubr.f32.mxu0 0.0
    %792 = vmatmul.mubr.f32.gmra.mrb[0].mxu0 %v464
    %v793 = vpop.f32.mrb[0].mxu0
    %v794 = vadd.f32 %v352, %v793
    %v795 = vpop.f32.mrb[0].mxu0
    %796 = vmatprep.mubr.f32.mxu0 0.0
    %797 = vmatmul.mubr.f32.gmra.mrb[0].mxu0 %v467
    %v798 = vpop.f32.mrb[0].mxu0
    %v799 = vadd.f32 %v352, %v798
    %v800 = vpop.f32.mrb[0].mxu0
    %801 = vmatprep.mubr.f32.mxu0 0.0
    %802 = vmatmul.mubr.f32.gmra.mrb[0].mxu0 %v470
    %v803 = vpop.f32.mrb[0].mxu0
    %v804 = vadd.f32 %v352, %v803
    %v805 = vpop.f32.mrb[0].mxu0
    %806 = vmatprep.mubr.f32.mxu0 0.0
    %807 = vmatmul.mubr.f32.gmra.mrb[0].mxu0 %v473
    %v808 = vpop.f32.mrb[0].mxu0
    %v809 = vadd.f32 %v352, %v808
    %v810 = vpop.f32.mrb[0].mxu0
    %811 = vmatprep.mubr.f32.mxu0 0.0
    %812 = vmatmul.mubr.f32.gmra.mrb[0].mxu0 %v476
    %v813 = vpop.f32.mrb[0].mxu0
    %v814 = vadd.f32 %v352, %v813
    %v815 = vpop.f32.mrb[0].mxu0
    %816 = vmatprep.mubr.f32.mxu0 0.0
    %817 = vmatmul.mubr.f32.gmra.mrb[0].mxu0 %v479
    %v818 = vpop.f32.mrb[0].mxu0
    %v819 = vadd.f32 %v352, %v818
    %v820 = vpop.f32.mrb[0].mxu0
    %821 = vmatprep.mubr.f32.mxu0 0.0
    %822 = vmatmul.mubr.f32.gmra.mrb[0].mxu0 %v482
    %v823 = vpop.f32.mrb[0].mxu0
    %v824 = vadd.f32 %v352, %v823
    %v825 = vpop.f32.mrb[0].mxu0
    %826 = vmatprep.mubr.f32.mxu0 0.0
    %827 = vmatmul.mubr.f32.gmra.mrb[0].mxu0 %v485
    %v828 = vpop.f32.mrb[0].mxu0
    %v829 = vadd.f32 %v352, %v828
    %v830 = vpop.f32.mrb[0].mxu0
    %831 = vmatprep.mubr.f32.mxu0 0.0
    %832 = vmatmul.mubr.f32.gmra.mrb[0].mxu0 %v488
    %v833 = vpop.f32.mrb[0].mxu0
    %v834 = vadd.f32 %v352, %v833
    %v835 = vpop.f32.mrb[0].mxu0
    %836 = vmatprep.mubr.f32.mxu0 0.0
    %837 = vmatmul.mubr.f32.gmra.mrb[0].mxu0 %v491
    %v838 = vpop.f32.mrb[0].mxu0
    %v839 = vadd.f32 %v352, %v838
    %v840 = vpop.f32.mrb[0].mxu0
    %841 = vmatprep.mubr.f32.mxu0 0.0
    %842 = vmatmul.mubr.f32.gmra.mrb[0].mxu0 %v494
    %v843 = vpop.f32.mrb[0].mxu0
    %v844 = vadd.f32 %v352, %v843
    %v845 = vpop.f32.mrb[0].mxu0
    %846 = vmatprep.mubr.f32.mxu0 0.0
    %847 = vmatmul.mubr.f32.gmra.mrb[0].mxu0 %v497
    %v848 = vpop.f32.mrb[0].mxu0
    %v849 = vadd.f32 %v352, %v848
    %v850 = vpop.f32.mrb[0].mxu0
    %851 = vmatprep.mubr.f32.mxu0 0.0
    %852 = vmatmul.mubr.f32.gmra.mrb[0].mxu0 %v500
    %v853 = vpop.f32.mrb[0].mxu0
    %v854 = vadd.f32 %v352, %v853
    %v855 = vpop.f32.mrb[0].mxu0
    %856 = vmatprep.mubr.f32.mxu0 0.0
    %857 = vmatmul.mubr.f32.gmra.mrb[0].mxu0 %v503
    %v858 = vpop.f32.mrb[0].mxu0
    %v859 = vadd.f32 %v352, %v858
    %v860 = vpop.f32.mrb[0].mxu0
    %861 = vmatprep.mubr.f32.mxu0 0.0
    %862 = vmatmul.mubr.f32.gmra.mrb[0].mxu0 %v506
    %v863 = vpop.f32.mrb[0].mxu0
    %v864 = vadd.f32 %v352, %v863
    %v865 = vpop.f32.mrb[0].mxu0
    %866 = vmatprep.mubr.f32.mxu0 0.0
    %867 = vmatmul.mubr.f32.gmra.mrb[0].mxu0 %v509
    %v868 = vpop.f32.mrb[0].mxu0
    %v869 = vadd.f32 %v352, %v868
    %v870 = vpop.f32.mrb[0].mxu0
    %871 = vmatprep.mubr.f32.mxu0 0.0
    %872 = vmatmul.mubr.f32.gmra.mrb[0].mxu0 %v512
    %v873 = vpop.f32.mrb[0].mxu0
    %v874 = vadd.f32 %v352, %v873
    %v875 = vpop.f32.mrb[0].mxu0
    %876 = vmatprep.mubr.f32.mxu0 0.0
    %877 = vmatmul.mubr.f32.gmra.mrb[0].mxu0 %v515
    %v878 = vpop.f32.mrb[0].mxu0
    %v879 = vadd.f32 %v352, %v878
    %v880 = vpop.f32.mrb[0].mxu0
    %881 = vmatprep.mubr.f32.mxu0 0.0
    %882 = vmatmul.mubr.f32.gmra.mrb[0].mxu0 %v518
    %v883 = vpop.f32.mrb[0].mxu0
    %v884 = vadd.f32 %v352, %v883
    %v885 = vpop.f32.mrb[0].mxu0
    %886 = vmatprep.mubr.f32.mxu0 0.0
    %887 = vmatmul.mubr.f32.gmra.mrb[0].mxu0 %v521
    %v888 = vpop.f32.mrb[0].mxu0
    %v889 = vadd.f32 %v352, %v888
    %v890 = vpop.f32.mrb[0].mxu0
    %891 = vmatprep.mubr.f32.mxu0 0.0
    %892 = vmatmul.mubr.f32.gmra.mrb[0].mxu0 %v524
    %v893 = vpop.f32.mrb[0].mxu0
    %v894 = vadd.f32 %v352, %v893
    %v895 = vpop.f32.mrb[0].mxu0
    %896 = vmatprep.mubr.f32.mxu0 0.0
    %897 = vmatmul.mubr.f32.gmra.mrb[0].mxu0 %v527
    %v898 = vpop.f32.mrb[0].mxu0
    %v899 = vadd.f32 %v352, %v898
    %v900 = vpop.f32.mrb[0].mxu0
    %901 = vmatprep.mubr.f32.mxu0 0.0
    %902 = vmatmul.mubr.f32.gmra.mrb[0].mxu0 %v530
    %v903 = vpop.f32.mrb[0].mxu0
    %v904 = vadd.f32 %v352, %v903
    %v905 = vpop.f32.mrb[0].mxu0
    %906 = vmatprep.mubr.f32.mxu0 0.0
    %907 = vmatmul.mubr.f32.gmra.mrb[0].mxu0 %v533
    %v908 = vpop.f32.mrb[0].mxu0
    %v909 = vadd.f32 %v352, %v908
    %v910 = vpop.f32.mrb[0].mxu0
    %911 = vmatprep.mubr.f32.mxu0 0.0
    %912 = vmatmul.mubr.f32.gmra.mrb[0].mxu0 %v536
    %v913 = vpop.f32.mrb[0].mxu0
    %v914 = vadd.f32 %v352, %v913
    %v915 = vpop.f32.mrb[0].mxu0
    %916 = vmatprep.mubr.f32.mxu0 0.0
    %917 = vmatmul.mubr.f32.gmra.mrb[0].mxu0 %v539
    %v918 = vpop.f32.mrb[0].mxu0
    %v919 = vadd.f32 %v352, %v918
    %v920 = vpop.f32.mrb[0].mxu0
    %921 = vmatprep.mubr.f32.mxu0 0.0
    %922 = vmatmul.mubr.f32.gmra.mrb[0].mxu0 %v542
    %v923 = vpop.f32.mrb[0].mxu0
    %v924 = vadd.f32 %v352, %v923
    %v925 = vpop.f32.mrb[0].mxu0
    %926 = vmatprep.mubr.f32.mxu0 0.0
    %927 = vmatmul.mubr.f32.gmra.mrb[0].mxu0 %v545
    %v928 = vpop.f32.mrb[0].mxu0
    %v929 = vadd.f32 %v352, %v928
    %v930 = vpop.f32.mrb[0].mxu0
    %931 = vdwg.mxu0
    %v932 = vld [vmem:[%s4] sm:$0x1]
    %v933 = vld [vmem:[%s5] sm:$0x1]
    %935 = vset.pattern.permute.xlu0 0
    %936 = vperm.xlu0 %935, %v138
    %v937 = vpop.permute.xlu0 %936
    %940 = vset.pattern.permute.xlu0 0
    %941 = vperm.xlu0 %940, %v139
    %v942 = vpop.permute.xlu0 %941
    %945 = vset.pattern.permute.xlu0 0
    %946 = vperm.xlu0 %945, %v140
    %v947 = vpop.permute.xlu0 %946
    %950 = vset.pattern.permute.xlu0 0
    %951 = vperm.xlu0 %950, %v141
    %v952 = vpop.permute.xlu0 %951
    %955 = vset.pattern.permute.xlu0 0
    %956 = vperm.xlu0 %955, %v142
    %v957 = vpop.permute.xlu0 %956
    %960 = vset.pattern.permute.xlu0 0
    %961 = vperm.xlu0 %960, %v143
    %v962 = vpop.permute.xlu0 %961
    %965 = vset.pattern.permute.xlu0 0
    %966 = vperm.xlu0 %965, %v144
    %v967 = vpop.permute.xlu0 %966
    %970 = vset.pattern.permute.xlu0 0
    %971 = vperm.xlu0 %970, %v145
    %v972 = vpop.permute.xlu0 %971
    %975 = vset.pattern.permute.xlu0 0
    %976 = vperm.xlu0 %975, %v146
    %v977 = vpop.permute.xlu0 %976
    %980 = vset.pattern.permute.xlu0 0
    %981 = vperm.xlu0 %980, %v147
    %v982 = vpop.permute.xlu0 %981
    %985 = vset.pattern.permute.xlu0 0
    %986 = vperm.xlu0 %985, %v148
    %v987 = vpop.permute.xlu0 %986
    %990 = vset.pattern.permute.xlu0 0
    %991 = vperm.xlu0 %990, %v149
    %v992 = vpop.permute.xlu0 %991
    %995 = vset.pattern.permute.xlu0 0
    %996 = vperm.xlu0 %995, %v150
    %v997 = vpop.permute.xlu0 %996
    %1000 = vset.pattern.permute.xlu0 0
    %1001 = vperm.xlu0 %1000, %v151
    %v1002 = vpop.permute.xlu0 %1001
    %1005 = vset.pattern.permute.xlu0 0
    %1006 = vperm.xlu0 %1005, %v152
    %v1007 = vpop.permute.xlu0 %1006
    %1010 = vset.pattern.permute.xlu0 0
    %1011 = vperm.xlu0 %1010, %v153
    %v1012 = vpop.permute.xlu0 %1011
    %1015 = vset.pattern.permute.xlu0 0
    %1016 = vperm.xlu0 %1015, %v154
    %v1017 = vpop.permute.xlu0 %1016
    %1020 = vset.pattern.permute.xlu0 0
    %1021 = vperm.xlu0 %1020, %v155
    %v1022 = vpop.permute.xlu0 %1021
    %1025 = vset.pattern.permute.xlu0 0
    %1026 = vperm.xlu0 %1025, %v156
    %v1027 = vpop.permute.xlu0 %1026
    %1030 = vset.pattern.permute.xlu0 0
    %1031 = vperm.xlu0 %1030, %v157
    %v1032 = vpop.permute.xlu0 %1031
    %1035 = vset.pattern.permute.xlu0 0
    %1036 = vperm.xlu0 %1035, %v158
    %v1037 = vpop.permute.xlu0 %1036
    %1040 = vset.pattern.permute.xlu0 0
    %1041 = vperm.xlu0 %1040, %v159
    %v1042 = vpop.permute.xlu0 %1041
    %1045 = vset.pattern.permute.xlu0 0
    %1046 = vperm.xlu0 %1045, %v160
    %v1047 = vpop.permute.xlu0 %1046
    %1050 = vset.pattern.permute.xlu0 0
    %1051 = vperm.xlu0 %1050, %v161
    %v1052 = vpop.permute.xlu0 %1051
    %1055 = vset.pattern.permute.xlu0 0
    %1056 = vperm.xlu0 %1055, %v162
    %v1057 = vpop.permute.xlu0 %1056
    %1060 = vset.pattern.permute.xlu0 0
    %1061 = vperm.xlu0 %1060, %v163
    %v1062 = vpop.permute.xlu0 %1061
    %1065 = vset.pattern.permute.xlu0 0
    %1066 = vperm.xlu0 %1065, %v164
    %v1067 = vpop.permute.xlu0 %1066
    %1070 = vset.pattern.permute.xlu0 0
    %1071 = vperm.xlu0 %1070, %v165
    %v1072 = vpop.permute.xlu0 %1071
    %1075 = vset.pattern.permute.xlu0 0
    %1076 = vperm.xlu0 %1075, %v166
    %v1077 = vpop.permute.xlu0 %1076
    %1080 = vset.pattern.permute.xlu0 0
    %1081 = vperm.xlu0 %1080, %v167
    %v1082 = vpop.permute.xlu0 %1081
    %1085 = vset.pattern.permute.xlu0 0
    %1086 = vperm.xlu0 %1085, %v168
    %v1087 = vpop.permute.xlu0 %1086
    %1090 = vset.pattern.permute.xlu0 0
    %1091 = vperm.xlu0 %1090, %v169
    %v1092 = vpop.permute.xlu0 %1091
    %1095 = vset.pattern.permute.xlu0 0
    %1096 = vperm.xlu0 %1095, %v170
    %v1097 = vpop.permute.xlu0 %1096
    %1100 = vset.pattern.permute.xlu0 0
    %1101 = vperm.xlu0 %1100, %v171
    %v1102 = vpop.permute.xlu0 %1101
    %1105 = vset.pattern.permute.xlu0 0
    %1106 = vperm.xlu0 %1105, %v172
    %v1107 = vpop.permute.xlu0 %1106
    %1110 = vset.pattern.permute.xlu0 0
    %1111 = vperm.xlu0 %1110, %v173
    %v1112 = vpop.permute.xlu0 %1111
    %1115 = vset.pattern.permute.xlu0 0
    %1116 = vperm.xlu0 %1115, %v174
    %v1117 = vpop.permute.xlu0 %1116
    %1120 = vset.pattern.permute.xlu0 0
    %1121 = vperm.xlu0 %1120, %v175
    %v1122 = vpop.permute.xlu0 %1121
    %1125 = vset.pattern.permute.xlu0 0
    %1126 = vperm.xlu0 %1125, %v176
    %v1127 = vpop.permute.xlu0 %1126
    %1130 = vset.pattern.permute.xlu0 0
    %1131 = vperm.xlu0 %1130, %v177
    %v1132 = vpop.permute.xlu0 %1131
    %1135 = vset.pattern.permute.xlu0 0
    %1136 = vperm.xlu0 %1135, %v178
    %v1137 = vpop.permute.xlu0 %1136
    %1140 = vset.pattern.permute.xlu0 0
    %1141 = vperm.xlu0 %1140, %v179
    %v1142 = vpop.permute.xlu0 %1141
    %1145 = vset.pattern.permute.xlu0 0
    %1146 = vperm.xlu0 %1145, %v180
    %v1147 = vpop.permute.xlu0 %1146
    %1150 = vset.pattern.permute.xlu0 0
    %1151 = vperm.xlu0 %1150, %v181
    %v1152 = vpop.permute.xlu0 %1151
    %1155 = vset.pattern.permute.xlu0 0
    %1156 = vperm.xlu0 %1155, %v182
    %v1157 = vpop.permute.xlu0 %1156
    %1160 = vset.pattern.permute.xlu0 0
    %1161 = vperm.xlu0 %1160, %v183
    %v1162 = vpop.permute.xlu0 %1161
    %1165 = vset.pattern.permute.xlu0 0
    %1166 = vperm.xlu0 %1165, %v184
    %v1167 = vpop.permute.xlu0 %1166
    %1170 = vset.pattern.permute.xlu0 0
    %1171 = vperm.xlu0 %1170, %v185
    %v1172 = vpop.permute.xlu0 %1171
    %1175 = vset.pattern.permute.xlu0 0
    %1176 = vperm.xlu0 %1175, %v186
    %v1177 = vpop.permute.xlu0 %1176
    %1180 = vset.pattern.permute.xlu0 0
    %1181 = vperm.xlu0 %1180, %v187
    %v1182 = vpop.permute.xlu0 %1181
    %1185 = vset.pattern.permute.xlu0 0
    %1186 = vperm.xlu0 %1185, %v188
    %v1187 = vpop.permute.xlu0 %1186
    %1190 = vset.pattern.permute.xlu0 0
    %1191 = vperm.xlu0 %1190, %v189
    %v1192 = vpop.permute.xlu0 %1191
    %1195 = vset.pattern.permute.xlu0 0
    %1196 = vperm.xlu0 %1195, %v190
    %v1197 = vpop.permute.xlu0 %1196
    %1200 = vset.pattern.permute.xlu0 0
    %1201 = vperm.xlu0 %1200, %v191
    %v1202 = vpop.permute.xlu0 %1201
    %1205 = vset.pattern.permute.xlu0 0
    %1206 = vperm.xlu0 %1205, %v192
    %v1207 = vpop.permute.xlu0 %1206
    %1210 = vset.pattern.permute.xlu0 0
    %1211 = vperm.xlu0 %1210, %v193
    %v1212 = vpop.permute.xlu0 %1211
    %1215 = vset.pattern.permute.xlu0 0
    %1216 = vperm.xlu0 %1215, %v194
    %v1217 = vpop.permute.xlu0 %1216
    %1220 = vset.pattern.permute.xlu0 0
    %1221 = vperm.xlu0 %1220, %v195
    %v1222 = vpop.permute.xlu0 %1221
    %1225 = vset.pattern.permute.xlu0 0
    %1226 = vperm.xlu0 %1225, %v196
    %v1227 = vpop.permute.xlu0 %1226
    %1230 = vset.pattern.permute.xlu0 0
    %1231 = vperm.xlu0 %1230, %v197
    %v1232 = vpop.permute.xlu0 %1231
    %1235 = vset.pattern.permute.xlu0 0
    %1236 = vperm.xlu0 %1235, %v198
    %v1237 = vpop.permute.xlu0 %1236
    %1240 = vset.pattern.permute.xlu0 0
    %1241 = vperm.xlu0 %1240, %v199
    %v1242 = vpop.permute.xlu0 %1241
    %1245 = vset.pattern.permute.xlu0 0
    %1246 = vperm.xlu0 %1245, %v200
    %v1247 = vpop.permute.xlu0 %1246
    %1250 = vset.pattern.permute.xlu0 0
    %1251 = vperm.xlu0 %1250, %v201
    %v1252 = vpop.permute.xlu0 %1251
    %v1254 = vmul.f32 %v614, %v937
    %v1255 = vmul.f32 %v619, %v942
    %v1256 = vmul.f32 %v624, %v947
    %v1257 = vmul.f32 %v629, %v952
    %v1258 = vmul.f32 %v634, %v957
    %v1259 = vmul.f32 %v639, %v962
    %v1260 = vmul.f32 %v644, %v967
    %v1261 = vmul.f32 %v649, %v972
    %v1262 = vmul.f32 %v654, %v977
    %v1263 = vmul.f32 %v659, %v982
    %v1264 = vmul.f32 %v664, %v987
    %v1265 = vmul.f32 %v669, %v992
    %v1266 = vmul.f32 %v674, %v997
    %v1267 = vmul.f32 %v679, %v1002
    %v1268 = vmul.f32 %v684, %v1007
    %v1269 = vmul.f32 %v689, %v1012
    %v1270 = vmul.f32 %v694, %v1017
    %v1271 = vmul.f32 %v699, %v1022
    %v1272 = vmul.f32 %v704, %v1027
    %v1273 = vmul.f32 %v709, %v1032
    %v1274 = vmul.f32 %v714, %v1037
    %v1275 = vmul.f32 %v719, %v1042
    %v1276 = vmul.f32 %v724, %v1047
    %v1277 = vmul.f32 %v729, %v1052
    %v1278 = vmul.f32 %v734, %v1057
    %v1279 = vmul.f32 %v739, %v1062
    %v1280 = vmul.f32 %v744, %v1067
    %v1281 = vmul.f32 %v749, %v1072
    %v1282 = vmul.f32 %v754, %v1077
    %v1283 = vmul.f32 %v759, %v1082
    %v1284 = vmul.f32 %v764, %v1087
    %v1285 = vmul.f32 %v769, %v1092
    %v1286 = vmul.f32 %v774, %v1097
    %v1287 = vmul.f32 %v779, %v1102
    %v1288 = vmul.f32 %v784, %v1107
    %v1289 = vmul.f32 %v789, %v1112
    %v1290 = vmul.f32 %v794, %v1117
    %v1291 = vmul.f32 %v799, %v1122
    %v1292 = vmul.f32 %v804, %v1127
    %v1293 = vmul.f32 %v809, %v1132
    %v1294 = vmul.f32 %v814, %v1137
    %v1295 = vmul.f32 %v819, %v1142
    %v1296 = vmul.f32 %v824, %v1147
    %v1297 = vmul.f32 %v829, %v1152
    %v1298 = vmul.f32 %v834, %v1157
    %v1299 = vmul.f32 %v839, %v1162
    %v1300 = vmul.f32 %v844, %v1167
    %v1301 = vmul.f32 %v849, %v1172
    %v1302 = vmul.f32 %v854, %v1177
    %v1303 = vmul.f32 %v859, %v1182
    %v1304 = vmul.f32 %v864, %v1187
    %v1305 = vmul.f32 %v869, %v1192
    %v1306 = vmul.f32 %v874, %v1197
    %v1307 = vmul.f32 %v879, %v1202
    %v1308 = vmul.f32 %v884, %v1207
    %v1309 = vmul.f32 %v889, %v1212
    %v1310 = vmul.f32 %v894, %v1217
    %v1311 = vmul.f32 %v899, %v1222
    %v1312 = vmul.f32 %v904, %v1227
    %v1313 = vmul.f32 %v909, %v1232
    %v1314 = vmul.f32 %v914, %v1237
    %v1315 = vmul.f32 %v919, %v1242
    %v1316 = vmul.f32 %v924, %v1247
    %v1317 = vmul.f32 %v929, %v1252
    %v1318 = vsel %vm354, %v1254, 0.0
    %v1319 = vsel %vm354, %v1255, 0.0
    %v1320 = vadd.f32 %v1318, %v1319
    %v1321 = vsel %vm354, %v1256, 0.0
    %v1322 = vadd.f32 %v1320, %v1321
    %v1323 = vsel %vm354, %v1257, 0.0
    %v1324 = vadd.f32 %v1322, %v1323
    %v1325 = vsel %vm354, %v1258, 0.0
    %v1326 = vadd.f32 %v1324, %v1325
    %v1327 = vsel %vm354, %v1259, 0.0
    %v1328 = vadd.f32 %v1326, %v1327
    %v1329 = vsel %vm354, %v1260, 0.0
    %v1330 = vadd.f32 %v1328, %v1329
    %v1331 = vsel %vm354, %v1261, 0.0
    %v1332 = vadd.f32 %v1330, %v1331
    %v1333 = vsel %vm354, %v1262, 0.0
    %v1334 = vadd.f32 %v1332, %v1333
    %v1335 = vsel %vm354, %v1263, 0.0
    %v1336 = vadd.f32 %v1334, %v1335
    %v1337 = vsel %vm354, %v1264, 0.0
    %v1338 = vadd.f32 %v1336, %v1337
    %v1339 = vsel %vm354, %v1265, 0.0
    %v1340 = vadd.f32 %v1338, %v1339
    %v1341 = vsel %vm354, %v1266, 0.0
    %v1342 = vadd.f32 %v1340, %v1341
    %v1343 = vsel %vm354, %v1267, 0.0
    %v1344 = vadd.f32 %v1342, %v1343
    %v1345 = vsel %vm354, %v1268, 0.0
    %v1346 = vadd.f32 %v1344, %v1345
    %v1347 = vsel %vm354, %v1269, 0.0
    %v1348 = vadd.f32 %v1346, %v1347
    %v1349 = vsel %vm354, %v1270, 0.0
    %v1350 = vadd.f32 %v1348, %v1349
    %v1351 = vsel %vm354, %v1271, 0.0
    %v1352 = vadd.f32 %v1350, %v1351
    %v1353 = vsel %vm354, %v1272, 0.0
    %v1354 = vadd.f32 %v1352, %v1353
    %v1355 = vsel %vm354, %v1273, 0.0
    %v1356 = vadd.f32 %v1354, %v1355
    %v1357 = vsel %vm354, %v1274, 0.0
    %v1358 = vadd.f32 %v1356, %v1357
    %v1359 = vsel %vm354, %v1275, 0.0
    %v1360 = vadd.f32 %v1358, %v1359
    %v1361 = vsel %vm354, %v1276, 0.0
    %v1362 = vadd.f32 %v1360, %v1361
    %v1363 = vsel %vm354, %v1277, 0.0
    %v1364 = vadd.f32 %v1362, %v1363
    %v1365 = vsel %vm354, %v1278, 0.0
    %v1366 = vadd.f32 %v1364, %v1365
    %v1367 = vsel %vm354, %v1279, 0.0
    %v1368 = vadd.f32 %v1366, %v1367
    %v1369 = vsel %vm354, %v1280, 0.0
    %v1370 = vadd.f32 %v1368, %v1369
    %v1371 = vsel %vm354, %v1281, 0.0
    %v1372 = vadd.f32 %v1370, %v1371
    %v1373 = vsel %vm354, %v1282, 0.0
    %v1374 = vadd.f32 %v1372, %v1373
    %v1375 = vsel %vm354, %v1283, 0.0
    %v1376 = vadd.f32 %v1374, %v1375
    %v1377 = vsel %vm354, %v1284, 0.0
    %v1378 = vadd.f32 %v1376, %v1377
    %v1379 = vsel %vm354, %v1285, 0.0
    %v1380 = vadd.f32 %v1378, %v1379
    %v1381 = vsel %vm354, %v1286, 0.0
    %v1382 = vadd.f32 %v1380, %v1381
    %v1383 = vsel %vm354, %v1287, 0.0
    %v1384 = vadd.f32 %v1382, %v1383
    %v1385 = vsel %vm354, %v1288, 0.0
    %v1386 = vadd.f32 %v1384, %v1385
    %v1387 = vsel %vm354, %v1289, 0.0
    %v1388 = vadd.f32 %v1386, %v1387
    %v1389 = vsel %vm354, %v1290, 0.0
    %v1390 = vadd.f32 %v1388, %v1389
    %v1391 = vsel %vm354, %v1291, 0.0
    %v1392 = vadd.f32 %v1390, %v1391
    %v1393 = vsel %vm354, %v1292, 0.0
    %v1394 = vadd.f32 %v1392, %v1393
    %v1395 = vsel %vm354, %v1293, 0.0
    %v1396 = vadd.f32 %v1394, %v1395
    %v1397 = vsel %vm354, %v1294, 0.0
    %v1398 = vadd.f32 %v1396, %v1397
    %v1399 = vsel %vm354, %v1295, 0.0
    %v1400 = vadd.f32 %v1398, %v1399
    %v1401 = vsel %vm354, %v1296, 0.0
    %v1402 = vadd.f32 %v1400, %v1401
    %v1403 = vsel %vm354, %v1297, 0.0
    %v1404 = vadd.f32 %v1402, %v1403
    %v1405 = vsel %vm354, %v1298, 0.0
    %v1406 = vadd.f32 %v1404, %v1405
    %v1407 = vsel %vm354, %v1299, 0.0
    %v1408 = vadd.f32 %v1406, %v1407
    %v1409 = vsel %vm354, %v1300, 0.0
    %v1410 = vadd.f32 %v1408, %v1409
    %v1411 = vsel %vm354, %v1301, 0.0
    %v1412 = vadd.f32 %v1410, %v1411
    %v1413 = vsel %vm354, %v1302, 0.0
    %v1414 = vadd.f32 %v1412, %v1413
    %v1415 = vsel %vm354, %v1303, 0.0
    %v1416 = vadd.f32 %v1414, %v1415
    %v1417 = vsel %vm354, %v1304, 0.0
    %v1418 = vadd.f32 %v1416, %v1417
    %v1419 = vsel %vm354, %v1305, 0.0
    %v1420 = vadd.f32 %v1418, %v1419
    %v1421 = vsel %vm354, %v1306, 0.0
    %v1422 = vadd.f32 %v1420, %v1421
    %v1423 = vsel %vm354, %v1307, 0.0
    %v1424 = vadd.f32 %v1422, %v1423
    %v1425 = vsel %vm354, %v1308, 0.0
    %v1426 = vadd.f32 %v1424, %v1425
    %v1427 = vsel %vm354, %v1309, 0.0
    %v1428 = vadd.f32 %v1426, %v1427
    %v1429 = vsel %vm354, %v1310, 0.0
    %v1430 = vadd.f32 %v1428, %v1429
    %v1431 = vsel %vm354, %v1311, 0.0
    %v1432 = vadd.f32 %v1430, %v1431
    %v1433 = vsel %vm354, %v1312, 0.0
    %v1434 = vadd.f32 %v1432, %v1433
    %v1435 = vsel %vm354, %v1313, 0.0
    %v1436 = vadd.f32 %v1434, %v1435
    %v1437 = vsel %vm354, %v1314, 0.0
    %v1438 = vadd.f32 %v1436, %v1437
    %v1439 = vsel %vm354, %v1315, 0.0
    %v1440 = vadd.f32 %v1438, %v1439
    %v1441 = vsel %vm354, %v1316, 0.0
    %v1442 = vadd.f32 %v1440, %v1441
    %v1443 = vsel %vm354, %v1317, 0.0
    %v1444 = vadd.f32 %v1442, %v1443
    %v1445 = vrot.slane %v1444, 4
    %v1446 = vadd.f32 %v1444, %v1445
    %v1447 = vrot.slane %v1446, 2
    %v1448 = vadd.f32 %v1446, %v1447
    %v1449 = vrot.slane %v1448, 1
    %v1450 = vadd.f32 %v1448, %v1449
    %v1451 = vstv %s342
    %v1452 = vmul.f32 %v1450, %v1451
    %v1453 = vsub.f32 %v614, %v1452
    %v1454 = vsub.f32 %v619, %v1452
    %v1455 = vsub.f32 %v624, %v1452
    %v1456 = vsub.f32 %v629, %v1452
    %v1457 = vsub.f32 %v634, %v1452
    %v1458 = vsub.f32 %v639, %v1452
    %v1459 = vsub.f32 %v644, %v1452
    %v1460 = vsub.f32 %v649, %v1452
    %v1461 = vsub.f32 %v654, %v1452
    %v1462 = vsub.f32 %v659, %v1452
    %v1463 = vsub.f32 %v664, %v1452
    %v1464 = vsub.f32 %v669, %v1452
    %v1465 = vsub.f32 %v674, %v1452
    %v1466 = vsub.f32 %v679, %v1452
    %v1467 = vsub.f32 %v684, %v1452
    %v1468 = vsub.f32 %v689, %v1452
    %v1469 = vsub.f32 %v694, %v1452
    %v1470 = vsub.f32 %v699, %v1452
    %v1471 = vsub.f32 %v704, %v1452
    %v1472 = vsub.f32 %v709, %v1452
    %v1473 = vsub.f32 %v714, %v1452
    %v1474 = vsub.f32 %v719, %v1452
    %v1475 = vsub.f32 %v724, %v1452
    %v1476 = vsub.f32 %v729, %v1452
    %v1477 = vsub.f32 %v734, %v1452
    %v1478 = vsub.f32 %v739, %v1452
    %v1479 = vsub.f32 %v744, %v1452
    %v1480 = vsub.f32 %v749, %v1452
    %v1481 = vsub.f32 %v754, %v1452
    %v1482 = vsub.f32 %v759, %v1452
    %v1483 = vsub.f32 %v764, %v1452
    %v1484 = vsub.f32 %v769, %v1452
    %v1485 = vsub.f32 %v774, %v1452
    %v1486 = vsub.f32 %v779, %v1452
    %v1487 = vsub.f32 %v784, %v1452
    %v1488 = vsub.f32 %v789, %v1452
    %v1489 = vsub.f32 %v794, %v1452
    %v1490 = vsub.f32 %v799, %v1452
    %v1491 = vsub.f32 %v804, %v1452
    %v1492 = vsub.f32 %v809, %v1452
    %v1493 = vsub.f32 %v814, %v1452
    %v1494 = vsub.f32 %v819, %v1452
    %v1495 = vsub.f32 %v824, %v1452
    %v1496 = vsub.f32 %v829, %v1452
    %v1497 = vsub.f32 %v834, %v1452
    %v1498 = vsub.f32 %v839, %v1452
    %v1499 = vsub.f32 %v844, %v1452
    %v1500 = vsub.f32 %v849, %v1452
    %v1501 = vsub.f32 %v854, %v1452
    %v1502 = vsub.f32 %v859, %v1452
    %v1503 = vsub.f32 %v864, %v1452
    %v1504 = vsub.f32 %v869, %v1452
    %v1505 = vsub.f32 %v874, %v1452
    %v1506 = vsub.f32 %v879, %v1452
    %v1507 = vsub.f32 %v884, %v1452
    %v1508 = vsub.f32 %v889, %v1452
    %v1509 = vsub.f32 %v894, %v1452
    %v1510 = vsub.f32 %v899, %v1452
    %v1511 = vsub.f32 %v904, %v1452
    %v1512 = vsub.f32 %v909, %v1452
    %v1513 = vsub.f32 %v914, %v1452
    %v1514 = vsub.f32 %v919, %v1452
    %v1515 = vsub.f32 %v924, %v1452
    %v1516 = vsub.f32 %v929, %v1452
    %v1517 = vmul.f32 %v1453, %v1453
    %v1518 = vmul.f32 %v1454, %v1454
    %v1519 = vmul.f32 %v1455, %v1455
    %v1520 = vmul.f32 %v1456, %v1456
    %v1521 = vmul.f32 %v1457, %v1457
    %v1522 = vmul.f32 %v1458, %v1458
    %v1523 = vmul.f32 %v1459, %v1459
    %v1524 = vmul.f32 %v1460, %v1460
    %v1525 = vmul.f32 %v1461, %v1461
    %v1526 = vmul.f32 %v1462, %v1462
    %v1527 = vmul.f32 %v1463, %v1463
    %v1528 = vmul.f32 %v1464, %v1464
    %v1529 = vmul.f32 %v1465, %v1465
    %v1530 = vmul.f32 %v1466, %v1466
    %v1531 = vmul.f32 %v1467, %v1467
    %v1532 = vmul.f32 %v1468, %v1468
    %v1533 = vmul.f32 %v1469, %v1469
    %v1534 = vmul.f32 %v1470, %v1470
    %v1535 = vmul.f32 %v1471, %v1471
    %v1536 = vmul.f32 %v1472, %v1472
    %v1537 = vmul.f32 %v1473, %v1473
    %v1538 = vmul.f32 %v1474, %v1474
    %v1539 = vmul.f32 %v1475, %v1475
    %v1540 = vmul.f32 %v1476, %v1476
    %v1541 = vmul.f32 %v1477, %v1477
    %v1542 = vmul.f32 %v1478, %v1478
    %v1543 = vmul.f32 %v1479, %v1479
    %v1544 = vmul.f32 %v1480, %v1480
    %v1545 = vmul.f32 %v1481, %v1481
    %v1546 = vmul.f32 %v1482, %v1482
    %v1547 = vmul.f32 %v1483, %v1483
    %v1548 = vmul.f32 %v1484, %v1484
    %v1549 = vmul.f32 %v1485, %v1485
    %v1550 = vmul.f32 %v1486, %v1486
    %v1551 = vmul.f32 %v1487, %v1487
    %v1552 = vmul.f32 %v1488, %v1488
    %v1553 = vmul.f32 %v1489, %v1489
    %v1554 = vmul.f32 %v1490, %v1490
    %v1555 = vmul.f32 %v1491, %v1491
    %v1556 = vmul.f32 %v1492, %v1492
    %v1557 = vmul.f32 %v1493, %v1493
    %v1558 = vmul.f32 %v1494, %v1494
    %v1559 = vmul.f32 %v1495, %v1495
    %v1560 = vmul.f32 %v1496, %v1496
    %v1561 = vmul.f32 %v1497, %v1497
    %v1562 = vmul.f32 %v1498, %v1498
    %v1563 = vmul.f32 %v1499, %v1499
    %v1564 = vmul.f32 %v1500, %v1500
    %v1565 = vmul.f32 %v1501, %v1501
    %v1566 = vmul.f32 %v1502, %v1502
    %v1567 = vmul.f32 %v1503, %v1503
    %v1568 = vmul.f32 %v1504, %v1504
    %v1569 = vmul.f32 %v1505, %v1505
    %v1570 = vmul.f32 %v1506, %v1506
    %v1571 = vmul.f32 %v1507, %v1507
    %v1572 = vmul.f32 %v1508, %v1508
    %v1573 = vmul.f32 %v1509, %v1509
    %v1574 = vmul.f32 %v1510, %v1510
    %v1575 = vmul.f32 %v1511, %v1511
    %v1576 = vmul.f32 %v1512, %v1512
    %v1577 = vmul.f32 %v1513, %v1513
    %v1578 = vmul.f32 %v1514, %v1514
    %v1579 = vmul.f32 %v1515, %v1515
    %v1580 = vmul.f32 %v1516, %v1516
    %v1581 = vmul.f32 %v1517, %v937
    %v1582 = vmul.f32 %v1518, %v942
    %v1583 = vmul.f32 %v1519, %v947
    %v1584 = vmul.f32 %v1520, %v952
    %v1585 = vmul.f32 %v1521, %v957
    %v1586 = vmul.f32 %v1522, %v962
    %v1587 = vmul.f32 %v1523, %v967
    %v1588 = vmul.f32 %v1524, %v972
    %v1589 = vmul.f32 %v1525, %v977
    %v1590 = vmul.f32 %v1526, %v982
    %v1591 = vmul.f32 %v1527, %v987
    %v1592 = vmul.f32 %v1528, %v992
    %v1593 = vmul.f32 %v1529, %v997
    %v1594 = vmul.f32 %v1530, %v1002
    %v1595 = vmul.f32 %v1531, %v1007
    %v1596 = vmul.f32 %v1532, %v1012
    %v1597 = vmul.f32 %v1533, %v1017
    %v1598 = vmul.f32 %v1534, %v1022
    %v1599 = vmul.f32 %v1535, %v1027
    %v1600 = vmul.f32 %v1536, %v1032
    %v1601 = vmul.f32 %v1537, %v1037
    %v1602 = vmul.f32 %v1538, %v1042
    %v1603 = vmul.f32 %v1539, %v1047
    %v1604 = vmul.f32 %v1540, %v1052
    %v1605 = vmul.f32 %v1541, %v1057
    %v1606 = vmul.f32 %v1542, %v1062
    %v1607 = vmul.f32 %v1543, %v1067
    %v1608 = vmul.f32 %v1544, %v1072
    %v1609 = vmul.f32 %v1545, %v1077
    %v1610 = vmul.f32 %v1546, %v1082
    %v1611 = vmul.f32 %v1547, %v1087
    %v1612 = vmul.f32 %v1548, %v1092
    %v1613 = vmul.f32 %v1549, %v1097
    %v1614 = vmul.f32 %v1550, %v1102
    %v1615 = vmul.f32 %v1551, %v1107
    %v1616 = vmul.f32 %v1552, %v1112
    %v1617 = vmul.f32 %v1553, %v1117
    %v1618 = vmul.f32 %v1554, %v1122
    %v1619 = vmul.f32 %v1555, %v1127
    %v1620 = vmul.f32 %v1556, %v1132
    %v1621 = vmul.f32 %v1557, %v1137
    %v1622 = vmul.f32 %v1558, %v1142
    %v1623 = vmul.f32 %v1559, %v1147
    %v1624 = vmul.f32 %v1560, %v1152
    %v1625 = vmul.f32 %v1561, %v1157
    %v1626 = vmul.f32 %v1562, %v1162
    %v1627 = vmul.f32 %v1563, %v1167
    %v1628 = vmul.f32 %v1564, %v1172
    %v1629 = vmul.f32 %v1565, %v1177
    %v1630 = vmul.f32 %v1566, %v1182
    %v1631 = vmul.f32 %v1567, %v1187
    %v1632 = vmul.f32 %v1568, %v1192
    %v1633 = vmul.f32 %v1569, %v1197
    %v1634 = vmul.f32 %v1570, %v1202
    %v1635 = vmul.f32 %v1571, %v1207
    %v1636 = vmul.f32 %v1572, %v1212
    %v1637 = vmul.f32 %v1573, %v1217
    %v1638 = vmul.f32 %v1574, %v1222
    %v1639 = vmul.f32 %v1575, %v1227
    %v1640 = vmul.f32 %v1576, %v1232
    %v1641 = vmul.f32 %v1577, %v1237
    %v1642 = vmul.f32 %v1578, %v1242
    %v1643 = vmul.f32 %v1579, %v1247
    %v1644 = vmul.f32 %v1580, %v1252
    %v1645 = vsel %vm354, %v1581, 0.0
    %v1646 = vsel %vm354, %v1582, 0.0
    %v1647 = vadd.f32 %v1645, %v1646
    %v1648 = vsel %vm354, %v1583, 0.0
    %v1649 = vadd.f32 %v1647, %v1648
    %v1650 = vsel %vm354, %v1584, 0.0
    %v1651 = vadd.f32 %v1649, %v1650
    %v1652 = vsel %vm354, %v1585, 0.0
    %v1653 = vadd.f32 %v1651, %v1652
    %v1654 = vsel %vm354, %v1586, 0.0
    %v1655 = vadd.f32 %v1653, %v1654
    %v1656 = vsel %vm354, %v1587, 0.0
    %v1657 = vadd.f32 %v1655, %v1656
    %v1658 = vsel %vm354, %v1588, 0.0
    %v1659 = vadd.f32 %v1657, %v1658
    %v1660 = vsel %vm354, %v1589, 0.0
    %v1661 = vadd.f32 %v1659, %v1660
    %v1662 = vsel %vm354, %v1590, 0.0
    %v1663 = vadd.f32 %v1661, %v1662
    %v1664 = vsel %vm354, %v1591, 0.0
    %v1665 = vadd.f32 %v1663, %v1664
    %v1666 = vsel %vm354, %v1592, 0.0
    %v1667 = vadd.f32 %v1665, %v1666
    %v1668 = vsel %vm354, %v1593, 0.0
    %v1669 = vadd.f32 %v1667, %v1668
    %v1670 = vsel %vm354, %v1594, 0.0
    %v1671 = vadd.f32 %v1669, %v1670
    %v1672 = vsel %vm354, %v1595, 0.0
    %v1673 = vadd.f32 %v1671, %v1672
    %v1674 = vsel %vm354, %v1596, 0.0
    %v1675 = vadd.f32 %v1673, %v1674
    %v1676 = vsel %vm354, %v1597, 0.0
    %v1677 = vadd.f32 %v1675, %v1676
    %v1678 = vsel %vm354, %v1598, 0.0
    %v1679 = vadd.f32 %v1677, %v1678
    %v1680 = vsel %vm354, %v1599, 0.0
    %v1681 = vadd.f32 %v1679, %v1680
    %v1682 = vsel %vm354, %v1600, 0.0
    %v1683 = vadd.f32 %v1681, %v1682
    %v1684 = vsel %vm354, %v1601, 0.0
    %v1685 = vadd.f32 %v1683, %v1684
    %v1686 = vsel %vm354, %v1602, 0.0
    %v1687 = vadd.f32 %v1685, %v1686
    %v1688 = vsel %vm354, %v1603, 0.0
    %v1689 = vadd.f32 %v1687, %v1688
    %v1690 = vsel %vm354, %v1604, 0.0
    %v1691 = vadd.f32 %v1689, %v1690
    %v1692 = vsel %vm354, %v1605, 0.0
    %v1693 = vadd.f32 %v1691, %v1692
    %v1694 = vsel %vm354, %v1606, 0.0
    %v1695 = vadd.f32 %v1693, %v1694
    %v1696 = vsel %vm354, %v1607, 0.0
    %v1697 = vadd.f32 %v1695, %v1696
    %v1698 = vsel %vm354, %v1608, 0.0
    %v1699 = vadd.f32 %v1697, %v1698
    %v1700 = vsel %vm354, %v1609, 0.0
    %v1701 = vadd.f32 %v1699, %v1700
    %v1702 = vsel %vm354, %v1610, 0.0
    %v1703 = vadd.f32 %v1701, %v1702
    %v1704 = vsel %vm354, %v1611, 0.0
    %v1705 = vadd.f32 %v1703, %v1704
    %v1706 = vsel %vm354, %v1612, 0.0
    %v1707 = vadd.f32 %v1705, %v1706
    %v1708 = vsel %vm354, %v1613, 0.0
    %v1709 = vadd.f32 %v1707, %v1708
    %v1710 = vsel %vm354, %v1614, 0.0
    %v1711 = vadd.f32 %v1709, %v1710
    %v1712 = vsel %vm354, %v1615, 0.0
    %v1713 = vadd.f32 %v1711, %v1712
    %v1714 = vsel %vm354, %v1616, 0.0
    %v1715 = vadd.f32 %v1713, %v1714
    %v1716 = vsel %vm354, %v1617, 0.0
    %v1717 = vadd.f32 %v1715, %v1716
    %v1718 = vsel %vm354, %v1618, 0.0
    %v1719 = vadd.f32 %v1717, %v1718
    %v1720 = vsel %vm354, %v1619, 0.0
    %v1721 = vadd.f32 %v1719, %v1720
    %v1722 = vsel %vm354, %v1620, 0.0
    %v1723 = vadd.f32 %v1721, %v1722
    %v1724 = vsel %vm354, %v1621, 0.0
    %v1725 = vadd.f32 %v1723, %v1724
    %v1726 = vsel %vm354, %v1622, 0.0
    %v1727 = vadd.f32 %v1725, %v1726
    %v1728 = vsel %vm354, %v1623, 0.0
    %v1729 = vadd.f32 %v1727, %v1728
    %v1730 = vsel %vm354, %v1624, 0.0
    %v1731 = vadd.f32 %v1729, %v1730
    %v1732 = vsel %vm354, %v1625, 0.0
    %v1733 = vadd.f32 %v1731, %v1732
    %v1734 = vsel %vm354, %v1626, 0.0
    %v1735 = vadd.f32 %v1733, %v1734
    %v1736 = vsel %vm354, %v1627, 0.0
    %v1737 = vadd.f32 %v1735, %v1736
    %v1738 = vsel %vm354, %v1628, 0.0
    %v1739 = vadd.f32 %v1737, %v1738
    %v1740 = vsel %vm354, %v1629, 0.0
    %v1741 = vadd.f32 %v1739, %v1740
    %v1742 = vsel %vm354, %v1630, 0.0
    %v1743 = vadd.f32 %v1741, %v1742
    %v1744 = vsel %vm354, %v1631, 0.0
    %v1745 = vadd.f32 %v1743, %v1744
    %v1746 = vsel %vm354, %v1632, 0.0
    %v1747 = vadd.f32 %v1745, %v1746
    %v1748 = vsel %vm354, %v1633, 0.0
    %v1749 = vadd.f32 %v1747, %v1748
    %v1750 = vsel %vm354, %v1634, 0.0
    %v1751 = vadd.f32 %v1749, %v1750
    %v1752 = vsel %vm354, %v1635, 0.0
    %v1753 = vadd.f32 %v1751, %v1752
    %v1754 = vsel %vm354, %v1636, 0.0
    %v1755 = vadd.f32 %v1753, %v1754
    %v1756 = vsel %vm354, %v1637, 0.0
    %v1757 = vadd.f32 %v1755, %v1756
    %v1758 = vsel %vm354, %v1638, 0.0
    %v1759 = vadd.f32 %v1757, %v1758
    %v1760 = vsel %vm354, %v1639, 0.0
    %v1761 = vadd.f32 %v1759, %v1760
    %v1762 = vsel %vm354, %v1640, 0.0
    %v1763 = vadd.f32 %v1761, %v1762
    %v1764 = vsel %vm354, %v1641, 0.0
    %v1765 = vadd.f32 %v1763, %v1764
    %v1766 = vsel %vm354, %v1642, 0.0
    %v1767 = vadd.f32 %v1765, %v1766
    %v1768 = vsel %vm354, %v1643, 0.0
    %v1769 = vadd.f32 %v1767, %v1768
    %v1770 = vsel %vm354, %v1644, 0.0
    %v1771 = vadd.f32 %v1769, %v1770
    %v1772 = vrot.slane %v1771, 4
    %v1773 = vadd.f32 %v1771, %v1772
    %v1774 = vrot.slane %v1773, 2
    %v1775 = vadd.f32 %v1773, %v1774
    %v1776 = vrot.slane %v1775, 1
    %v1777 = vadd.f32 %v1775, %v1776
    %v1778 = vmul.f32 %v1777, %v1451
    %v1779 = vadd.f32 %v1778, 1e-05
    %v1780 = vrsqrt.pop %v1779
    %v1781 = vmul.f32 %v1453, %v1780
    %v1782 = vmul.f32 %v1454, %v1780
    %v1783 = vmul.f32 %v1455, %v1780
    %v1784 = vmul.f32 %v1456, %v1780
    %v1785 = vmul.f32 %v1457, %v1780
    %v1786 = vmul.f32 %v1458, %v1780
    %v1787 = vmul.f32 %v1459, %v1780
    %v1788 = vmul.f32 %v1460, %v1780
    %v1789 = vmul.f32 %v1461, %v1780
    %v1790 = vmul.f32 %v1462, %v1780
    %v1791 = vmul.f32 %v1463, %v1780
    %v1792 = vmul.f32 %v1464, %v1780
    %v1793 = vmul.f32 %v1465, %v1780
    %v1794 = vmul.f32 %v1466, %v1780
    %v1795 = vmul.f32 %v1467, %v1780
    %v1796 = vmul.f32 %v1468, %v1780
    %v1797 = vmul.f32 %v1469, %v1780
    %v1798 = vmul.f32 %v1470, %v1780
    %v1799 = vmul.f32 %v1471, %v1780
    %v1800 = vmul.f32 %v1472, %v1780
    %v1801 = vmul.f32 %v1473, %v1780
    %v1802 = vmul.f32 %v1474, %v1780
    %v1803 = vmul.f32 %v1475, %v1780
    %v1804 = vmul.f32 %v1476, %v1780
    %v1805 = vmul.f32 %v1477, %v1780
    %v1806 = vmul.f32 %v1478, %v1780
    %v1807 = vmul.f32 %v1479, %v1780
    %v1808 = vmul.f32 %v1480, %v1780
    %v1809 = vmul.f32 %v1481, %v1780
    %v1810 = vmul.f32 %v1482, %v1780
    %v1811 = vmul.f32 %v1483, %v1780
    %v1812 = vmul.f32 %v1484, %v1780
    %v1813 = vmul.f32 %v1485, %v1780
    %v1814 = vmul.f32 %v1486, %v1780
    %v1815 = vmul.f32 %v1487, %v1780
    %v1816 = vmul.f32 %v1488, %v1780
    %v1817 = vmul.f32 %v1489, %v1780
    %v1818 = vmul.f32 %v1490, %v1780
    %v1819 = vmul.f32 %v1491, %v1780
    %v1820 = vmul.f32 %v1492, %v1780
    %v1821 = vmul.f32 %v1493, %v1780
    %v1822 = vmul.f32 %v1494, %v1780
    %v1823 = vmul.f32 %v1495, %v1780
    %v1824 = vmul.f32 %v1496, %v1780
    %v1825 = vmul.f32 %v1497, %v1780
    %v1826 = vmul.f32 %v1498, %v1780
    %v1827 = vmul.f32 %v1499, %v1780
    %v1828 = vmul.f32 %v1500, %v1780
    %v1829 = vmul.f32 %v1501, %v1780
    %v1830 = vmul.f32 %v1502, %v1780
    %v1831 = vmul.f32 %v1503, %v1780
    %v1832 = vmul.f32 %v1504, %v1780
    %v1833 = vmul.f32 %v1505, %v1780
    %v1834 = vmul.f32 %v1506, %v1780
    %v1835 = vmul.f32 %v1507, %v1780
    %v1836 = vmul.f32 %v1508, %v1780
    %v1837 = vmul.f32 %v1509, %v1780
    %v1838 = vmul.f32 %v1510, %v1780
    %v1839 = vmul.f32 %v1511, %v1780
    %v1840 = vmul.f32 %v1512, %v1780
    %v1841 = vmul.f32 %v1513, %v1780
    %v1842 = vmul.f32 %v1514, %v1780
    %v1843 = vmul.f32 %v1515, %v1780
    %v1844 = vmul.f32 %v1516, %v1780
    %v1846 = vlaneseq
    %v1847 = vshrl.u32 %v1846, 7
    %v1848 = vsub.s32 0, %v1847
    %v1849 = vrot.slane %v932, %v1848
    %v1851 = vmul.f32 %v1781, %v1849
    %v1852 = vmul.f32 %v1782, %v1849
    %v1853 = vmul.f32 %v1783, %v1849
    %v1854 = vmul.f32 %v1784, %v1849
    %v1855 = vmul.f32 %v1785, %v1849
    %v1856 = vmul.f32 %v1786, %v1849
    %v1857 = vmul.f32 %v1787, %v1849
    %v1858 = vmul.f32 %v1788, %v1849
    %v1859 = vmul.f32 %v1789, %v1849
    %v1860 = vmul.f32 %v1790, %v1849
    %v1861 = vmul.f32 %v1791, %v1849
    %v1862 = vmul.f32 %v1792, %v1849
    %v1863 = vmul.f32 %v1793, %v1849
    %v1864 = vmul.f32 %v1794, %v1849
    %v1865 = vmul.f32 %v1795, %v1849
    %v1866 = vmul.f32 %v1796, %v1849
    %v1867 = vmul.f32 %v1797, %v1849
    %v1868 = vmul.f32 %v1798, %v1849
    %v1869 = vmul.f32 %v1799, %v1849
    %v1870 = vmul.f32 %v1800, %v1849
    %v1871 = vmul.f32 %v1801, %v1849
    %v1872 = vmul.f32 %v1802, %v1849
    %v1873 = vmul.f32 %v1803, %v1849
    %v1874 = vmul.f32 %v1804, %v1849
    %v1875 = vmul.f32 %v1805, %v1849
    %v1876 = vmul.f32 %v1806, %v1849
    %v1877 = vmul.f32 %v1807, %v1849
    %v1878 = vmul.f32 %v1808, %v1849
    %v1879 = vmul.f32 %v1809, %v1849
    %v1880 = vmul.f32 %v1810, %v1849
    %v1881 = vmul.f32 %v1811, %v1849
    %v1882 = vmul.f32 %v1812, %v1849
    %v1883 = vmul.f32 %v1813, %v1849
    %v1884 = vmul.f32 %v1814, %v1849
    %v1885 = vmul.f32 %v1815, %v1849
    %v1886 = vmul.f32 %v1816, %v1849
    %v1887 = vmul.f32 %v1817, %v1849
    %v1888 = vmul.f32 %v1818, %v1849
    %v1889 = vmul.f32 %v1819, %v1849
    %v1890 = vmul.f32 %v1820, %v1849
    %v1891 = vmul.f32 %v1821, %v1849
    %v1892 = vmul.f32 %v1822, %v1849
    %v1893 = vmul.f32 %v1823, %v1849
    %v1894 = vmul.f32 %v1824, %v1849
    %v1895 = vmul.f32 %v1825, %v1849
    %v1896 = vmul.f32 %v1826, %v1849
    %v1897 = vmul.f32 %v1827, %v1849
    %v1898 = vmul.f32 %v1828, %v1849
    %v1899 = vmul.f32 %v1829, %v1849
    %v1900 = vmul.f32 %v1830, %v1849
    %v1901 = vmul.f32 %v1831, %v1849
    %v1902 = vmul.f32 %v1832, %v1849
    %v1903 = vmul.f32 %v1833, %v1849
    %v1904 = vmul.f32 %v1834, %v1849
    %v1905 = vmul.f32 %v1835, %v1849
    %v1906 = vmul.f32 %v1836, %v1849
    %v1907 = vmul.f32 %v1837, %v1849
    %v1908 = vmul.f32 %v1838, %v1849
    %v1909 = vmul.f32 %v1839, %v1849
    %v1910 = vmul.f32 %v1840, %v1849
    %v1911 = vmul.f32 %v1841, %v1849
    %v1912 = vmul.f32 %v1842, %v1849
    %v1913 = vmul.f32 %v1843, %v1849
    %v1914 = vmul.f32 %v1844, %v1849
    %v1916 = vlaneseq
    %v1917 = vshrl.u32 %v1916, 7
    %v1918 = vsub.s32 0, %v1917
    %v1919 = vrot.slane %v933, %v1918
    %v1921 = vadd.f32 %v1851, %v1919
    %v1922 = vadd.f32 %v1852, %v1919
    %v1923 = vadd.f32 %v1853, %v1919
    %v1924 = vadd.f32 %v1854, %v1919
    %v1925 = vadd.f32 %v1855, %v1919
    %v1926 = vadd.f32 %v1856, %v1919
    %v1927 = vadd.f32 %v1857, %v1919
    %v1928 = vadd.f32 %v1858, %v1919
    %v1929 = vadd.f32 %v1859, %v1919
    %v1930 = vadd.f32 %v1860, %v1919
    %v1931 = vadd.f32 %v1861, %v1919
    %v1932 = vadd.f32 %v1862, %v1919
    %v1933 = vadd.f32 %v1863, %v1919
    %v1934 = vadd.f32 %v1864, %v1919
    %v1935 = vadd.f32 %v1865, %v1919
    %v1936 = vadd.f32 %v1866, %v1919
    %v1937 = vadd.f32 %v1867, %v1919
    %v1938 = vadd.f32 %v1868, %v1919
    %v1939 = vadd.f32 %v1869, %v1919
    %v1940 = vadd.f32 %v1870, %v1919
    %v1941 = vadd.f32 %v1871, %v1919
    %v1942 = vadd.f32 %v1872, %v1919
    %v1943 = vadd.f32 %v1873, %v1919
    %v1944 = vadd.f32 %v1874, %v1919
    %v1945 = vadd.f32 %v1875, %v1919
    %v1946 = vadd.f32 %v1876, %v1919
    %v1947 = vadd.f32 %v1877, %v1919
    %v1948 = vadd.f32 %v1878, %v1919
    %v1949 = vadd.f32 %v1879, %v1919
    %v1950 = vadd.f32 %v1880, %v1919
    %v1951 = vadd.f32 %v1881, %v1919
    %v1952 = vadd.f32 %v1882, %v1919
    %v1953 = vadd.f32 %v1883, %v1919
    %v1954 = vadd.f32 %v1884, %v1919
    %v1955 = vadd.f32 %v1885, %v1919
    %v1956 = vadd.f32 %v1886, %v1919
    %v1957 = vadd.f32 %v1887, %v1919
    %v1958 = vadd.f32 %v1888, %v1919
    %v1959 = vadd.f32 %v1889, %v1919
    %v1960 = vadd.f32 %v1890, %v1919
    %v1961 = vadd.f32 %v1891, %v1919
    %v1962 = vadd.f32 %v1892, %v1919
    %v1963 = vadd.f32 %v1893, %v1919
    %v1964 = vadd.f32 %v1894, %v1919
    %v1965 = vadd.f32 %v1895, %v1919
    %v1966 = vadd.f32 %v1896, %v1919
    %v1967 = vadd.f32 %v1897, %v1919
    %v1968 = vadd.f32 %v1898, %v1919
    %v1969 = vadd.f32 %v1899, %v1919
    %v1970 = vadd.f32 %v1900, %v1919
    %v1971 = vadd.f32 %v1901, %v1919
    %v1972 = vadd.f32 %v1902, %v1919
    %v1973 = vadd.f32 %v1903, %v1919
    %v1974 = vadd.f32 %v1904, %v1919
    %v1975 = vadd.f32 %v1905, %v1919
    %v1976 = vadd.f32 %v1906, %v1919
    %v1977 = vadd.f32 %v1907, %v1919
    %v1978 = vadd.f32 %v1908, %v1919
    %v1979 = vadd.f32 %v1909, %v1919
    %v1980 = vadd.f32 %v1910, %v1919
    %v1981 = vadd.f32 %v1911, %v1919
    %v1982 = vadd.f32 %v1912, %v1919
    %v1983 = vadd.f32 %v1913, %v1919
    %v1984 = vadd.f32 %v1914, %v1919
    %v1985 = vmax.f32 %v1921, 0.0
    %v1986 = vmax.f32 %v1922, 0.0
    %v1987 = vmax.f32 %v1923, 0.0
    %v1988 = vmax.f32 %v1924, 0.0
    %v1989 = vmax.f32 %v1925, 0.0
    %v1990 = vmax.f32 %v1926, 0.0
    %v1991 = vmax.f32 %v1927, 0.0
    %v1992 = vmax.f32 %v1928, 0.0
    %v1993 = vmax.f32 %v1929, 0.0
    %v1994 = vmax.f32 %v1930, 0.0
    %v1995 = vmax.f32 %v1931, 0.0
    %v1996 = vmax.f32 %v1932, 0.0
    %v1997 = vmax.f32 %v1933, 0.0
    %v1998 = vmax.f32 %v1934, 0.0
    %v1999 = vmax.f32 %v1935, 0.0
    %v2000 = vmax.f32 %v1936, 0.0
    %v2001 = vmax.f32 %v1937, 0.0
    %v2002 = vmax.f32 %v1938, 0.0
    %v2003 = vmax.f32 %v1939, 0.0
    %v2004 = vmax.f32 %v1940, 0.0
    %v2005 = vmax.f32 %v1941, 0.0
    %v2006 = vmax.f32 %v1942, 0.0
    %v2007 = vmax.f32 %v1943, 0.0
    %v2008 = vmax.f32 %v1944, 0.0
    %v2009 = vmax.f32 %v1945, 0.0
    %v2010 = vmax.f32 %v1946, 0.0
    %v2011 = vmax.f32 %v1947, 0.0
    %v2012 = vmax.f32 %v1948, 0.0
    %v2013 = vmax.f32 %v1949, 0.0
    %v2014 = vmax.f32 %v1950, 0.0
    %v2015 = vmax.f32 %v1951, 0.0
    %v2016 = vmax.f32 %v1952, 0.0
    %v2017 = vmax.f32 %v1953, 0.0
    %v2018 = vmax.f32 %v1954, 0.0
    %v2019 = vmax.f32 %v1955, 0.0
    %v2020 = vmax.f32 %v1956, 0.0
    %v2021 = vmax.f32 %v1957, 0.0
    %v2022 = vmax.f32 %v1958, 0.0
    %v2023 = vmax.f32 %v1959, 0.0
    %v2024 = vmax.f32 %v1960, 0.0
    %v2025 = vmax.f32 %v1961, 0.0
    %v2026 = vmax.f32 %v1962, 0.0
    %v2027 = vmax.f32 %v1963, 0.0
    %v2028 = vmax.f32 %v1964, 0.0
    %v2029 = vmax.f32 %v1965, 0.0
    %v2030 = vmax.f32 %v1966, 0.0
    %v2031 = vmax.f32 %v1967, 0.0
    %v2032 = vmax.f32 %v1968, 0.0
    %v2033 = vmax.f32 %v1969, 0.0
    %v2034 = vmax.f32 %v1970, 0.0
    %v2035 = vmax.f32 %v1971, 0.0
    %v2036 = vmax.f32 %v1972, 0.0
    %v2037 = vmax.f32 %v1973, 0.0
    %v2038 = vmax.f32 %v1974, 0.0
    %v2039 = vmax.f32 %v1975, 0.0
    %v2040 = vmax.f32 %v1976, 0.0
    %v2041 = vmax.f32 %v1977, 0.0
    %v2042 = vmax.f32 %v1978, 0.0
    %v2043 = vmax.f32 %v1979, 0.0
    %v2044 = vmax.f32 %v1980, 0.0
    %v2045 = vmax.f32 %v1981, 0.0
    %v2046 = vmax.f32 %v1982, 0.0
    %v2047 = vmax.f32 %v1983, 0.0
    %v2048 = vmax.f32 %v1984, 0.0
    %v2049 = vmul.f32 %v1985, %v937
    %v2050 = vmul.f32 %v1986, %v942
    %v2051 = vmul.f32 %v1987, %v947
    %v2052 = vmul.f32 %v1988, %v952
    %v2053 = vmul.f32 %v1989, %v957
    %v2054 = vmul.f32 %v1990, %v962
    %v2055 = vmul.f32 %v1991, %v967
    %v2056 = vmul.f32 %v1992, %v972
    %v2057 = vmul.f32 %v1993, %v977
    %v2058 = vmul.f32 %v1994, %v982
    %v2059 = vmul.f32 %v1995, %v987
    %v2060 = vmul.f32 %v1996, %v992
    %v2061 = vmul.f32 %v1997, %v997
    %v2062 = vmul.f32 %v1998, %v1002
    %v2063 = vmul.f32 %v1999, %v1007
    %v2064 = vmul.f32 %v2000, %v1012
    %v2065 = vmul.f32 %v2001, %v1017
    %v2066 = vmul.f32 %v2002, %v1022
    %v2067 = vmul.f32 %v2003, %v1027
    %v2068 = vmul.f32 %v2004, %v1032
    %v2069 = vmul.f32 %v2005, %v1037
    %v2070 = vmul.f32 %v2006, %v1042
    %v2071 = vmul.f32 %v2007, %v1047
    %v2072 = vmul.f32 %v2008, %v1052
    %v2073 = vmul.f32 %v2009, %v1057
    %v2074 = vmul.f32 %v2010, %v1062
    %v2075 = vmul.f32 %v2011, %v1067
    %v2076 = vmul.f32 %v2012, %v1072
    %v2077 = vmul.f32 %v2013, %v1077
    %v2078 = vmul.f32 %v2014, %v1082
    %v2079 = vmul.f32 %v2015, %v1087
    %v2080 = vmul.f32 %v2016, %v1092
    %v2081 = vmul.f32 %v2017, %v1097
    %v2082 = vmul.f32 %v2018, %v1102
    %v2083 = vmul.f32 %v2019, %v1107
    %v2084 = vmul.f32 %v2020, %v1112
    %v2085 = vmul.f32 %v2021, %v1117
    %v2086 = vmul.f32 %v2022, %v1122
    %v2087 = vmul.f32 %v2023, %v1127
    %v2088 = vmul.f32 %v2024, %v1132
    %v2089 = vmul.f32 %v2025, %v1137
    %v2090 = vmul.f32 %v2026, %v1142
    %v2091 = vmul.f32 %v2027, %v1147
    %v2092 = vmul.f32 %v2028, %v1152
    %v2093 = vmul.f32 %v2029, %v1157
    %v2094 = vmul.f32 %v2030, %v1162
    %v2095 = vmul.f32 %v2031, %v1167
    %v2096 = vmul.f32 %v2032, %v1172
    %v2097 = vmul.f32 %v2033, %v1177
    %v2098 = vmul.f32 %v2034, %v1182
    %v2099 = vmul.f32 %v2035, %v1187
    %v2100 = vmul.f32 %v2036, %v1192
    %v2101 = vmul.f32 %v2037, %v1197
    %v2102 = vmul.f32 %v2038, %v1202
    %v2103 = vmul.f32 %v2039, %v1207
    %v2104 = vmul.f32 %v2040, %v1212
    %v2105 = vmul.f32 %v2041, %v1217
    %v2106 = vmul.f32 %v2042, %v1222
    %v2107 = vmul.f32 %v2043, %v1227
    %v2108 = vmul.f32 %v2044, %v1232
    %v2109 = vmul.f32 %v2045, %v1237
    %v2110 = vmul.f32 %v2046, %v1242
    %v2111 = vmul.f32 %v2047, %v1247
    %v2112 = vmul.f32 %v2048, %v1252
    %2113 = vst.msk [vmem:[#allocation2] sm:$0xff] %vm354, 0.0
    %2114 = vst.msk [vmem:[#allocation2 + $0x8] sm:$0xff] %vm354, 0.0
    %vm2115 = vcmask 254976
    %2116 = vst.msk [vmem:[#allocation2 + $0x10] sm:$0x3] %vm2115, 0.0
    %2117 = vst.msk [vmem:[#allocation2 + $0x18] sm:$0xff] %vm354, 0.0
    %2118 = vst.msk [vmem:[#allocation2 + $0x20] sm:$0xff] %vm354, 0.0
    %2119 = vst.msk [vmem:[#allocation2 + $0x28] sm:$0x3] %vm2115, 0.0
    %2120 = vst.msk [vmem:[#allocation2 + $0x30] sm:$0xff] %vm354, 0.0
    %2121 = vst.msk [vmem:[#allocation2 + $0x38] sm:$0xff] %vm354, 0.0
    %2122 = vst.msk [vmem:[#allocation2 + $0x40] sm:$0x3] %vm2115, 0.0
    %2123 = vst.msk [vmem:[#allocation2 + $0x48] sm:$0xff] %vm354, 0.0
    %2124 = vst.msk [vmem:[#allocation2 + $0x50] sm:$0xff] %vm354, 0.0
    %2125 = vst.msk [vmem:[#allocation2 + $0x58] sm:$0x3] %vm2115, 0.0
    %2126 = vst.msk [vmem:[#allocation2 + $0x60] sm:$0xff] %vm354, 0.0
    %2127 = vst.msk [vmem:[#allocation2 + $0x68] sm:$0xff] %vm354, 0.0
    %2128 = vst.msk [vmem:[#allocation2 + $0x70] sm:$0x3] %vm2115, 0.0
    %2129 = vst.msk [vmem:[#allocation2 + $0x78] sm:$0xff] %vm354, 0.0
    %2130 = vst.msk [vmem:[#allocation2 + $0x80] sm:$0xff] %vm354, 0.0
    %2131 = vst.msk [vmem:[#allocation2 + $0x88] sm:$0x3] %vm2115, 0.0
    %2132 = vst.msk [vmem:[#allocation2 + $0x90] sm:$0xff] %vm354, 0.0
    %2133 = vst.msk [vmem:[#allocation2 + $0x98] sm:$0xff] %vm354, 0.0
    %2134 = vst.msk [vmem:[#allocation2 + $0xa0] sm:$0x3] %vm2115, 0.0
    %2135 = vst.msk [vmem:[#allocation2 + $0xa8] sm:$0xff] %vm354, 0.0
    %2136 = vst.msk [vmem:[#allocation2 + $0xb0] sm:$0xff] %vm354, 0.0
    %2137 = vst.msk [vmem:[#allocation2 + $0xb8] sm:$0x3] %vm2115, 0.0
    %2138 = vst.msk [vmem:[#allocation2 + $0xc0] sm:$0xff] %vm354, 0.0
    %2139 = vst.msk [vmem:[#allocation2 + $0xc8] sm:$0xff] %vm354, 0.0
    %2140 = vst.msk [vmem:[#allocation2 + $0xd0] sm:$0x3] %vm2115, 0.0
    %2141 = vst.msk [vmem:[#allocation2 + $0xd8] sm:$0xff] %vm354, 0.0
    %2142 = vst.msk [vmem:[#allocation2 + $0xe0] sm:$0xff] %vm354, 0.0
    %2143 = vst.msk [vmem:[#allocation2 + $0xe8] sm:$0x3] %vm2115, 0.0
    %2144 = vst.msk [vmem:[#allocation2 + $0xf0] sm:$0xff] %vm354, 0.0
    %2145 = vst.msk [vmem:[#allocation2 + $0xf8] sm:$0xff] %vm354, 0.0
    %2146 = vst.msk [vmem:[#allocation2 + $0x100] sm:$0x3] %vm2115, 0.0
    %2147 = vst.msk [vmem:[#allocation2 + $0x108] sm:$0xff] %vm354, 0.0
    %2148 = vst.msk [vmem:[#allocation2 + $0x110] sm:$0xff] %vm354, 0.0
    %2149 = vst.msk [vmem:[#allocation2 + $0x118] sm:$0x3] %vm2115, 0.0
    %2150 = vst.msk [vmem:[#allocation2 + $0x120] sm:$0xff] %vm354, 0.0
    %2151 = vst.msk [vmem:[#allocation2 + $0x128] sm:$0xff] %vm354, 0.0
    %2152 = vst.msk [vmem:[#allocation2 + $0x130] sm:$0x3] %vm2115, 0.0
    %2153 = vst.msk [vmem:[#allocation2 + $0x138] sm:$0xff] %vm354, 0.0
    %2154 = vst.msk [vmem:[#allocation2 + $0x140] sm:$0xff] %vm354, 0.0
    %2155 = vst.msk [vmem:[#allocation2 + $0x148] sm:$0x3] %vm2115, 0.0
    %2156 = vst.msk [vmem:[#allocation2 + $0x150] sm:$0xff] %vm354, 0.0
    %2157 = vst.msk [vmem:[#allocation2 + $0x158] sm:$0xff] %vm354, 0.0
    %2158 = vst.msk [vmem:[#allocation2 + $0x160] sm:$0x3] %vm2115, 0.0
    %2159 = vst.msk [vmem:[#allocation2 + $0x168] sm:$0xff] %vm354, 0.0
    %2160 = vst.msk [vmem:[#allocation2 + $0x170] sm:$0xff] %vm354, 0.0
    %2161 = vst.msk [vmem:[#allocation2 + $0x178] sm:$0x3] %vm2115, 0.0
    %2162 = vst.msk [vmem:[#allocation2 + $0x180] sm:$0xff] %vm354, 0.0
    %2163 = vst.msk [vmem:[#allocation2 + $0x188] sm:$0xff] %vm354, 0.0
    %2164 = vst.msk [vmem:[#allocation2 + $0x190] sm:$0x3] %vm2115, 0.0
    %2165 = vst.msk [vmem:[#allocation2 + $0x198] sm:$0xff] %vm354, 0.0
    %2166 = vst.msk [vmem:[#allocation2 + $0x1a0] sm:$0xff] %vm354, 0.0
    %2167 = vst.msk [vmem:[#allocation2 + $0x1a8] sm:$0x3] %vm2115, 0.0
    %2168 = vst.msk [vmem:[#allocation2 + $0x1b0] sm:$0xff] %vm354, 0.0
    %2169 = vst.msk [vmem:[#allocation2 + $0x1b8] sm:$0xff] %vm354, 0.0
    %2170 = vst.msk [vmem:[#allocation2 + $0x1c0] sm:$0x3] %vm2115, 0.0
    %2171 = vst.msk [vmem:[#allocation2 + $0x1c8] sm:$0xff] %vm354, 0.0
    %2172 = vst.msk [vmem:[#allocation2 + $0x1d0] sm:$0xff] %vm354, 0.0
    %2173 = vst.msk [vmem:[#allocation2 + $0x1d8] sm:$0x3] %vm2115, 0.0
    %2174 = vst.msk [vmem:[#allocation2 + $0x1e0] sm:$0xff] %vm354, 0.0
    %2175 = vst.msk [vmem:[#allocation2 + $0x1e8] sm:$0xff] %vm354, 0.0
    %2176 = vst.msk [vmem:[#allocation2 + $0x1f0] sm:$0x3] %vm2115, 0.0
    %2177 = vst.msk [vmem:[#allocation2 + $0x1f8] sm:$0xff] %vm354, 0.0
    %2178 = vst.msk [vmem:[#allocation2 + $0x200] sm:$0xff] %vm354, 0.0
    %2179 = vst.msk [vmem:[#allocation2 + $0x208] sm:$0x3] %vm2115, 0.0
    %2180 = vst.msk [vmem:[#allocation2 + $0x210] sm:$0xff] %vm354, 0.0
    %2181 = vst.msk [vmem:[#allocation2 + $0x218] sm:$0xff] %vm354, 0.0
    %2182 = vst.msk [vmem:[#allocation2 + $0x220] sm:$0x3] %vm2115, 0.0
    %2183 = vst.msk [vmem:[#allocation2 + $0x228] sm:$0xff] %vm354, 0.0
    %2184 = vst.msk [vmem:[#allocation2 + $0x230] sm:$0xff] %vm354, 0.0
    %2185 = vst.msk [vmem:[#allocation2 + $0x238] sm:$0x3] %vm2115, 0.0
    %2186 = vst.msk [vmem:[#allocation2 + $0x240] sm:$0xff] %vm354, 0.0
    %2187 = vst.msk [vmem:[#allocation2 + $0x248] sm:$0xff] %vm354, 0.0
    %2188 = vst.msk [vmem:[#allocation2 + $0x250] sm:$0x3] %vm2115, 0.0
    %2189 = vst.msk [vmem:[#allocation2 + $0x258] sm:$0xff] %vm354, 0.0
    %2190 = vst.msk [vmem:[#allocation2 + $0x260] sm:$0xff] %vm354, 0.0
    %2191 = vst.msk [vmem:[#allocation2 + $0x268] sm:$0x3] %vm2115, 0.0
    %2192 = vst.msk [vmem:[#allocation2 + $0x270] sm:$0xff] %vm354, 0.0
    %2193 = vst.msk [vmem:[#allocation2 + $0x278] sm:$0xff] %vm354, 0.0
    %2194 = vst.msk [vmem:[#allocation2 + $0x280] sm:$0x3] %vm2115, 0.0
    %2195 = vst.msk [vmem:[#allocation2 + $0x288] sm:$0xff] %vm354, 0.0
    %2196 = vst.msk [vmem:[#allocation2 + $0x290] sm:$0xff] %vm354, 0.0
    %2197 = vst.msk [vmem:[#allocation2 + $0x298] sm:$0x3] %vm2115, 0.0
    %2198 = vst.msk [vmem:[#allocation2 + $0x2a0] sm:$0xff] %vm354, 0.0
    %2199 = vst.msk [vmem:[#allocation2 + $0x2a8] sm:$0xff] %vm354, 0.0
    %2200 = vst.msk [vmem:[#allocation2 + $0x2b0] sm:$0x3] %vm2115, 0.0
    %2201 = vst.msk [vmem:[#allocation2 + $0x2b8] sm:$0xff] %vm354, 0.0
    %2202 = vst.msk [vmem:[#allocation2 + $0x2c0] sm:$0xff] %vm354, 0.0
    %2203 = vst.msk [vmem:[#allocation2 + $0x2c8] sm:$0x3] %vm2115, 0.0
    %2204 = vst.msk [vmem:[#allocation2 + $0x2d0] sm:$0xff] %vm354, 0.0
    %2205 = vst.msk [vmem:[#allocation2 + $0x2d8] sm:$0xff] %vm354, 0.0
    %2206 = vst.msk [vmem:[#allocation2 + $0x2e0] sm:$0x3] %vm2115, 0.0
    %2207 = vst.msk [vmem:[#allocation2 + $0x2e8] sm:$0xff] %vm354, 0.0
    %2208 = vst.msk [vmem:[#allocation2 + $0x2f0] sm:$0xff] %vm354, 0.0
    %2209 = vst.msk [vmem:[#allocation2 + $0x2f8] sm:$0x3] %vm2115, 0.0
    %2210 = vst.msk [vmem:[#allocation2 + $0x300] sm:$0xff] %vm354, 0.0
    %2211 = vst.msk [vmem:[#allocation2 + $0x308] sm:$0xff] %vm354, 0.0
    %2212 = vst.msk [vmem:[#allocation2 + $0x310] sm:$0x3] %vm2115, 0.0
    %2213 = vst.msk [vmem:[#allocation2 + $0x318] sm:$0xff] %vm354, 0.0
    %2214 = vst.msk [vmem:[#allocation2 + $0x320] sm:$0xff] %vm354, 0.0
    %2215 = vst.msk [vmem:[#allocation2 + $0x328] sm:$0x3] %vm2115, 0.0
    %2216 = vst.msk [vmem:[#allocation2 + $0x330] sm:$0xff] %vm354, 0.0
    %2217 = vst.msk [vmem:[#allocation2 + $0x338] sm:$0xff] %vm354, 0.0
    %2218 = vst.msk [vmem:[#allocation2 + $0x340] sm:$0x3] %vm2115, 0.0
    %2219 = vst.msk [vmem:[#allocation2 + $0x348] sm:$0xff] %vm354, 0.0
    %2220 = vst.msk [vmem:[#allocation2 + $0x350] sm:$0xff] %vm354, 0.0
    %2221 = vst.msk [vmem:[#allocation2 + $0x358] sm:$0x3] %vm2115, 0.0
    %s2222 = scalar_lea.vmem [#allocation2], 24
    %2223 = vst.msk [vmem:[%s2222 + $0x1] sm:$0xff] %vm354, %v2049
    %2224 = vst.msk [vmem:[%s2222 + $0x9] sm:$0xff] %vm354, %v2050
    %2225 = vst.msk [vmem:[%s2222 + $0x19] sm:$0xff] %vm354, %v2051
    %2226 = vst.msk [vmem:[%s2222 + $0x21] sm:$0xff] %vm354, %v2052
    %2227 = vst.msk [vmem:[%s2222 + $0x31] sm:$0xff] %vm354, %v2053
    %2228 = vst.msk [vmem:[%s2222 + $0x39] sm:$0xff] %vm354, %v2054
    %2229 = vst.msk [vmem:[%s2222 + $0x49] sm:$0xff] %vm354, %v2055
    %2230 = vst.msk [vmem:[%s2222 + $0x51] sm:$0xff] %vm354, %v2056
    %2231 = vst.msk [vmem:[%s2222 + $0x61] sm:$0xff] %vm354, %v2057
    %2232 = vst.msk [vmem:[%s2222 + $0x69] sm:$0xff] %vm354, %v2058
    %2233 = vst.msk [vmem:[%s2222 + $0x79] sm:$0xff] %vm354, %v2059
    %2234 = vst.msk [vmem:[%s2222 + $0x81] sm:$0xff] %vm354, %v2060
    %2235 = vst.msk [vmem:[%s2222 + $0x91] sm:$0xff] %vm354, %v2061
    %2236 = vst.msk [vmem:[%s2222 + $0x99] sm:$0xff] %vm354, %v2062
    %2237 = vst.msk [vmem:[%s2222 + $0xa9] sm:$0xff] %vm354, %v2063
    %2238 = vst.msk [vmem:[%s2222 + $0xb1] sm:$0xff] %vm354, %v2064
    %2239 = vst.msk [vmem:[%s2222 + $0xc1] sm:$0xff] %vm354, %v2065
    %2240 = vst.msk [vmem:[%s2222 + $0xc9] sm:$0xff] %vm354, %v2066
    %2241 = vst.msk [vmem:[%s2222 + $0xd9] sm:$0xff] %vm354, %v2067
    %2242 = vst.msk [vmem:[%s2222 + $0xe1] sm:$0xff] %vm354, %v2068
    %2243 = vst.msk [vmem:[%s2222 + $0xf1] sm:$0xff] %vm354, %v2069
    %2244 = vst.msk [vmem:[%s2222 + $0xf9] sm:$0xff] %vm354, %v2070
    %2245 = vst.msk [vmem:[%s2222 + $0x109] sm:$0xff] %vm354, %v2071
    %2246 = vst.msk [vmem:[%s2222 + $0x111] sm:$0xff] %vm354, %v2072
    %2247 = vst.msk [vmem:[%s2222 + $0x121] sm:$0xff] %vm354, %v2073
    %2248 = vst.msk [vmem:[%s2222 + $0x129] sm:$0xff] %vm354, %v2074
    %2249 = vst.msk [vmem:[%s2222 + $0x139] sm:$0xff] %vm354, %v2075
    %2250 = vst.msk [vmem:[%s2222 + $0x141] sm:$0xff] %vm354, %v2076
    %2251 = vst.msk [vmem:[%s2222 + $0x151] sm:$0xff] %vm354, %v2077
    %2252 = vst.msk [vmem:[%s2222 + $0x159] sm:$0xff] %vm354, %v2078
    %2253 = vst.msk [vmem:[%s2222 + $0x169] sm:$0xff] %vm354, %v2079
    %2254 = vst.msk [vmem:[%s2222 + $0x171] sm:$0xff] %vm354, %v2080
    %2255 = vst.msk [vmem:[%s2222 + $0x1b1] sm:$0xff] %vm354, %v2081
    %2256 = vst.msk [vmem:[%s2222 + $0x1b9] sm:$0xff] %vm354, %v2082
    %2257 = vst.msk [vmem:[%s2222 + $0x1c9] sm:$0xff] %vm354, %v2083
    %2258 = vst.msk [vmem:[%s2222 + $0x1d1] sm:$0xff] %vm354, %v2084
    %2259 = vst.msk [vmem:[%s2222 + $0x1e1] sm:$0xff] %vm354, %v2085
    %2260 = vst.msk [vmem:[%s2222 + $0x1e9] sm:$0xff] %vm354, %v2086
    %2261 = vst.msk [vmem:[%s2222 + $0x1f9] sm:$0xff] %vm354, %v2087
    %2262 = vst.msk [vmem:[%s2222 + $0x201] sm:$0xff] %vm354, %v2088
    %2263 = vst.msk [vmem:[%s2222 + $0x211] sm:$0xff] %vm354, %v2089
    %2264 = vst.msk [vmem:[%s2222 + $0x219] sm:$0xff] %vm354, %v2090
    %2265 = vst.msk [vmem:[%s2222 + $0x229] sm:$0xff] %vm354, %v2091
    %2266 = vst.msk [vmem:[%s2222 + $0x231] sm:$0xff] %vm354, %v2092
    %2267 = vst.msk [vmem:[%s2222 + $0x241] sm:$0xff] %vm354, %v2093
    %2268 = vst.msk [vmem:[%s2222 + $0x249] sm:$0xff] %vm354, %v2094
    %2269 = vst.msk [vmem:[%s2222 + $0x259] sm:$0xff] %vm354, %v2095
    %2270 = vst.msk [vmem:[%s2222 + $0x261] sm:$0xff] %vm354, %v2096
    %2271 = vst.msk [vmem:[%s2222 + $0x271] sm:$0xff] %vm354, %v2097
    %2272 = vst.msk [vmem:[%s2222 + $0x279] sm:$0xff] %vm354, %v2098
    %2273 = vst.msk [vmem:[%s2222 + $0x289] sm:$0xff] %vm354, %v2099
    %2274 = vst.msk [vmem:[%s2222 + $0x291] sm:$0xff] %vm354, %v2100
    %2275 = vst.msk [vmem:[%s2222 + $0x2a1] sm:$0xff] %vm354, %v2101
    %2276 = vst.msk [vmem:[%s2222 + $0x2a9] sm:$0xff] %vm354, %v2102
    %2277 = vst.msk [vmem:[%s2222 + $0x2b9] sm:$0xff] %vm354, %v2103
    %2278 = vst.msk [vmem:[%s2222 + $0x2c1] sm:$0xff] %vm354, %v2104
    %2279 = vst.msk [vmem:[%s2222 + $0x2d1] sm:$0xff] %vm354, %v2105
    %2280 = vst.msk [vmem:[%s2222 + $0x2d9] sm:$0xff] %vm354, %v2106
    %2281 = vst.msk [vmem:[%s2222 + $0x2e9] sm:$0xff] %vm354, %v2107
    %2282 = vst.msk [vmem:[%s2222 + $0x2f1] sm:$0xff] %vm354, %v2108
    %2283 = vst.msk [vmem:[%s2222 + $0x301] sm:$0xff] %vm354, %v2109
    %2284 = vst.msk [vmem:[%s2222 + $0x309] sm:$0xff] %vm354, %v2110
    %2285 = vst.msk [vmem:[%s2222 + $0x319] sm:$0xff] %vm354, %v2111
    %2286 = vst.msk [vmem:[%s2222 + $0x321] sm:$0xff] %vm354, %v2112
    %v2287 = vld [vmem:[#allocation2] sm:$0xff]
    %v2288 = vld [vmem:[#allocation2 + $0x8] sm:$0xff]
    %v2289 = vld [vmem:[#allocation2 + $0x18] sm:$0xff]
    %v2290 = vld [vmem:[#allocation2 + $0x20] sm:$0xff]
    %v2291 = vld [vmem:[#allocation2 + $0x30] sm:$0xff]
    %v2292 = vld [vmem:[#allocation2 + $0x38] sm:$0xff]
    %v2293 = vld [vmem:[#allocation2 + $0x48] sm:$0xff]
    %v2294 = vld [vmem:[#allocation2 + $0x50] sm:$0xff]
    %v2295 = vld [vmem:[#allocation2 + $0x60] sm:$0xff]
    %v2296 = vld [vmem:[#allocation2 + $0x68] sm:$0xff]
    %v2297 = vld [vmem:[#allocation2 + $0x78] sm:$0xff]
    %v2298 = vld [vmem:[#allocation2 + $0x80] sm:$0xff]
    %v2299 = vld [vmem:[#allocation2 + $0x90] sm:$0xff]
    %v2300 = vld [vmem:[#allocation2 + $0x98] sm:$0xff]
    %v2301 = vld [vmem:[#allocation2 + $0xa8] sm:$0xff]
    %v2302 = vld [vmem:[#allocation2 + $0xb0] sm:$0xff]
    %v2303 = vld [vmem:[#allocation2 + $0xc0] sm:$0xff]
    %v2304 = vld [vmem:[#allocation2 + $0xc8] sm:$0xff]
    %v2305 = vld [vmem:[#allocation2 + $0xd8] sm:$0xff]
    %v2306 = vld [vmem:[#allocation2 + $0xe0] sm:$0xff]
    %v2307 = vld [vmem:[#allocation2 + $0xf0] sm:$0xff]
    %v2308 = vld [vmem:[#allocation2 + $0xf8] sm:$0xff]
    %v2309 = vld [vmem:[#allocation2 + $0x108] sm:$0xff]
    %v2310 = vld [vmem:[#allocation2 + $0x110] sm:$0xff]
    %v2311 = vld [vmem:[#allocation2 + $0x120] sm:$0xff]
    %v2312 = vld [vmem:[#allocation2 + $0x128] sm:$0xff]
    %v2313 = vld [vmem:[#allocation2 + $0x138] sm:$0xff]
    %v2314 = vld [vmem:[#allocation2 + $0x140] sm:$0xff]
    %v2315 = vld [vmem:[#allocation2 + $0x150] sm:$0xff]
    %v2316 = vld [vmem:[#allocation2 + $0x158] sm:$0xff]
    %v2317 = vld [vmem:[#allocation2 + $0x168] sm:$0xff]
    %v2318 = vld [vmem:[#allocation2 + $0x170] sm:$0xff]
    %v2319 = vld [vmem:[#allocation2 + $0x1b0] sm:$0xff]
    %v2320 = vld [vmem:[#allocation2 + $0x1b8] sm:$0xff]
    %v2321 = vld [vmem:[#allocation2 + $0x1c8] sm:$0xff]
    %v2322 = vld [vmem:[#allocation2 + $0x1d0] sm:$0xff]
    %v2323 = vld [vmem:[#allocation2 + $0x1e0] sm:$0xff]
    %v2324 = vld [vmem:[#allocation2 + $0x1e8] sm:$0xff]
    %v2325 = vld [vmem:[#allocation2 + $0x1f8] sm:$0xff]
    %v2326 = vld [vmem:[#allocation2 + $0x200] sm:$0xff]
    %v2327 = vld [vmem:[#allocation2 + $0x210] sm:$0xff]
    %v2328 = vld [vmem:[#allocation2 + $0x218] sm:$0xff]
    %v2329 = vld [vmem:[#allocation2 + $0x228] sm:$0xff]
    %v2330 = vld [vmem:[#allocation2 + $0x230] sm:$0xff]
    %v2331 = vld [vmem:[#allocation2 + $0x240] sm:$0xff]
    %v2332 = vld [vmem:[#allocation2 + $0x248] sm:$0xff]
    %v2333 = vld [vmem:[#allocation2 + $0x258] sm:$0xff]
    %v2334 = vld [vmem:[#allocation2 + $0x260] sm:$0xff]
    %v2335 = vld [vmem:[#allocation2 + $0x270] sm:$0xff]
    %v2336 = vld [vmem:[#allocation2 + $0x278] sm:$0xff]
    %v2337 = vld [vmem:[#allocation2 + $0x288] sm:$0xff]
    %v2338 = vld [vmem:[#allocation2 + $0x290] sm:$0xff]
    %v2339 = vld [vmem:[#allocation2 + $0x2a0] sm:$0xff]
    %v2340 = vld [vmem:[#allocation2 + $0x2a8] sm:$0xff]
    %v2341 = vld [vmem:[#allocation2 + $0x2b8] sm:$0xff]
    %v2342 = vld [vmem:[#allocation2 + $0x2c0] sm:$0xff]
    %v2343 = vld [vmem:[#allocation2 + $0x2d0] sm:$0xff]
    %v2344 = vld [vmem:[#allocation2 + $0x2d8] sm:$0xff]
    %v2345 = vld [vmem:[#allocation2 + $0x2e8] sm:$0xff]
    %v2346 = vld [vmem:[#allocation2 + $0x2f0] sm:$0xff]
    %v2347 = vld [vmem:[#allocation2 + $0x300] sm:$0xff]
    %v2348 = vld [vmem:[#allocation2 + $0x308] sm:$0xff]
    %v2349 = vld [vmem:[#allocation2 + $0x318] sm:$0xff]
    %v2350 = vld [vmem:[#allocation2 + $0x320] sm:$0xff]
    %v2351 = vld [vmem:[#allocation3] sm:$0xff]
    %v2352 = vld [vmem:[#allocation3 + $0x8] sm:$0xff]
    %v2353 = vld [vmem:[#allocation3 + $0x10] sm:$0xff]
    %v2354 = vld [vmem:[#allocation3 + $0x18] sm:$0xff]
    %v2355 = vld [vmem:[#allocation2 + $0x1] sm:$0xff]
    %v2356 = vld [vmem:[#allocation2 + $0x9] sm:$0xff]
    %v2357 = vld [vmem:[#allocation2 + $0x19] sm:$0xff]
    %v2358 = vld [vmem:[#allocation2 + $0x21] sm:$0xff]
    %v2359 = vld [vmem:[#allocation2 + $0x31] sm:$0xff]
    %v2360 = vld [vmem:[#allocation2 + $0x39] sm:$0xff]
    %v2361 = vld [vmem:[#allocation2 + $0x49] sm:$0xff]
    %v2362 = vld [vmem:[#allocation2 + $0x51] sm:$0xff]
    %v2363 = vld [vmem:[#allocation2 + $0x61] sm:$0xff]
    %v2364 = vld [vmem:[#allocation2 + $0x69] sm:$0xff]
    %v2365 = vld [vmem:[#allocation2 + $0x79] sm:$0xff]
    %v2366 = vld [vmem:[#allocation2 + $0x81] sm:$0xff]
    %v2367 = vld [vmem:[#allocation2 + $0x91] sm:$0xff]
    %v2368 = vld [vmem:[#allocation2 + $0x99] sm:$0xff]
    %v2369 = vld [vmem:[#allocation2 + $0xa9] sm:$0xff]
    %v2370 = vld [vmem:[#allocation2 + $0xb1] sm:$0xff]
    %v2371 = vld [vmem:[#allocation2 + $0xc1] sm:$0xff]
    %v2372 = vld [vmem:[#allocation2 + $0xc9] sm:$0xff]
    %v2373 = vld [vmem:[#allocation2 + $0xd9] sm:$0xff]
    %v2374 = vld [vmem:[#allocation2 + $0xe1] sm:$0xff]
    %v2375 = vld [vmem:[#allocation2 + $0xf1] sm:$0xff]
    %v2376 = vld [vmem:[#allocation2 + $0xf9] sm:$0xff]
    %v2377 = vld [vmem:[#allocation2 + $0x109] sm:$0xff]
    %v2378 = vld [vmem:[#allocation2 + $0x111] sm:$0xff]
    %v2379 = vld [vmem:[#allocation2 + $0x121] sm:$0xff]
    %v2380 = vld [vmem:[#allocation2 + $0x129] sm:$0xff]
    %v2381 = vld [vmem:[#allocation2 + $0x139] sm:$0xff]
    %v2382 = vld [vmem:[#allocation2 + $0x141] sm:$0xff]
    %v2383 = vld [vmem:[#allocation2 + $0x151] sm:$0xff]
    %v2384 = vld [vmem:[#allocation2 + $0x159] sm:$0xff]
    %v2385 = vld [vmem:[#allocation2 + $0x169] sm:$0xff]
    %v2386 = vld [vmem:[#allocation2 + $0x171] sm:$0xff]
    %v2387 = vld [vmem:[#allocation2 + $0x1b1] sm:$0xff]
    %v2388 = vld [vmem:[#allocation2 + $0x1b9] sm:$0xff]
    %v2389 = vld [vmem:[#allocation2 + $0x1c9] sm:$0xff]
    %v2390 = vld [vmem:[#allocation2 + $0x1d1] sm:$0xff]
    %v2391 = vld [vmem:[#allocation2 + $0x1e1] sm:$0xff]
    %v2392 = vld [vmem:[#allocation2 + $0x1e9] sm:$0xff]
    %v2393 = vld [vmem:[#allocation2 + $0x1f9] sm:$0xff]
    %v2394 = vld [vmem:[#allocation2 + $0x201] sm:$0xff]
    %v2395 = vld [vmem:[#allocation2 + $0x211] sm:$0xff]
    %v2396 = vld [vmem:[#allocation2 + $0x219] sm:$0xff]
    %v2397 = vld [vmem:[#allocation2 + $0x229] sm:$0xff]
    %v2398 = vld [vmem:[#allocation2 + $0x231] sm:$0xff]
    %v2399 = vld [vmem:[#allocation2 + $0x241] sm:$0xff]
    %v2400 = vld [vmem:[#allocation2 + $0x249] sm:$0xff]
    %v2401 = vld [vmem:[#allocation2 + $0x259] sm:$0xff]
    %v2402 = vld [vmem:[#allocation2 + $0x261] sm:$0xff]
    %v2403 = vld [vmem:[#allocation2 + $0x271] sm:$0xff]
    %v2404 = vld [vmem:[#allocation2 + $0x279] sm:$0xff]
    %v2405 = vld [vmem:[#allocation2 + $0x289] sm:$0xff]
    %v2406 = vld [vmem:[#allocation2 + $0x291] sm:$0xff]
    %v2407 = vld [vmem:[#allocation2 + $0x2a1] sm:$0xff]
    %v2408 = vld [vmem:[#allocation2 + $0x2a9] sm:$0xff]
    %v2409 = vld [vmem:[#allocation2 + $0x2b9] sm:$0xff]
    %v2410 = vld [vmem:[#allocation2 + $0x2c1] sm:$0xff]
    %v2411 = vld [vmem:[#allocation2 + $0x2d1] sm:$0xff]
    %v2412 = vld [vmem:[#allocation2 + $0x2d9] sm:$0xff]
    %v2413 = vld [vmem:[#allocation2 + $0x2e9] sm:$0xff]
    %v2414 = vld [vmem:[#allocation2 + $0x2f1] sm:$0xff]
    %v2415 = vld [vmem:[#allocation2 + $0x301] sm:$0xff]
    %v2416 = vld [vmem:[#allocation2 + $0x309] sm:$0xff]
    %v2417 = vld [vmem:[#allocation2 + $0x319] sm:$0xff]
    %v2418 = vld [vmem:[#allocation2 + $0x321] sm:$0xff]
    %s2419 = scalar_lea.vmem [#allocation3], 32
    %v2420 = vld [vmem:[%s2419] sm:$0xff]
    %v2421 = vld [vmem:[%s2419 + $0x8] sm:$0xff]
    %v2422 = vld [vmem:[%s2419 + $0x10] sm:$0xff]
    %v2423 = vld [vmem:[%s2419 + $0x18] sm:$0xff]
    %v2425 = vsel %vm354, %v2355, 0
    %v2428 = vsel %vm354, %v2356, 0
    %v2431 = vsel %vm354, %v2357, 0
    %v2434 = vsel %vm354, %v2358, 0
    %v2437 = vsel %vm354, %v2359, 0
    %v2440 = vsel %vm354, %v2360, 0
    %v2443 = vsel %vm354, %v2361, 0
    %v2446 = vsel %vm354, %v2362, 0
    %v2449 = vsel %vm354, %v2363, 0
    %v2452 = vsel %vm354, %v2364, 0
    %v2455 = vsel %vm354, %v2365, 0
    %v2458 = vsel %vm354, %v2366, 0
    %v2461 = vsel %vm354, %v2367, 0
    %v2464 = vsel %vm354, %v2368, 0
    %v2467 = vsel %vm354, %v2369, 0
    %v2470 = vsel %vm354, %v2370, 0
    %v2473 = vsel %vm354, %v2371, 0
    %v2476 = vsel %vm354, %v2372, 0
    %v2479 = vsel %vm354, %v2373, 0
    %v2482 = vsel %vm354, %v2374, 0
    %v2485 = vsel %vm354, %v2375, 0
    %v2488 = vsel %vm354, %v2376, 0
    %v2491 = vsel %vm354, %v2377, 0
    %v2494 = vsel %vm354, %v2378, 0
    %v2497 = vsel %vm354, %v2379, 0
    %v2500 = vsel %vm354, %v2380, 0
    %v2503 = vsel %vm354, %v2381, 0
    %v2506 = vsel %vm354, %v2382, 0
    %v2509 = vsel %vm354, %v2383, 0
    %v2512 = vsel %vm354, %v2384, 0
    %v2515 = vsel %vm354, %v2385, 0
    %v2518 = vsel %vm354, %v2386, 0
    %v2521 = vsel %vm354, %v2387, 0
    %v2524 = vsel %vm354, %v2388, 0
    %v2527 = vsel %vm354, %v2389, 0
    %v2530 = vsel %vm354, %v2390, 0
    %v2533 = vsel %vm354, %v2391, 0
    %v2536 = vsel %vm354, %v2392, 0
    %v2539 = vsel %vm354, %v2393, 0
    %v2542 = vsel %vm354, %v2394, 0
    %v2545 = vsel %vm354, %v2395, 0
    %v2548 = vsel %vm354, %v2396, 0
    %v2551 = vsel %vm354, %v2397, 0
    %v2554 = vsel %vm354, %v2398, 0
    %v2557 = vsel %vm354, %v2399, 0
    %v2560 = vsel %vm354, %v2400, 0
    %v2563 = vsel %vm354, %v2401, 0
    %v2566 = vsel %vm354, %v2402, 0
    %v2569 = vsel %vm354, %v2403, 0
    %v2572 = vsel %vm354, %v2404, 0
    %v2575 = vsel %vm354, %v2405, 0
    %v2578 = vsel %vm354, %v2406, 0
    %v2581 = vsel %vm354, %v2407, 0
    %v2584 = vsel %vm354, %v2408, 0
    %v2587 = vsel %vm354, %v2409, 0
    %v2590 = vsel %vm354, %v2410, 0
    %v2593 = vsel %vm354, %v2411, 0
    %v2596 = vsel %vm354, %v2412, 0
    %v2599 = vsel %vm354, %v2413, 0
    %v2602 = vsel %vm354, %v2414, 0
    %v2605 = vsel %vm354, %v2415, 0
    %v2608 = vsel %vm354, %v2416, 0
    %v2611 = vsel %vm354, %v2417, 0
    %v2614 = vsel %vm354, %v2418, 0
    %2616 = vmatprep.subr.mxu0 0.0
    %2617 = vmatpush1.msra.mxu0 %v2420
    %2618 = vmatprep.subr.mxu0 0.0
    %2619 = vmatpush1.msra.mxu0 %v2421
    %2620 = vmatprep.subr.mxu0 0.0
    %2621 = vmatpush1.msra.mxu0 %v2422
    %2622 = vmatprep.subr.mxu0 0.0
    %2623 = vmatpush1.msra.mxu0 %v2423
    %2624 = vmatprep.subr.mxu0 0.0
    %2625 = vmatpush1.msra.mxu0 0.0
    %2626 = vmatprep.subr.mxu0 0.0
    %2627 = vmatpush1.msra.mxu0 0.0
    %2628 = vmatprep.subr.mxu0 0.0
    %2629 = vmatpush1.msra.mxu0 0.0
    %2630 = vmatprep.subr.mxu0 0.0
    %2631 = vmatpush1.msra.mxu0 0.0
    %2632 = vmatprep.subr.mxu0 0.0
    %2633 = vmatpush1.msra.mxu0 0.0
    %2634 = vmatprep.subr.mxu0 0.0
    %2635 = vmatpush1.msra.mxu0 0.0
    %2636 = vmatprep.subr.mxu0 0.0
    %2637 = vmatpush1.msra.mxu0 0.0
    %2638 = vmatprep.subr.mxu0 0.0
    %2639 = vmatpush1.msra.mxu0 0.0
    %2640 = vmatprep.subr.mxu0 0.0
    %2641 = vmatpush1.msra.mxu0 0.0
    %2642 = vmatprep.subr.mxu0 0.0
    %2643 = vmatpush1.msra.mxu0 0.0
    %2644 = vmatprep.subr.mxu0 0.0
    %2645 = vmatpush1.msra.mxu0 0.0
    %2646 = vmatprep.subr.mxu0 0.0
    %2647 = vmatpush1.msra.mxu0 0.0
    %2648 = vmatprep.subr.mxu0 0.0
    %2649 = vmatpush1.msra.mxu0 0.0
    %2650 = vmatprep.subr.mxu0 0.0
    %2651 = vmatpush1.msra.mxu0 0.0
    %2652 = vmatprep.subr.mxu0 0.0
    %2653 = vmatpush1.msra.mxu0 0.0
    %2654 = vmatprep.subr.mxu0 0.0
    %2655 = vmatpush1.msra.mxu0 0.0
    %2656 = vmatprep.subr.mxu0 0.0
    %2657 = vmatpush1.msra.mxu0 0.0
    %2658 = vmatprep.subr.mxu0 0.0
    %2659 = vmatpush1.msra.mxu0 0.0
    %2660 = vmatprep.subr.mxu0 0.0
    %2661 = vmatpush1.msra.mxu0 0.0
    %2662 = vmatprep.subr.mxu0 0.0
    %2663 = vmatpush1.msra.mxu0 0.0
    %2664 = vmatprep.subr.mxu0 0.0
    %2665 = vmatpush1.msra.mxu0 0.0
    %2666 = vmatprep.subr.mxu0 0.0
    %2667 = vmatpush1.msra.mxu0 0.0
    %2668 = vmatprep.subr.mxu0 0.0
    %2669 = vmatpush1.msra.mxu0 0.0
    %2670 = vmatprep.subr.mxu0 0.0
    %2671 = vmatpush1.msra.mxu0 0.0
    %2672 = vmatprep.subr.mxu0 0.0
    %2673 = vmatpush1.msra.mxu0 0.0
    %2674 = vmatprep.subr.mxu0 0.0
    %2675 = vmatpush1.msra.mxu0 0.0
    %2676 = vmatprep.subr.mxu0 0.0
    %2677 = vmatpush1.msra.mxu0 0.0
    %2678 = vmatprep.subr.mxu0 0.0
    %2679 = vmatpush1.msra.mxu0 0.0
    %2680 = vmatprep.mubr.f32.mxu0 0.0
    %2681 = vmatmul.mubr.f32.gmra.mrb[0].mxu0 %v2425
    %v2682 = vpop.f32.mrb[0].mxu0
    %v2683 = vadd.f32 0.0, %v2682
    %v2684 = vpop.f32.mrb[0].mxu0
    %2685 = vmatprep.mubr.f32.mxu0 0.0
    %2686 = vmatmul.mubr.f32.gmra.mrb[0].mxu0 %v2428
    %v2687 = vpop.f32.mrb[0].mxu0
    %v2688 = vadd.f32 0.0, %v2687
    %v2689 = vpop.f32.mrb[0].mxu0
    %2690 = vmatprep.mubr.f32.mxu0 0.0
    %2691 = vmatmul.mubr.f32.gmra.mrb[0].mxu0 %v2431
    %v2692 = vpop.f32.mrb[0].mxu0
    %v2693 = vadd.f32 0.0, %v2692
    %v2694 = vpop.f32.mrb[0].mxu0
    %2695 = vmatprep.mubr.f32.mxu0 0.0
    %2696 = vmatmul.mubr.f32.gmra.mrb[0].mxu0 %v2434
    %v2697 = vpop.f32.mrb[0].mxu0
    %v2698 = vadd.f32 0.0, %v2697
    %v2699 = vpop.f32.mrb[0].mxu0
    %2700 = vmatprep.mubr.f32.mxu0 0.0
    %2701 = vmatmul.mubr.f32.gmra.mrb[0].mxu0 %v2437
    %v2702 = vpop.f32.mrb[0].mxu0
    %v2703 = vadd.f32 0.0, %v2702
    %v2704 = vpop.f32.mrb[0].mxu0
    %2705 = vmatprep.mubr.f32.mxu0 0.0
    %2706 = vmatmul.mubr.f32.gmra.mrb[0].mxu0 %v2440
    %v2707 = vpop.f32.mrb[0].mxu0
    %v2708 = vadd.f32 0.0, %v2707
    %v2709 = vpop.f32.mrb[0].mxu0
    %2710 = vmatprep.mubr.f32.mxu0 0.0
    %2711 = vmatmul.mubr.f32.gmra.mrb[0].mxu0 %v2443
    %v2712 = vpop.f32.mrb[0].mxu0
    %v2713 = vadd.f32 0.0, %v2712
    %v2714 = vpop.f32.mrb[0].mxu0
    %2715 = vmatprep.mubr.f32.mxu0 0.0
    %2716 = vmatmul.mubr.f32.gmra.mrb[0].mxu0 %v2446
    %v2717 = vpop.f32.mrb[0].mxu0
    %v2718 = vadd.f32 0.0, %v2717
    %v2719 = vpop.f32.mrb[0].mxu0
    %2720 = vmatprep.mubr.f32.mxu0 0.0
    %2721 = vmatmul.mubr.f32.gmra.mrb[0].mxu0 %v2449
    %v2722 = vpop.f32.mrb[0].mxu0
    %v2723 = vadd.f32 0.0, %v2722
    %v2724 = vpop.f32.mrb[0].mxu0
    %2725 = vmatprep.mubr.f32.mxu0 0.0
    %2726 = vmatmul.mubr.f32.gmra.mrb[0].mxu0 %v2452
    %v2727 = vpop.f32.mrb[0].mxu0
    %v2728 = vadd.f32 0.0, %v2727
    %v2729 = vpop.f32.mrb[0].mxu0
    %2730 = vmatprep.mubr.f32.mxu0 0.0
    %2731 = vmatmul.mubr.f32.gmra.mrb[0].mxu0 %v2455
    %v2732 = vpop.f32.mrb[0].mxu0
    %v2733 = vadd.f32 0.0, %v2732
    %v2734 = vpop.f32.mrb[0].mxu0
    %2735 = vmatprep.mubr.f32.mxu0 0.0
    %2736 = vmatmul.mubr.f32.gmra.mrb[0].mxu0 %v2458
    %v2737 = vpop.f32.mrb[0].mxu0
    %v2738 = vadd.f32 0.0, %v2737
    %v2739 = vpop.f32.mrb[0].mxu0
    %2740 = vmatprep.mubr.f32.mxu0 0.0
    %2741 = vmatmul.mubr.f32.gmra.mrb[0].mxu0 %v2461
    %v2742 = vpop.f32.mrb[0].mxu0
    %v2743 = vadd.f32 0.0, %v2742
    %v2744 = vpop.f32.mrb[0].mxu0
    %2745 = vmatprep.mubr.f32.mxu0 0.0
    %2746 = vmatmul.mubr.f32.gmra.mrb[0].mxu0 %v2464
    %v2747 = vpop.f32.mrb[0].mxu0
    %v2748 = vadd.f32 0.0, %v2747
    %v2749 = vpop.f32.mrb[0].mxu0
    %2750 = vmatprep.mubr.f32.mxu0 0.0
    %2751 = vmatmul.mubr.f32.gmra.mrb[0].mxu0 %v2467
    %v2752 = vpop.f32.mrb[0].mxu0
    %v2753 = vadd.f32 0.0, %v2752
    %v2754 = vpop.f32.mrb[0].mxu0
    %2755 = vmatprep.mubr.f32.mxu0 0.0
    %2756 = vmatmul.mubr.f32.gmra.mrb[0].mxu0 %v2470
    %v2757 = vpop.f32.mrb[0].mxu0
    %v2758 = vadd.f32 0.0, %v2757
    %v2759 = vpop.f32.mrb[0].mxu0
    %2760 = vmatprep.mubr.f32.mxu0 0.0
    %2761 = vmatmul.mubr.f32.gmra.mrb[0].mxu0 %v2473
    %v2762 = vpop.f32.mrb[0].mxu0
    %v2763 = vadd.f32 0.0, %v2762
    %v2764 = vpop.f32.mrb[0].mxu0
    %2765 = vmatprep.mubr.f32.mxu0 0.0
    %2766 = vmatmul.mubr.f32.gmra.mrb[0].mxu0 %v2476
    %v2767 = vpop.f32.mrb[0].mxu0
    %v2768 = vadd.f32 0.0, %v2767
    %v2769 = vpop.f32.mrb[0].mxu0
    %2770 = vmatprep.mubr.f32.mxu0 0.0
    %2771 = vmatmul.mubr.f32.gmra.mrb[0].mxu0 %v2479
    %v2772 = vpop.f32.mrb[0].mxu0
    %v2773 = vadd.f32 0.0, %v2772
    %v2774 = vpop.f32.mrb[0].mxu0
    %2775 = vmatprep.mubr.f32.mxu0 0.0
    %2776 = vmatmul.mubr.f32.gmra.mrb[0].mxu0 %v2482
    %v2777 = vpop.f32.mrb[0].mxu0
    %v2778 = vadd.f32 0.0, %v2777
    %v2779 = vpop.f32.mrb[0].mxu0
    %2780 = vmatprep.mubr.f32.mxu0 0.0
    %2781 = vmatmul.mubr.f32.gmra.mrb[0].mxu0 %v2485
    %v2782 = vpop.f32.mrb[0].mxu0
    %v2783 = vadd.f32 0.0, %v2782
    %v2784 = vpop.f32.mrb[0].mxu0
    %2785 = vmatprep.mubr.f32.mxu0 0.0
    %2786 = vmatmul.mubr.f32.gmra.mrb[0].mxu0 %v2488
    %v2787 = vpop.f32.mrb[0].mxu0
    %v2788 = vadd.f32 0.0, %v2787
    %v2789 = vpop.f32.mrb[0].mxu0
    %2790 = vmatprep.mubr.f32.mxu0 0.0
    %2791 = vmatmul.mubr.f32.gmra.mrb[0].mxu0 %v2491
    %v2792 = vpop.f32.mrb[0].mxu0
    %v2793 = vadd.f32 0.0, %v2792
    %v2794 = vpop.f32.mrb[0].mxu0
    %2795 = vmatprep.mubr.f32.mxu0 0.0
    %2796 = vmatmul.mubr.f32.gmra.mrb[0].mxu0 %v2494
    %v2797 = vpop.f32.mrb[0].mxu0
    %v2798 = vadd.f32 0.0, %v2797
    %v2799 = vpop.f32.mrb[0].mxu0
    %2800 = vmatprep.mubr.f32.mxu0 0.0
    %2801 = vmatmul.mubr.f32.gmra.mrb[0].mxu0 %v2497
    %v2802 = vpop.f32.mrb[0].mxu0
    %v2803 = vadd.f32 0.0, %v2802
    %v2804 = vpop.f32.mrb[0].mxu0
    %2805 = vmatprep.mubr.f32.mxu0 0.0
    %2806 = vmatmul.mubr.f32.gmra.mrb[0].mxu0 %v2500
    %v2807 = vpop.f32.mrb[0].mxu0
    %v2808 = vadd.f32 0.0, %v2807
    %v2809 = vpop.f32.mrb[0].mxu0
    %2810 = vmatprep.mubr.f32.mxu0 0.0
    %2811 = vmatmul.mubr.f32.gmra.mrb[0].mxu0 %v2503
    %v2812 = vpop.f32.mrb[0].mxu0
    %v2813 = vadd.f32 0.0, %v2812
    %v2814 = vpop.f32.mrb[0].mxu0
    %2815 = vmatprep.mubr.f32.mxu0 0.0
    %2816 = vmatmul.mubr.f32.gmra.mrb[0].mxu0 %v2506
    %v2817 = vpop.f32.mrb[0].mxu0
    %v2818 = vadd.f32 0.0, %v2817
    %v2819 = vpop.f32.mrb[0].mxu0
    %2820 = vmatprep.mubr.f32.mxu0 0.0
    %2821 = vmatmul.mubr.f32.gmra.mrb[0].mxu0 %v2509
    %v2822 = vpop.f32.mrb[0].mxu0
    %v2823 = vadd.f32 0.0, %v2822
    %v2824 = vpop.f32.mrb[0].mxu0
    %2825 = vmatprep.mubr.f32.mxu0 0.0
    %2826 = vmatmul.mubr.f32.gmra.mrb[0].mxu0 %v2512
    %v2827 = vpop.f32.mrb[0].mxu0
    %v2828 = vadd.f32 0.0, %v2827
    %v2829 = vpop.f32.mrb[0].mxu0
    %2830 = vmatprep.mubr.f32.mxu0 0.0
    %2831 = vmatmul.mubr.f32.gmra.mrb[0].mxu0 %v2515
    %v2832 = vpop.f32.mrb[0].mxu0
    %v2833 = vadd.f32 0.0, %v2832
    %v2834 = vpop.f32.mrb[0].mxu0
    %2835 = vmatprep.mubr.f32.mxu0 0.0
    %2836 = vmatmul.mubr.f32.gmra.mrb[0].mxu0 %v2518
    %v2837 = vpop.f32.mrb[0].mxu0
    %v2838 = vadd.f32 0.0, %v2837
    %v2839 = vpop.f32.mrb[0].mxu0
    %2840 = vmatprep.mubr.f32.mxu0 0.0
    %2841 = vmatmul.mubr.f32.gmra.mrb[0].mxu0 %v2521
    %v2842 = vpop.f32.mrb[0].mxu0
    %v2843 = vadd.f32 0.0, %v2842
    %v2844 = vpop.f32.mrb[0].mxu0
    %2845 = vmatprep.mubr.f32.mxu0 0.0
    %2846 = vmatmul.mubr.f32.gmra.mrb[0].mxu0 %v2524
    %v2847 = vpop.f32.mrb[0].mxu0
    %v2848 = vadd.f32 0.0, %v2847
    %v2849 = vpop.f32.mrb[0].mxu0
    %2850 = vmatprep.mubr.f32.mxu0 0.0
    %2851 = vmatmul.mubr.f32.gmra.mrb[0].mxu0 %v2527
    %v2852 = vpop.f32.mrb[0].mxu0
    %v2853 = vadd.f32 0.0, %v2852
    %v2854 = vpop.f32.mrb[0].mxu0
    %2855 = vmatprep.mubr.f32.mxu0 0.0
    %2856 = vmatmul.mubr.f32.gmra.mrb[0].mxu0 %v2530
    %v2857 = vpop.f32.mrb[0].mxu0
    %v2858 = vadd.f32 0.0, %v2857
    %v2859 = vpop.f32.mrb[0].mxu0
    %2860 = vmatprep.mubr.f32.mxu0 0.0
    %2861 = vmatmul.mubr.f32.gmra.mrb[0].mxu0 %v2533
    %v2862 = vpop.f32.mrb[0].mxu0
    %v2863 = vadd.f32 0.0, %v2862
    %v2864 = vpop.f32.mrb[0].mxu0
    %2865 = vmatprep.mubr.f32.mxu0 0.0
    %2866 = vmatmul.mubr.f32.gmra.mrb[0].mxu0 %v2536
    %v2867 = vpop.f32.mrb[0].mxu0
    %v2868 = vadd.f32 0.0, %v2867
    %v2869 = vpop.f32.mrb[0].mxu0
    %2870 = vmatprep.mubr.f32.mxu0 0.0
    %2871 = vmatmul.mubr.f32.gmra.mrb[0].mxu0 %v2539
    %v2872 = vpop.f32.mrb[0].mxu0
    %v2873 = vadd.f32 0.0, %v2872
    %v2874 = vpop.f32.mrb[0].mxu0
    %2875 = vmatprep.mubr.f32.mxu0 0.0
    %2876 = vmatmul.mubr.f32.gmra.mrb[0].mxu0 %v2542
    %v2877 = vpop.f32.mrb[0].mxu0
    %v2878 = vadd.f32 0.0, %v2877
    %v2879 = vpop.f32.mrb[0].mxu0
    %2880 = vmatprep.mubr.f32.mxu0 0.0
    %2881 = vmatmul.mubr.f32.gmra.mrb[0].mxu0 %v2545
    %v2882 = vpop.f32.mrb[0].mxu0
    %v2883 = vadd.f32 0.0, %v2882
    %v2884 = vpop.f32.mrb[0].mxu0
    %2885 = vmatprep.mubr.f32.mxu0 0.0
    %2886 = vmatmul.mubr.f32.gmra.mrb[0].mxu0 %v2548
    %v2887 = vpop.f32.mrb[0].mxu0
    %v2888 = vadd.f32 0.0, %v2887
    %v2889 = vpop.f32.mrb[0].mxu0
    %2890 = vmatprep.mubr.f32.mxu0 0.0
    %2891 = vmatmul.mubr.f32.gmra.mrb[0].mxu0 %v2551
    %v2892 = vpop.f32.mrb[0].mxu0
    %v2893 = vadd.f32 0.0, %v2892
    %v2894 = vpop.f32.mrb[0].mxu0
    %2895 = vmatprep.mubr.f32.mxu0 0.0
    %2896 = vmatmul.mubr.f32.gmra.mrb[0].mxu0 %v2554
    %v2897 = vpop.f32.mrb[0].mxu0
    %v2898 = vadd.f32 0.0, %v2897
    %v2899 = vpop.f32.mrb[0].mxu0
    %2900 = vmatprep.mubr.f32.mxu0 0.0
    %2901 = vmatmul.mubr.f32.gmra.mrb[0].mxu0 %v2557
    %v2902 = vpop.f32.mrb[0].mxu0
    %v2903 = vadd.f32 0.0, %v2902
    %v2904 = vpop.f32.mrb[0].mxu0
    %2905 = vmatprep.mubr.f32.mxu0 0.0
    %2906 = vmatmul.mubr.f32.gmra.mrb[0].mxu0 %v2560
    %v2907 = vpop.f32.mrb[0].mxu0
    %v2908 = vadd.f32 0.0, %v2907
    %v2909 = vpop.f32.mrb[0].mxu0
    %2910 = vmatprep.mubr.f32.mxu0 0.0
    %2911 = vmatmul.mubr.f32.gmra.mrb[0].mxu0 %v2563
    %v2912 = vpop.f32.mrb[0].mxu0
    %v2913 = vadd.f32 0.0, %v2912
    %v2914 = vpop.f32.mrb[0].mxu0
    %2915 = vmatprep.mubr.f32.mxu0 0.0
    %2916 = vmatmul.mubr.f32.gmra.mrb[0].mxu0 %v2566
    %v2917 = vpop.f32.mrb[0].mxu0
    %v2918 = vadd.f32 0.0, %v2917
    %v2919 = vpop.f32.mrb[0].mxu0
    %2920 = vmatprep.mubr.f32.mxu0 0.0
    %2921 = vmatmul.mubr.f32.gmra.mrb[0].mxu0 %v2569
    %v2922 = vpop.f32.mrb[0].mxu0
    %v2923 = vadd.f32 0.0, %v2922
    %v2924 = vpop.f32.mrb[0].mxu0
    %2925 = vmatprep.mubr.f32.mxu0 0.0
    %2926 = vmatmul.mubr.f32.gmra.mrb[0].mxu0 %v2572
    %v2927 = vpop.f32.mrb[0].mxu0
    %v2928 = vadd.f32 0.0, %v2927
    %v2929 = vpop.f32.mrb[0].mxu0
    %2930 = vmatprep.mubr.f32.mxu0 0.0
    %2931 = vmatmul.mubr.f32.gmra.mrb[0].mxu0 %v2575
    %v2932 = vpop.f32.mrb[0].mxu0
    %v2933 = vadd.f32 0.0, %v2932
    %v2934 = vpop.f32.mrb[0].mxu0
    %2935 = vmatprep.mubr.f32.mxu0 0.0
    %2936 = vmatmul.mubr.f32.gmra.mrb[0].mxu0 %v2578
    %v2937 = vpop.f32.mrb[0].mxu0
    %v2938 = vadd.f32 0.0, %v2937
    %v2939 = vpop.f32.mrb[0].mxu0
    %2940 = vmatprep.mubr.f32.mxu0 0.0
    %2941 = vmatmul.mubr.f32.gmra.mrb[0].mxu0 %v2581
    %v2942 = vpop.f32.mrb[0].mxu0
    %v2943 = vadd.f32 0.0, %v2942
    %v2944 = vpop.f32.mrb[0].mxu0
    %2945 = vmatprep.mubr.f32.mxu0 0.0
    %2946 = vmatmul.mubr.f32.gmra.mrb[0].mxu0 %v2584
    %v2947 = vpop.f32.mrb[0].mxu0
    %v2948 = vadd.f32 0.0, %v2947
    %v2949 = vpop.f32.mrb[0].mxu0
    %2950 = vmatprep.mubr.f32.mxu0 0.0
    %2951 = vmatmul.mubr.f32.gmra.mrb[0].mxu0 %v2587
    %v2952 = vpop.f32.mrb[0].mxu0
    %v2953 = vadd.f32 0.0, %v2952
    %v2954 = vpop.f32.mrb[0].mxu0
    %2955 = vmatprep.mubr.f32.mxu0 0.0
    %2956 = vmatmul.mubr.f32.gmra.mrb[0].mxu0 %v2590
    %v2957 = vpop.f32.mrb[0].mxu0
    %v2958 = vadd.f32 0.0, %v2957
    %v2959 = vpop.f32.mrb[0].mxu0
    %2960 = vmatprep.mubr.f32.mxu0 0.0
    %2961 = vmatmul.mubr.f32.gmra.mrb[0].mxu0 %v2593
    %v2962 = vpop.f32.mrb[0].mxu0
    %v2963 = vadd.f32 0.0, %v2962
    %v2964 = vpop.f32.mrb[0].mxu0
    %2965 = vmatprep.mubr.f32.mxu0 0.0
    %2966 = vmatmul.mubr.f32.gmra.mrb[0].mxu0 %v2596
    %v2967 = vpop.f32.mrb[0].mxu0
    %v2968 = vadd.f32 0.0, %v2967
    %v2969 = vpop.f32.mrb[0].mxu0
    %2970 = vmatprep.mubr.f32.mxu0 0.0
    %2971 = vmatmul.mubr.f32.gmra.mrb[0].mxu0 %v2599
    %v2972 = vpop.f32.mrb[0].mxu0
    %v2973 = vadd.f32 0.0, %v2972
    %v2974 = vpop.f32.mrb[0].mxu0
    %2975 = vmatprep.mubr.f32.mxu0 0.0
    %2976 = vmatmul.mubr.f32.gmra.mrb[0].mxu0 %v2602
    %v2977 = vpop.f32.mrb[0].mxu0
    %v2978 = vadd.f32 0.0, %v2977
    %v2979 = vpop.f32.mrb[0].mxu0
    %2980 = vmatprep.mubr.f32.mxu0 0.0
    %2981 = vmatmul.mubr.f32.gmra.mrb[0].mxu0 %v2605
    %v2982 = vpop.f32.mrb[0].mxu0
    %v2983 = vadd.f32 0.0, %v2982
    %v2984 = vpop.f32.mrb[0].mxu0
    %2985 = vmatprep.mubr.f32.mxu0 0.0
    %2986 = vmatmul.mubr.f32.gmra.mrb[0].mxu0 %v2608
    %v2987 = vpop.f32.mrb[0].mxu0
    %v2988 = vadd.f32 0.0, %v2987
    %v2989 = vpop.f32.mrb[0].mxu0
    %2990 = vmatprep.mubr.f32.mxu0 0.0
    %2991 = vmatmul.mubr.f32.gmra.mrb[0].mxu0 %v2611
    %v2992 = vpop.f32.mrb[0].mxu0
    %v2993 = vadd.f32 0.0, %v2992
    %v2994 = vpop.f32.mrb[0].mxu0
    %2995 = vmatprep.mubr.f32.mxu0 0.0
    %2996 = vmatmul.mubr.f32.gmra.mrb[0].mxu0 %v2614
    %v2997 = vpop.f32.mrb[0].mxu0
    %v2998 = vadd.f32 0.0, %v2997
    %v2999 = vpop.f32.mrb[0].mxu0
    %3000 = vdwg.mxu0
    %v3002 = vsel %vm354, %v2287, 0
    %v3005 = vsel %vm354, %v2288, 0
    %v3008 = vsel %vm354, %v2289, 0
    %v3011 = vsel %vm354, %v2290, 0
    %v3014 = vsel %vm354, %v2291, 0
    %v3017 = vsel %vm354, %v2292, 0
    %v3020 = vsel %vm354, %v2293, 0
    %v3023 = vsel %vm354, %v2294, 0
    %v3026 = vsel %vm354, %v2295, 0
    %v3029 = vsel %vm354, %v2296, 0
    %v3032 = vsel %vm354, %v2297, 0
    %v3035 = vsel %vm354, %v2298, 0
    %v3038 = vsel %vm354, %v2299, 0
    %v3041 = vsel %vm354, %v2300, 0
    %v3044 = vsel %vm354, %v2301, 0
    %v3047 = vsel %vm354, %v2302, 0
    %v3050 = vsel %vm354, %v2303, 0
    %v3053 = vsel %vm354, %v2304, 0
    %v3056 = vsel %vm354, %v2305, 0
    %v3059 = vsel %vm354, %v2306, 0
    %v3062 = vsel %vm354, %v2307, 0
    %v3065 = vsel %vm354, %v2308, 0
    %v3068 = vsel %vm354, %v2309, 0
    %v3071 = vsel %vm354, %v2310, 0
    %v3074 = vsel %vm354, %v2311, 0
    %v3077 = vsel %vm354, %v2312, 0
    %v3080 = vsel %vm354, %v2313, 0
    %v3083 = vsel %vm354, %v2314, 0
    %v3086 = vsel %vm354, %v2315, 0
    %v3089 = vsel %vm354, %v2316, 0
    %v3092 = vsel %vm354, %v2317, 0
    %v3095 = vsel %vm354, %v2318, 0
    %v3098 = vsel %vm354, %v2319, 0
    %v3101 = vsel %vm354, %v2320, 0
    %v3104 = vsel %vm354, %v2321, 0
    %v3107 = vsel %vm354, %v2322, 0
    %v3110 = vsel %vm354, %v2323, 0
    %v3113 = vsel %vm354, %v2324, 0
    %v3116 = vsel %vm354, %v2325, 0
    %v3119 = vsel %vm354, %v2326, 0
    %v3122 = vsel %vm354, %v2327, 0
    %v3125 = vsel %vm354, %v2328, 0
    %v3128 = vsel %vm354, %v2329, 0
    %v3131 = vsel %vm354, %v2330, 0
    %v3134 = vsel %vm354, %v2331, 0
    %v3137 = vsel %vm354, %v2332, 0
    %v3140 = vsel %vm354, %v2333, 0
    %v3143 = vsel %vm354, %v2334, 0
    %v3146 = vsel %vm354, %v2335, 0
    %v3149 = vsel %vm354, %v2336, 0
    %v3152 = vsel %vm354, %v2337, 0
    %v3155 = vsel %vm354, %v2338, 0
    %v3158 = vsel %vm354, %v2339, 0
    %v3161 = vsel %vm354, %v2340, 0
    %v3164 = vsel %vm354, %v2341, 0
    %v3167 = vsel %vm354, %v2342, 0
    %v3170 = vsel %vm354, %v2343, 0
    %v3173 = vsel %vm354, %v2344, 0
    %v3176 = vsel %vm354, %v2345, 0
    %v3179 = vsel %vm354, %v2346, 0
    %v3182 = vsel %vm354, %v2347, 0
    %v3185 = vsel %vm354, %v2348, 0
    %v3188 = vsel %vm354, %v2349, 0
    %v3191 = vsel %vm354, %v2350, 0
    %3193 = vmatprep.subr.mxu0 0.0
    %3194 = vmatpush1.msra.mxu0 %v2351
    %3195 = vmatprep.subr.mxu0 0.0
    %3196 = vmatpush1.msra.mxu0 %v2352
    %3197 = vmatprep.subr.mxu0 0.0
    %3198 = vmatpush1.msra.mxu0 %v2353
    %3199 = vmatprep.subr.mxu0 0.0
    %3200 = vmatpush1.msra.mxu0 %v2354
    %3201 = vmatprep.subr.mxu0 0.0
    %3202 = vmatpush1.msra.mxu0 0.0
    %3203 = vmatprep.subr.mxu0 0.0
    %3204 = vmatpush1.msra.mxu0 0.0
    %3205 = vmatprep.subr.mxu0 0.0
    %3206 = vmatpush1.msra.mxu0 0.0
    %3207 = vmatprep.subr.mxu0 0.0
    %3208 = vmatpush1.msra.mxu0 0.0
    %3209 = vmatprep.subr.mxu0 0.0
    %3210 = vmatpush1.msra.mxu0 0.0
    %3211 = vmatprep.subr.mxu0 0.0
    %3212 = vmatpush1.msra.mxu0 0.0
    %3213 = vmatprep.subr.mxu0 0.0
    %3214 = vmatpush1.msra.mxu0 0.0
    %3215 = vmatprep.subr.mxu0 0.0
    %3216 = vmatpush1.msra.mxu0 0.0
    %3217 = vmatprep.subr.mxu0 0.0
    %3218 = vmatpush1.msra.mxu0 0.0
    %3219 = vmatprep.subr.mxu0 0.0
    %3220 = vmatpush1.msra.mxu0 0.0
    %3221 = vmatprep.subr.mxu0 0.0
    %3222 = vmatpush1.msra.mxu0 0.0
    %3223 = vmatprep.subr.mxu0 0.0
    %3224 = vmatpush1.msra.mxu0 0.0
    %3225 = vmatprep.subr.mxu0 0.0
    %3226 = vmatpush1.msra.mxu0 0.0
    %3227 = vmatprep.subr.mxu0 0.0
    %3228 = vmatpush1.msra.mxu0 0.0
    %3229 = vmatprep.subr.mxu0 0.0
    %3230 = vmatpush1.msra.mxu0 0.0
    %3231 = vmatprep.subr.mxu0 0.0
    %3232 = vmatpush1.msra.mxu0 0.0
    %3233 = vmatprep.subr.mxu0 0.0
    %3234 = vmatpush1.msra.mxu0 0.0
    %3235 = vmatprep.subr.mxu0 0.0
    %3236 = vmatpush1.msra.mxu0 0.0
    %3237 = vmatprep.subr.mxu0 0.0
    %3238 = vmatpush1.msra.mxu0 0.0
    %3239 = vmatprep.subr.mxu0 0.0
    %3240 = vmatpush1.msra.mxu0 0.0
    %3241 = vmatprep.subr.mxu0 0.0
    %3242 = vmatpush1.msra.mxu0 0.0
    %3243 = vmatprep.subr.mxu0 0.0
    %3244 = vmatpush1.msra.mxu0 0.0
    %3245 = vmatprep.subr.mxu0 0.0
    %3246 = vmatpush1.msra.mxu0 0.0
    %3247 = vmatprep.subr.mxu0 0.0
    %3248 = vmatpush1.msra.mxu0 0.0
    %3249 = vmatprep.subr.mxu0 0.0
    %3250 = vmatpush1.msra.mxu0 0.0
    %3251 = vmatprep.subr.mxu0 0.0
    %3252 = vmatpush1.msra.mxu0 0.0
    %3253 = vmatprep.subr.mxu0 0.0
    %3254 = vmatpush1.msra.mxu0 0.0
    %3255 = vmatprep.subr.mxu0 0.0
    %3256 = vmatpush1.msra.mxu0 0.0
    %3257 = vmatprep.mubr.f32.mxu0 0.0
    %3258 = vmatmul.mubr.f32.gmra.mrb[0].mxu0 %v3002
    %v3259 = vpop.f32.mrb[0].mxu0
    %v3260 = vadd.f32 %v2683, %v3259
    %v3261 = vpop.f32.mrb[0].mxu0
    %3262 = vmatprep.mubr.f32.mxu0 0.0
    %3263 = vmatmul.mubr.f32.gmra.mrb[0].mxu0 %v3005
    %v3264 = vpop.f32.mrb[0].mxu0
    %v3265 = vadd.f32 %v2688, %v3264
    %v3266 = vpop.f32.mrb[0].mxu0
    %3267 = vmatprep.mubr.f32.mxu0 0.0
    %3268 = vmatmul.mubr.f32.gmra.mrb[0].mxu0 %v3008
    %v3269 = vpop.f32.mrb[0].mxu0
    %v3270 = vadd.f32 %v2693, %v3269
    %v3271 = vpop.f32.mrb[0].mxu0
    %3272 = vmatprep.mubr.f32.mxu0 0.0
    %3273 = vmatmul.mubr.f32.gmra.mrb[0].mxu0 %v3011
    %v3274 = vpop.f32.mrb[0].mxu0
    %v3275 = vadd.f32 %v2698, %v3274
    %v3276 = vpop.f32.mrb[0].mxu0
    %3277 = vmatprep.mubr.f32.mxu0 0.0
    %3278 = vmatmul.mubr.f32.gmra.mrb[0].mxu0 %v3014
    %v3279 = vpop.f32.mrb[0].mxu0
    %v3280 = vadd.f32 %v2703, %v3279
    %v3281 = vpop.f32.mrb[0].mxu0
    %3282 = vmatprep.mubr.f32.mxu0 0.0
    %3283 = vmatmul.mubr.f32.gmra.mrb[0].mxu0 %v3017
    %v3284 = vpop.f32.mrb[0].mxu0
    %v3285 = vadd.f32 %v2708, %v3284
    %v3286 = vpop.f32.mrb[0].mxu0
    %3287 = vmatprep.mubr.f32.mxu0 0.0
    %3288 = vmatmul.mubr.f32.gmra.mrb[0].mxu0 %v3020
    %v3289 = vpop.f32.mrb[0].mxu0
    %v3290 = vadd.f32 %v2713, %v3289
    %v3291 = vpop.f32.mrb[0].mxu0
    %3292 = vmatprep.mubr.f32.mxu0 0.0
    %3293 = vmatmul.mubr.f32.gmra.mrb[0].mxu0 %v3023
    %v3294 = vpop.f32.mrb[0].mxu0
    %v3295 = vadd.f32 %v2718, %v3294
    %v3296 = vpop.f32.mrb[0].mxu0
    %3297 = vmatprep.mubr.f32.mxu0 0.0
    %3298 = vmatmul.mubr.f32.gmra.mrb[0].mxu0 %v3026
    %v3299 = vpop.f32.mrb[0].mxu0
    %v3300 = vadd.f32 %v2723, %v3299
    %v3301 = vpop.f32.mrb[0].mxu0
    %3302 = vmatprep.mubr.f32.mxu0 0.0
    %3303 = vmatmul.mubr.f32.gmra.mrb[0].mxu0 %v3029
    %v3304 = vpop.f32.mrb[0].mxu0
    %v3305 = vadd.f32 %v2728, %v3304
    %v3306 = vpop.f32.mrb[0].mxu0
    %3307 = vmatprep.mubr.f32.mxu0 0.0
    %3308 = vmatmul.mubr.f32.gmra.mrb[0].mxu0 %v3032
    %v3309 = vpop.f32.mrb[0].mxu0
    %v3310 = vadd.f32 %v2733, %v3309
    %v3311 = vpop.f32.mrb[0].mxu0
    %3312 = vmatprep.mubr.f32.mxu0 0.0
    %3313 = vmatmul.mubr.f32.gmra.mrb[0].mxu0 %v3035
    %v3314 = vpop.f32.mrb[0].mxu0
    %v3315 = vadd.f32 %v2738, %v3314
    %v3316 = vpop.f32.mrb[0].mxu0
    %3317 = vmatprep.mubr.f32.mxu0 0.0
    %3318 = vmatmul.mubr.f32.gmra.mrb[0].mxu0 %v3038
    %v3319 = vpop.f32.mrb[0].mxu0
    %v3320 = vadd.f32 %v2743, %v3319
    %v3321 = vpop.f32.mrb[0].mxu0
    %3322 = vmatprep.mubr.f32.mxu0 0.0
    %3323 = vmatmul.mubr.f32.gmra.mrb[0].mxu0 %v3041
    %v3324 = vpop.f32.mrb[0].mxu0
    %v3325 = vadd.f32 %v2748, %v3324
    %v3326 = vpop.f32.mrb[0].mxu0
    %3327 = vmatprep.mubr.f32.mxu0 0.0
    %3328 = vmatmul.mubr.f32.gmra.mrb[0].mxu0 %v3044
    %v3329 = vpop.f32.mrb[0].mxu0
    %v3330 = vadd.f32 %v2753, %v3329
    %v3331 = vpop.f32.mrb[0].mxu0
    %3332 = vmatprep.mubr.f32.mxu0 0.0
    %3333 = vmatmul.mubr.f32.gmra.mrb[0].mxu0 %v3047
    %v3334 = vpop.f32.mrb[0].mxu0
    %v3335 = vadd.f32 %v2758, %v3334
    %v3336 = vpop.f32.mrb[0].mxu0
    %3337 = vmatprep.mubr.f32.mxu0 0.0
    %3338 = vmatmul.mubr.f32.gmra.mrb[0].mxu0 %v3050
    %v3339 = vpop.f32.mrb[0].mxu0
    %v3340 = vadd.f32 %v2763, %v3339
    %v3341 = vpop.f32.mrb[0].mxu0
    %3342 = vmatprep.mubr.f32.mxu0 0.0
    %3343 = vmatmul.mubr.f32.gmra.mrb[0].mxu0 %v3053
    %v3344 = vpop.f32.mrb[0].mxu0
    %v3345 = vadd.f32 %v2768, %v3344
    %v3346 = vpop.f32.mrb[0].mxu0
    %3347 = vmatprep.mubr.f32.mxu0 0.0
    %3348 = vmatmul.mubr.f32.gmra.mrb[0].mxu0 %v3056
    %v3349 = vpop.f32.mrb[0].mxu0
    %v3350 = vadd.f32 %v2773, %v3349
    %v3351 = vpop.f32.mrb[0].mxu0
    %3352 = vmatprep.mubr.f32.mxu0 0.0
    %3353 = vmatmul.mubr.f32.gmra.mrb[0].mxu0 %v3059
    %v3354 = vpop.f32.mrb[0].mxu0
    %v3355 = vadd.f32 %v2778, %v3354
    %v3356 = vpop.f32.mrb[0].mxu0
    %3357 = vmatprep.mubr.f32.mxu0 0.0
    %3358 = vmatmul.mubr.f32.gmra.mrb[0].mxu0 %v3062
    %v3359 = vpop.f32.mrb[0].mxu0
    %v3360 = vadd.f32 %v2783, %v3359
    %v3361 = vpop.f32.mrb[0].mxu0
    %3362 = vmatprep.mubr.f32.mxu0 0.0
    %3363 = vmatmul.mubr.f32.gmra.mrb[0].mxu0 %v3065
    %v3364 = vpop.f32.mrb[0].mxu0
    %v3365 = vadd.f32 %v2788, %v3364
    %v3366 = vpop.f32.mrb[0].mxu0
    %3367 = vmatprep.mubr.f32.mxu0 0.0
    %3368 = vmatmul.mubr.f32.gmra.mrb[0].mxu0 %v3068
    %v3369 = vpop.f32.mrb[0].mxu0
    %v3370 = vadd.f32 %v2793, %v3369
    %v3371 = vpop.f32.mrb[0].mxu0
    %3372 = vmatprep.mubr.f32.mxu0 0.0
    %3373 = vmatmul.mubr.f32.gmra.mrb[0].mxu0 %v3071
    %v3374 = vpop.f32.mrb[0].mxu0
    %v3375 = vadd.f32 %v2798, %v3374
    %v3376 = vpop.f32.mrb[0].mxu0
    %3377 = vmatprep.mubr.f32.mxu0 0.0
    %3378 = vmatmul.mubr.f32.gmra.mrb[0].mxu0 %v3074
    %v3379 = vpop.f32.mrb[0].mxu0
    %v3380 = vadd.f32 %v2803, %v3379
    %v3381 = vpop.f32.mrb[0].mxu0
    %3382 = vmatprep.mubr.f32.mxu0 0.0
    %3383 = vmatmul.mubr.f32.gmra.mrb[0].mxu0 %v3077
    %v3384 = vpop.f32.mrb[0].mxu0
    %v3385 = vadd.f32 %v2808, %v3384
    %v3386 = vpop.f32.mrb[0].mxu0
    %3387 = vmatprep.mubr.f32.mxu0 0.0
    %3388 = vmatmul.mubr.f32.gmra.mrb[0].mxu0 %v3080
    %v3389 = vpop.f32.mrb[0].mxu0
    %v3390 = vadd.f32 %v2813, %v3389
    %v3391 = vpop.f32.mrb[0].mxu0
    %3392 = vmatprep.mubr.f32.mxu0 0.0
    %3393 = vmatmul.mubr.f32.gmra.mrb[0].mxu0 %v3083
    %v3394 = vpop.f32.mrb[0].mxu0
    %v3395 = vadd.f32 %v2818, %v3394
    %v3396 = vpop.f32.mrb[0].mxu0
    %3397 = vmatprep.mubr.f32.mxu0 0.0
    %3398 = vmatmul.mubr.f32.gmra.mrb[0].mxu0 %v3086
    %v3399 = vpop.f32.mrb[0].mxu0
    %v3400 = vadd.f32 %v2823, %v3399
    %v3401 = vpop.f32.mrb[0].mxu0
    %3402 = vmatprep.mubr.f32.mxu0 0.0
    %3403 = vmatmul.mubr.f32.gmra.mrb[0].mxu0 %v3089
    %v3404 = vpop.f32.mrb[0].mxu0
    %v3405 = vadd.f32 %v2828, %v3404
    %v3406 = vpop.f32.mrb[0].mxu0
    %3407 = vmatprep.mubr.f32.mxu0 0.0
    %3408 = vmatmul.mubr.f32.gmra.mrb[0].mxu0 %v3092
    %v3409 = vpop.f32.mrb[0].mxu0
    %v3410 = vadd.f32 %v2833, %v3409
    %v3411 = vpop.f32.mrb[0].mxu0
    %3412 = vmatprep.mubr.f32.mxu0 0.0
    %3413 = vmatmul.mubr.f32.gmra.mrb[0].mxu0 %v3095
    %v3414 = vpop.f32.mrb[0].mxu0
    %v3415 = vadd.f32 %v2838, %v3414
    %v3416 = vpop.f32.mrb[0].mxu0
    %3417 = vmatprep.mubr.f32.mxu0 0.0
    %3418 = vmatmul.mubr.f32.gmra.mrb[0].mxu0 %v3098
    %v3419 = vpop.f32.mrb[0].mxu0
    %v3420 = vadd.f32 %v2843, %v3419
    %v3421 = vpop.f32.mrb[0].mxu0
    %3422 = vmatprep.mubr.f32.mxu0 0.0
    %3423 = vmatmul.mubr.f32.gmra.mrb[0].mxu0 %v3101
    %v3424 = vpop.f32.mrb[0].mxu0
    %v3425 = vadd.f32 %v2848, %v3424
    %v3426 = vpop.f32.mrb[0].mxu0
    %3427 = vmatprep.mubr.f32.mxu0 0.0
    %3428 = vmatmul.mubr.f32.gmra.mrb[0].mxu0 %v3104
    %v3429 = vpop.f32.mrb[0].mxu0
    %v3430 = vadd.f32 %v2853, %v3429
    %v3431 = vpop.f32.mrb[0].mxu0
    %3432 = vmatprep.mubr.f32.mxu0 0.0
    %3433 = vmatmul.mubr.f32.gmra.mrb[0].mxu0 %v3107
    %v3434 = vpop.f32.mrb[0].mxu0
    %v3435 = vadd.f32 %v2858, %v3434
    %v3436 = vpop.f32.mrb[0].mxu0
    %3437 = vmatprep.mubr.f32.mxu0 0.0
    %3438 = vmatmul.mubr.f32.gmra.mrb[0].mxu0 %v3110
    %v3439 = vpop.f32.mrb[0].mxu0
    %v3440 = vadd.f32 %v2863, %v3439
    %v3441 = vpop.f32.mrb[0].mxu0
    %3442 = vmatprep.mubr.f32.mxu0 0.0
    %3443 = vmatmul.mubr.f32.gmra.mrb[0].mxu0 %v3113
    %v3444 = vpop.f32.mrb[0].mxu0
    %v3445 = vadd.f32 %v2868, %v3444
    %v3446 = vpop.f32.mrb[0].mxu0
    %3447 = vmatprep.mubr.f32.mxu0 0.0
    %3448 = vmatmul.mubr.f32.gmra.mrb[0].mxu0 %v3116
    %v3449 = vpop.f32.mrb[0].mxu0
    %v3450 = vadd.f32 %v2873, %v3449
    %v3451 = vpop.f32.mrb[0].mxu0
    %3452 = vmatprep.mubr.f32.mxu0 0.0
    %3453 = vmatmul.mubr.f32.gmra.mrb[0].mxu0 %v3119
    %v3454 = vpop.f32.mrb[0].mxu0
    %v3455 = vadd.f32 %v2878, %v3454
    %v3456 = vpop.f32.mrb[0].mxu0
    %3457 = vmatprep.mubr.f32.mxu0 0.0
    %3458 = vmatmul.mubr.f32.gmra.mrb[0].mxu0 %v3122
    %v3459 = vpop.f32.mrb[0].mxu0
    %v3460 = vadd.f32 %v2883, %v3459
    %v3461 = vpop.f32.mrb[0].mxu0
    %3462 = vmatprep.mubr.f32.mxu0 0.0
    %3463 = vmatmul.mubr.f32.gmra.mrb[0].mxu0 %v3125
    %v3464 = vpop.f32.mrb[0].mxu0
    %v3465 = vadd.f32 %v2888, %v3464
    %v3466 = vpop.f32.mrb[0].mxu0
    %3467 = vmatprep.mubr.f32.mxu0 0.0
    %3468 = vmatmul.mubr.f32.gmra.mrb[0].mxu0 %v3128
    %v3469 = vpop.f32.mrb[0].mxu0
    %v3470 = vadd.f32 %v2893, %v3469
    %v3471 = vpop.f32.mrb[0].mxu0
    %3472 = vmatprep.mubr.f32.mxu0 0.0
    %3473 = vmatmul.mubr.f32.gmra.mrb[0].mxu0 %v3131
    %v3474 = vpop.f32.mrb[0].mxu0
    %v3475 = vadd.f32 %v2898, %v3474
    %v3476 = vpop.f32.mrb[0].mxu0
    %3477 = vmatprep.mubr.f32.mxu0 0.0
    %3478 = vmatmul.mubr.f32.gmra.mrb[0].mxu0 %v3134
    %v3479 = vpop.f32.mrb[0].mxu0
    %v3480 = vadd.f32 %v2903, %v3479
    %v3481 = vpop.f32.mrb[0].mxu0
    %3482 = vmatprep.mubr.f32.mxu0 0.0
    %3483 = vmatmul.mubr.f32.gmra.mrb[0].mxu0 %v3137
    %v3484 = vpop.f32.mrb[0].mxu0
    %v3485 = vadd.f32 %v2908, %v3484
    %v3486 = vpop.f32.mrb[0].mxu0
    %3487 = vmatprep.mubr.f32.mxu0 0.0
    %3488 = vmatmul.mubr.f32.gmra.mrb[0].mxu0 %v3140
    %v3489 = vpop.f32.mrb[0].mxu0
    %v3490 = vadd.f32 %v2913, %v3489
    %v3491 = vpop.f32.mrb[0].mxu0
    %3492 = vmatprep.mubr.f32.mxu0 0.0
    %3493 = vmatmul.mubr.f32.gmra.mrb[0].mxu0 %v3143
    %v3494 = vpop.f32.mrb[0].mxu0
    %v3495 = vadd.f32 %v2918, %v3494
    %v3496 = vpop.f32.mrb[0].mxu0
    %3497 = vmatprep.mubr.f32.mxu0 0.0
    %3498 = vmatmul.mubr.f32.gmra.mrb[0].mxu0 %v3146
    %v3499 = vpop.f32.mrb[0].mxu0
    %v3500 = vadd.f32 %v2923, %v3499
    %v3501 = vpop.f32.mrb[0].mxu0
    %3502 = vmatprep.mubr.f32.mxu0 0.0
    %3503 = vmatmul.mubr.f32.gmra.mrb[0].mxu0 %v3149
    %v3504 = vpop.f32.mrb[0].mxu0
    %v3505 = vadd.f32 %v2928, %v3504
    %v3506 = vpop.f32.mrb[0].mxu0
    %3507 = vmatprep.mubr.f32.mxu0 0.0
    %3508 = vmatmul.mubr.f32.gmra.mrb[0].mxu0 %v3152
    %v3509 = vpop.f32.mrb[0].mxu0
    %v3510 = vadd.f32 %v2933, %v3509
    %v3511 = vpop.f32.mrb[0].mxu0
    %3512 = vmatprep.mubr.f32.mxu0 0.0
    %3513 = vmatmul.mubr.f32.gmra.mrb[0].mxu0 %v3155
    %v3514 = vpop.f32.mrb[0].mxu0
    %v3515 = vadd.f32 %v2938, %v3514
    %v3516 = vpop.f32.mrb[0].mxu0
    %3517 = vmatprep.mubr.f32.mxu0 0.0
    %3518 = vmatmul.mubr.f32.gmra.mrb[0].mxu0 %v3158
    %v3519 = vpop.f32.mrb[0].mxu0
    %v3520 = vadd.f32 %v2943, %v3519
    %v3521 = vpop.f32.mrb[0].mxu0
    %3522 = vmatprep.mubr.f32.mxu0 0.0
    %3523 = vmatmul.mubr.f32.gmra.mrb[0].mxu0 %v3161
    %v3524 = vpop.f32.mrb[0].mxu0
    %v3525 = vadd.f32 %v2948, %v3524
    %v3526 = vpop.f32.mrb[0].mxu0
    %3527 = vmatprep.mubr.f32.mxu0 0.0
    %3528 = vmatmul.mubr.f32.gmra.mrb[0].mxu0 %v3164
    %v3529 = vpop.f32.mrb[0].mxu0
    %v3530 = vadd.f32 %v2953, %v3529
    %v3531 = vpop.f32.mrb[0].mxu0
    %3532 = vmatprep.mubr.f32.mxu0 0.0
    %3533 = vmatmul.mubr.f32.gmra.mrb[0].mxu0 %v3167
    %v3534 = vpop.f32.mrb[0].mxu0
    %v3535 = vadd.f32 %v2958, %v3534
    %v3536 = vpop.f32.mrb[0].mxu0
    %3537 = vmatprep.mubr.f32.mxu0 0.0
    %3538 = vmatmul.mubr.f32.gmra.mrb[0].mxu0 %v3170
    %v3539 = vpop.f32.mrb[0].mxu0
    %v3540 = vadd.f32 %v2963, %v3539
    %v3541 = vpop.f32.mrb[0].mxu0
    %3542 = vmatprep.mubr.f32.mxu0 0.0
    %3543 = vmatmul.mubr.f32.gmra.mrb[0].mxu0 %v3173
    %v3544 = vpop.f32.mrb[0].mxu0
    %v3545 = vadd.f32 %v2968, %v3544
    %v3546 = vpop.f32.mrb[0].mxu0
    %3547 = vmatprep.mubr.f32.mxu0 0.0
    %3548 = vmatmul.mubr.f32.gmra.mrb[0].mxu0 %v3176
    %v3549 = vpop.f32.mrb[0].mxu0
    %v3550 = vadd.f32 %v2973, %v3549
    %v3551 = vpop.f32.mrb[0].mxu0
    %3552 = vmatprep.mubr.f32.mxu0 0.0
    %3553 = vmatmul.mubr.f32.gmra.mrb[0].mxu0 %v3179
    %v3554 = vpop.f32.mrb[0].mxu0
    %v3555 = vadd.f32 %v2978, %v3554
    %v3556 = vpop.f32.mrb[0].mxu0
    %3557 = vmatprep.mubr.f32.mxu0 0.0
    %3558 = vmatmul.mubr.f32.gmra.mrb[0].mxu0 %v3182
    %v3559 = vpop.f32.mrb[0].mxu0
    %v3560 = vadd.f32 %v2983, %v3559
    %v3561 = vpop.f32.mrb[0].mxu0
    %3562 = vmatprep.mubr.f32.mxu0 0.0
    %3563 = vmatmul.mubr.f32.gmra.mrb[0].mxu0 %v3185
    %v3564 = vpop.f32.mrb[0].mxu0
    %v3565 = vadd.f32 %v2988, %v3564
    %v3566 = vpop.f32.mrb[0].mxu0
    %3567 = vmatprep.mubr.f32.mxu0 0.0
    %3568 = vmatmul.mubr.f32.gmra.mrb[0].mxu0 %v3188
    %v3569 = vpop.f32.mrb[0].mxu0
    %v3570 = vadd.f32 %v2993, %v3569
    %v3571 = vpop.f32.mrb[0].mxu0
    %3572 = vmatprep.mubr.f32.mxu0 0.0
    %3573 = vmatmul.mubr.f32.gmra.mrb[0].mxu0 %v3191
    %v3574 = vpop.f32.mrb[0].mxu0
    %v3575 = vadd.f32 %v2998, %v3574
    %v3576 = vpop.f32.mrb[0].mxu0
    %3577 = vdwg.mxu0
    %v3578 = vld [vmem:[#allocation2 + $0x2] sm:$0xff]
    %v3579 = vld [vmem:[#allocation2 + $0xa] sm:$0xff]
    %v3580 = vld [vmem:[#allocation2 + $0x1a] sm:$0xff]
    %v3581 = vld [vmem:[#allocation2 + $0x22] sm:$0xff]
    %v3582 = vld [vmem:[#allocation2 + $0x32] sm:$0xff]
    %v3583 = vld [vmem:[#allocation2 + $0x3a] sm:$0xff]
    %v3584 = vld [vmem:[#allocation2 + $0x4a] sm:$0xff]
    %v3585 = vld [vmem:[#allocation2 + $0x52] sm:$0xff]
    %v3586 = vld [vmem:[#allocation2 + $0x62] sm:$0xff]
    %v3587 = vld [vmem:[#allocation2 + $0x6a] sm:$0xff]
    %v3588 = vld [vmem:[#allocation2 + $0x7a] sm:$0xff]
    %v3589 = vld [vmem:[#allocation2 + $0x82] sm:$0xff]
    %v3590 = vld [vmem:[#allocation2 + $0x92] sm:$0xff]
    %v3591 = vld [vmem:[#allocation2 + $0x9a] sm:$0xff]
    %v3592 = vld [vmem:[#allocation2 + $0xaa] sm:$0xff]
    %v3593 = vld [vmem:[#allocation2 + $0xb2] sm:$0xff]
    %v3594 = vld [vmem:[#allocation2 + $0xc2] sm:$0xff]
    %v3595 = vld [vmem:[#allocation2 + $0xca] sm:$0xff]
    %v3596 = vld [vmem:[#allocation2 + $0xda] sm:$0xff]
    %v3597 = vld [vmem:[#allocation2 + $0xe2] sm:$0xff]
    %v3598 = vld [vmem:[#allocation2 + $0xf2] sm:$0xff]
    %v3599 = vld [vmem:[#allocation2 + $0xfa] sm:$0xff]
    %v3600 = vld [vmem:[#allocation2 + $0x10a] sm:$0xff]
    %v3601 = vld [vmem:[#allocation2 + $0x112] sm:$0xff]
    %v3602 = vld [vmem:[#allocation2 + $0x122] sm:$0xff]
    %v3603 = vld [vmem:[#allocation2 + $0x12a] sm:$0xff]
    %v3604 = vld [vmem:[#allocation2 + $0x13a] sm:$0xff]
    %v3605 = vld [vmem:[#allocation2 + $0x142] sm:$0xff]
    %v3606 = vld [vmem:[#allocation2 + $0x152] sm:$0xff]
    %v3607 = vld [vmem:[#allocation2 + $0x15a] sm:$0xff]
    %v3608 = vld [vmem:[#allocation2 + $0x16a] sm:$0xff]
    %v3609 = vld [vmem:[#allocation2 + $0x172] sm:$0xff]
    %v3610 = vld [vmem:[#allocation2 + $0x1b2] sm:$0xff]
    %v3611 = vld [vmem:[#allocation2 + $0x1ba] sm:$0xff]
    %v3612 = vld [vmem:[#allocation2 + $0x1ca] sm:$0xff]
    %v3613 = vld [vmem:[#allocation2 + $0x1d2] sm:$0xff]
    %v3614 = vld [vmem:[#allocation2 + $0x1e2] sm:$0xff]
    %v3615 = vld [vmem:[#allocation2 + $0x1ea] sm:$0xff]
    %v3616 = vld [vmem:[#allocation2 + $0x1fa] sm:$0xff]
    %v3617 = vld [vmem:[#allocation2 + $0x202] sm:$0xff]
    %v3618 = vld [vmem:[#allocation2 + $0x212] sm:$0xff]
    %v3619 = vld [vmem:[#allocation2 + $0x21a] sm:$0xff]
    %v3620 = vld [vmem:[#allocation2 + $0x22a] sm:$0xff]
    %v3621 = vld [vmem:[#allocation2 + $0x232] sm:$0xff]
    %v3622 = vld [vmem:[#allocation2 + $0x242] sm:$0xff]
    %v3623 = vld [vmem:[#allocation2 + $0x24a] sm:$0xff]
    %v3624 = vld [vmem:[#allocation2 + $0x25a] sm:$0xff]
    %v3625 = vld [vmem:[#allocation2 + $0x262] sm:$0xff]
    %v3626 = vld [vmem:[#allocation2 + $0x272] sm:$0xff]
    %v3627 = vld [vmem:[#allocation2 + $0x27a] sm:$0xff]
    %v3628 = vld [vmem:[#allocation2 + $0x28a] sm:$0xff]
    %v3629 = vld [vmem:[#allocation2 + $0x292] sm:$0xff]
    %v3630 = vld [vmem:[#allocation2 + $0x2a2] sm:$0xff]
    %v3631 = vld [vmem:[#allocation2 + $0x2aa] sm:$0xff]
    %v3632 = vld [vmem:[#allocation2 + $0x2ba] sm:$0xff]
    %v3633 = vld [vmem:[#allocation2 + $0x2c2] sm:$0xff]
    %v3634 = vld [vmem:[#allocation2 + $0x2d2] sm:$0xff]
    %v3635 = vld [vmem:[#allocation2 + $0x2da] sm:$0xff]
    %v3636 = vld [vmem:[#allocation2 + $0x2ea] sm:$0xff]
    %v3637 = vld [vmem:[#allocation2 + $0x2f2] sm:$0xff]
    %v3638 = vld [vmem:[#allocation2 + $0x302] sm:$0xff]
    %v3639 = vld [vmem:[#allocation2 + $0x30a] sm:$0xff]
    %v3640 = vld [vmem:[#allocation2 + $0x31a] sm:$0xff]
    %v3641 = vld [vmem:[#allocation2 + $0x322] sm:$0xff]
    %s3642 = scalar_lea.vmem [#allocation3], 64
    %v3643 = vld [vmem:[%s3642] sm:$0xff]
    %v3644 = vld [vmem:[%s3642 + $0x8] sm:$0xff]
    %v3645 = vld [vmem:[%s3642 + $0x10] sm:$0xff]
    %v3646 = vld [vmem:[%s3642 + $0x18] sm:$0xff]
    %v3648 = vsel %vm354, %v3578, 0
    %v3651 = vsel %vm354, %v3579, 0
    %v3654 = vsel %vm354, %v3580, 0
    %v3657 = vsel %vm354, %v3581, 0
    %v3660 = vsel %vm354, %v3582, 0
    %v3663 = vsel %vm354, %v3583, 0
    %v3666 = vsel %vm354, %v3584, 0
    %v3669 = vsel %vm354, %v3585, 0
    %v3672 = vsel %vm354, %v3586, 0
    %v3675 = vsel %vm354, %v3587, 0
    %v3678 = vsel %vm354, %v3588, 0
    %v3681 = vsel %vm354, %v3589, 0
    %v3684 = vsel %vm354, %v3590, 0
    %v3687 = vsel %vm354, %v3591, 0
    %v3690 = vsel %vm354, %v3592, 0
    %v3693 = vsel %vm354, %v3593, 0
    %v3696 = vsel %vm354, %v3594, 0
    %v3699 = vsel %vm354, %v3595, 0
    %v3702 = vsel %vm354, %v3596, 0
    %v3705 = vsel %vm354, %v3597, 0
    %v3708 = vsel %vm354, %v3598, 0
    %v3711 = vsel %vm354, %v3599, 0
    %v3714 = vsel %vm354, %v3600, 0
    %v3717 = vsel %vm354, %v3601, 0
    %v3720 = vsel %vm354, %v3602, 0
    %v3723 = vsel %vm354, %v3603, 0
    %v3726 = vsel %vm354, %v3604, 0
    %v3729 = vsel %vm354, %v3605, 0
    %v3732 = vsel %vm354, %v3606, 0
    %v3735 = vsel %vm354, %v3607, 0
    %v3738 = vsel %vm354, %v3608, 0
    %v3741 = vsel %vm354, %v3609, 0
    %v3744 = vsel %vm354, %v3610, 0
    %v3747 = vsel %vm354, %v3611, 0
    %v3750 = vsel %vm354, %v3612, 0
    %v3753 = vsel %vm354, %v3613, 0
    %v3756 = vsel %vm354, %v3614, 0
    %v3759 = vsel %vm354, %v3615, 0
    %v3762 = vsel %vm354, %v3616, 0
    %v3765 = vsel %vm354, %v3617, 0
    %v3768 = vsel %vm354, %v3618, 0
    %v3771 = vsel %vm354, %v3619, 0
    %v3774 = vsel %vm354, %v3620, 0
    %v3777 = vsel %vm354, %v3621, 0
    %v3780 = vsel %vm354, %v3622, 0
    %v3783 = vsel %vm354, %v3623, 0
    %v3786 = vsel %vm354, %v3624, 0
    %v3789 = vsel %vm354, %v3625, 0
    %v3792 = vsel %vm354, %v3626, 0
    %v3795 = vsel %vm354, %v3627, 0
    %v3798 = vsel %vm354, %v3628, 0
    %v3801 = vsel %vm354, %v3629, 0
    %v3804 = vsel %vm354, %v3630, 0
    %v3807 = vsel %vm354, %v3631, 0
    %v3810 = vsel %vm354, %v3632, 0
    %v3813 = vsel %vm354, %v3633, 0
    %v3816 = vsel %vm354, %v3634, 0
    %v3819 = vsel %vm354, %v3635, 0
    %v3822 = vsel %vm354, %v3636, 0
    %v3825 = vsel %vm354, %v3637, 0
    %v3828 = vsel %vm354, %v3638, 0
    %v3831 = vsel %vm354, %v3639, 0
    %v3834 = vsel %vm354, %v3640, 0
    %v3837 = vsel %vm354, %v3641, 0
    %3839 = vmatprep.subr.mxu0 0.0
    %3840 = vmatpush1.msra.mxu0 %v3643
    %3841 = vmatprep.subr.mxu0 0.0
    %3842 = vmatpush1.msra.mxu0 %v3644
    %3843 = vmatprep.subr.mxu0 0.0
    %3844 = vmatpush1.msra.mxu0 %v3645
    %3845 = vmatprep.subr.mxu0 0.0
    %3846 = vmatpush1.msra.mxu0 %v3646
    %3847 = vmatprep.subr.mxu0 0.0
    %3848 = vmatpush1.msra.mxu0 0.0
    %3849 = vmatprep.subr.mxu0 0.0
    %3850 = vmatpush1.msra.mxu0 0.0
    %3851 = vmatprep.subr.mxu0 0.0
    %3852 = vmatpush1.msra.mxu0 0.0
    %3853 = vmatprep.subr.mxu0 0.0
    %3854 = vmatpush1.msra.mxu0 0.0
    %3855 = vmatprep.subr.mxu0 0.0
    %3856 = vmatpush1.msra.mxu0 0.0
    %3857 = vmatprep.subr.mxu0 0.0
    %3858 = vmatpush1.msra.mxu0 0.0
    %3859 = vmatprep.subr.mxu0 0.0
    %3860 = vmatpush1.msra.mxu0 0.0
    %3861 = vmatprep.subr.mxu0 0.0
    %3862 = vmatpush1.msra.mxu0 0.0
    %3863 = vmatprep.subr.mxu0 0.0
    %3864 = vmatpush1.msra.mxu0 0.0
    %3865 = vmatprep.subr.mxu0 0.0
    %3866 = vmatpush1.msra.mxu0 0.0
    %3867 = vmatprep.subr.mxu0 0.0
    %3868 = vmatpush1.msra.mxu0 0.0
    %3869 = vmatprep.subr.mxu0 0.0
    %3870 = vmatpush1.msra.mxu0 0.0
    %3871 = vmatprep.subr.mxu0 0.0
    %3872 = vmatpush1.msra.mxu0 0.0
    %3873 = vmatprep.subr.mxu0 0.0
    %3874 = vmatpush1.msra.mxu0 0.0
    %3875 = vmatprep.subr.mxu0 0.0
    %3876 = vmatpush1.msra.mxu0 0.0
    %3877 = vmatprep.subr.mxu0 0.0
    %3878 = vmatpush1.msra.mxu0 0.0
    %3879 = vmatprep.subr.mxu0 0.0
    %3880 = vmatpush1.msra.mxu0 0.0
    %3881 = vmatprep.subr.mxu0 0.0
    %3882 = vmatpush1.msra.mxu0 0.0
    %3883 = vmatprep.subr.mxu0 0.0
    %3884 = vmatpush1.msra.mxu0 0.0
    %3885 = vmatprep.subr.mxu0 0.0
    %3886 = vmatpush1.msra.mxu0 0.0
    %3887 = vmatprep.subr.mxu0 0.0
    %3888 = vmatpush1.msra.mxu0 0.0
    %3889 = vmatprep.subr.mxu0 0.0
    %3890 = vmatpush1.msra.mxu0 0.0
    %3891 = vmatprep.subr.mxu0 0.0
    %3892 = vmatpush1.msra.mxu0 0.0
    %3893 = vmatprep.subr.mxu0 0.0
    %3894 = vmatpush1.msra.mxu0 0.0
    %3895 = vmatprep.subr.mxu0 0.0
    %3896 = vmatpush1.msra.mxu0 0.0
    %3897 = vmatprep.subr.mxu0 0.0
    %3898 = vmatpush1.msra.mxu0 0.0
    %3899 = vmatprep.subr.mxu0 0.0
    %3900 = vmatpush1.msra.mxu0 0.0
    %3901 = vmatprep.subr.mxu0 0.0
    %3902 = vmatpush1.msra.mxu0 0.0
    %3903 = vmatprep.mubr.f32.mxu0 0.0
    %3904 = vmatmul.mubr.f32.gmra.mrb[0].mxu0 %v3648
    %v3905 = vpop.f32.mrb[0].mxu0
    %v3906 = vadd.f32 0.0, %v3905
    %v3907 = vpop.f32.mrb[0].mxu0
    %3908 = vmatprep.mubr.f32.mxu0 0.0
    %3909 = vmatmul.mubr.f32.gmra.mrb[0].mxu0 %v3651
    %v3910 = vpop.f32.mrb[0].mxu0
    %v3911 = vadd.f32 0.0, %v3910
    %v3912 = vpop.f32.mrb[0].mxu0
    %3913 = vmatprep.mubr.f32.mxu0 0.0
    %3914 = vmatmul.mubr.f32.gmra.mrb[0].mxu0 %v3654
    %v3915 = vpop.f32.mrb[0].mxu0
    %v3916 = vadd.f32 0.0, %v3915
    %v3917 = vpop.f32.mrb[0].mxu0
    %3918 = vmatprep.mubr.f32.mxu0 0.0
    %3919 = vmatmul.mubr.f32.gmra.mrb[0].mxu0 %v3657
    %v3920 = vpop.f32.mrb[0].mxu0
    %v3921 = vadd.f32 0.0, %v3920
    %v3922 = vpop.f32.mrb[0].mxu0
    %3923 = vmatprep.mubr.f32.mxu0 0.0
    %3924 = vmatmul.mubr.f32.gmra.mrb[0].mxu0 %v3660
    %v3925 = vpop.f32.mrb[0].mxu0
    %v3926 = vadd.f32 0.0, %v3925
    %v3927 = vpop.f32.mrb[0].mxu0
    %3928 = vmatprep.mubr.f32.mxu0 0.0
    %3929 = vmatmul.mubr.f32.gmra.mrb[0].mxu0 %v3663
    %v3930 = vpop.f32.mrb[0].mxu0
    %v3931 = vadd.f32 0.0, %v3930
    %v3932 = vpop.f32.mrb[0].mxu0
    %3933 = vmatprep.mubr.f32.mxu0 0.0
    %3934 = vmatmul.mubr.f32.gmra.mrb[0].mxu0 %v3666
    %v3935 = vpop.f32.mrb[0].mxu0
    %v3936 = vadd.f32 0.0, %v3935
    %v3937 = vpop.f32.mrb[0].mxu0
    %3938 = vmatprep.mubr.f32.mxu0 0.0
    %3939 = vmatmul.mubr.f32.gmra.mrb[0].mxu0 %v3669
    %v3940 = vpop.f32.mrb[0].mxu0
    %v3941 = vadd.f32 0.0, %v3940
    %v3942 = vpop.f32.mrb[0].mxu0
    %3943 = vmatprep.mubr.f32.mxu0 0.0
    %3944 = vmatmul.mubr.f32.gmra.mrb[0].mxu0 %v3672
    %v3945 = vpop.f32.mrb[0].mxu0
    %v3946 = vadd.f32 0.0, %v3945
    %v3947 = vpop.f32.mrb[0].mxu0
    %3948 = vmatprep.mubr.f32.mxu0 0.0
    %3949 = vmatmul.mubr.f32.gmra.mrb[0].mxu0 %v3675
    %v3950 = vpop.f32.mrb[0].mxu0
    %v3951 = vadd.f32 0.0, %v3950
    %v3952 = vpop.f32.mrb[0].mxu0
    %3953 = vmatprep.mubr.f32.mxu0 0.0
    %3954 = vmatmul.mubr.f32.gmra.mrb[0].mxu0 %v3678
    %v3955 = vpop.f32.mrb[0].mxu0
    %v3956 = vadd.f32 0.0, %v3955
    %v3957 = vpop.f32.mrb[0].mxu0
    %3958 = vmatprep.mubr.f32.mxu0 0.0
    %3959 = vmatmul.mubr.f32.gmra.mrb[0].mxu0 %v3681
    %v3960 = vpop.f32.mrb[0].mxu0
    %v3961 = vadd.f32 0.0, %v3960
    %v3962 = vpop.f32.mrb[0].mxu0
    %3963 = vmatprep.mubr.f32.mxu0 0.0
    %3964 = vmatmul.mubr.f32.gmra.mrb[0].mxu0 %v3684
    %v3965 = vpop.f32.mrb[0].mxu0
    %v3966 = vadd.f32 0.0, %v3965
    %v3967 = vpop.f32.mrb[0].mxu0
    %3968 = vmatprep.mubr.f32.mxu0 0.0
    %3969 = vmatmul.mubr.f32.gmra.mrb[0].mxu0 %v3687
    %v3970 = vpop.f32.mrb[0].mxu0
    %v3971 = vadd.f32 0.0, %v3970
    %v3972 = vpop.f32.mrb[0].mxu0
    %3973 = vmatprep.mubr.f32.mxu0 0.0
    %3974 = vmatmul.mubr.f32.gmra.mrb[0].mxu0 %v3690
    %v3975 = vpop.f32.mrb[0].mxu0
    %v3976 = vadd.f32 0.0, %v3975
    %v3977 = vpop.f32.mrb[0].mxu0
    %3978 = vmatprep.mubr.f32.mxu0 0.0
    %3979 = vmatmul.mubr.f32.gmra.mrb[0].mxu0 %v3693
    %v3980 = vpop.f32.mrb[0].mxu0
    %v3981 = vadd.f32 0.0, %v3980
    %v3982 = vpop.f32.mrb[0].mxu0
    %3983 = vmatprep.mubr.f32.mxu0 0.0
    %3984 = vmatmul.mubr.f32.gmra.mrb[0].mxu0 %v3696
    %v3985 = vpop.f32.mrb[0].mxu0
    %v3986 = vadd.f32 0.0, %v3985
    %v3987 = vpop.f32.mrb[0].mxu0
    %3988 = vmatprep.mubr.f32.mxu0 0.0
    %3989 = vmatmul.mubr.f32.gmra.mrb[0].mxu0 %v3699
    %v3990 = vpop.f32.mrb[0].mxu0
    %v3991 = vadd.f32 0.0, %v3990
    %v3992 = vpop.f32.mrb[0].mxu0
    %3993 = vmatprep.mubr.f32.mxu0 0.0
    %3994 = vmatmul.mubr.f32.gmra.mrb[0].mxu0 %v3702
    %v3995 = vpop.f32.mrb[0].mxu0
    %v3996 = vadd.f32 0.0, %v3995
    %v3997 = vpop.f32.mrb[0].mxu0
    %3998 = vmatprep.mubr.f32.mxu0 0.0
    %3999 = vmatmul.mubr.f32.gmra.mrb[0].mxu0 %v3705
    %v4000 = vpop.f32.mrb[0].mxu0
    %v4001 = vadd.f32 0.0, %v4000
    %v4002 = vpop.f32.mrb[0].mxu0
    %4003 = vmatprep.mubr.f32.mxu0 0.0
    %4004 = vmatmul.mubr.f32.gmra.mrb[0].mxu0 %v3708
    %v4005 = vpop.f32.mrb[0].mxu0
    %v4006 = vadd.f32 0.0, %v4005
    %v4007 = vpop.f32.mrb[0].mxu0
    %4008 = vmatprep.mubr.f32.mxu0 0.0
    %4009 = vmatmul.mubr.f32.gmra.mrb[0].mxu0 %v3711
    %v4010 = vpop.f32.mrb[0].mxu0
    %v4011 = vadd.f32 0.0, %v4010
    %v4012 = vpop.f32.mrb[0].mxu0
    %4013 = vmatprep.mubr.f32.mxu0 0.0
    %4014 = vmatmul.mubr.f32.gmra.mrb[0].mxu0 %v3714
    %v4015 = vpop.f32.mrb[0].mxu0
    %v4016 = vadd.f32 0.0, %v4015
    %v4017 = vpop.f32.mrb[0].mxu0
    %4018 = vmatprep.mubr.f32.mxu0 0.0
    %4019 = vmatmul.mubr.f32.gmra.mrb[0].mxu0 %v3717
    %v4020 = vpop.f32.mrb[0].mxu0
    %v4021 = vadd.f32 0.0, %v4020
    %v4022 = vpop.f32.mrb[0].mxu0
    %4023 = vmatprep.mubr.f32.mxu0 0.0
    %4024 = vmatmul.mubr.f32.gmra.mrb[0].mxu0 %v3720
    %v4025 = vpop.f32.mrb[0].mxu0
    %v4026 = vadd.f32 0.0, %v4025
    %v4027 = vpop.f32.mrb[0].mxu0
    %4028 = vmatprep.mubr.f32.mxu0 0.0
    %4029 = vmatmul.mubr.f32.gmra.mrb[0].mxu0 %v3723
    %v4030 = vpop.f32.mrb[0].mxu0
    %v4031 = vadd.f32 0.0, %v4030
    %v4032 = vpop.f32.mrb[0].mxu0
    %4033 = vmatprep.mubr.f32.mxu0 0.0
    %4034 = vmatmul.mubr.f32.gmra.mrb[0].mxu0 %v3726
    %v4035 = vpop.f32.mrb[0].mxu0
    %v4036 = vadd.f32 0.0, %v4035
    %v4037 = vpop.f32.mrb[0].mxu0
    %4038 = vmatprep.mubr.f32.mxu0 0.0
    %4039 = vmatmul.mubr.f32.gmra.mrb[0].mxu0 %v3729
    %v4040 = vpop.f32.mrb[0].mxu0
    %v4041 = vadd.f32 0.0, %v4040
    %v4042 = vpop.f32.mrb[0].mxu0
    %4043 = vmatprep.mubr.f32.mxu0 0.0
    %4044 = vmatmul.mubr.f32.gmra.mrb[0].mxu0 %v3732
    %v4045 = vpop.f32.mrb[0].mxu0
    %v4046 = vadd.f32 0.0, %v4045
    %v4047 = vpop.f32.mrb[0].mxu0
    %4048 = vmatprep.mubr.f32.mxu0 0.0
    %4049 = vmatmul.mubr.f32.gmra.mrb[0].mxu0 %v3735
    %v4050 = vpop.f32.mrb[0].mxu0
    %v4051 = vadd.f32 0.0, %v4050
    %v4052 = vpop.f32.mrb[0].mxu0
    %4053 = vmatprep.mubr.f32.mxu0 0.0
    %4054 = vmatmul.mubr.f32.gmra.mrb[0].mxu0 %v3738
    %v4055 = vpop.f32.mrb[0].mxu0
    %v4056 = vadd.f32 0.0, %v4055
    %v4057 = vpop.f32.mrb[0].mxu0
    %4058 = vmatprep.mubr.f32.mxu0 0.0
    %4059 = vmatmul.mubr.f32.gmra.mrb[0].mxu0 %v3741
    %v4060 = vpop.f32.mrb[0].mxu0
    %v4061 = vadd.f32 0.0, %v4060
    %v4062 = vpop.f32.mrb[0].mxu0
    %4063 = vmatprep.mubr.f32.mxu0 0.0
    %4064 = vmatmul.mubr.f32.gmra.mrb[0].mxu0 %v3744
    %v4065 = vpop.f32.mrb[0].mxu0
    %v4066 = vadd.f32 0.0, %v4065
    %v4067 = vpop.f32.mrb[0].mxu0
    %4068 = vmatprep.mubr.f32.mxu0 0.0
    %4069 = vmatmul.mubr.f32.gmra.mrb[0].mxu0 %v3747
    %v4070 = vpop.f32.mrb[0].mxu0
    %v4071 = vadd.f32 0.0, %v4070
    %v4072 = vpop.f32.mrb[0].mxu0
    %4073 = vmatprep.mubr.f32.mxu0 0.0
    %4074 = vmatmul.mubr.f32.gmra.mrb[0].mxu0 %v3750
    %v4075 = vpop.f32.mrb[0].mxu0
    %v4076 = vadd.f32 0.0, %v4075
    %v4077 = vpop.f32.mrb[0].mxu0
    %4078 = vmatprep.mubr.f32.mxu0 0.0
    %4079 = vmatmul.mubr.f32.gmra.mrb[0].mxu0 %v3753
    %v4080 = vpop.f32.mrb[0].mxu0
    %v4081 = vadd.f32 0.0, %v4080
    %v4082 = vpop.f32.mrb[0].mxu0
    %4083 = vmatprep.mubr.f32.mxu0 0.0
    %4084 = vmatmul.mubr.f32.gmra.mrb[0].mxu0 %v3756
    %v4085 = vpop.f32.mrb[0].mxu0
    %v4086 = vadd.f32 0.0, %v4085
    %v4087 = vpop.f32.mrb[0].mxu0
    %4088 = vmatprep.mubr.f32.mxu0 0.0
    %4089 = vmatmul.mubr.f32.gmra.mrb[0].mxu0 %v3759
    %v4090 = vpop.f32.mrb[0].mxu0
    %v4091 = vadd.f32 0.0, %v4090
    %v4092 = vpop.f32.mrb[0].mxu0
    %4093 = vmatprep.mubr.f32.mxu0 0.0
    %4094 = vmatmul.mubr.f32.gmra.mrb[0].mxu0 %v3762
    %v4095 = vpop.f32.mrb[0].mxu0
    %v4096 = vadd.f32 0.0, %v4095
    %v4097 = vpop.f32.mrb[0].mxu0
    %4098 = vmatprep.mubr.f32.mxu0 0.0
    %4099 = vmatmul.mubr.f32.gmra.mrb[0].mxu0 %v3765
    %v4100 = vpop.f32.mrb[0].mxu0
    %v4101 = vadd.f32 0.0, %v4100
    %v4102 = vpop.f32.mrb[0].mxu0
    %4103 = vmatprep.mubr.f32.mxu0 0.0
    %4104 = vmatmul.mubr.f32.gmra.mrb[0].mxu0 %v3768
    %v4105 = vpop.f32.mrb[0].mxu0
    %v4106 = vadd.f32 0.0, %v4105
    %v4107 = vpop.f32.mrb[0].mxu0
    %4108 = vmatprep.mubr.f32.mxu0 0.0
    %4109 = vmatmul.mubr.f32.gmra.mrb[0].mxu0 %v3771
    %v4110 = vpop.f32.mrb[0].mxu0
    %v4111 = vadd.f32 0.0, %v4110
    %v4112 = vpop.f32.mrb[0].mxu0
    %4113 = vmatprep.mubr.f32.mxu0 0.0
    %4114 = vmatmul.mubr.f32.gmra.mrb[0].mxu0 %v3774
    %v4115 = vpop.f32.mrb[0].mxu0
    %v4116 = vadd.f32 0.0, %v4115
    %v4117 = vpop.f32.mrb[0].mxu0
    %4118 = vmatprep.mubr.f32.mxu0 0.0
    %4119 = vmatmul.mubr.f32.gmra.mrb[0].mxu0 %v3777
    %v4120 = vpop.f32.mrb[0].mxu0
    %v4121 = vadd.f32 0.0, %v4120
    %v4122 = vpop.f32.mrb[0].mxu0
    %4123 = vmatprep.mubr.f32.mxu0 0.0
    %4124 = vmatmul.mubr.f32.gmra.mrb[0].mxu0 %v3780
    %v4125 = vpop.f32.mrb[0].mxu0
    %v4126 = vadd.f32 0.0, %v4125
    %v4127 = vpop.f32.mrb[0].mxu0
    %4128 = vmatprep.mubr.f32.mxu0 0.0
    %4129 = vmatmul.mubr.f32.gmra.mrb[0].mxu0 %v3783
    %v4130 = vpop.f32.mrb[0].mxu0
    %v4131 = vadd.f32 0.0, %v4130
    %v4132 = vpop.f32.mrb[0].mxu0
    %4133 = vmatprep.mubr.f32.mxu0 0.0
    %4134 = vmatmul.mubr.f32.gmra.mrb[0].mxu0 %v3786
    %v4135 = vpop.f32.mrb[0].mxu0
    %v4136 = vadd.f32 0.0, %v4135
    %v4137 = vpop.f32.mrb[0].mxu0
    %4138 = vmatprep.mubr.f32.mxu0 0.0
    %4139 = vmatmul.mubr.f32.gmra.mrb[0].mxu0 %v3789
    %v4140 = vpop.f32.mrb[0].mxu0
    %v4141 = vadd.f32 0.0, %v4140
    %v4142 = vpop.f32.mrb[0].mxu0
    %4143 = vmatprep.mubr.f32.mxu0 0.0
    %4144 = vmatmul.mubr.f32.gmra.mrb[0].mxu0 %v3792
    %v4145 = vpop.f32.mrb[0].mxu0
    %v4146 = vadd.f32 0.0, %v4145
    %v4147 = vpop.f32.mrb[0].mxu0
    %4148 = vmatprep.mubr.f32.mxu0 0.0
    %4149 = vmatmul.mubr.f32.gmra.mrb[0].mxu0 %v3795
    %v4150 = vpop.f32.mrb[0].mxu0
    %v4151 = vadd.f32 0.0, %v4150
    %v4152 = vpop.f32.mrb[0].mxu0
    %4153 = vmatprep.mubr.f32.mxu0 0.0
    %4154 = vmatmul.mubr.f32.gmra.mrb[0].mxu0 %v3798
    %v4155 = vpop.f32.mrb[0].mxu0
    %v4156 = vadd.f32 0.0, %v4155
    %v4157 = vpop.f32.mrb[0].mxu0
    %4158 = vmatprep.mubr.f32.mxu0 0.0
    %4159 = vmatmul.mubr.f32.gmra.mrb[0].mxu0 %v3801
    %v4160 = vpop.f32.mrb[0].mxu0
    %v4161 = vadd.f32 0.0, %v4160
    %v4162 = vpop.f32.mrb[0].mxu0
    %4163 = vmatprep.mubr.f32.mxu0 0.0
    %4164 = vmatmul.mubr.f32.gmra.mrb[0].mxu0 %v3804
    %v4165 = vpop.f32.mrb[0].mxu0
    %v4166 = vadd.f32 0.0, %v4165
    %v4167 = vpop.f32.mrb[0].mxu0
    %4168 = vmatprep.mubr.f32.mxu0 0.0
    %4169 = vmatmul.mubr.f32.gmra.mrb[0].mxu0 %v3807
    %v4170 = vpop.f32.mrb[0].mxu0
    %v4171 = vadd.f32 0.0, %v4170
    %v4172 = vpop.f32.mrb[0].mxu0
    %4173 = vmatprep.mubr.f32.mxu0 0.0
    %4174 = vmatmul.mubr.f32.gmra.mrb[0].mxu0 %v3810
    %v4175 = vpop.f32.mrb[0].mxu0
    %v4176 = vadd.f32 0.0, %v4175
    %v4177 = vpop.f32.mrb[0].mxu0
    %4178 = vmatprep.mubr.f32.mxu0 0.0
    %4179 = vmatmul.mubr.f32.gmra.mrb[0].mxu0 %v3813
    %v4180 = vpop.f32.mrb[0].mxu0
    %v4181 = vadd.f32 0.0, %v4180
    %v4182 = vpop.f32.mrb[0].mxu0
    %4183 = vmatprep.mubr.f32.mxu0 0.0
    %4184 = vmatmul.mubr.f32.gmra.mrb[0].mxu0 %v3816
    %v4185 = vpop.f32.mrb[0].mxu0
    %v4186 = vadd.f32 0.0, %v4185
    %v4187 = vpop.f32.mrb[0].mxu0
    %4188 = vmatprep.mubr.f32.mxu0 0.0
    %4189 = vmatmul.mubr.f32.gmra.mrb[0].mxu0 %v3819
    %v4190 = vpop.f32.mrb[0].mxu0
    %v4191 = vadd.f32 0.0, %v4190
    %v4192 = vpop.f32.mrb[0].mxu0
    %4193 = vmatprep.mubr.f32.mxu0 0.0
    %4194 = vmatmul.mubr.f32.gmra.mrb[0].mxu0 %v3822
    %v4195 = vpop.f32.mrb[0].mxu0
    %v4196 = vadd.f32 0.0, %v4195
    %v4197 = vpop.f32.mrb[0].mxu0
    %4198 = vmatprep.mubr.f32.mxu0 0.0
    %4199 = vmatmul.mubr.f32.gmra.mrb[0].mxu0 %v3825
    %v4200 = vpop.f32.mrb[0].mxu0
    %v4201 = vadd.f32 0.0, %v4200
    %v4202 = vpop.f32.mrb[0].mxu0
    %4203 = vmatprep.mubr.f32.mxu0 0.0
    %4204 = vmatmul.mubr.f32.gmra.mrb[0].mxu0 %v3828
    %v4205 = vpop.f32.mrb[0].mxu0
    %v4206 = vadd.f32 0.0, %v4205
    %v4207 = vpop.f32.mrb[0].mxu0
    %4208 = vmatprep.mubr.f32.mxu0 0.0
    %4209 = vmatmul.mubr.f32.gmra.mrb[0].mxu0 %v3831
    %v4210 = vpop.f32.mrb[0].mxu0
    %v4211 = vadd.f32 0.0, %v4210
    %v4212 = vpop.f32.mrb[0].mxu0
    %4213 = vmatprep.mubr.f32.mxu0 0.0
    %4214 = vmatmul.mubr.f32.gmra.mrb[0].mxu0 %v3834
    %v4215 = vpop.f32.mrb[0].mxu0
    %v4216 = vadd.f32 0.0, %v4215
    %v4217 = vpop.f32.mrb[0].mxu0
    %4218 = vmatprep.mubr.f32.mxu0 0.0
    %4219 = vmatmul.mubr.f32.gmra.mrb[0].mxu0 %v3837
    %v4220 = vpop.f32.mrb[0].mxu0
    %v4221 = vadd.f32 0.0, %v4220
    %v4222 = vpop.f32.mrb[0].mxu0
    %4223 = vdwg.mxu0
    %v4224 = vadd.f32 %v3260, %v3906
    %v4225 = vadd.f32 %v3265, %v3911
    %v4226 = vadd.f32 %v3270, %v3916
    %v4227 = vadd.f32 %v3275, %v3921
    %v4228 = vadd.f32 %v3280, %v3926
    %v4229 = vadd.f32 %v3285, %v3931
    %v4230 = vadd.f32 %v3290, %v3936
    %v4231 = vadd.f32 %v3295, %v3941
    %v4232 = vadd.f32 %v3300, %v3946
    %v4233 = vadd.f32 %v3305, %v3951
    %v4234 = vadd.f32 %v3310, %v3956
    %v4235 = vadd.f32 %v3315, %v3961
    %v4236 = vadd.f32 %v3320, %v3966
    %v4237 = vadd.f32 %v3325, %v3971
    %v4238 = vadd.f32 %v3330, %v3976
    %v4239 = vadd.f32 %v3335, %v3981
    %v4240 = vadd.f32 %v3340, %v3986
    %v4241 = vadd.f32 %v3345, %v3991
    %v4242 = vadd.f32 %v3350, %v3996
    %v4243 = vadd.f32 %v3355, %v4001
    %v4244 = vadd.f32 %v3360, %v4006
    %v4245 = vadd.f32 %v3365, %v4011
    %v4246 = vadd.f32 %v3370, %v4016
    %v4247 = vadd.f32 %v3375, %v4021
    %v4248 = vadd.f32 %v3380, %v4026
    %v4249 = vadd.f32 %v3385, %v4031
    %v4250 = vadd.f32 %v3390, %v4036
    %v4251 = vadd.f32 %v3395, %v4041
    %v4252 = vadd.f32 %v3400, %v4046
    %v4253 = vadd.f32 %v3405, %v4051
    %v4254 = vadd.f32 %v3410, %v4056
    %v4255 = vadd.f32 %v3415, %v4061
    %v4256 = vadd.f32 %v3420, %v4066
    %v4257 = vadd.f32 %v3425, %v4071
    %v4258 = vadd.f32 %v3430, %v4076
    %v4259 = vadd.f32 %v3435, %v4081
    %v4260 = vadd.f32 %v3440, %v4086
    %v4261 = vadd.f32 %v3445, %v4091
    %v4262 = vadd.f32 %v3450, %v4096
    %v4263 = vadd.f32 %v3455, %v4101
    %v4264 = vadd.f32 %v3460, %v4106
    %v4265 = vadd.f32 %v3465, %v4111
    %v4266 = vadd.f32 %v3470, %v4116
    %v4267 = vadd.f32 %v3475, %v4121
    %v4268 = vadd.f32 %v3480, %v4126
    %v4269 = vadd.f32 %v3485, %v4131
    %v4270 = vadd.f32 %v3490, %v4136
    %v4271 = vadd.f32 %v3495, %v4141
    %v4272 = vadd.f32 %v3500, %v4146
    %v4273 = vadd.f32 %v3505, %v4151
    %v4274 = vadd.f32 %v3510, %v4156
    %v4275 = vadd.f32 %v3515, %v4161
    %v4276 = vadd.f32 %v3520, %v4166
    %v4277 = vadd.f32 %v3525, %v4171
    %v4278 = vadd.f32 %v3530, %v4176
    %v4279 = vadd.f32 %v3535, %v4181
    %v4280 = vadd.f32 %v3540, %v4186
    %v4281 = vadd.f32 %v3545, %v4191
    %v4282 = vadd.f32 %v3550, %v4196
    %v4283 = vadd.f32 %v3555, %v4201
    %v4284 = vadd.f32 %v3560, %v4206
    %v4285 = vadd.f32 %v3565, %v4211
    %v4286 = vadd.f32 %v3570, %v4216
    %v4287 = vadd.f32 %v3575, %v4221
    %v4288 = vld [vmem:[%s2222] sm:$0xff]
    %v4289 = vld [vmem:[%s2222 + $0x8] sm:$0xff]
    %v4290 = vld [vmem:[%s2222 + $0x18] sm:$0xff]
    %v4291 = vld [vmem:[%s2222 + $0x20] sm:$0xff]
    %v4292 = vld [vmem:[%s2222 + $0x30] sm:$0xff]
    %v4293 = vld [vmem:[%s2222 + $0x38] sm:$0xff]
    %v4294 = vld [vmem:[%s2222 + $0x48] sm:$0xff]
    %v4295 = vld [vmem:[%s2222 + $0x50] sm:$0xff]
    %v4296 = vld [vmem:[%s2222 + $0x60] sm:$0xff]
    %v4297 = vld [vmem:[%s2222 + $0x68] sm:$0xff]
    %v4298 = vld [vmem:[%s2222 + $0x78] sm:$0xff]
    %v4299 = vld [vmem:[%s2222 + $0x80] sm:$0xff]
    %v4300 = vld [vmem:[%s2222 + $0x90] sm:$0xff]
    %v4301 = vld [vmem:[%s2222 + $0x98] sm:$0xff]
    %v4302 = vld [vmem:[%s2222 + $0xa8] sm:$0xff]
    %v4303 = vld [vmem:[%s2222 + $0xb0] sm:$0xff]
    %v4304 = vld [vmem:[%s2222 + $0xc0] sm:$0xff]
    %v4305 = vld [vmem:[%s2222 + $0xc8] sm:$0xff]
    %v4306 = vld [vmem:[%s2222 + $0xd8] sm:$0xff]
    %v4307 = vld [vmem:[%s2222 + $0xe0] sm:$0xff]
    %v4308 = vld [vmem:[%s2222 + $0xf0] sm:$0xff]
    %v4309 = vld [vmem:[%s2222 + $0xf8] sm:$0xff]
    %v4310 = vld [vmem:[%s2222 + $0x108] sm:$0xff]
    %v4311 = vld [vmem:[%s2222 + $0x110] sm:$0xff]
    %v4312 = vld [vmem:[%s2222 + $0x120] sm:$0xff]
    %v4313 = vld [vmem:[%s2222 + $0x128] sm:$0xff]
    %v4314 = vld [vmem:[%s2222 + $0x138] sm:$0xff]
    %v4315 = vld [vmem:[%s2222 + $0x140] sm:$0xff]
    %v4316 = vld [vmem:[%s2222 + $0x150] sm:$0xff]
    %v4317 = vld [vmem:[%s2222 + $0x158] sm:$0xff]
    %v4318 = vld [vmem:[%s2222 + $0x168] sm:$0xff]
    %v4319 = vld [vmem:[%s2222 + $0x170] sm:$0xff]
    %v4320 = vld [vmem:[%s2222 + $0x1b0] sm:$0xff]
    %v4321 = vld [vmem:[%s2222 + $0x1b8] sm:$0xff]
    %v4322 = vld [vmem:[%s2222 + $0x1c8] sm:$0xff]
    %v4323 = vld [vmem:[%s2222 + $0x1d0] sm:$0xff]
    %v4324 = vld [vmem:[%s2222 + $0x1e0] sm:$0xff]
    %v4325 = vld [vmem:[%s2222 + $0x1e8] sm:$0xff]
    %v4326 = vld [vmem:[%s2222 + $0x1f8] sm:$0xff]
    %v4327 = vld [vmem:[%s2222 + $0x200] sm:$0xff]
    %v4328 = vld [vmem:[%s2222 + $0x210] sm:$0xff]
    %v4329 = vld [vmem:[%s2222 + $0x218] sm:$0xff]
    %v4330 = vld [vmem:[%s2222 + $0x228] sm:$0xff]
    %v4331 = vld [vmem:[%s2222 + $0x230] sm:$0xff]
    %v4332 = vld [vmem:[%s2222 + $0x240] sm:$0xff]
    %v4333 = vld [vmem:[%s2222 + $0x248] sm:$0xff]
    %v4334 = vld [vmem:[%s2222 + $0x258] sm:$0xff]
    %v4335 = vld [vmem:[%s2222 + $0x260] sm:$0xff]
    %v4336 = vld [vmem:[%s2222 + $0x270] sm:$0xff]
    %v4337 = vld [vmem:[%s2222 + $0x278] sm:$0xff]
    %v4338 = vld [vmem:[%s2222 + $0x288] sm:$0xff]
    %v4339 = vld [vmem:[%s2222 + $0x290] sm:$0xff]
    %v4340 = vld [vmem:[%s2222 + $0x2a0] sm:$0xff]
    %v4341 = vld [vmem:[%s2222 + $0x2a8] sm:$0xff]
    %v4342 = vld [vmem:[%s2222 + $0x2b8] sm:$0xff]
    %v4343 = vld [vmem:[%s2222 + $0x2c0] sm:$0xff]
    %v4344 = vld [vmem:[%s2222 + $0x2d0] sm:$0xff]
    %v4345 = vld [vmem:[%s2222 + $0x2d8] sm:$0xff]
    %v4346 = vld [vmem:[%s2222 + $0x2e8] sm:$0xff]
    %v4347 = vld [vmem:[%s2222 + $0x2f0] sm:$0xff]
    %v4348 = vld [vmem:[%s2222 + $0x300] sm:$0xff]
    %v4349 = vld [vmem:[%s2222 + $0x308] sm:$0xff]
    %v4350 = vld [vmem:[%s2222 + $0x318] sm:$0xff]
    %v4351 = vld [vmem:[%s2222 + $0x320] sm:$0xff]
    %s4352 = scalar_lea.vmem [#allocation3], 96
    %v4353 = vld [vmem:[%s4352] sm:$0xff]
    %v4354 = vld [vmem:[%s4352 + $0x8] sm:$0xff]
    %v4355 = vld [vmem:[%s4352 + $0x10] sm:$0xff]
    %v4356 = vld [vmem:[%s4352 + $0x18] sm:$0xff]
    %v4358 = vsel %vm354, %v4288, 0
    %v4361 = vsel %vm354, %v4289, 0
    %v4364 = vsel %vm354, %v4290, 0
    %v4367 = vsel %vm354, %v4291, 0
    %v4370 = vsel %vm354, %v4292, 0
    %v4373 = vsel %vm354, %v4293, 0
    %v4376 = vsel %vm354, %v4294, 0
    %v4379 = vsel %vm354, %v4295, 0
    %v4382 = vsel %vm354, %v4296, 0
    %v4385 = vsel %vm354, %v4297, 0
    %v4388 = vsel %vm354, %v4298, 0
    %v4391 = vsel %vm354, %v4299, 0
    %v4394 = vsel %vm354, %v4300, 0
    %v4397 = vsel %vm354, %v4301, 0
    %v4400 = vsel %vm354, %v4302, 0
    %v4403 = vsel %vm354, %v4303, 0
    %v4406 = vsel %vm354, %v4304, 0
    %v4409 = vsel %vm354, %v4305, 0
    %v4412 = vsel %vm354, %v4306, 0
    %v4415 = vsel %vm354, %v4307, 0
    %v4418 = vsel %vm354, %v4308, 0
    %v4421 = vsel %vm354, %v4309, 0
    %v4424 = vsel %vm354, %v4310, 0
    %v4427 = vsel %vm354, %v4311, 0
    %v4430 = vsel %vm354, %v4312, 0
    %v4433 = vsel %vm354, %v4313, 0
    %v4436 = vsel %vm354, %v4314, 0
    %v4439 = vsel %vm354, %v4315, 0
    %v4442 = vsel %vm354, %v4316, 0
    %v4445 = vsel %vm354, %v4317, 0
    %v4448 = vsel %vm354, %v4318, 0
    %v4451 = vsel %vm354, %v4319, 0
    %v4454 = vsel %vm354, %v4320, 0
    %v4457 = vsel %vm354, %v4321, 0
    %v4460 = vsel %vm354, %v4322, 0
    %v4463 = vsel %vm354, %v4323, 0
    %v4466 = vsel %vm354, %v4324, 0
    %v4469 = vsel %vm354, %v4325, 0
    %v4472 = vsel %vm354, %v4326, 0
    %v4475 = vsel %vm354, %v4327, 0
    %v4478 = vsel %vm354, %v4328, 0
    %v4481 = vsel %vm354, %v4329, 0
    %v4484 = vsel %vm354, %v4330, 0
    %v4487 = vsel %vm354, %v4331, 0
    %v4490 = vsel %vm354, %v4332, 0
    %v4493 = vsel %vm354, %v4333, 0
    %v4496 = vsel %vm354, %v4334, 0
    %v4499 = vsel %vm354, %v4335, 0
    %v4502 = vsel %vm354, %v4336, 0
    %v4505 = vsel %vm354, %v4337, 0
    %v4508 = vsel %vm354, %v4338, 0
    %v4511 = vsel %vm354, %v4339, 0
    %v4514 = vsel %vm354, %v4340, 0
    %v4517 = vsel %vm354, %v4341, 0
    %v4520 = vsel %vm354, %v4342, 0
    %v4523 = vsel %vm354, %v4343, 0
    %v4526 = vsel %vm354, %v4344, 0
    %v4529 = vsel %vm354, %v4345, 0
    %v4532 = vsel %vm354, %v4346, 0
    %v4535 = vsel %vm354, %v4347, 0
    %v4538 = vsel %vm354, %v4348, 0
    %v4541 = vsel %vm354, %v4349, 0
    %v4544 = vsel %vm354, %v4350, 0
    %v4547 = vsel %vm354, %v4351, 0
    %4549 = vmatprep.subr.mxu0 0.0
    %4550 = vmatpush1.msra.mxu0 %v4353
    %4551 = vmatprep.subr.mxu0 0.0
    %4552 = vmatpush1.msra.mxu0 %v4354
    %4553 = vmatprep.subr.mxu0 0.0
    %4554 = vmatpush1.msra.mxu0 %v4355
    %4555 = vmatprep.subr.mxu0 0.0
    %4556 = vmatpush1.msra.mxu0 %v4356
    %4557 = vmatprep.subr.mxu0 0.0
    %4558 = vmatpush1.msra.mxu0 0.0
    %4559 = vmatprep.subr.mxu0 0.0
    %4560 = vmatpush1.msra.mxu0 0.0
    %4561 = vmatprep.subr.mxu0 0.0
    %4562 = vmatpush1.msra.mxu0 0.0
    %4563 = vmatprep.subr.mxu0 0.0
    %4564 = vmatpush1.msra.mxu0 0.0
    %4565 = vmatprep.subr.mxu0 0.0
    %4566 = vmatpush1.msra.mxu0 0.0
    %4567 = vmatprep.subr.mxu0 0.0
    %4568 = vmatpush1.msra.mxu0 0.0
    %4569 = vmatprep.subr.mxu0 0.0
    %4570 = vmatpush1.msra.mxu0 0.0
    %4571 = vmatprep.subr.mxu0 0.0
    %4572 = vmatpush1.msra.mxu0 0.0
    %4573 = vmatprep.subr.mxu0 0.0
    %4574 = vmatpush1.msra.mxu0 0.0
    %4575 = vmatprep.subr.mxu0 0.0
    %4576 = vmatpush1.msra.mxu0 0.0
    %4577 = vmatprep.subr.mxu0 0.0
    %4578 = vmatpush1.msra.mxu0 0.0
    %4579 = vmatprep.subr.mxu0 0.0
    %4580 = vmatpush1.msra.mxu0 0.0
    %4581 = vmatprep.subr.mxu0 0.0
    %4582 = vmatpush1.msra.mxu0 0.0
    %4583 = vmatprep.subr.mxu0 0.0
    %4584 = vmatpush1.msra.mxu0 0.0
    %4585 = vmatprep.subr.mxu0 0.0
    %4586 = vmatpush1.msra.mxu0 0.0
    %4587 = vmatprep.subr.mxu0 0.0
    %4588 = vmatpush1.msra.mxu0 0.0
    %4589 = vmatprep.subr.mxu0 0.0
    %4590 = vmatpush1.msra.mxu0 0.0
    %4591 = vmatprep.subr.mxu0 0.0
    %4592 = vmatpush1.msra.mxu0 0.0
    %4593 = vmatprep.subr.mxu0 0.0
    %4594 = vmatpush1.msra.mxu0 0.0
    %4595 = vmatprep.subr.mxu0 0.0
    %4596 = vmatpush1.msra.mxu0 0.0
    %4597 = vmatprep.subr.mxu0 0.0
    %4598 = vmatpush1.msra.mxu0 0.0
    %4599 = vmatprep.subr.mxu0 0.0
    %4600 = vmatpush1.msra.mxu0 0.0
    %4601 = vmatprep.subr.mxu0 0.0
    %4602 = vmatpush1.msra.mxu0 0.0
    %4603 = vmatprep.subr.mxu0 0.0
    %4604 = vmatpush1.msra.mxu0 0.0
    %4605 = vmatprep.subr.mxu0 0.0
    %4606 = vmatpush1.msra.mxu0 0.0
    %4607 = vmatprep.subr.mxu0 0.0
    %4608 = vmatpush1.msra.mxu0 0.0
    %4609 = vmatprep.subr.mxu0 0.0
    %4610 = vmatpush1.msra.mxu0 0.0
    %4611 = vmatprep.subr.mxu0 0.0
    %4612 = vmatpush1.msra.mxu0 0.0
    %4613 = vmatprep.mubr.f32.mxu0 0.0
    %4614 = vmatmul.mubr.f32.gmra.mrb[0].mxu0 %v4358
    %v4615 = vpop.f32.mrb[0].mxu0
    %v4616 = vadd.f32 0.0, %v4615
    %v4617 = vpop.f32.mrb[0].mxu0
    %4618 = vmatprep.mubr.f32.mxu0 0.0
    %4619 = vmatmul.mubr.f32.gmra.mrb[0].mxu0 %v4361
    %v4620 = vpop.f32.mrb[0].mxu0
    %v4621 = vadd.f32 0.0, %v4620
    %v4622 = vpop.f32.mrb[0].mxu0
    %4623 = vmatprep.mubr.f32.mxu0 0.0
    %4624 = vmatmul.mubr.f32.gmra.mrb[0].mxu0 %v4364
    %v4625 = vpop.f32.mrb[0].mxu0
    %v4626 = vadd.f32 0.0, %v4625
    %v4627 = vpop.f32.mrb[0].mxu0
    %4628 = vmatprep.mubr.f32.mxu0 0.0
    %4629 = vmatmul.mubr.f32.gmra.mrb[0].mxu0 %v4367
    %v4630 = vpop.f32.mrb[0].mxu0
    %v4631 = vadd.f32 0.0, %v4630
    %v4632 = vpop.f32.mrb[0].mxu0
    %4633 = vmatprep.mubr.f32.mxu0 0.0
    %4634 = vmatmul.mubr.f32.gmra.mrb[0].mxu0 %v4370
    %v4635 = vpop.f32.mrb[0].mxu0
    %v4636 = vadd.f32 0.0, %v4635
    %v4637 = vpop.f32.mrb[0].mxu0
    %4638 = vmatprep.mubr.f32.mxu0 0.0
    %4639 = vmatmul.mubr.f32.gmra.mrb[0].mxu0 %v4373
    %v4640 = vpop.f32.mrb[0].mxu0
    %v4641 = vadd.f32 0.0, %v4640
    %v4642 = vpop.f32.mrb[0].mxu0
    %4643 = vmatprep.mubr.f32.mxu0 0.0
    %4644 = vmatmul.mubr.f32.gmra.mrb[0].mxu0 %v4376
    %v4645 = vpop.f32.mrb[0].mxu0
    %v4646 = vadd.f32 0.0, %v4645
    %v4647 = vpop.f32.mrb[0].mxu0
    %4648 = vmatprep.mubr.f32.mxu0 0.0
    %4649 = vmatmul.mubr.f32.gmra.mrb[0].mxu0 %v4379
    %v4650 = vpop.f32.mrb[0].mxu0
    %v4651 = vadd.f32 0.0, %v4650
    %v4652 = vpop.f32.mrb[0].mxu0
    %4653 = vmatprep.mubr.f32.mxu0 0.0
    %4654 = vmatmul.mubr.f32.gmra.mrb[0].mxu0 %v4382
    %v4655 = vpop.f32.mrb[0].mxu0
    %v4656 = vadd.f32 0.0, %v4655
    %v4657 = vpop.f32.mrb[0].mxu0
    %4658 = vmatprep.mubr.f32.mxu0 0.0
    %4659 = vmatmul.mubr.f32.gmra.mrb[0].mxu0 %v4385
    %v4660 = vpop.f32.mrb[0].mxu0
    %v4661 = vadd.f32 0.0, %v4660
    %v4662 = vpop.f32.mrb[0].mxu0
    %4663 = vmatprep.mubr.f32.mxu0 0.0
    %4664 = vmatmul.mubr.f32.gmra.mrb[0].mxu0 %v4388
    %v4665 = vpop.f32.mrb[0].mxu0
    %v4666 = vadd.f32 0.0, %v4665
    %v4667 = vpop.f32.mrb[0].mxu0
    %4668 = vmatprep.mubr.f32.mxu0 0.0
    %4669 = vmatmul.mubr.f32.gmra.mrb[0].mxu0 %v4391
    %v4670 = vpop.f32.mrb[0].mxu0
    %v4671 = vadd.f32 0.0, %v4670
    %v4672 = vpop.f32.mrb[0].mxu0
    %4673 = vmatprep.mubr.f32.mxu0 0.0
    %4674 = vmatmul.mubr.f32.gmra.mrb[0].mxu0 %v4394
    %v4675 = vpop.f32.mrb[0].mxu0
    %v4676 = vadd.f32 0.0, %v4675
    %v4677 = vpop.f32.mrb[0].mxu0
    %4678 = vmatprep.mubr.f32.mxu0 0.0
    %4679 = vmatmul.mubr.f32.gmra.mrb[0].mxu0 %v4397
    %v4680 = vpop.f32.mrb[0].mxu0
    %v4681 = vadd.f32 0.0, %v4680
    %v4682 = vpop.f32.mrb[0].mxu0
    %4683 = vmatprep.mubr.f32.mxu0 0.0
    %4684 = vmatmul.mubr.f32.gmra.mrb[0].mxu0 %v4400
    %v4685 = vpop.f32.mrb[0].mxu0
    %v4686 = vadd.f32 0.0, %v4685
    %v4687 = vpop.f32.mrb[0].mxu0
    %4688 = vmatprep.mubr.f32.mxu0 0.0
    %4689 = vmatmul.mubr.f32.gmra.mrb[0].mxu0 %v4403
    %v4690 = vpop.f32.mrb[0].mxu0
    %v4691 = vadd.f32 0.0, %v4690
    %v4692 = vpop.f32.mrb[0].mxu0
    %4693 = vmatprep.mubr.f32.mxu0 0.0
    %4694 = vmatmul.mubr.f32.gmra.mrb[0].mxu0 %v4406
    %v4695 = vpop.f32.mrb[0].mxu0
    %v4696 = vadd.f32 0.0, %v4695
    %v4697 = vpop.f32.mrb[0].mxu0
    %4698 = vmatprep.mubr.f32.mxu0 0.0
    %4699 = vmatmul.mubr.f32.gmra.mrb[0].mxu0 %v4409
    %v4700 = vpop.f32.mrb[0].mxu0
    %v4701 = vadd.f32 0.0, %v4700
    %v4702 = vpop.f32.mrb[0].mxu0
    %4703 = vmatprep.mubr.f32.mxu0 0.0
    %4704 = vmatmul.mubr.f32.gmra.mrb[0].mxu0 %v4412
    %v4705 = vpop.f32.mrb[0].mxu0
    %v4706 = vadd.f32 0.0, %v4705
    %v4707 = vpop.f32.mrb[0].mxu0
    %4708 = vmatprep.mubr.f32.mxu0 0.0
    %4709 = vmatmul.mubr.f32.gmra.mrb[0].mxu0 %v4415
    %v4710 = vpop.f32.mrb[0].mxu0
    %v4711 = vadd.f32 0.0, %v4710
    %v4712 = vpop.f32.mrb[0].mxu0
    %4713 = vmatprep.mubr.f32.mxu0 0.0
    %4714 = vmatmul.mubr.f32.gmra.mrb[0].mxu0 %v4418
    %v4715 = vpop.f32.mrb[0].mxu0
    %v4716 = vadd.f32 0.0, %v4715
    %v4717 = vpop.f32.mrb[0].mxu0
    %4718 = vmatprep.mubr.f32.mxu0 0.0
    %4719 = vmatmul.mubr.f32.gmra.mrb[0].mxu0 %v4421
    %v4720 = vpop.f32.mrb[0].mxu0
    %v4721 = vadd.f32 0.0, %v4720
    %v4722 = vpop.f32.mrb[0].mxu0
    %4723 = vmatprep.mubr.f32.mxu0 0.0
    %4724 = vmatmul.mubr.f32.gmra.mrb[0].mxu0 %v4424
    %v4725 = vpop.f32.mrb[0].mxu0
    %v4726 = vadd.f32 0.0, %v4725
    %v4727 = vpop.f32.mrb[0].mxu0
    %4728 = vmatprep.mubr.f32.mxu0 0.0
    %4729 = vmatmul.mubr.f32.gmra.mrb[0].mxu0 %v4427
    %v4730 = vpop.f32.mrb[0].mxu0
    %v4731 = vadd.f32 0.0, %v4730
    %v4732 = vpop.f32.mrb[0].mxu0
    %4733 = vmatprep.mubr.f32.mxu0 0.0
    %4734 = vmatmul.mubr.f32.gmra.mrb[0].mxu0 %v4430
    %v4735 = vpop.f32.mrb[0].mxu0
    %v4736 = vadd.f32 0.0, %v4735
    %v4737 = vpop.f32.mrb[0].mxu0
    %4738 = vmatprep.mubr.f32.mxu0 0.0
    %4739 = vmatmul.mubr.f32.gmra.mrb[0].mxu0 %v4433
    %v4740 = vpop.f32.mrb[0].mxu0
    %v4741 = vadd.f32 0.0, %v4740
    %v4742 = vpop.f32.mrb[0].mxu0
    %4743 = vmatprep.mubr.f32.mxu0 0.0
    %4744 = vmatmul.mubr.f32.gmra.mrb[0].mxu0 %v4436
    %v4745 = vpop.f32.mrb[0].mxu0
    %v4746 = vadd.f32 0.0, %v4745
    %v4747 = vpop.f32.mrb[0].mxu0
    %4748 = vmatprep.mubr.f32.mxu0 0.0
    %4749 = vmatmul.mubr.f32.gmra.mrb[0].mxu0 %v4439
    %v4750 = vpop.f32.mrb[0].mxu0
    %v4751 = vadd.f32 0.0, %v4750
    %v4752 = vpop.f32.mrb[0].mxu0
    %4753 = vmatprep.mubr.f32.mxu0 0.0
    %4754 = vmatmul.mubr.f32.gmra.mrb[0].mxu0 %v4442
    %v4755 = vpop.f32.mrb[0].mxu0
    %v4756 = vadd.f32 0.0, %v4755
    %v4757 = vpop.f32.mrb[0].mxu0
    %4758 = vmatprep.mubr.f32.mxu0 0.0
    %4759 = vmatmul.mubr.f32.gmra.mrb[0].mxu0 %v4445
    %v4760 = vpop.f32.mrb[0].mxu0
    %v4761 = vadd.f32 0.0, %v4760
    %v4762 = vpop.f32.mrb[0].mxu0
    %4763 = vmatprep.mubr.f32.mxu0 0.0
    %4764 = vmatmul.mubr.f32.gmra.mrb[0].mxu0 %v4448
    %v4765 = vpop.f32.mrb[0].mxu0
    %v4766 = vadd.f32 0.0, %v4765
    %v4767 = vpop.f32.mrb[0].mxu0
    %4768 = vmatprep.mubr.f32.mxu0 0.0
    %4769 = vmatmul.mubr.f32.gmra.mrb[0].mxu0 %v4451
    %v4770 = vpop.f32.mrb[0].mxu0
    %v4771 = vadd.f32 0.0, %v4770
    %v4772 = vpop.f32.mrb[0].mxu0
    %4773 = vmatprep.mubr.f32.mxu0 0.0
    %4774 = vmatmul.mubr.f32.gmra.mrb[0].mxu0 %v4454
    %v4775 = vpop.f32.mrb[0].mxu0
    %v4776 = vadd.f32 0.0, %v4775
    %v4777 = vpop.f32.mrb[0].mxu0
    %4778 = vmatprep.mubr.f32.mxu0 0.0
    %4779 = vmatmul.mubr.f32.gmra.mrb[0].mxu0 %v4457
    %v4780 = vpop.f32.mrb[0].mxu0
    %v4781 = vadd.f32 0.0, %v4780
    %v4782 = vpop.f32.mrb[0].mxu0
    %4783 = vmatprep.mubr.f32.mxu0 0.0
    %4784 = vmatmul.mubr.f32.gmra.mrb[0].mxu0 %v4460
    %v4785 = vpop.f32.mrb[0].mxu0
    %v4786 = vadd.f32 0.0, %v4785
    %v4787 = vpop.f32.mrb[0].mxu0
    %4788 = vmatprep.mubr.f32.mxu0 0.0
    %4789 = vmatmul.mubr.f32.gmra.mrb[0].mxu0 %v4463
    %v4790 = vpop.f32.mrb[0].mxu0
    %v4791 = vadd.f32 0.0, %v4790
    %v4792 = vpop.f32.mrb[0].mxu0
    %4793 = vmatprep.mubr.f32.mxu0 0.0
    %4794 = vmatmul.mubr.f32.gmra.mrb[0].mxu0 %v4466
    %v4795 = vpop.f32.mrb[0].mxu0
    %v4796 = vadd.f32 0.0, %v4795
    %v4797 = vpop.f32.mrb[0].mxu0
    %4798 = vmatprep.mubr.f32.mxu0 0.0
    %4799 = vmatmul.mubr.f32.gmra.mrb[0].mxu0 %v4469
    %v4800 = vpop.f32.mrb[0].mxu0
    %v4801 = vadd.f32 0.0, %v4800
    %v4802 = vpop.f32.mrb[0].mxu0
    %4803 = vmatprep.mubr.f32.mxu0 0.0
    %4804 = vmatmul.mubr.f32.gmra.mrb[0].mxu0 %v4472
    %v4805 = vpop.f32.mrb[0].mxu0
    %v4806 = vadd.f32 0.0, %v4805
    %v4807 = vpop.f32.mrb[0].mxu0
    %4808 = vmatprep.mubr.f32.mxu0 0.0
    %4809 = vmatmul.mubr.f32.gmra.mrb[0].mxu0 %v4475
    %v4810 = vpop.f32.mrb[0].mxu0
    %v4811 = vadd.f32 0.0, %v4810
    %v4812 = vpop.f32.mrb[0].mxu0
    %4813 = vmatprep.mubr.f32.mxu0 0.0
    %4814 = vmatmul.mubr.f32.gmra.mrb[0].mxu0 %v4478
    %v4815 = vpop.f32.mrb[0].mxu0
    %v4816 = vadd.f32 0.0, %v4815
    %v4817 = vpop.f32.mrb[0].mxu0
    %4818 = vmatprep.mubr.f32.mxu0 0.0
    %4819 = vmatmul.mubr.f32.gmra.mrb[0].mxu0 %v4481
    %v4820 = vpop.f32.mrb[0].mxu0
    %v4821 = vadd.f32 0.0, %v4820
    %v4822 = vpop.f32.mrb[0].mxu0
    %4823 = vmatprep.mubr.f32.mxu0 0.0
    %4824 = vmatmul.mubr.f32.gmra.mrb[0].mxu0 %v4484
    %v4825 = vpop.f32.mrb[0].mxu0
    %v4826 = vadd.f32 0.0, %v4825
    %v4827 = vpop.f32.mrb[0].mxu0
    %4828 = vmatprep.mubr.f32.mxu0 0.0
    %4829 = vmatmul.mubr.f32.gmra.mrb[0].mxu0 %v4487
    %v4830 = vpop.f32.mrb[0].mxu0
    %v4831 = vadd.f32 0.0, %v4830
    %v4832 = vpop.f32.mrb[0].mxu0
    %4833 = vmatprep.mubr.f32.mxu0 0.0
    %4834 = vmatmul.mubr.f32.gmra.mrb[0].mxu0 %v4490
    %v4835 = vpop.f32.mrb[0].mxu0
    %v4836 = vadd.f32 0.0, %v4835
    %v4837 = vpop.f32.mrb[0].mxu0
    %4838 = vmatprep.mubr.f32.mxu0 0.0
    %4839 = vmatmul.mubr.f32.gmra.mrb[0].mxu0 %v4493
    %v4840 = vpop.f32.mrb[0].mxu0
    %v4841 = vadd.f32 0.0, %v4840
    %v4842 = vpop.f32.mrb[0].mxu0
    %4843 = vmatprep.mubr.f32.mxu0 0.0
    %4844 = vmatmul.mubr.f32.gmra.mrb[0].mxu0 %v4496
    %v4845 = vpop.f32.mrb[0].mxu0
    %v4846 = vadd.f32 0.0, %v4845
    %v4847 = vpop.f32.mrb[0].mxu0
    %4848 = vmatprep.mubr.f32.mxu0 0.0
    %4849 = vmatmul.mubr.f32.gmra.mrb[0].mxu0 %v4499
    %v4850 = vpop.f32.mrb[0].mxu0
    %v4851 = vadd.f32 0.0, %v4850
    %v4852 = vpop.f32.mrb[0].mxu0
    %4853 = vmatprep.mubr.f32.mxu0 0.0
    %4854 = vmatmul.mubr.f32.gmra.mrb[0].mxu0 %v4502
    %v4855 = vpop.f32.mrb[0].mxu0
    %v4856 = vadd.f32 0.0, %v4855
    %v4857 = vpop.f32.mrb[0].mxu0
    %4858 = vmatprep.mubr.f32.mxu0 0.0
    %4859 = vmatmul.mubr.f32.gmra.mrb[0].mxu0 %v4505
    %v4860 = vpop.f32.mrb[0].mxu0
    %v4861 = vadd.f32 0.0, %v4860
    %v4862 = vpop.f32.mrb[0].mxu0
    %4863 = vmatprep.mubr.f32.mxu0 0.0
    %4864 = vmatmul.mubr.f32.gmra.mrb[0].mxu0 %v4508
    %v4865 = vpop.f32.mrb[0].mxu0
    %v4866 = vadd.f32 0.0, %v4865
    %v4867 = vpop.f32.mrb[0].mxu0
    %4868 = vmatprep.mubr.f32.mxu0 0.0
    %4869 = vmatmul.mubr.f32.gmra.mrb[0].mxu0 %v4511
    %v4870 = vpop.f32.mrb[0].mxu0
    %v4871 = vadd.f32 0.0, %v4870
    %v4872 = vpop.f32.mrb[0].mxu0
    %4873 = vmatprep.mubr.f32.mxu0 0.0
    %4874 = vmatmul.mubr.f32.gmra.mrb[0].mxu0 %v4514
    %v4875 = vpop.f32.mrb[0].mxu0
    %v4876 = vadd.f32 0.0, %v4875
    %v4877 = vpop.f32.mrb[0].mxu0
    %4878 = vmatprep.mubr.f32.mxu0 0.0
    %4879 = vmatmul.mubr.f32.gmra.mrb[0].mxu0 %v4517
    %v4880 = vpop.f32.mrb[0].mxu0
    %v4881 = vadd.f32 0.0, %v4880
    %v4882 = vpop.f32.mrb[0].mxu0
    %4883 = vmatprep.mubr.f32.mxu0 0.0
    %4884 = vmatmul.mubr.f32.gmra.mrb[0].mxu0 %v4520
    %v4885 = vpop.f32.mrb[0].mxu0
    %v4886 = vadd.f32 0.0, %v4885
    %v4887 = vpop.f32.mrb[0].mxu0
    %4888 = vmatprep.mubr.f32.mxu0 0.0
    %4889 = vmatmul.mubr.f32.gmra.mrb[0].mxu0 %v4523
    %v4890 = vpop.f32.mrb[0].mxu0
    %v4891 = vadd.f32 0.0, %v4890
    %v4892 = vpop.f32.mrb[0].mxu0
    %4893 = vmatprep.mubr.f32.mxu0 0.0
    %4894 = vmatmul.mubr.f32.gmra.mrb[0].mxu0 %v4526
    %v4895 = vpop.f32.mrb[0].mxu0
    %v4896 = vadd.f32 0.0, %v4895
    %v4897 = vpop.f32.mrb[0].mxu0
    %4898 = vmatprep.mubr.f32.mxu0 0.0
    %4899 = vmatmul.mubr.f32.gmra.mrb[0].mxu0 %v4529
    %v4900 = vpop.f32.mrb[0].mxu0
    %v4901 = vadd.f32 0.0, %v4900
    %v4902 = vpop.f32.mrb[0].mxu0
    %4903 = vmatprep.mubr.f32.mxu0 0.0
    %4904 = vmatmul.mubr.f32.gmra.mrb[0].mxu0 %v4532
    %v4905 = vpop.f32.mrb[0].mxu0
    %v4906 = vadd.f32 0.0, %v4905
    %v4907 = vpop.f32.mrb[0].mxu0
    %4908 = vmatprep.mubr.f32.mxu0 0.0
    %4909 = vmatmul.mubr.f32.gmra.mrb[0].mxu0 %v4535
    %v4910 = vpop.f32.mrb[0].mxu0
    %v4911 = vadd.f32 0.0, %v4910
    %v4912 = vpop.f32.mrb[0].mxu0
    %4913 = vmatprep.mubr.f32.mxu0 0.0
    %4914 = vmatmul.mubr.f32.gmra.mrb[0].mxu0 %v4538
    %v4915 = vpop.f32.mrb[0].mxu0
    %v4916 = vadd.f32 0.0, %v4915
    %v4917 = vpop.f32.mrb[0].mxu0
    %4918 = vmatprep.mubr.f32.mxu0 0.0
    %4919 = vmatmul.mubr.f32.gmra.mrb[0].mxu0 %v4541
    %v4920 = vpop.f32.mrb[0].mxu0
    %v4921 = vadd.f32 0.0, %v4920
    %v4922 = vpop.f32.mrb[0].mxu0
    %4923 = vmatprep.mubr.f32.mxu0 0.0
    %4924 = vmatmul.mubr.f32.gmra.mrb[0].mxu0 %v4544
    %v4925 = vpop.f32.mrb[0].mxu0
    %v4926 = vadd.f32 0.0, %v4925
    %v4927 = vpop.f32.mrb[0].mxu0
    %4928 = vmatprep.mubr.f32.mxu0 0.0
    %4929 = vmatmul.mubr.f32.gmra.mrb[0].mxu0 %v4547
    %v4930 = vpop.f32.mrb[0].mxu0
    %v4931 = vadd.f32 0.0, %v4930
    %v4932 = vpop.f32.mrb[0].mxu0
    %4933 = vdwg.mxu0
    %v4934 = vadd.f32 %v4224, %v4616
    %v4935 = vadd.f32 %v4225, %v4621
    %v4936 = vadd.f32 %v4226, %v4626
    %v4937 = vadd.f32 %v4227, %v4631
    %v4938 = vadd.f32 %v4228, %v4636
    %v4939 = vadd.f32 %v4229, %v4641
    %v4940 = vadd.f32 %v4230, %v4646
    %v4941 = vadd.f32 %v4231, %v4651
    %v4942 = vadd.f32 %v4232, %v4656
    %v4943 = vadd.f32 %v4233, %v4661
    %v4944 = vadd.f32 %v4234, %v4666
    %v4945 = vadd.f32 %v4235, %v4671
    %v4946 = vadd.f32 %v4236, %v4676
    %v4947 = vadd.f32 %v4237, %v4681
    %v4948 = vadd.f32 %v4238, %v4686
    %v4949 = vadd.f32 %v4239, %v4691
    %v4950 = vadd.f32 %v4240, %v4696
    %v4951 = vadd.f32 %v4241, %v4701
    %v4952 = vadd.f32 %v4242, %v4706
    %v4953 = vadd.f32 %v4243, %v4711
    %v4954 = vadd.f32 %v4244, %v4716
    %v4955 = vadd.f32 %v4245, %v4721
    %v4956 = vadd.f32 %v4246, %v4726
    %v4957 = vadd.f32 %v4247, %v4731
    %v4958 = vadd.f32 %v4248, %v4736
    %v4959 = vadd.f32 %v4249, %v4741
    %v4960 = vadd.f32 %v4250, %v4746
    %v4961 = vadd.f32 %v4251, %v4751
    %v4962 = vadd.f32 %v4252, %v4756
    %v4963 = vadd.f32 %v4253, %v4761
    %v4964 = vadd.f32 %v4254, %v4766
    %v4965 = vadd.f32 %v4255, %v4771
    %v4966 = vadd.f32 %v4256, %v4776
    %v4967 = vadd.f32 %v4257, %v4781
    %v4968 = vadd.f32 %v4258, %v4786
    %v4969 = vadd.f32 %v4259, %v4791
    %v4970 = vadd.f32 %v4260, %v4796
    %v4971 = vadd.f32 %v4261, %v4801
    %v4972 = vadd.f32 %v4262, %v4806
    %v4973 = vadd.f32 %v4263, %v4811
    %v4974 = vadd.f32 %v4264, %v4816
    %v4975 = vadd.f32 %v4265, %v4821
    %v4976 = vadd.f32 %v4266, %v4826
    %v4977 = vadd.f32 %v4267, %v4831
    %v4978 = vadd.f32 %v4268, %v4836
    %v4979 = vadd.f32 %v4269, %v4841
    %v4980 = vadd.f32 %v4270, %v4846
    %v4981 = vadd.f32 %v4271, %v4851
    %v4982 = vadd.f32 %v4272, %v4856
    %v4983 = vadd.f32 %v4273, %v4861
    %v4984 = vadd.f32 %v4274, %v4866
    %v4985 = vadd.f32 %v4275, %v4871
    %v4986 = vadd.f32 %v4276, %v4876
    %v4987 = vadd.f32 %v4277, %v4881
    %v4988 = vadd.f32 %v4278, %v4886
    %v4989 = vadd.f32 %v4279, %v4891
    %v4990 = vadd.f32 %v4280, %v4896
    %v4991 = vadd.f32 %v4281, %v4901
    %v4992 = vadd.f32 %v4282, %v4906
    %v4993 = vadd.f32 %v4283, %v4911
    %v4994 = vadd.f32 %v4284, %v4916
    %v4995 = vadd.f32 %v4285, %v4921
    %v4996 = vadd.f32 %v4286, %v4926
    %v4997 = vadd.f32 %v4287, %v4931
    %v4998 = vld [vmem:[%s2222 + $0x1] sm:$0xff]
    %v4999 = vld [vmem:[%s2222 + $0x9] sm:$0xff]
    %v5000 = vld [vmem:[%s2222 + $0x19] sm:$0xff]
    %v5001 = vld [vmem:[%s2222 + $0x21] sm:$0xff]
    %v5002 = vld [vmem:[%s2222 + $0x31] sm:$0xff]
    %v5003 = vld [vmem:[%s2222 + $0x39] sm:$0xff]
    %v5004 = vld [vmem:[%s2222 + $0x49] sm:$0xff]
    %v5005 = vld [vmem:[%s2222 + $0x51] sm:$0xff]
    %v5006 = vld [vmem:[%s2222 + $0x61] sm:$0xff]
    %v5007 = vld [vmem:[%s2222 + $0x69] sm:$0xff]
    %v5008 = vld [vmem:[%s2222 + $0x79] sm:$0xff]
    %v5009 = vld [vmem:[%s2222 + $0x81] sm:$0xff]
    %v5010 = vld [vmem:[%s2222 + $0x91] sm:$0xff]
    %v5011 = vld [vmem:[%s2222 + $0x99] sm:$0xff]
    %v5012 = vld [vmem:[%s2222 + $0xa9] sm:$0xff]
    %v5013 = vld [vmem:[%s2222 + $0xb1] sm:$0xff]
    %v5014 = vld [vmem:[%s2222 + $0xc1] sm:$0xff]
    %v5015 = vld [vmem:[%s2222 + $0xc9] sm:$0xff]
    %v5016 = vld [vmem:[%s2222 + $0xd9] sm:$0xff]
    %v5017 = vld [vmem:[%s2222 + $0xe1] sm:$0xff]
    %v5018 = vld [vmem:[%s2222 + $0xf1] sm:$0xff]
    %v5019 = vld [vmem:[%s2222 + $0xf9] sm:$0xff]
    %v5020 = vld [vmem:[%s2222 + $0x109] sm:$0xff]
    %v5021 = vld [vmem:[%s2222 + $0x111] sm:$0xff]
    %v5022 = vld [vmem:[%s2222 + $0x121] sm:$0xff]
    %v5023 = vld [vmem:[%s2222 + $0x129] sm:$0xff]
    %v5024 = vld [vmem:[%s2222 + $0x139] sm:$0xff]
    %v5025 = vld [vmem:[%s2222 + $0x141] sm:$0xff]
    %v5026 = vld [vmem:[%s2222 + $0x151] sm:$0xff]
    %v5027 = vld [vmem:[%s2222 + $0x159] sm:$0xff]
    %v5028 = vld [vmem:[%s2222 + $0x169] sm:$0xff]
    %v5029 = vld [vmem:[%s2222 + $0x171] sm:$0xff]
    %v5030 = vld [vmem:[%s2222 + $0x1b1] sm:$0xff]
    %v5031 = vld [vmem:[%s2222 + $0x1b9] sm:$0xff]
    %v5032 = vld [vmem:[%s2222 + $0x1c9] sm:$0xff]
    %v5033 = vld [vmem:[%s2222 + $0x1d1] sm:$0xff]
    %v5034 = vld [vmem:[%s2222 + $0x1e1] sm:$0xff]
    %v5035 = vld [vmem:[%s2222 + $0x1e9] sm:$0xff]
    %v5036 = vld [vmem:[%s2222 + $0x1f9] sm:$0xff]
    %v5037 = vld [vmem:[%s2222 + $0x201] sm:$0xff]
    %v5038 = vld [vmem:[%s2222 + $0x211] sm:$0xff]
    %v5039 = vld [vmem:[%s2222 + $0x219] sm:$0xff]
    %v5040 = vld [vmem:[%s2222 + $0x229] sm:$0xff]
    %v5041 = vld [vmem:[%s2222 + $0x231] sm:$0xff]
    %v5042 = vld [vmem:[%s2222 + $0x241] sm:$0xff]
    %v5043 = vld [vmem:[%s2222 + $0x249] sm:$0xff]
    %v5044 = vld [vmem:[%s2222 + $0x259] sm:$0xff]
    %v5045 = vld [vmem:[%s2222 + $0x261] sm:$0xff]
    %v5046 = vld [vmem:[%s2222 + $0x271] sm:$0xff]
    %v5047 = vld [vmem:[%s2222 + $0x279] sm:$0xff]
    %v5048 = vld [vmem:[%s2222 + $0x289] sm:$0xff]
    %v5049 = vld [vmem:[%s2222 + $0x291] sm:$0xff]
    %v5050 = vld [vmem:[%s2222 + $0x2a1] sm:$0xff]
    %v5051 = vld [vmem:[%s2222 + $0x2a9] sm:$0xff]
    %v5052 = vld [vmem:[%s2222 + $0x2b9] sm:$0xff]
    %v5053 = vld [vmem:[%s2222 + $0x2c1] sm:$0xff]
    %v5054 = vld [vmem:[%s2222 + $0x2d1] sm:$0xff]
    %v5055 = vld [vmem:[%s2222 + $0x2d9] sm:$0xff]
    %v5056 = vld [vmem:[%s2222 + $0x2e9] sm:$0xff]
    %v5057 = vld [vmem:[%s2222 + $0x2f1] sm:$0xff]
    %v5058 = vld [vmem:[%s2222 + $0x301] sm:$0xff]
    %v5059 = vld [vmem:[%s2222 + $0x309] sm:$0xff]
    %v5060 = vld [vmem:[%s2222 + $0x319] sm:$0xff]
    %v5061 = vld [vmem:[%s2222 + $0x321] sm:$0xff]
    %s5062 = scalar_lea.vmem [#allocation3], 128
    %v5063 = vld [vmem:[%s5062] sm:$0xff]
    %v5064 = vld [vmem:[%s5062 + $0x8] sm:$0xff]
    %v5065 = vld [vmem:[%s5062 + $0x10] sm:$0xff]
    %v5066 = vld [vmem:[%s5062 + $0x18] sm:$0xff]
    %v5068 = vsel %vm354, %v4998, 0
    %v5071 = vsel %vm354, %v4999, 0
    %v5074 = vsel %vm354, %v5000, 0
    %v5077 = vsel %vm354, %v5001, 0
    %v5080 = vsel %vm354, %v5002, 0
    %v5083 = vsel %vm354, %v5003, 0
    %v5086 = vsel %vm354, %v5004, 0
    %v5089 = vsel %vm354, %v5005, 0
    %v5092 = vsel %vm354, %v5006, 0
    %v5095 = vsel %vm354, %v5007, 0
    %v5098 = vsel %vm354, %v5008, 0
    %v5101 = vsel %vm354, %v5009, 0
    %v5104 = vsel %vm354, %v5010, 0
    %v5107 = vsel %vm354, %v5011, 0
    %v5110 = vsel %vm354, %v5012, 0
    %v5113 = vsel %vm354, %v5013, 0
    %v5116 = vsel %vm354, %v5014, 0
    %v5119 = vsel %vm354, %v5015, 0
    %v5122 = vsel %vm354, %v5016, 0
    %v5125 = vsel %vm354, %v5017, 0
    %v5128 = vsel %vm354, %v5018, 0
    %v5131 = vsel %vm354, %v5019, 0
    %v5134 = vsel %vm354, %v5020, 0
    %v5137 = vsel %vm354, %v5021, 0
    %v5140 = vsel %vm354, %v5022, 0
    %v5143 = vsel %vm354, %v5023, 0
    %v5146 = vsel %vm354, %v5024, 0
    %v5149 = vsel %vm354, %v5025, 0
    %v5152 = vsel %vm354, %v5026, 0
    %v5155 = vsel %vm354, %v5027, 0
    %v5158 = vsel %vm354, %v5028, 0
    %v5161 = vsel %vm354, %v5029, 0
    %v5164 = vsel %vm354, %v5030, 0
    %v5167 = vsel %vm354, %v5031, 0
    %v5170 = vsel %vm354, %v5032, 0
    %v5173 = vsel %vm354, %v5033, 0
    %v5176 = vsel %vm354, %v5034, 0
    %v5179 = vsel %vm354, %v5035, 0
    %v5182 = vsel %vm354, %v5036, 0
    %v5185 = vsel %vm354, %v5037, 0
    %v5188 = vsel %vm354, %v5038, 0
    %v5191 = vsel %vm354, %v5039, 0
    %v5194 = vsel %vm354, %v5040, 0
    %v5197 = vsel %vm354, %v5041, 0
    %v5200 = vsel %vm354, %v5042, 0
    %v5203 = vsel %vm354, %v5043, 0
    %v5206 = vsel %vm354, %v5044, 0
    %v5209 = vsel %vm354, %v5045, 0
    %v5212 = vsel %vm354, %v5046, 0
    %v5215 = vsel %vm354, %v5047, 0
    %v5218 = vsel %vm354, %v5048, 0
    %v5221 = vsel %vm354, %v5049, 0
    %v5224 = vsel %vm354, %v5050, 0
    %v5227 = vsel %vm354, %v5051, 0
    %v5230 = vsel %vm354, %v5052, 0
    %v5233 = vsel %vm354, %v5053, 0
    %v5236 = vsel %vm354, %v5054, 0
    %v5239 = vsel %vm354, %v5055, 0
    %v5242 = vsel %vm354, %v5056, 0
    %v5245 = vsel %vm354, %v5057, 0
    %v5248 = vsel %vm354, %v5058, 0
    %v5251 = vsel %vm354, %v5059, 0
    %v5254 = vsel %vm354, %v5060, 0
    %v5257 = vsel %vm354, %v5061, 0
    %5259 = vmatprep.subr.mxu0 0.0
    %5260 = vmatpush1.msra.mxu0 %v5063
    %5261 = vmatprep.subr.mxu0 0.0
    %5262 = vmatpush1.msra.mxu0 %v5064
    %5263 = vmatprep.subr.mxu0 0.0
    %5264 = vmatpush1.msra.mxu0 %v5065
    %5265 = vmatprep.subr.mxu0 0.0
    %5266 = vmatpush1.msra.mxu0 %v5066
    %5267 = vmatprep.subr.mxu0 0.0
    %5268 = vmatpush1.msra.mxu0 0.0
    %5269 = vmatprep.subr.mxu0 0.0
    %5270 = vmatpush1.msra.mxu0 0.0
    %5271 = vmatprep.subr.mxu0 0.0
    %5272 = vmatpush1.msra.mxu0 0.0
    %5273 = vmatprep.subr.mxu0 0.0
    %5274 = vmatpush1.msra.mxu0 0.0
    %5275 = vmatprep.subr.mxu0 0.0
    %5276 = vmatpush1.msra.mxu0 0.0
    %5277 = vmatprep.subr.mxu0 0.0
    %5278 = vmatpush1.msra.mxu0 0.0
    %5279 = vmatprep.subr.mxu0 0.0
    %5280 = vmatpush1.msra.mxu0 0.0
    %5281 = vmatprep.subr.mxu0 0.0
    %5282 = vmatpush1.msra.mxu0 0.0
    %5283 = vmatprep.subr.mxu0 0.0
    %5284 = vmatpush1.msra.mxu0 0.0
    %5285 = vmatprep.subr.mxu0 0.0
    %5286 = vmatpush1.msra.mxu0 0.0
    %5287 = vmatprep.subr.mxu0 0.0
    %5288 = vmatpush1.msra.mxu0 0.0
    %5289 = vmatprep.subr.mxu0 0.0
    %5290 = vmatpush1.msra.mxu0 0.0
    %5291 = vmatprep.subr.mxu0 0.0
    %5292 = vmatpush1.msra.mxu0 0.0
    %5293 = vmatprep.subr.mxu0 0.0
    %5294 = vmatpush1.msra.mxu0 0.0
    %5295 = vmatprep.subr.mxu0 0.0
    %5296 = vmatpush1.msra.mxu0 0.0
    %5297 = vmatprep.subr.mxu0 0.0
    %5298 = vmatpush1.msra.mxu0 0.0
    %5299 = vmatprep.subr.mxu0 0.0
    %5300 = vmatpush1.msra.mxu0 0.0
    %5301 = vmatprep.subr.mxu0 0.0
    %5302 = vmatpush1.msra.mxu0 0.0
    %5303 = vmatprep.subr.mxu0 0.0
    %5304 = vmatpush1.msra.mxu0 0.0
    %5305 = vmatprep.subr.mxu0 0.0
    %5306 = vmatpush1.msra.mxu0 0.0
    %5307 = vmatprep.subr.mxu0 0.0
    %5308 = vmatpush1.msra.mxu0 0.0
    %5309 = vmatprep.subr.mxu0 0.0
    %5310 = vmatpush1.msra.mxu0 0.0
    %5311 = vmatprep.subr.mxu0 0.0
    %5312 = vmatpush1.msra.mxu0 0.0
    %5313 = vmatprep.subr.mxu0 0.0
    %5314 = vmatpush1.msra.mxu0 0.0
    %5315 = vmatprep.subr.mxu0 0.0
    %5316 = vmatpush1.msra.mxu0 0.0
    %5317 = vmatprep.subr.mxu0 0.0
    %5318 = vmatpush1.msra.mxu0 0.0
    %5319 = vmatprep.subr.mxu0 0.0
    %5320 = vmatpush1.msra.mxu0 0.0
    %5321 = vmatprep.subr.mxu0 0.0
    %5322 = vmatpush1.msra.mxu0 0.0
    %5323 = vmatprep.mubr.f32.mxu0 0.0
    %5324 = vmatmul.mubr.f32.gmra.mrb[0].mxu0 %v5068
    %v5325 = vpop.f32.mrb[0].mxu0
    %v5326 = vadd.f32 0.0, %v5325
    %v5327 = vpop.f32.mrb[0].mxu0
    %5328 = vmatprep.mubr.f32.mxu0 0.0
    %5329 = vmatmul.mubr.f32.gmra.mrb[0].mxu0 %v5071
    %v5330 = vpop.f32.mrb[0].mxu0
    %v5331 = vadd.f32 0.0, %v5330
    %v5332 = vpop.f32.mrb[0].mxu0
    %5333 = vmatprep.mubr.f32.mxu0 0.0
    %5334 = vmatmul.mubr.f32.gmra.mrb[0].mxu0 %v5074
    %v5335 = vpop.f32.mrb[0].mxu0
    %v5336 = vadd.f32 0.0, %v5335
    %v5337 = vpop.f32.mrb[0].mxu0
    %5338 = vmatprep.mubr.f32.mxu0 0.0
    %5339 = vmatmul.mubr.f32.gmra.mrb[0].mxu0 %v5077
    %v5340 = vpop.f32.mrb[0].mxu0
    %v5341 = vadd.f32 0.0, %v5340
    %v5342 = vpop.f32.mrb[0].mxu0
    %5343 = vmatprep.mubr.f32.mxu0 0.0
    %5344 = vmatmul.mubr.f32.gmra.mrb[0].mxu0 %v5080
    %v5345 = vpop.f32.mrb[0].mxu0
    %v5346 = vadd.f32 0.0, %v5345
    %v5347 = vpop.f32.mrb[0].mxu0
    %5348 = vmatprep.mubr.f32.mxu0 0.0
    %5349 = vmatmul.mubr.f32.gmra.mrb[0].mxu0 %v5083
    %v5350 = vpop.f32.mrb[0].mxu0
    %v5351 = vadd.f32 0.0, %v5350
    %v5352 = vpop.f32.mrb[0].mxu0
    %5353 = vmatprep.mubr.f32.mxu0 0.0
    %5354 = vmatmul.mubr.f32.gmra.mrb[0].mxu0 %v5086
    %v5355 = vpop.f32.mrb[0].mxu0
    %v5356 = vadd.f32 0.0, %v5355
    %v5357 = vpop.f32.mrb[0].mxu0
    %5358 = vmatprep.mubr.f32.mxu0 0.0
    %5359 = vmatmul.mubr.f32.gmra.mrb[0].mxu0 %v5089
    %v5360 = vpop.f32.mrb[0].mxu0
    %v5361 = vadd.f32 0.0, %v5360
    %v5362 = vpop.f32.mrb[0].mxu0
    %5363 = vmatprep.mubr.f32.mxu0 0.0
    %5364 = vmatmul.mubr.f32.gmra.mrb[0].mxu0 %v5092
    %v5365 = vpop.f32.mrb[0].mxu0
    %v5366 = vadd.f32 0.0, %v5365
    %v5367 = vpop.f32.mrb[0].mxu0
    %5368 = vmatprep.mubr.f32.mxu0 0.0
    %5369 = vmatmul.mubr.f32.gmra.mrb[0].mxu0 %v5095
    %v5370 = vpop.f32.mrb[0].mxu0
    %v5371 = vadd.f32 0.0, %v5370
    %v5372 = vpop.f32.mrb[0].mxu0
    %5373 = vmatprep.mubr.f32.mxu0 0.0
    %5374 = vmatmul.mubr.f32.gmra.mrb[0].mxu0 %v5098
    %v5375 = vpop.f32.mrb[0].mxu0
    %v5376 = vadd.f32 0.0, %v5375
    %v5377 = vpop.f32.mrb[0].mxu0
    %5378 = vmatprep.mubr.f32.mxu0 0.0
    %5379 = vmatmul.mubr.f32.gmra.mrb[0].mxu0 %v5101
    %v5380 = vpop.f32.mrb[0].mxu0
    %v5381 = vadd.f32 0.0, %v5380
    %v5382 = vpop.f32.mrb[0].mxu0
    %5383 = vmatprep.mubr.f32.mxu0 0.0
    %5384 = vmatmul.mubr.f32.gmra.mrb[0].mxu0 %v5104
    %v5385 = vpop.f32.mrb[0].mxu0
    %v5386 = vadd.f32 0.0, %v5385
    %v5387 = vpop.f32.mrb[0].mxu0
    %5388 = vmatprep.mubr.f32.mxu0 0.0
    %5389 = vmatmul.mubr.f32.gmra.mrb[0].mxu0 %v5107
    %v5390 = vpop.f32.mrb[0].mxu0
    %v5391 = vadd.f32 0.0, %v5390
    %v5392 = vpop.f32.mrb[0].mxu0
    %5393 = vmatprep.mubr.f32.mxu0 0.0
    %5394 = vmatmul.mubr.f32.gmra.mrb[0].mxu0 %v5110
    %v5395 = vpop.f32.mrb[0].mxu0
    %v5396 = vadd.f32 0.0, %v5395
    %v5397 = vpop.f32.mrb[0].mxu0
    %5398 = vmatprep.mubr.f32.mxu0 0.0
    %5399 = vmatmul.mubr.f32.gmra.mrb[0].mxu0 %v5113
    %v5400 = vpop.f32.mrb[0].mxu0
    %v5401 = vadd.f32 0.0, %v5400
    %v5402 = vpop.f32.mrb[0].mxu0
    %5403 = vmatprep.mubr.f32.mxu0 0.0
    %5404 = vmatmul.mubr.f32.gmra.mrb[0].mxu0 %v5116
    %v5405 = vpop.f32.mrb[0].mxu0
    %v5406 = vadd.f32 0.0, %v5405
    %v5407 = vpop.f32.mrb[0].mxu0
    %5408 = vmatprep.mubr.f32.mxu0 0.0
    %5409 = vmatmul.mubr.f32.gmra.mrb[0].mxu0 %v5119
    %v5410 = vpop.f32.mrb[0].mxu0
    %v5411 = vadd.f32 0.0, %v5410
    %v5412 = vpop.f32.mrb[0].mxu0
    %5413 = vmatprep.mubr.f32.mxu0 0.0
    %5414 = vmatmul.mubr.f32.gmra.mrb[0].mxu0 %v5122
    %v5415 = vpop.f32.mrb[0].mxu0
    %v5416 = vadd.f32 0.0, %v5415
    %v5417 = vpop.f32.mrb[0].mxu0
    %5418 = vmatprep.mubr.f32.mxu0 0.0
    %5419 = vmatmul.mubr.f32.gmra.mrb[0].mxu0 %v5125
    %v5420 = vpop.f32.mrb[0].mxu0
    %v5421 = vadd.f32 0.0, %v5420
    %v5422 = vpop.f32.mrb[0].mxu0
    %5423 = vmatprep.mubr.f32.mxu0 0.0
    %5424 = vmatmul.mubr.f32.gmra.mrb[0].mxu0 %v5128
    %v5425 = vpop.f32.mrb[0].mxu0
    %v5426 = vadd.f32 0.0, %v5425
    %v5427 = vpop.f32.mrb[0].mxu0
    %5428 = vmatprep.mubr.f32.mxu0 0.0
    %5429 = vmatmul.mubr.f32.gmra.mrb[0].mxu0 %v5131
    %v5430 = vpop.f32.mrb[0].mxu0
    %v5431 = vadd.f32 0.0, %v5430
    %v5432 = vpop.f32.mrb[0].mxu0
    %5433 = vmatprep.mubr.f32.mxu0 0.0
    %5434 = vmatmul.mubr.f32.gmra.mrb[0].mxu0 %v5134
    %v5435 = vpop.f32.mrb[0].mxu0
    %v5436 = vadd.f32 0.0, %v5435
    %v5437 = vpop.f32.mrb[0].mxu0
    %5438 = vmatprep.mubr.f32.mxu0 0.0
    %5439 = vmatmul.mubr.f32.gmra.mrb[0].mxu0 %v5137
    %v5440 = vpop.f32.mrb[0].mxu0
    %v5441 = vadd.f32 0.0, %v5440
    %v5442 = vpop.f32.mrb[0].mxu0
    %5443 = vmatprep.mubr.f32.mxu0 0.0
    %5444 = vmatmul.mubr.f32.gmra.mrb[0].mxu0 %v5140
    %v5445 = vpop.f32.mrb[0].mxu0
    %v5446 = vadd.f32 0.0, %v5445
    %v5447 = vpop.f32.mrb[0].mxu0
    %5448 = vmatprep.mubr.f32.mxu0 0.0
    %5449 = vmatmul.mubr.f32.gmra.mrb[0].mxu0 %v5143
    %v5450 = vpop.f32.mrb[0].mxu0
    %v5451 = vadd.f32 0.0, %v5450
    %v5452 = vpop.f32.mrb[0].mxu0
    %5453 = vmatprep.mubr.f32.mxu0 0.0
    %5454 = vmatmul.mubr.f32.gmra.mrb[0].mxu0 %v5146
    %v5455 = vpop.f32.mrb[0].mxu0
    %v5456 = vadd.f32 0.0, %v5455
    %v5457 = vpop.f32.mrb[0].mxu0
    %5458 = vmatprep.mubr.f32.mxu0 0.0
    %5459 = vmatmul.mubr.f32.gmra.mrb[0].mxu0 %v5149
    %v5460 = vpop.f32.mrb[0].mxu0
    %v5461 = vadd.f32 0.0, %v5460
    %v5462 = vpop.f32.mrb[0].mxu0
    %5463 = vmatprep.mubr.f32.mxu0 0.0
    %5464 = vmatmul.mubr.f32.gmra.mrb[0].mxu0 %v5152
    %v5465 = vpop.f32.mrb[0].mxu0
    %v5466 = vadd.f32 0.0, %v5465
    %v5467 = vpop.f32.mrb[0].mxu0
    %5468 = vmatprep.mubr.f32.mxu0 0.0
    %5469 = vmatmul.mubr.f32.gmra.mrb[0].mxu0 %v5155
    %v5470 = vpop.f32.mrb[0].mxu0
    %v5471 = vadd.f32 0.0, %v5470
    %v5472 = vpop.f32.mrb[0].mxu0
    %5473 = vmatprep.mubr.f32.mxu0 0.0
    %5474 = vmatmul.mubr.f32.gmra.mrb[0].mxu0 %v5158
    %v5475 = vpop.f32.mrb[0].mxu0
    %v5476 = vadd.f32 0.0, %v5475
    %v5477 = vpop.f32.mrb[0].mxu0
    %5478 = vmatprep.mubr.f32.mxu0 0.0
    %5479 = vmatmul.mubr.f32.gmra.mrb[0].mxu0 %v5161
    %v5480 = vpop.f32.mrb[0].mxu0
    %v5481 = vadd.f32 0.0, %v5480
    %v5482 = vpop.f32.mrb[0].mxu0
    %5483 = vmatprep.mubr.f32.mxu0 0.0
    %5484 = vmatmul.mubr.f32.gmra.mrb[0].mxu0 %v5164
    %v5485 = vpop.f32.mrb[0].mxu0
    %v5486 = vadd.f32 0.0, %v5485
    %v5487 = vpop.f32.mrb[0].mxu0
    %5488 = vmatprep.mubr.f32.mxu0 0.0
    %5489 = vmatmul.mubr.f32.gmra.mrb[0].mxu0 %v5167
    %v5490 = vpop.f32.mrb[0].mxu0
    %v5491 = vadd.f32 0.0, %v5490
    %v5492 = vpop.f32.mrb[0].mxu0
    %5493 = vmatprep.mubr.f32.mxu0 0.0
    %5494 = vmatmul.mubr.f32.gmra.mrb[0].mxu0 %v5170
    %v5495 = vpop.f32.mrb[0].mxu0
    %v5496 = vadd.f32 0.0, %v5495
    %v5497 = vpop.f32.mrb[0].mxu0
    %5498 = vmatprep.mubr.f32.mxu0 0.0
    %5499 = vmatmul.mubr.f32.gmra.mrb[0].mxu0 %v5173
    %v5500 = vpop.f32.mrb[0].mxu0
    %v5501 = vadd.f32 0.0, %v5500
    %v5502 = vpop.f32.mrb[0].mxu0
    %5503 = vmatprep.mubr.f32.mxu0 0.0
    %5504 = vmatmul.mubr.f32.gmra.mrb[0].mxu0 %v5176
    %v5505 = vpop.f32.mrb[0].mxu0
    %v5506 = vadd.f32 0.0, %v5505
    %v5507 = vpop.f32.mrb[0].mxu0
    %5508 = vmatprep.mubr.f32.mxu0 0.0
    %5509 = vmatmul.mubr.f32.gmra.mrb[0].mxu0 %v5179
    %v5510 = vpop.f32.mrb[0].mxu0
    %v5511 = vadd.f32 0.0, %v5510
    %v5512 = vpop.f32.mrb[0].mxu0
    %5513 = vmatprep.mubr.f32.mxu0 0.0
    %5514 = vmatmul.mubr.f32.gmra.mrb[0].mxu0 %v5182
    %v5515 = vpop.f32.mrb[0].mxu0
    %v5516 = vadd.f32 0.0, %v5515
    %v5517 = vpop.f32.mrb[0].mxu0
    %5518 = vmatprep.mubr.f32.mxu0 0.0
    %5519 = vmatmul.mubr.f32.gmra.mrb[0].mxu0 %v5185
    %v5520 = vpop.f32.mrb[0].mxu0
    %v5521 = vadd.f32 0.0, %v5520
    %v5522 = vpop.f32.mrb[0].mxu0
    %5523 = vmatprep.mubr.f32.mxu0 0.0
    %5524 = vmatmul.mubr.f32.gmra.mrb[0].mxu0 %v5188
    %v5525 = vpop.f32.mrb[0].mxu0
    %v5526 = vadd.f32 0.0, %v5525
    %v5527 = vpop.f32.mrb[0].mxu0
    %5528 = vmatprep.mubr.f32.mxu0 0.0
    %5529 = vmatmul.mubr.f32.gmra.mrb[0].mxu0 %v5191
    %v5530 = vpop.f32.mrb[0].mxu0
    %v5531 = vadd.f32 0.0, %v5530
    %v5532 = vpop.f32.mrb[0].mxu0
    %5533 = vmatprep.mubr.f32.mxu0 0.0
    %5534 = vmatmul.mubr.f32.gmra.mrb[0].mxu0 %v5194
    %v5535 = vpop.f32.mrb[0].mxu0
    %v5536 = vadd.f32 0.0, %v5535
    %v5537 = vpop.f32.mrb[0].mxu0
    %5538 = vmatprep.mubr.f32.mxu0 0.0
    %5539 = vmatmul.mubr.f32.gmra.mrb[0].mxu0 %v5197
    %v5540 = vpop.f32.mrb[0].mxu0
    %v5541 = vadd.f32 0.0, %v5540
    %v5542 = vpop.f32.mrb[0].mxu0
    %5543 = vmatprep.mubr.f32.mxu0 0.0
    %5544 = vmatmul.mubr.f32.gmra.mrb[0].mxu0 %v5200
    %v5545 = vpop.f32.mrb[0].mxu0
    %v5546 = vadd.f32 0.0, %v5545
    %v5547 = vpop.f32.mrb[0].mxu0
    %5548 = vmatprep.mubr.f32.mxu0 0.0
    %5549 = vmatmul.mubr.f32.gmra.mrb[0].mxu0 %v5203
    %v5550 = vpop.f32.mrb[0].mxu0
    %v5551 = vadd.f32 0.0, %v5550
    %v5552 = vpop.f32.mrb[0].mxu0
    %5553 = vmatprep.mubr.f32.mxu0 0.0
    %5554 = vmatmul.mubr.f32.gmra.mrb[0].mxu0 %v5206
    %v5555 = vpop.f32.mrb[0].mxu0
    %v5556 = vadd.f32 0.0, %v5555
    %v5557 = vpop.f32.mrb[0].mxu0
    %5558 = vmatprep.mubr.f32.mxu0 0.0
    %5559 = vmatmul.mubr.f32.gmra.mrb[0].mxu0 %v5209
    %v5560 = vpop.f32.mrb[0].mxu0
    %v5561 = vadd.f32 0.0, %v5560
    %v5562 = vpop.f32.mrb[0].mxu0
    %5563 = vmatprep.mubr.f32.mxu0 0.0
    %5564 = vmatmul.mubr.f32.gmra.mrb[0].mxu0 %v5212
    %v5565 = vpop.f32.mrb[0].mxu0
    %v5566 = vadd.f32 0.0, %v5565
    %v5567 = vpop.f32.mrb[0].mxu0
    %5568 = vmatprep.mubr.f32.mxu0 0.0
    %5569 = vmatmul.mubr.f32.gmra.mrb[0].mxu0 %v5215
    %v5570 = vpop.f32.mrb[0].mxu0
    %v5571 = vadd.f32 0.0, %v5570
    %v5572 = vpop.f32.mrb[0].mxu0
    %5573 = vmatprep.mubr.f32.mxu0 0.0
    %5574 = vmatmul.mubr.f32.gmra.mrb[0].mxu0 %v5218
    %v5575 = vpop.f32.mrb[0].mxu0
    %v5576 = vadd.f32 0.0, %v5575
    %v5577 = vpop.f32.mrb[0].mxu0
    %5578 = vmatprep.mubr.f32.mxu0 0.0
    %5579 = vmatmul.mubr.f32.gmra.mrb[0].mxu0 %v5221
    %v5580 = vpop.f32.mrb[0].mxu0
    %v5581 = vadd.f32 0.0, %v5580
    %v5582 = vpop.f32.mrb[0].mxu0
    %5583 = vmatprep.mubr.f32.mxu0 0.0
    %5584 = vmatmul.mubr.f32.gmra.mrb[0].mxu0 %v5224
    %v5585 = vpop.f32.mrb[0].mxu0
    %v5586 = vadd.f32 0.0, %v5585
    %v5587 = vpop.f32.mrb[0].mxu0
    %5588 = vmatprep.mubr.f32.mxu0 0.0
    %5589 = vmatmul.mubr.f32.gmra.mrb[0].mxu0 %v5227
    %v5590 = vpop.f32.mrb[0].mxu0
    %v5591 = vadd.f32 0.0, %v5590
    %v5592 = vpop.f32.mrb[0].mxu0
    %5593 = vmatprep.mubr.f32.mxu0 0.0
    %5594 = vmatmul.mubr.f32.gmra.mrb[0].mxu0 %v5230
    %v5595 = vpop.f32.mrb[0].mxu0
    %v5596 = vadd.f32 0.0, %v5595
    %v5597 = vpop.f32.mrb[0].mxu0
    %5598 = vmatprep.mubr.f32.mxu0 0.0
    %5599 = vmatmul.mubr.f32.gmra.mrb[0].mxu0 %v5233
    %v5600 = vpop.f32.mrb[0].mxu0
    %v5601 = vadd.f32 0.0, %v5600
    %v5602 = vpop.f32.mrb[0].mxu0
    %5603 = vmatprep.mubr.f32.mxu0 0.0
    %5604 = vmatmul.mubr.f32.gmra.mrb[0].mxu0 %v5236
    %v5605 = vpop.f32.mrb[0].mxu0
    %v5606 = vadd.f32 0.0, %v5605
    %v5607 = vpop.f32.mrb[0].mxu0
    %5608 = vmatprep.mubr.f32.mxu0 0.0
    %5609 = vmatmul.mubr.f32.gmra.mrb[0].mxu0 %v5239
    %v5610 = vpop.f32.mrb[0].mxu0
    %v5611 = vadd.f32 0.0, %v5610
    %v5612 = vpop.f32.mrb[0].mxu0
    %5613 = vmatprep.mubr.f32.mxu0 0.0
    %5614 = vmatmul.mubr.f32.gmra.mrb[0].mxu0 %v5242
    %v5615 = vpop.f32.mrb[0].mxu0
    %v5616 = vadd.f32 0.0, %v5615
    %v5617 = vpop.f32.mrb[0].mxu0
    %5618 = vmatprep.mubr.f32.mxu0 0.0
    %5619 = vmatmul.mubr.f32.gmra.mrb[0].mxu0 %v5245
    %v5620 = vpop.f32.mrb[0].mxu0
    %v5621 = vadd.f32 0.0, %v5620
    %v5622 = vpop.f32.mrb[0].mxu0
    %5623 = vmatprep.mubr.f32.mxu0 0.0
    %5624 = vmatmul.mubr.f32.gmra.mrb[0].mxu0 %v5248
    %v5625 = vpop.f32.mrb[0].mxu0
    %v5626 = vadd.f32 0.0, %v5625
    %v5627 = vpop.f32.mrb[0].mxu0
    %5628 = vmatprep.mubr.f32.mxu0 0.0
    %5629 = vmatmul.mubr.f32.gmra.mrb[0].mxu0 %v5251
    %v5630 = vpop.f32.mrb[0].mxu0
    %v5631 = vadd.f32 0.0, %v5630
    %v5632 = vpop.f32.mrb[0].mxu0
    %5633 = vmatprep.mubr.f32.mxu0 0.0
    %5634 = vmatmul.mubr.f32.gmra.mrb[0].mxu0 %v5254
    %v5635 = vpop.f32.mrb[0].mxu0
    %v5636 = vadd.f32 0.0, %v5635
    %v5637 = vpop.f32.mrb[0].mxu0
    %5638 = vmatprep.mubr.f32.mxu0 0.0
    %5639 = vmatmul.mubr.f32.gmra.mrb[0].mxu0 %v5257
    %v5640 = vpop.f32.mrb[0].mxu0
    %v5641 = vadd.f32 0.0, %v5640
    %v5642 = vpop.f32.mrb[0].mxu0
    %5643 = vdwg.mxu0
    %v5644 = vadd.f32 %v4934, %v5326
    %v5645 = vadd.f32 %v4935, %v5331
    %v5646 = vadd.f32 %v4936, %v5336
    %v5647 = vadd.f32 %v4937, %v5341
    %v5648 = vadd.f32 %v4938, %v5346
    %v5649 = vadd.f32 %v4939, %v5351
    %v5650 = vadd.f32 %v4940, %v5356
    %v5651 = vadd.f32 %v4941, %v5361
    %v5652 = vadd.f32 %v4942, %v5366
    %v5653 = vadd.f32 %v4943, %v5371
    %v5654 = vadd.f32 %v4944, %v5376
    %v5655 = vadd.f32 %v4945, %v5381
    %v5656 = vadd.f32 %v4946, %v5386
    %v5657 = vadd.f32 %v4947, %v5391
    %v5658 = vadd.f32 %v4948, %v5396
    %v5659 = vadd.f32 %v4949, %v5401
    %v5660 = vadd.f32 %v4950, %v5406
    %v5661 = vadd.f32 %v4951, %v5411
    %v5662 = vadd.f32 %v4952, %v5416
    %v5663 = vadd.f32 %v4953, %v5421
    %v5664 = vadd.f32 %v4954, %v5426
    %v5665 = vadd.f32 %v4955, %v5431
    %v5666 = vadd.f32 %v4956, %v5436
    %v5667 = vadd.f32 %v4957, %v5441
    %v5668 = vadd.f32 %v4958, %v5446
    %v5669 = vadd.f32 %v4959, %v5451
    %v5670 = vadd.f32 %v4960, %v5456
    %v5671 = vadd.f32 %v4961, %v5461
    %v5672 = vadd.f32 %v4962, %v5466
    %v5673 = vadd.f32 %v4963, %v5471
    %v5674 = vadd.f32 %v4964, %v5476
    %v5675 = vadd.f32 %v4965, %v5481
    %v5676 = vadd.f32 %v4966, %v5486
    %v5677 = vadd.f32 %v4967, %v5491
    %v5678 = vadd.f32 %v4968, %v5496
    %v5679 = vadd.f32 %v4969, %v5501
    %v5680 = vadd.f32 %v4970, %v5506
    %v5681 = vadd.f32 %v4971, %v5511
    %v5682 = vadd.f32 %v4972, %v5516
    %v5683 = vadd.f32 %v4973, %v5521
    %v5684 = vadd.f32 %v4974, %v5526
    %v5685 = vadd.f32 %v4975, %v5531
    %v5686 = vadd.f32 %v4976, %v5536
    %v5687 = vadd.f32 %v4977, %v5541
    %v5688 = vadd.f32 %v4978, %v5546
    %v5689 = vadd.f32 %v4979, %v5551
    %v5690 = vadd.f32 %v4980, %v5556
    %v5691 = vadd.f32 %v4981, %v5561
    %v5692 = vadd.f32 %v4982, %v5566
    %v5693 = vadd.f32 %v4983, %v5571
    %v5694 = vadd.f32 %v4984, %v5576
    %v5695 = vadd.f32 %v4985, %v5581
    %v5696 = vadd.f32 %v4986, %v5586
    %v5697 = vadd.f32 %v4987, %v5591
    %v5698 = vadd.f32 %v4988, %v5596
    %v5699 = vadd.f32 %v4989, %v5601
    %v5700 = vadd.f32 %v4990, %v5606
    %v5701 = vadd.f32 %v4991, %v5611
    %v5702 = vadd.f32 %v4992, %v5616
    %v5703 = vadd.f32 %v4993, %v5621
    %v5704 = vadd.f32 %v4994, %v5626
    %v5705 = vadd.f32 %v4995, %v5631
    %v5706 = vadd.f32 %v4996, %v5636
    %v5707 = vadd.f32 %v4997, %v5641
    %v5708 = vld [vmem:[%s2222 + $0x2] sm:$0xff]
    %v5709 = vld [vmem:[%s2222 + $0xa] sm:$0xff]
    %v5710 = vld [vmem:[%s2222 + $0x1a] sm:$0xff]
    %v5711 = vld [vmem:[%s2222 + $0x22] sm:$0xff]
    %v5712 = vld [vmem:[%s2222 + $0x32] sm:$0xff]
    %v5713 = vld [vmem:[%s2222 + $0x3a] sm:$0xff]
    %v5714 = vld [vmem:[%s2222 + $0x4a] sm:$0xff]
    %v5715 = vld [vmem:[%s2222 + $0x52] sm:$0xff]
    %v5716 = vld [vmem:[%s2222 + $0x62] sm:$0xff]
    %v5717 = vld [vmem:[%s2222 + $0x6a] sm:$0xff]
    %v5718 = vld [vmem:[%s2222 + $0x7a] sm:$0xff]
    %v5719 = vld [vmem:[%s2222 + $0x82] sm:$0xff]
    %v5720 = vld [vmem:[%s2222 + $0x92] sm:$0xff]
    %v5721 = vld [vmem:[%s2222 + $0x9a] sm:$0xff]
    %v5722 = vld [vmem:[%s2222 + $0xaa] sm:$0xff]
    %v5723 = vld [vmem:[%s2222 + $0xb2] sm:$0xff]
    %v5724 = vld [vmem:[%s2222 + $0xc2] sm:$0xff]
    %v5725 = vld [vmem:[%s2222 + $0xca] sm:$0xff]
    %v5726 = vld [vmem:[%s2222 + $0xda] sm:$0xff]
    %v5727 = vld [vmem:[%s2222 + $0xe2] sm:$0xff]
    %v5728 = vld [vmem:[%s2222 + $0xf2] sm:$0xff]
    %v5729 = vld [vmem:[%s2222 + $0xfa] sm:$0xff]
    %v5730 = vld [vmem:[%s2222 + $0x10a] sm:$0xff]
    %v5731 = vld [vmem:[%s2222 + $0x112] sm:$0xff]
    %v5732 = vld [vmem:[%s2222 + $0x122] sm:$0xff]
    %v5733 = vld [vmem:[%s2222 + $0x12a] sm:$0xff]
    %v5734 = vld [vmem:[%s2222 + $0x13a] sm:$0xff]
    %v5735 = vld [vmem:[%s2222 + $0x142] sm:$0xff]
    %v5736 = vld [vmem:[%s2222 + $0x152] sm:$0xff]
    %v5737 = vld [vmem:[%s2222 + $0x15a] sm:$0xff]
    %v5738 = vld [vmem:[%s2222 + $0x16a] sm:$0xff]
    %v5739 = vld [vmem:[%s2222 + $0x172] sm:$0xff]
    %v5740 = vld [vmem:[%s2222 + $0x1b2] sm:$0xff]
    %v5741 = vld [vmem:[%s2222 + $0x1ba] sm:$0xff]
    %v5742 = vld [vmem:[%s2222 + $0x1ca] sm:$0xff]
    %v5743 = vld [vmem:[%s2222 + $0x1d2] sm:$0xff]
    %v5744 = vld [vmem:[%s2222 + $0x1e2] sm:$0xff]
    %v5745 = vld [vmem:[%s2222 + $0x1ea] sm:$0xff]
    %v5746 = vld [vmem:[%s2222 + $0x1fa] sm:$0xff]
    %v5747 = vld [vmem:[%s2222 + $0x202] sm:$0xff]
    %v5748 = vld [vmem:[%s2222 + $0x212] sm:$0xff]
    %v5749 = vld [vmem:[%s2222 + $0x21a] sm:$0xff]
    %v5750 = vld [vmem:[%s2222 + $0x22a] sm:$0xff]
    %v5751 = vld [vmem:[%s2222 + $0x232] sm:$0xff]
    %v5752 = vld [vmem:[%s2222 + $0x242] sm:$0xff]
    %v5753 = vld [vmem:[%s2222 + $0x24a] sm:$0xff]
    %v5754 = vld [vmem:[%s2222 + $0x25a] sm:$0xff]
    %v5755 = vld [vmem:[%s2222 + $0x262] sm:$0xff]
    %v5756 = vld [vmem:[%s2222 + $0x272] sm:$0xff]
    %v5757 = vld [vmem:[%s2222 + $0x27a] sm:$0xff]
    %v5758 = vld [vmem:[%s2222 + $0x28a] sm:$0xff]
    %v5759 = vld [vmem:[%s2222 + $0x292] sm:$0xff]
    %v5760 = vld [vmem:[%s2222 + $0x2a2] sm:$0xff]
    %v5761 = vld [vmem:[%s2222 + $0x2aa] sm:$0xff]
    %v5762 = vld [vmem:[%s2222 + $0x2ba] sm:$0xff]
    %v5763 = vld [vmem:[%s2222 + $0x2c2] sm:$0xff]
    %v5764 = vld [vmem:[%s2222 + $0x2d2] sm:$0xff]
    %v5765 = vld [vmem:[%s2222 + $0x2da] sm:$0xff]
    %v5766 = vld [vmem:[%s2222 + $0x2ea] sm:$0xff]
    %v5767 = vld [vmem:[%s2222 + $0x2f2] sm:$0xff]
    %v5768 = vld [vmem:[%s2222 + $0x302] sm:$0xff]
    %v5769 = vld [vmem:[%s2222 + $0x30a] sm:$0xff]
    %v5770 = vld [vmem:[%s2222 + $0x31a] sm:$0xff]
    %v5771 = vld [vmem:[%s2222 + $0x322] sm:$0xff]
    %s5772 = scalar_lea.vmem [#allocation3], 160
    %v5773 = vld [vmem:[%s5772] sm:$0xff]
    %v5774 = vld [vmem:[%s5772 + $0x8] sm:$0xff]
    %v5775 = vld [vmem:[%s5772 + $0x10] sm:$0xff]
    %v5776 = vld [vmem:[%s5772 + $0x18] sm:$0xff]
    %v5778 = vsel %vm354, %v5708, 0
    %v5781 = vsel %vm354, %v5709, 0
    %v5784 = vsel %vm354, %v5710, 0
    %v5787 = vsel %vm354, %v5711, 0
    %v5790 = vsel %vm354, %v5712, 0
    %v5793 = vsel %vm354, %v5713, 0
    %v5796 = vsel %vm354, %v5714, 0
    %v5799 = vsel %vm354, %v5715, 0
    %v5802 = vsel %vm354, %v5716, 0
    %v5805 = vsel %vm354, %v5717, 0
    %v5808 = vsel %vm354, %v5718, 0
    %v5811 = vsel %vm354, %v5719, 0
    %v5814 = vsel %vm354, %v5720, 0
    %v5817 = vsel %vm354, %v5721, 0
    %v5820 = vsel %vm354, %v5722, 0
    %v5823 = vsel %vm354, %v5723, 0
    %v5826 = vsel %vm354, %v5724, 0
    %v5829 = vsel %vm354, %v5725, 0
    %v5832 = vsel %vm354, %v5726, 0
    %v5835 = vsel %vm354, %v5727, 0
    %v5838 = vsel %vm354, %v5728, 0
    %v5841 = vsel %vm354, %v5729, 0
    %v5844 = vsel %vm354, %v5730, 0
    %v5847 = vsel %vm354, %v5731, 0
    %v5850 = vsel %vm354, %v5732, 0
    %v5853 = vsel %vm354, %v5733, 0
    %v5856 = vsel %vm354, %v5734, 0
    %v5859 = vsel %vm354, %v5735, 0
    %v5862 = vsel %vm354, %v5736, 0
    %v5865 = vsel %vm354, %v5737, 0
    %v5868 = vsel %vm354, %v5738, 0
    %v5871 = vsel %vm354, %v5739, 0
    %v5874 = vsel %vm354, %v5740, 0
    %v5877 = vsel %vm354, %v5741, 0
    %v5880 = vsel %vm354, %v5742, 0
    %v5883 = vsel %vm354, %v5743, 0
    %v5886 = vsel %vm354, %v5744, 0
    %v5889 = vsel %vm354, %v5745, 0
    %v5892 = vsel %vm354, %v5746, 0
    %v5895 = vsel %vm354, %v5747, 0
    %v5898 = vsel %vm354, %v5748, 0
    %v5901 = vsel %vm354, %v5749, 0
    %v5904 = vsel %vm354, %v5750, 0
    %v5907 = vsel %vm354, %v5751, 0
    %v5910 = vsel %vm354, %v5752, 0
    %v5913 = vsel %vm354, %v5753, 0
    %v5916 = vsel %vm354, %v5754, 0
    %v5919 = vsel %vm354, %v5755, 0
    %v5922 = vsel %vm354, %v5756, 0
    %v5925 = vsel %vm354, %v5757, 0
    %v5928 = vsel %vm354, %v5758, 0
    %v5931 = vsel %vm354, %v5759, 0
    %v5934 = vsel %vm354, %v5760, 0
    %v5937 = vsel %vm354, %v5761, 0
    %v5940 = vsel %vm354, %v5762, 0
    %v5943 = vsel %vm354, %v5763, 0
    %v5946 = vsel %vm354, %v5764, 0
    %v5949 = vsel %vm354, %v5765, 0
    %v5952 = vsel %vm354, %v5766, 0
    %v5955 = vsel %vm354, %v5767, 0
    %v5958 = vsel %vm354, %v5768, 0
    %v5961 = vsel %vm354, %v5769, 0
    %v5964 = vsel %vm354, %v5770, 0
    %v5967 = vsel %vm354, %v5771, 0
    %5969 = vmatprep.subr.mxu0 0.0
    %5970 = vmatpush1.msra.mxu0 %v5773
    %5971 = vmatprep.subr.mxu0 0.0
    %5972 = vmatpush1.msra.mxu0 %v5774
    %5973 = vmatprep.subr.mxu0 0.0
    %5974 = vmatpush1.msra.mxu0 %v5775
    %5975 = vmatprep.subr.mxu0 0.0
    %5976 = vmatpush1.msra.mxu0 %v5776
    %5977 = vmatprep.subr.mxu0 0.0
    %5978 = vmatpush1.msra.mxu0 0.0
    %5979 = vmatprep.subr.mxu0 0.0
    %5980 = vmatpush1.msra.mxu0 0.0
    %5981 = vmatprep.subr.mxu0 0.0
    %5982 = vmatpush1.msra.mxu0 0.0
    %5983 = vmatprep.subr.mxu0 0.0
    %5984 = vmatpush1.msra.mxu0 0.0
    %5985 = vmatprep.subr.mxu0 0.0
    %5986 = vmatpush1.msra.mxu0 0.0
    %5987 = vmatprep.subr.mxu0 0.0
    %5988 = vmatpush1.msra.mxu0 0.0
    %5989 = vmatprep.subr.mxu0 0.0
    %5990 = vmatpush1.msra.mxu0 0.0
    %5991 = vmatprep.subr.mxu0 0.0
    %5992 = vmatpush1.msra.mxu0 0.0
    %5993 = vmatprep.subr.mxu0 0.0
    %5994 = vmatpush1.msra.mxu0 0.0
    %5995 = vmatprep.subr.mxu0 0.0
    %5996 = vmatpush1.msra.mxu0 0.0
    %5997 = vmatprep.subr.mxu0 0.0
    %5998 = vmatpush1.msra.mxu0 0.0
    %5999 = vmatprep.subr.mxu0 0.0
    %6000 = vmatpush1.msra.mxu0 0.0
    %6001 = vmatprep.subr.mxu0 0.0
    %6002 = vmatpush1.msra.mxu0 0.0
    %6003 = vmatprep.subr.mxu0 0.0
    %6004 = vmatpush1.msra.mxu0 0.0
    %6005 = vmatprep.subr.mxu0 0.0
    %6006 = vmatpush1.msra.mxu0 0.0
    %6007 = vmatprep.subr.mxu0 0.0
    %6008 = vmatpush1.msra.mxu0 0.0
    %6009 = vmatprep.subr.mxu0 0.0
    %6010 = vmatpush1.msra.mxu0 0.0
    %6011 = vmatprep.subr.mxu0 0.0
    %6012 = vmatpush1.msra.mxu0 0.0
    %6013 = vmatprep.subr.mxu0 0.0
    %6014 = vmatpush1.msra.mxu0 0.0
    %6015 = vmatprep.subr.mxu0 0.0
    %6016 = vmatpush1.msra.mxu0 0.0
    %6017 = vmatprep.subr.mxu0 0.0
    %6018 = vmatpush1.msra.mxu0 0.0
    %6019 = vmatprep.subr.mxu0 0.0
    %6020 = vmatpush1.msra.mxu0 0.0
    %6021 = vmatprep.subr.mxu0 0.0
    %6022 = vmatpush1.msra.mxu0 0.0
    %6023 = vmatprep.subr.mxu0 0.0
    %6024 = vmatpush1.msra.mxu0 0.0
    %6025 = vmatprep.subr.mxu0 0.0
    %6026 = vmatpush1.msra.mxu0 0.0
    %6027 = vmatprep.subr.mxu0 0.0
    %6028 = vmatpush1.msra.mxu0 0.0
    %6029 = vmatprep.subr.mxu0 0.0
    %6030 = vmatpush1.msra.mxu0 0.0
    %6031 = vmatprep.subr.mxu0 0.0
    %6032 = vmatpush1.msra.mxu0 0.0
    %6033 = vmatprep.mubr.f32.mxu0 0.0
    %6034 = vmatmul.mubr.f32.gmra.mrb[0].mxu0 %v5778
    %v6035 = vpop.f32.mrb[0].mxu0
    %v6036 = vadd.f32 0.0, %v6035
    %v6037 = vpop.f32.mrb[0].mxu0
    %6038 = vmatprep.mubr.f32.mxu0 0.0
    %6039 = vmatmul.mubr.f32.gmra.mrb[0].mxu0 %v5781
    %v6040 = vpop.f32.mrb[0].mxu0
    %v6041 = vadd.f32 0.0, %v6040
    %v6042 = vpop.f32.mrb[0].mxu0
    %6043 = vmatprep.mubr.f32.mxu0 0.0
    %6044 = vmatmul.mubr.f32.gmra.mrb[0].mxu0 %v5784
    %v6045 = vpop.f32.mrb[0].mxu0
    %v6046 = vadd.f32 0.0, %v6045
    %v6047 = vpop.f32.mrb[0].mxu0
    %6048 = vmatprep.mubr.f32.mxu0 0.0
    %6049 = vmatmul.mubr.f32.gmra.mrb[0].mxu0 %v5787
    %v6050 = vpop.f32.mrb[0].mxu0
    %v6051 = vadd.f32 0.0, %v6050
    %v6052 = vpop.f32.mrb[0].mxu0
    %6053 = vmatprep.mubr.f32.mxu0 0.0
    %6054 = vmatmul.mubr.f32.gmra.mrb[0].mxu0 %v5790
    %v6055 = vpop.f32.mrb[0].mxu0
    %v6056 = vadd.f32 0.0, %v6055
    %v6057 = vpop.f32.mrb[0].mxu0
    %6058 = vmatprep.mubr.f32.mxu0 0.0
    %6059 = vmatmul.mubr.f32.gmra.mrb[0].mxu0 %v5793
    %v6060 = vpop.f32.mrb[0].mxu0
    %v6061 = vadd.f32 0.0, %v6060
    %v6062 = vpop.f32.mrb[0].mxu0
    %6063 = vmatprep.mubr.f32.mxu0 0.0
    %6064 = vmatmul.mubr.f32.gmra.mrb[0].mxu0 %v5796
    %v6065 = vpop.f32.mrb[0].mxu0
    %v6066 = vadd.f32 0.0, %v6065
    %v6067 = vpop.f32.mrb[0].mxu0
    %6068 = vmatprep.mubr.f32.mxu0 0.0
    %6069 = vmatmul.mubr.f32.gmra.mrb[0].mxu0 %v5799
    %v6070 = vpop.f32.mrb[0].mxu0
    %v6071 = vadd.f32 0.0, %v6070
    %v6072 = vpop.f32.mrb[0].mxu0
    %6073 = vmatprep.mubr.f32.mxu0 0.0
    %6074 = vmatmul.mubr.f32.gmra.mrb[0].mxu0 %v5802
    %v6075 = vpop.f32.mrb[0].mxu0
    %v6076 = vadd.f32 0.0, %v6075
    %v6077 = vpop.f32.mrb[0].mxu0
    %6078 = vmatprep.mubr.f32.mxu0 0.0
    %6079 = vmatmul.mubr.f32.gmra.mrb[0].mxu0 %v5805
    %v6080 = vpop.f32.mrb[0].mxu0
    %v6081 = vadd.f32 0.0, %v6080
    %v6082 = vpop.f32.mrb[0].mxu0
    %6083 = vmatprep.mubr.f32.mxu0 0.0
    %6084 = vmatmul.mubr.f32.gmra.mrb[0].mxu0 %v5808
    %v6085 = vpop.f32.mrb[0].mxu0
    %v6086 = vadd.f32 0.0, %v6085
    %v6087 = vpop.f32.mrb[0].mxu0
    %6088 = vmatprep.mubr.f32.mxu0 0.0
    %6089 = vmatmul.mubr.f32.gmra.mrb[0].mxu0 %v5811
    %v6090 = vpop.f32.mrb[0].mxu0
    %v6091 = vadd.f32 0.0, %v6090
    %v6092 = vpop.f32.mrb[0].mxu0
    %6093 = vmatprep.mubr.f32.mxu0 0.0
    %6094 = vmatmul.mubr.f32.gmra.mrb[0].mxu0 %v5814
    %v6095 = vpop.f32.mrb[0].mxu0
    %v6096 = vadd.f32 0.0, %v6095
    %v6097 = vpop.f32.mrb[0].mxu0
    %6098 = vmatprep.mubr.f32.mxu0 0.0
    %6099 = vmatmul.mubr.f32.gmra.mrb[0].mxu0 %v5817
    %v6100 = vpop.f32.mrb[0].mxu0
    %v6101 = vadd.f32 0.0, %v6100
    %v6102 = vpop.f32.mrb[0].mxu0
    %6103 = vmatprep.mubr.f32.mxu0 0.0
    %6104 = vmatmul.mubr.f32.gmra.mrb[0].mxu0 %v5820
    %v6105 = vpop.f32.mrb[0].mxu0
    %v6106 = vadd.f32 0.0, %v6105
    %v6107 = vpop.f32.mrb[0].mxu0
    %6108 = vmatprep.mubr.f32.mxu0 0.0
    %6109 = vmatmul.mubr.f32.gmra.mrb[0].mxu0 %v5823
    %v6110 = vpop.f32.mrb[0].mxu0
    %v6111 = vadd.f32 0.0, %v6110
    %v6112 = vpop.f32.mrb[0].mxu0
    %6113 = vmatprep.mubr.f32.mxu0 0.0
    %6114 = vmatmul.mubr.f32.gmra.mrb[0].mxu0 %v5826
    %v6115 = vpop.f32.mrb[0].mxu0
    %v6116 = vadd.f32 0.0, %v6115
    %v6117 = vpop.f32.mrb[0].mxu0
    %6118 = vmatprep.mubr.f32.mxu0 0.0
    %6119 = vmatmul.mubr.f32.gmra.mrb[0].mxu0 %v5829
    %v6120 = vpop.f32.mrb[0].mxu0
    %v6121 = vadd.f32 0.0, %v6120
    %v6122 = vpop.f32.mrb[0].mxu0
    %6123 = vmatprep.mubr.f32.mxu0 0.0
    %6124 = vmatmul.mubr.f32.gmra.mrb[0].mxu0 %v5832
    %v6125 = vpop.f32.mrb[0].mxu0
    %v6126 = vadd.f32 0.0, %v6125
    %v6127 = vpop.f32.mrb[0].mxu0
    %6128 = vmatprep.mubr.f32.mxu0 0.0
    %6129 = vmatmul.mubr.f32.gmra.mrb[0].mxu0 %v5835
    %v6130 = vpop.f32.mrb[0].mxu0
    %v6131 = vadd.f32 0.0, %v6130
    %v6132 = vpop.f32.mrb[0].mxu0
    %6133 = vmatprep.mubr.f32.mxu0 0.0
    %6134 = vmatmul.mubr.f32.gmra.mrb[0].mxu0 %v5838
    %v6135 = vpop.f32.mrb[0].mxu0
    %v6136 = vadd.f32 0.0, %v6135
    %v6137 = vpop.f32.mrb[0].mxu0
    %6138 = vmatprep.mubr.f32.mxu0 0.0
    %6139 = vmatmul.mubr.f32.gmra.mrb[0].mxu0 %v5841
    %v6140 = vpop.f32.mrb[0].mxu0
    %v6141 = vadd.f32 0.0, %v6140
    %v6142 = vpop.f32.mrb[0].mxu0
    %6143 = vmatprep.mubr.f32.mxu0 0.0
    %6144 = vmatmul.mubr.f32.gmra.mrb[0].mxu0 %v5844
    %v6145 = vpop.f32.mrb[0].mxu0
    %v6146 = vadd.f32 0.0, %v6145
    %v6147 = vpop.f32.mrb[0].mxu0
    %6148 = vmatprep.mubr.f32.mxu0 0.0
    %6149 = vmatmul.mubr.f32.gmra.mrb[0].mxu0 %v5847
    %v6150 = vpop.f32.mrb[0].mxu0
    %v6151 = vadd.f32 0.0, %v6150
    %v6152 = vpop.f32.mrb[0].mxu0
    %6153 = vmatprep.mubr.f32.mxu0 0.0
    %6154 = vmatmul.mubr.f32.gmra.mrb[0].mxu0 %v5850
    %v6155 = vpop.f32.mrb[0].mxu0
    %v6156 = vadd.f32 0.0, %v6155
    %v6157 = vpop.f32.mrb[0].mxu0
    %6158 = vmatprep.mubr.f32.mxu0 0.0
    %6159 = vmatmul.mubr.f32.gmra.mrb[0].mxu0 %v5853
    %v6160 = vpop.f32.mrb[0].mxu0
    %v6161 = vadd.f32 0.0, %v6160
    %v6162 = vpop.f32.mrb[0].mxu0
    %6163 = vmatprep.mubr.f32.mxu0 0.0
    %6164 = vmatmul.mubr.f32.gmra.mrb[0].mxu0 %v5856
    %v6165 = vpop.f32.mrb[0].mxu0
    %v6166 = vadd.f32 0.0, %v6165
    %v6167 = vpop.f32.mrb[0].mxu0
    %6168 = vmatprep.mubr.f32.mxu0 0.0
    %6169 = vmatmul.mubr.f32.gmra.mrb[0].mxu0 %v5859
    %v6170 = vpop.f32.mrb[0].mxu0
    %v6171 = vadd.f32 0.0, %v6170
    %v6172 = vpop.f32.mrb[0].mxu0
    %6173 = vmatprep.mubr.f32.mxu0 0.0
    %6174 = vmatmul.mubr.f32.gmra.mrb[0].mxu0 %v5862
    %v6175 = vpop.f32.mrb[0].mxu0
    %v6176 = vadd.f32 0.0, %v6175
    %v6177 = vpop.f32.mrb[0].mxu0
    %6178 = vmatprep.mubr.f32.mxu0 0.0
    %6179 = vmatmul.mubr.f32.gmra.mrb[0].mxu0 %v5865
    %v6180 = vpop.f32.mrb[0].mxu0
    %v6181 = vadd.f32 0.0, %v6180
    %v6182 = vpop.f32.mrb[0].mxu0
    %6183 = vmatprep.mubr.f32.mxu0 0.0
    %6184 = vmatmul.mubr.f32.gmra.mrb[0].mxu0 %v5868
    %v6185 = vpop.f32.mrb[0].mxu0
    %v6186 = vadd.f32 0.0, %v6185
    %v6187 = vpop.f32.mrb[0].mxu0
    %6188 = vmatprep.mubr.f32.mxu0 0.0
    %6189 = vmatmul.mubr.f32.gmra.mrb[0].mxu0 %v5871
    %v6190 = vpop.f32.mrb[0].mxu0
    %v6191 = vadd.f32 0.0, %v6190
    %v6192 = vpop.f32.mrb[0].mxu0
    %6193 = vmatprep.mubr.f32.mxu0 0.0
    %6194 = vmatmul.mubr.f32.gmra.mrb[0].mxu0 %v5874
    %v6195 = vpop.f32.mrb[0].mxu0
    %v6196 = vadd.f32 0.0, %v6195
    %v6197 = vpop.f32.mrb[0].mxu0
    %6198 = vmatprep.mubr.f32.mxu0 0.0
    %6199 = vmatmul.mubr.f32.gmra.mrb[0].mxu0 %v5877
    %v6200 = vpop.f32.mrb[0].mxu0
    %v6201 = vadd.f32 0.0, %v6200
    %v6202 = vpop.f32.mrb[0].mxu0
    %6203 = vmatprep.mubr.f32.mxu0 0.0
    %6204 = vmatmul.mubr.f32.gmra.mrb[0].mxu0 %v5880
    %v6205 = vpop.f32.mrb[0].mxu0
    %v6206 = vadd.f32 0.0, %v6205
    %v6207 = vpop.f32.mrb[0].mxu0
    %6208 = vmatprep.mubr.f32.mxu0 0.0
    %6209 = vmatmul.mubr.f32.gmra.mrb[0].mxu0 %v5883
    %v6210 = vpop.f32.mrb[0].mxu0
    %v6211 = vadd.f32 0.0, %v6210
    %v6212 = vpop.f32.mrb[0].mxu0
    %6213 = vmatprep.mubr.f32.mxu0 0.0
    %6214 = vmatmul.mubr.f32.gmra.mrb[0].mxu0 %v5886
    %v6215 = vpop.f32.mrb[0].mxu0
    %v6216 = vadd.f32 0.0, %v6215
    %v6217 = vpop.f32.mrb[0].mxu0
    %6218 = vmatprep.mubr.f32.mxu0 0.0
    %6219 = vmatmul.mubr.f32.gmra.mrb[0].mxu0 %v5889
    %v6220 = vpop.f32.mrb[0].mxu0
    %v6221 = vadd.f32 0.0, %v6220
    %v6222 = vpop.f32.mrb[0].mxu0
    %6223 = vmatprep.mubr.f32.mxu0 0.0
    %6224 = vmatmul.mubr.f32.gmra.mrb[0].mxu0 %v5892
    %v6225 = vpop.f32.mrb[0].mxu0
    %v6226 = vadd.f32 0.0, %v6225
    %v6227 = vpop.f32.mrb[0].mxu0
    %6228 = vmatprep.mubr.f32.mxu0 0.0
    %6229 = vmatmul.mubr.f32.gmra.mrb[0].mxu0 %v5895
    %v6230 = vpop.f32.mrb[0].mxu0
    %v6231 = vadd.f32 0.0, %v6230
    %v6232 = vpop.f32.mrb[0].mxu0
    %6233 = vmatprep.mubr.f32.mxu0 0.0
    %6234 = vmatmul.mubr.f32.gmra.mrb[0].mxu0 %v5898
    %v6235 = vpop.f32.mrb[0].mxu0
    %v6236 = vadd.f32 0.0, %v6235
    %v6237 = vpop.f32.mrb[0].mxu0
    %6238 = vmatprep.mubr.f32.mxu0 0.0
    %6239 = vmatmul.mubr.f32.gmra.mrb[0].mxu0 %v5901
    %v6240 = vpop.f32.mrb[0].mxu0
    %v6241 = vadd.f32 0.0, %v6240
    %v6242 = vpop.f32.mrb[0].mxu0
    %6243 = vmatprep.mubr.f32.mxu0 0.0
    %6244 = vmatmul.mubr.f32.gmra.mrb[0].mxu0 %v5904
    %v6245 = vpop.f32.mrb[0].mxu0
    %v6246 = vadd.f32 0.0, %v6245
    %v6247 = vpop.f32.mrb[0].mxu0
    %6248 = vmatprep.mubr.f32.mxu0 0.0
    %6249 = vmatmul.mubr.f32.gmra.mrb[0].mxu0 %v5907
    %v6250 = vpop.f32.mrb[0].mxu0
    %v6251 = vadd.f32 0.0, %v6250
    %v6252 = vpop.f32.mrb[0].mxu0
    %6253 = vmatprep.mubr.f32.mxu0 0.0
    %6254 = vmatmul.mubr.f32.gmra.mrb[0].mxu0 %v5910
    %v6255 = vpop.f32.mrb[0].mxu0
    %v6256 = vadd.f32 0.0, %v6255
    %v6257 = vpop.f32.mrb[0].mxu0
    %6258 = vmatprep.mubr.f32.mxu0 0.0
    %6259 = vmatmul.mubr.f32.gmra.mrb[0].mxu0 %v5913
    %v6260 = vpop.f32.mrb[0].mxu0
    %v6261 = vadd.f32 0.0, %v6260
    %v6262 = vpop.f32.mrb[0].mxu0
    %6263 = vmatprep.mubr.f32.mxu0 0.0
    %6264 = vmatmul.mubr.f32.gmra.mrb[0].mxu0 %v5916
    %v6265 = vpop.f32.mrb[0].mxu0
    %v6266 = vadd.f32 0.0, %v6265
    %v6267 = vpop.f32.mrb[0].mxu0
    %6268 = vmatprep.mubr.f32.mxu0 0.0
    %6269 = vmatmul.mubr.f32.gmra.mrb[0].mxu0 %v5919
    %v6270 = vpop.f32.mrb[0].mxu0
    %v6271 = vadd.f32 0.0, %v6270
    %v6272 = vpop.f32.mrb[0].mxu0
    %6273 = vmatprep.mubr.f32.mxu0 0.0
    %6274 = vmatmul.mubr.f32.gmra.mrb[0].mxu0 %v5922
    %v6275 = vpop.f32.mrb[0].mxu0
    %v6276 = vadd.f32 0.0, %v6275
    %v6277 = vpop.f32.mrb[0].mxu0
    %6278 = vmatprep.mubr.f32.mxu0 0.0
    %6279 = vmatmul.mubr.f32.gmra.mrb[0].mxu0 %v5925
    %v6280 = vpop.f32.mrb[0].mxu0
    %v6281 = vadd.f32 0.0, %v6280
    %v6282 = vpop.f32.mrb[0].mxu0
    %6283 = vmatprep.mubr.f32.mxu0 0.0
    %6284 = vmatmul.mubr.f32.gmra.mrb[0].mxu0 %v5928
    %v6285 = vpop.f32.mrb[0].mxu0
    %v6286 = vadd.f32 0.0, %v6285
    %v6287 = vpop.f32.mrb[0].mxu0
    %6288 = vmatprep.mubr.f32.mxu0 0.0
    %6289 = vmatmul.mubr.f32.gmra.mrb[0].mxu0 %v5931
    %v6290 = vpop.f32.mrb[0].mxu0
    %v6291 = vadd.f32 0.0, %v6290
    %v6292 = vpop.f32.mrb[0].mxu0
    %6293 = vmatprep.mubr.f32.mxu0 0.0
    %6294 = vmatmul.mubr.f32.gmra.mrb[0].mxu0 %v5934
    %v6295 = vpop.f32.mrb[0].mxu0
    %v6296 = vadd.f32 0.0, %v6295
    %v6297 = vpop.f32.mrb[0].mxu0
    %6298 = vmatprep.mubr.f32.mxu0 0.0
    %6299 = vmatmul.mubr.f32.gmra.mrb[0].mxu0 %v5937
    %v6300 = vpop.f32.mrb[0].mxu0
    %v6301 = vadd.f32 0.0, %v6300
    %v6302 = vpop.f32.mrb[0].mxu0
    %6303 = vmatprep.mubr.f32.mxu0 0.0
    %6304 = vmatmul.mubr.f32.gmra.mrb[0].mxu0 %v5940
    %v6305 = vpop.f32.mrb[0].mxu0
    %v6306 = vadd.f32 0.0, %v6305
    %v6307 = vpop.f32.mrb[0].mxu0
    %6308 = vmatprep.mubr.f32.mxu0 0.0
    %6309 = vmatmul.mubr.f32.gmra.mrb[0].mxu0 %v5943
    %v6310 = vpop.f32.mrb[0].mxu0
    %v6311 = vadd.f32 0.0, %v6310
    %v6312 = vpop.f32.mrb[0].mxu0
    %6313 = vmatprep.mubr.f32.mxu0 0.0
    %6314 = vmatmul.mubr.f32.gmra.mrb[0].mxu0 %v5946
    %v6315 = vpop.f32.mrb[0].mxu0
    %v6316 = vadd.f32 0.0, %v6315
    %v6317 = vpop.f32.mrb[0].mxu0
    %6318 = vmatprep.mubr.f32.mxu0 0.0
    %6319 = vmatmul.mubr.f32.gmra.mrb[0].mxu0 %v5949
    %v6320 = vpop.f32.mrb[0].mxu0
    %v6321 = vadd.f32 0.0, %v6320
    %v6322 = vpop.f32.mrb[0].mxu0
    %6323 = vmatprep.mubr.f32.mxu0 0.0
    %6324 = vmatmul.mubr.f32.gmra.mrb[0].mxu0 %v5952
    %v6325 = vpop.f32.mrb[0].mxu0
    %v6326 = vadd.f32 0.0, %v6325
    %v6327 = vpop.f32.mrb[0].mxu0
    %6328 = vmatprep.mubr.f32.mxu0 0.0
    %6329 = vmatmul.mubr.f32.gmra.mrb[0].mxu0 %v5955
    %v6330 = vpop.f32.mrb[0].mxu0
    %v6331 = vadd.f32 0.0, %v6330
    %v6332 = vpop.f32.mrb[0].mxu0
    %6333 = vmatprep.mubr.f32.mxu0 0.0
    %6334 = vmatmul.mubr.f32.gmra.mrb[0].mxu0 %v5958
    %v6335 = vpop.f32.mrb[0].mxu0
    %v6336 = vadd.f32 0.0, %v6335
    %v6337 = vpop.f32.mrb[0].mxu0
    %6338 = vmatprep.mubr.f32.mxu0 0.0
    %6339 = vmatmul.mubr.f32.gmra.mrb[0].mxu0 %v5961
    %v6340 = vpop.f32.mrb[0].mxu0
    %v6341 = vadd.f32 0.0, %v6340
    %v6342 = vpop.f32.mrb[0].mxu0
    %6343 = vmatprep.mubr.f32.mxu0 0.0
    %6344 = vmatmul.mubr.f32.gmra.mrb[0].mxu0 %v5964
    %v6345 = vpop.f32.mrb[0].mxu0
    %v6346 = vadd.f32 0.0, %v6345
    %v6347 = vpop.f32.mrb[0].mxu0
    %6348 = vmatprep.mubr.f32.mxu0 0.0
    %6349 = vmatmul.mubr.f32.gmra.mrb[0].mxu0 %v5967
    %v6350 = vpop.f32.mrb[0].mxu0
    %v6351 = vadd.f32 0.0, %v6350
    %v6352 = vpop.f32.mrb[0].mxu0
    %6353 = vdwg.mxu0
    %v6354 = vadd.f32 %v5644, %v6036
    %v6355 = vadd.f32 %v5645, %v6041
    %v6356 = vadd.f32 %v5646, %v6046
    %v6357 = vadd.f32 %v5647, %v6051
    %v6358 = vadd.f32 %v5648, %v6056
    %v6359 = vadd.f32 %v5649, %v6061
    %v6360 = vadd.f32 %v5650, %v6066
    %v6361 = vadd.f32 %v5651, %v6071
    %v6362 = vadd.f32 %v5652, %v6076
    %v6363 = vadd.f32 %v5653, %v6081
    %v6364 = vadd.f32 %v5654, %v6086
    %v6365 = vadd.f32 %v5655, %v6091
    %v6366 = vadd.f32 %v5656, %v6096
    %v6367 = vadd.f32 %v5657, %v6101
    %v6368 = vadd.f32 %v5658, %v6106
    %v6369 = vadd.f32 %v5659, %v6111
    %v6370 = vadd.f32 %v5660, %v6116
    %v6371 = vadd.f32 %v5661, %v6121
    %v6372 = vadd.f32 %v5662, %v6126
    %v6373 = vadd.f32 %v5663, %v6131
    %v6374 = vadd.f32 %v5664, %v6136
    %v6375 = vadd.f32 %v5665, %v6141
    %v6376 = vadd.f32 %v5666, %v6146
    %v6377 = vadd.f32 %v5667, %v6151
    %v6378 = vadd.f32 %v5668, %v6156
    %v6379 = vadd.f32 %v5669, %v6161
    %v6380 = vadd.f32 %v5670, %v6166
    %v6381 = vadd.f32 %v5671, %v6171
    %v6382 = vadd.f32 %v5672, %v6176
    %v6383 = vadd.f32 %v5673, %v6181
    %v6384 = vadd.f32 %v5674, %v6186
    %v6385 = vadd.f32 %v5675, %v6191
    %v6386 = vadd.f32 %v5676, %v6196
    %v6387 = vadd.f32 %v5677, %v6201
    %v6388 = vadd.f32 %v5678, %v6206
    %v6389 = vadd.f32 %v5679, %v6211
    %v6390 = vadd.f32 %v5680, %v6216
    %v6391 = vadd.f32 %v5681, %v6221
    %v6392 = vadd.f32 %v5682, %v6226
    %v6393 = vadd.f32 %v5683, %v6231
    %v6394 = vadd.f32 %v5684, %v6236
    %v6395 = vadd.f32 %v5685, %v6241
    %v6396 = vadd.f32 %v5686, %v6246
    %v6397 = vadd.f32 %v5687, %v6251
    %v6398 = vadd.f32 %v5688, %v6256
    %v6399 = vadd.f32 %v5689, %v6261
    %v6400 = vadd.f32 %v5690, %v6266
    %v6401 = vadd.f32 %v5691, %v6271
    %v6402 = vadd.f32 %v5692, %v6276
    %v6403 = vadd.f32 %v5693, %v6281
    %v6404 = vadd.f32 %v5694, %v6286
    %v6405 = vadd.f32 %v5695, %v6291
    %v6406 = vadd.f32 %v5696, %v6296
    %v6407 = vadd.f32 %v5697, %v6301
    %v6408 = vadd.f32 %v5698, %v6306
    %v6409 = vadd.f32 %v5699, %v6311
    %v6410 = vadd.f32 %v5700, %v6316
    %v6411 = vadd.f32 %v5701, %v6321
    %v6412 = vadd.f32 %v5702, %v6326
    %v6413 = vadd.f32 %v5703, %v6331
    %v6414 = vadd.f32 %v5704, %v6336
    %v6415 = vadd.f32 %v5705, %v6341
    %v6416 = vadd.f32 %v5706, %v6346
    %v6417 = vadd.f32 %v5707, %v6351
    %s6418 = scalar_lea.vmem [#allocation2], 48
    %v6419 = vld [vmem:[%s6418] sm:$0xff]
    %v6420 = vld [vmem:[%s6418 + $0x8] sm:$0xff]
    %v6421 = vld [vmem:[%s6418 + $0x18] sm:$0xff]
    %v6422 = vld [vmem:[%s6418 + $0x20] sm:$0xff]
    %v6423 = vld [vmem:[%s6418 + $0x30] sm:$0xff]
    %v6424 = vld [vmem:[%s6418 + $0x38] sm:$0xff]
    %v6425 = vld [vmem:[%s6418 + $0x48] sm:$0xff]
    %v6426 = vld [vmem:[%s6418 + $0x50] sm:$0xff]
    %v6427 = vld [vmem:[%s6418 + $0x60] sm:$0xff]
    %v6428 = vld [vmem:[%s6418 + $0x68] sm:$0xff]
    %v6429 = vld [vmem:[%s6418 + $0x78] sm:$0xff]
    %v6430 = vld [vmem:[%s6418 + $0x80] sm:$0xff]
    %v6431 = vld [vmem:[%s6418 + $0x90] sm:$0xff]
    %v6432 = vld [vmem:[%s6418 + $0x98] sm:$0xff]
    %v6433 = vld [vmem:[%s6418 + $0xa8] sm:$0xff]
    %v6434 = vld [vmem:[%s6418 + $0xb0] sm:$0xff]
    %v6435 = vld [vmem:[%s6418 + $0xc0] sm:$0xff]
    %v6436 = vld [vmem:[%s6418 + $0xc8] sm:$0xff]
    %v6437 = vld [vmem:[%s6418 + $0xd8] sm:$0xff]
    %v6438 = vld [vmem:[%s6418 + $0xe0] sm:$0xff]
    %v6439 = vld [vmem:[%s6418 + $0xf0] sm:$0xff]
    %v6440 = vld [vmem:[%s6418 + $0xf8] sm:$0xff]
    %v6441 = vld [vmem:[%s6418 + $0x108] sm:$0xff]
    %v6442 = vld [vmem:[%s6418 + $0x110] sm:$0xff]
    %v6443 = vld [vmem:[%s6418 + $0x120] sm:$0xff]
    %v6444 = vld [vmem:[%s6418 + $0x128] sm:$0xff]
    %v6445 = vld [vmem:[%s6418 + $0x138] sm:$0xff]
    %v6446 = vld [vmem:[%s6418 + $0x140] sm:$0xff]
    %v6447 = vld [vmem:[%s6418 + $0x150] sm:$0xff]
    %v6448 = vld [vmem:[%s6418 + $0x158] sm:$0xff]
    %v6449 = vld [vmem:[%s6418 + $0x168] sm:$0xff]
    %v6450 = vld [vmem:[%s6418 + $0x170] sm:$0xff]
    %v6451 = vld [vmem:[%s6418 + $0x1b0] sm:$0xff]
    %v6452 = vld [vmem:[%s6418 + $0x1b8] sm:$0xff]
    %v6453 = vld [vmem:[%s6418 + $0x1c8] sm:$0xff]
    %v6454 = vld [vmem:[%s6418 + $0x1d0] sm:$0xff]
    %v6455 = vld [vmem:[%s6418 + $0x1e0] sm:$0xff]
    %v6456 = vld [vmem:[%s6418 + $0x1e8] sm:$0xff]
    %v6457 = vld [vmem:[%s6418 + $0x1f8] sm:$0xff]
    %v6458 = vld [vmem:[%s6418 + $0x200] sm:$0xff]
    %v6459 = vld [vmem:[%s6418 + $0x210] sm:$0xff]
    %v6460 = vld [vmem:[%s6418 + $0x218] sm:$0xff]
    %v6461 = vld [vmem:[%s6418 + $0x228] sm:$0xff]
    %v6462 = vld [vmem:[%s6418 + $0x230] sm:$0xff]
    %v6463 = vld [vmem:[%s6418 + $0x240] sm:$0xff]
    %v6464 = vld [vmem:[%s6418 + $0x248] sm:$0xff]
    %v6465 = vld [vmem:[%s6418 + $0x258] sm:$0xff]
    %v6466 = vld [vmem:[%s6418 + $0x260] sm:$0xff]
    %v6467 = vld [vmem:[%s6418 + $0x270] sm:$0xff]
    %v6468 = vld [vmem:[%s6418 + $0x278] sm:$0xff]
    %v6469 = vld [vmem:[%s6418 + $0x288] sm:$0xff]
    %v6470 = vld [vmem:[%s6418 + $0x290] sm:$0xff]
    %v6471 = vld [vmem:[%s6418 + $0x2a0] sm:$0xff]
    %v6472 = vld [vmem:[%s6418 + $0x2a8] sm:$0xff]
    %v6473 = vld [vmem:[%s6418 + $0x2b8] sm:$0xff]
    %v6474 = vld [vmem:[%s6418 + $0x2c0] sm:$0xff]
    %v6475 = vld [vmem:[%s6418 + $0x2d0] sm:$0xff]
    %v6476 = vld [vmem:[%s6418 + $0x2d8] sm:$0xff]
    %v6477 = vld [vmem:[%s6418 + $0x2e8] sm:$0xff]
    %v6478 = vld [vmem:[%s6418 + $0x2f0] sm:$0xff]
    %v6479 = vld [vmem:[%s6418 + $0x300] sm:$0xff]
    %v6480 = vld [vmem:[%s6418 + $0x308] sm:$0xff]
    %v6481 = vld [vmem:[%s6418 + $0x318] sm:$0xff]
    %v6482 = vld [vmem:[%s6418 + $0x320] sm:$0xff]
    %s6483 = scalar_lea.vmem [#allocation3], 192
    %v6484 = vld [vmem:[%s6483] sm:$0xff]
    %v6485 = vld [vmem:[%s6483 + $0x8] sm:$0xff]
    %v6486 = vld [vmem:[%s6483 + $0x10] sm:$0xff]
    %v6487 = vld [vmem:[%s6483 + $0x18] sm:$0xff]
    %v6489 = vsel %vm354, %v6419, 0
    %v6492 = vsel %vm354, %v6420, 0
    %v6495 = vsel %vm354, %v6421, 0
    %v6498 = vsel %vm354, %v6422, 0
    %v6501 = vsel %vm354, %v6423, 0
    %v6504 = vsel %vm354, %v6424, 0
    %v6507 = vsel %vm354, %v6425, 0
    %v6510 = vsel %vm354, %v6426, 0
    %v6513 = vsel %vm354, %v6427, 0
    %v6516 = vsel %vm354, %v6428, 0
    %v6519 = vsel %vm354, %v6429, 0
    %v6522 = vsel %vm354, %v6430, 0
    %v6525 = vsel %vm354, %v6431, 0
    %v6528 = vsel %vm354, %v6432, 0
    %v6531 = vsel %vm354, %v6433, 0
    %v6534 = vsel %vm354, %v6434, 0
    %v6537 = vsel %vm354, %v6435, 0
    %v6540 = vsel %vm354, %v6436, 0
    %v6543 = vsel %vm354, %v6437, 0
    %v6546 = vsel %vm354, %v6438, 0
    %v6549 = vsel %vm354, %v6439, 0
    %v6552 = vsel %vm354, %v6440, 0
    %v6555 = vsel %vm354, %v6441, 0
    %v6558 = vsel %vm354, %v6442, 0
    %v6561 = vsel %vm354, %v6443, 0
    %v6564 = vsel %vm354, %v6444, 0
    %v6567 = vsel %vm354, %v6445, 0
    %v6570 = vsel %vm354, %v6446, 0
    %v6573 = vsel %vm354, %v6447, 0
    %v6576 = vsel %vm354, %v6448, 0
    %v6579 = vsel %vm354, %v6449, 0
    %v6582 = vsel %vm354, %v6450, 0
    %v6585 = vsel %vm354, %v6451, 0
    %v6588 = vsel %vm354, %v6452, 0
    %v6591 = vsel %vm354, %v6453, 0
    %v6594 = vsel %vm354, %v6454, 0
    %v6597 = vsel %vm354, %v6455, 0
    %v6600 = vsel %vm354, %v6456, 0
    %v6603 = vsel %vm354, %v6457, 0
    %v6606 = vsel %vm354, %v6458, 0
    %v6609 = vsel %vm354, %v6459, 0
    %v6612 = vsel %vm354, %v6460, 0
    %v6615 = vsel %vm354, %v6461, 0
    %v6618 = vsel %vm354, %v6462, 0
    %v6621 = vsel %vm354, %v6463, 0
    %v6624 = vsel %vm354, %v6464, 0
    %v6627 = vsel %vm354, %v6465, 0
    %v6630 = vsel %vm354, %v6466, 0
    %v6633 = vsel %vm354, %v6467, 0
    %v6636 = vsel %vm354, %v6468, 0
    %v6639 = vsel %vm354, %v6469, 0
    %v6642 = vsel %vm354, %v6470, 0
    %v6645 = vsel %vm354, %v6471, 0
    %v6648 = vsel %vm354, %v6472, 0
    %v6651 = vsel %vm354, %v6473, 0
    %v6654 = vsel %vm354, %v6474, 0
    %v6657 = vsel %vm354, %v6475, 0
    %v6660 = vsel %vm354, %v6476, 0
    %v6663 = vsel %vm354, %v6477, 0
    %v6666 = vsel %vm354, %v6478, 0
    %v6669 = vsel %vm354, %v6479, 0
    %v6672 = vsel %vm354, %v6480, 0
    %v6675 = vsel %vm354, %v6481, 0
    %v6678 = vsel %vm354, %v6482, 0
    %6680 = vmatprep.subr.mxu0 0.0
    %6681 = vmatpush1.msra.mxu0 %v6484
    %6682 = vmatprep.subr.mxu0 0.0
    %6683 = vmatpush1.msra.mxu0 %v6485
    %6684 = vmatprep.subr.mxu0 0.0
    %6685 = vmatpush1.msra.mxu0 %v6486
    %6686 = vmatprep.subr.mxu0 0.0
    %6687 = vmatpush1.msra.mxu0 %v6487
    %6688 = vmatprep.subr.mxu0 0.0
    %6689 = vmatpush1.msra.mxu0 0.0
    %6690 = vmatprep.subr.mxu0 0.0
    %6691 = vmatpush1.msra.mxu0 0.0
    %6692 = vmatprep.subr.mxu0 0.0
    %6693 = vmatpush1.msra.mxu0 0.0
    %6694 = vmatprep.subr.mxu0 0.0
    %6695 = vmatpush1.msra.mxu0 0.0
    %6696 = vmatprep.subr.mxu0 0.0
    %6697 = vmatpush1.msra.mxu0 0.0
    %6698 = vmatprep.subr.mxu0 0.0
    %6699 = vmatpush1.msra.mxu0 0.0
    %6700 = vmatprep.subr.mxu0 0.0
    %6701 = vmatpush1.msra.mxu0 0.0
    %6702 = vmatprep.subr.mxu0 0.0
    %6703 = vmatpush1.msra.mxu0 0.0
    %6704 = vmatprep.subr.mxu0 0.0
    %6705 = vmatpush1.msra.mxu0 0.0
    %6706 = vmatprep.subr.mxu0 0.0
    %6707 = vmatpush1.msra.mxu0 0.0
    %6708 = vmatprep.subr.mxu0 0.0
    %6709 = vmatpush1.msra.mxu0 0.0
    %6710 = vmatprep.subr.mxu0 0.0
    %6711 = vmatpush1.msra.mxu0 0.0
    %6712 = vmatprep.subr.mxu0 0.0
    %6713 = vmatpush1.msra.mxu0 0.0
    %6714 = vmatprep.subr.mxu0 0.0
    %6715 = vmatpush1.msra.mxu0 0.0
    %6716 = vmatprep.subr.mxu0 0.0
    %6717 = vmatpush1.msra.mxu0 0.0
    %6718 = vmatprep.subr.mxu0 0.0
    %6719 = vmatpush1.msra.mxu0 0.0
    %6720 = vmatprep.subr.mxu0 0.0
    %6721 = vmatpush1.msra.mxu0 0.0
    %6722 = vmatprep.subr.mxu0 0.0
    %6723 = vmatpush1.msra.mxu0 0.0
    %6724 = vmatprep.subr.mxu0 0.0
    %6725 = vmatpush1.msra.mxu0 0.0
    %6726 = vmatprep.subr.mxu0 0.0
    %6727 = vmatpush1.msra.mxu0 0.0
    %6728 = vmatprep.subr.mxu0 0.0
    %6729 = vmatpush1.msra.mxu0 0.0
    %6730 = vmatprep.subr.mxu0 0.0
    %6731 = vmatpush1.msra.mxu0 0.0
    %6732 = vmatprep.subr.mxu0 0.0
    %6733 = vmatpush1.msra.mxu0 0.0
    %6734 = vmatprep.subr.mxu0 0.0
    %6735 = vmatpush1.msra.mxu0 0.0
    %6736 = vmatprep.subr.mxu0 0.0
    %6737 = vmatpush1.msra.mxu0 0.0
    %6738 = vmatprep.subr.mxu0 0.0
    %6739 = vmatpush1.msra.mxu0 0.0
    %6740 = vmatprep.subr.mxu0 0.0
    %6741 = vmatpush1.msra.mxu0 0.0
    %6742 = vmatprep.subr.mxu0 0.0
    %6743 = vmatpush1.msra.mxu0 0.0
    %6744 = vmatprep.mubr.f32.mxu0 0.0
    %6745 = vmatmul.mubr.f32.gmra.mrb[0].mxu0 %v6489
    %v6746 = vpop.f32.mrb[0].mxu0
    %v6747 = vadd.f32 0.0, %v6746
    %v6748 = vpop.f32.mrb[0].mxu0
    %6749 = vmatprep.mubr.f32.mxu0 0.0
    %6750 = vmatmul.mubr.f32.gmra.mrb[0].mxu0 %v6492
    %v6751 = vpop.f32.mrb[0].mxu0
    %v6752 = vadd.f32 0.0, %v6751
    %v6753 = vpop.f32.mrb[0].mxu0
    %6754 = vmatprep.mubr.f32.mxu0 0.0
    %6755 = vmatmul.mubr.f32.gmra.mrb[0].mxu0 %v6495
    %v6756 = vpop.f32.mrb[0].mxu0
    %v6757 = vadd.f32 0.0, %v6756
    %v6758 = vpop.f32.mrb[0].mxu0
    %6759 = vmatprep.mubr.f32.mxu0 0.0
    %6760 = vmatmul.mubr.f32.gmra.mrb[0].mxu0 %v6498
    %v6761 = vpop.f32.mrb[0].mxu0
    %v6762 = vadd.f32 0.0, %v6761
    %v6763 = vpop.f32.mrb[0].mxu0
    %6764 = vmatprep.mubr.f32.mxu0 0.0
    %6765 = vmatmul.mubr.f32.gmra.mrb[0].mxu0 %v6501
    %v6766 = vpop.f32.mrb[0].mxu0
    %v6767 = vadd.f32 0.0, %v6766
    %v6768 = vpop.f32.mrb[0].mxu0
    %6769 = vmatprep.mubr.f32.mxu0 0.0
    %6770 = vmatmul.mubr.f32.gmra.mrb[0].mxu0 %v6504
    %v6771 = vpop.f32.mrb[0].mxu0
    %v6772 = vadd.f32 0.0, %v6771
    %v6773 = vpop.f32.mrb[0].mxu0
    %6774 = vmatprep.mubr.f32.mxu0 0.0
    %6775 = vmatmul.mubr.f32.gmra.mrb[0].mxu0 %v6507
    %v6776 = vpop.f32.mrb[0].mxu0
    %v6777 = vadd.f32 0.0, %v6776
    %v6778 = vpop.f32.mrb[0].mxu0
    %6779 = vmatprep.mubr.f32.mxu0 0.0
    %6780 = vmatmul.mubr.f32.gmra.mrb[0].mxu0 %v6510
    %v6781 = vpop.f32.mrb[0].mxu0
    %v6782 = vadd.f32 0.0, %v6781
    %v6783 = vpop.f32.mrb[0].mxu0
    %6784 = vmatprep.mubr.f32.mxu0 0.0
    %6785 = vmatmul.mubr.f32.gmra.mrb[0].mxu0 %v6513
    %v6786 = vpop.f32.mrb[0].mxu0
    %v6787 = vadd.f32 0.0, %v6786
    %v6788 = vpop.f32.mrb[0].mxu0
    %6789 = vmatprep.mubr.f32.mxu0 0.0
    %6790 = vmatmul.mubr.f32.gmra.mrb[0].mxu0 %v6516
    %v6791 = vpop.f32.mrb[0].mxu0
    %v6792 = vadd.f32 0.0, %v6791
    %v6793 = vpop.f32.mrb[0].mxu0
    %6794 = vmatprep.mubr.f32.mxu0 0.0
    %6795 = vmatmul.mubr.f32.gmra.mrb[0].mxu0 %v6519
    %v6796 = vpop.f32.mrb[0].mxu0
    %v6797 = vadd.f32 0.0, %v6796
    %v6798 = vpop.f32.mrb[0].mxu0
    %6799 = vmatprep.mubr.f32.mxu0 0.0
    %6800 = vmatmul.mubr.f32.gmra.mrb[0].mxu0 %v6522
    %v6801 = vpop.f32.mrb[0].mxu0
    %v6802 = vadd.f32 0.0, %v6801
    %v6803 = vpop.f32.mrb[0].mxu0
    %6804 = vmatprep.mubr.f32.mxu0 0.0
    %6805 = vmatmul.mubr.f32.gmra.mrb[0].mxu0 %v6525
    %v6806 = vpop.f32.mrb[0].mxu0
    %v6807 = vadd.f32 0.0, %v6806
    %v6808 = vpop.f32.mrb[0].mxu0
    %6809 = vmatprep.mubr.f32.mxu0 0.0
    %6810 = vmatmul.mubr.f32.gmra.mrb[0].mxu0 %v6528
    %v6811 = vpop.f32.mrb[0].mxu0
    %v6812 = vadd.f32 0.0, %v6811
    %v6813 = vpop.f32.mrb[0].mxu0
    %6814 = vmatprep.mubr.f32.mxu0 0.0
    %6815 = vmatmul.mubr.f32.gmra.mrb[0].mxu0 %v6531
    %v6816 = vpop.f32.mrb[0].mxu0
    %v6817 = vadd.f32 0.0, %v6816
    %v6818 = vpop.f32.mrb[0].mxu0
    %6819 = vmatprep.mubr.f32.mxu0 0.0
    %6820 = vmatmul.mubr.f32.gmra.mrb[0].mxu0 %v6534
    %v6821 = vpop.f32.mrb[0].mxu0
    %v6822 = vadd.f32 0.0, %v6821
    %v6823 = vpop.f32.mrb[0].mxu0
    %6824 = vmatprep.mubr.f32.mxu0 0.0
    %6825 = vmatmul.mubr.f32.gmra.mrb[0].mxu0 %v6537
    %v6826 = vpop.f32.mrb[0].mxu0
    %v6827 = vadd.f32 0.0, %v6826
    %v6828 = vpop.f32.mrb[0].mxu0
    %6829 = vmatprep.mubr.f32.mxu0 0.0
    %6830 = vmatmul.mubr.f32.gmra.mrb[0].mxu0 %v6540
    %v6831 = vpop.f32.mrb[0].mxu0
    %v6832 = vadd.f32 0.0, %v6831
    %v6833 = vpop.f32.mrb[0].mxu0
    %6834 = vmatprep.mubr.f32.mxu0 0.0
    %6835 = vmatmul.mubr.f32.gmra.mrb[0].mxu0 %v6543
    %v6836 = vpop.f32.mrb[0].mxu0
    %v6837 = vadd.f32 0.0, %v6836
    %v6838 = vpop.f32.mrb[0].mxu0
    %6839 = vmatprep.mubr.f32.mxu0 0.0
    %6840 = vmatmul.mubr.f32.gmra.mrb[0].mxu0 %v6546
    %v6841 = vpop.f32.mrb[0].mxu0
    %v6842 = vadd.f32 0.0, %v6841
    %v6843 = vpop.f32.mrb[0].mxu0
    %6844 = vmatprep.mubr.f32.mxu0 0.0
    %6845 = vmatmul.mubr.f32.gmra.mrb[0].mxu0 %v6549
    %v6846 = vpop.f32.mrb[0].mxu0
    %v6847 = vadd.f32 0.0, %v6846
    %v6848 = vpop.f32.mrb[0].mxu0
    %6849 = vmatprep.mubr.f32.mxu0 0.0
    %6850 = vmatmul.mubr.f32.gmra.mrb[0].mxu0 %v6552
    %v6851 = vpop.f32.mrb[0].mxu0
    %v6852 = vadd.f32 0.0, %v6851
    %v6853 = vpop.f32.mrb[0].mxu0
    %6854 = vmatprep.mubr.f32.mxu0 0.0
    %6855 = vmatmul.mubr.f32.gmra.mrb[0].mxu0 %v6555
    %v6856 = vpop.f32.mrb[0].mxu0
    %v6857 = vadd.f32 0.0, %v6856
    %v6858 = vpop.f32.mrb[0].mxu0
    %6859 = vmatprep.mubr.f32.mxu0 0.0
    %6860 = vmatmul.mubr.f32.gmra.mrb[0].mxu0 %v6558
    %v6861 = vpop.f32.mrb[0].mxu0
    %v6862 = vadd.f32 0.0, %v6861
    %v6863 = vpop.f32.mrb[0].mxu0
    %6864 = vmatprep.mubr.f32.mxu0 0.0
    %6865 = vmatmul.mubr.f32.gmra.mrb[0].mxu0 %v6561
    %v6866 = vpop.f32.mrb[0].mxu0
    %v6867 = vadd.f32 0.0, %v6866
    %v6868 = vpop.f32.mrb[0].mxu0
    %6869 = vmatprep.mubr.f32.mxu0 0.0
    %6870 = vmatmul.mubr.f32.gmra.mrb[0].mxu0 %v6564
    %v6871 = vpop.f32.mrb[0].mxu0
    %v6872 = vadd.f32 0.0, %v6871
    %v6873 = vpop.f32.mrb[0].mxu0
    %6874 = vmatprep.mubr.f32.mxu0 0.0
    %6875 = vmatmul.mubr.f32.gmra.mrb[0].mxu0 %v6567
    %v6876 = vpop.f32.mrb[0].mxu0
    %v6877 = vadd.f32 0.0, %v6876
    %v6878 = vpop.f32.mrb[0].mxu0
    %6879 = vmatprep.mubr.f32.mxu0 0.0
    %6880 = vmatmul.mubr.f32.gmra.mrb[0].mxu0 %v6570
    %v6881 = vpop.f32.mrb[0].mxu0
    %v6882 = vadd.f32 0.0, %v6881
    %v6883 = vpop.f32.mrb[0].mxu0
    %6884 = vmatprep.mubr.f32.mxu0 0.0
    %6885 = vmatmul.mubr.f32.gmra.mrb[0].mxu0 %v6573
    %v6886 = vpop.f32.mrb[0].mxu0
    %v6887 = vadd.f32 0.0, %v6886
    %v6888 = vpop.f32.mrb[0].mxu0
    %6889 = vmatprep.mubr.f32.mxu0 0.0
    %6890 = vmatmul.mubr.f32.gmra.mrb[0].mxu0 %v6576
    %v6891 = vpop.f32.mrb[0].mxu0
    %v6892 = vadd.f32 0.0, %v6891
    %v6893 = vpop.f32.mrb[0].mxu0
    %6894 = vmatprep.mubr.f32.mxu0 0.0
    %6895 = vmatmul.mubr.f32.gmra.mrb[0].mxu0 %v6579
    %v6896 = vpop.f32.mrb[0].mxu0
    %v6897 = vadd.f32 0.0, %v6896
    %v6898 = vpop.f32.mrb[0].mxu0
    %6899 = vmatprep.mubr.f32.mxu0 0.0
    %6900 = vmatmul.mubr.f32.gmra.mrb[0].mxu0 %v6582
    %v6901 = vpop.f32.mrb[0].mxu0
    %v6902 = vadd.f32 0.0, %v6901
    %v6903 = vpop.f32.mrb[0].mxu0
    %6904 = vmatprep.mubr.f32.mxu0 0.0
    %6905 = vmatmul.mubr.f32.gmra.mrb[0].mxu0 %v6585
    %v6906 = vpop.f32.mrb[0].mxu0
    %v6907 = vadd.f32 0.0, %v6906
    %v6908 = vpop.f32.mrb[0].mxu0
    %6909 = vmatprep.mubr.f32.mxu0 0.0
    %6910 = vmatmul.mubr.f32.gmra.mrb[0].mxu0 %v6588
    %v6911 = vpop.f32.mrb[0].mxu0
    %v6912 = vadd.f32 0.0, %v6911
    %v6913 = vpop.f32.mrb[0].mxu0
    %6914 = vmatprep.mubr.f32.mxu0 0.0
    %6915 = vmatmul.mubr.f32.gmra.mrb[0].mxu0 %v6591
    %v6916 = vpop.f32.mrb[0].mxu0
    %v6917 = vadd.f32 0.0, %v6916
    %v6918 = vpop.f32.mrb[0].mxu0
    %6919 = vmatprep.mubr.f32.mxu0 0.0
    %6920 = vmatmul.mubr.f32.gmra.mrb[0].mxu0 %v6594
    %v6921 = vpop.f32.mrb[0].mxu0
    %v6922 = vadd.f32 0.0, %v6921
    %v6923 = vpop.f32.mrb[0].mxu0
    %6924 = vmatprep.mubr.f32.mxu0 0.0
    %6925 = vmatmul.mubr.f32.gmra.mrb[0].mxu0 %v6597
    %v6926 = vpop.f32.mrb[0].mxu0
    %v6927 = vadd.f32 0.0, %v6926
    %v6928 = vpop.f32.mrb[0].mxu0
    %6929 = vmatprep.mubr.f32.mxu0 0.0
    %6930 = vmatmul.mubr.f32.gmra.mrb[0].mxu0 %v6600
    %v6931 = vpop.f32.mrb[0].mxu0
    %v6932 = vadd.f32 0.0, %v6931
    %v6933 = vpop.f32.mrb[0].mxu0
    %6934 = vmatprep.mubr.f32.mxu0 0.0
    %6935 = vmatmul.mubr.f32.gmra.mrb[0].mxu0 %v6603
    %v6936 = vpop.f32.mrb[0].mxu0
    %v6937 = vadd.f32 0.0, %v6936
    %v6938 = vpop.f32.mrb[0].mxu0
    %6939 = vmatprep.mubr.f32.mxu0 0.0
    %6940 = vmatmul.mubr.f32.gmra.mrb[0].mxu0 %v6606
    %v6941 = vpop.f32.mrb[0].mxu0
    %v6942 = vadd.f32 0.0, %v6941
    %v6943 = vpop.f32.mrb[0].mxu0
    %6944 = vmatprep.mubr.f32.mxu0 0.0
    %6945 = vmatmul.mubr.f32.gmra.mrb[0].mxu0 %v6609
    %v6946 = vpop.f32.mrb[0].mxu0
    %v6947 = vadd.f32 0.0, %v6946
    %v6948 = vpop.f32.mrb[0].mxu0
    %6949 = vmatprep.mubr.f32.mxu0 0.0
    %6950 = vmatmul.mubr.f32.gmra.mrb[0].mxu0 %v6612
    %v6951 = vpop.f32.mrb[0].mxu0
    %v6952 = vadd.f32 0.0, %v6951
    %v6953 = vpop.f32.mrb[0].mxu0
    %6954 = vmatprep.mubr.f32.mxu0 0.0
    %6955 = vmatmul.mubr.f32.gmra.mrb[0].mxu0 %v6615
    %v6956 = vpop.f32.mrb[0].mxu0
    %v6957 = vadd.f32 0.0, %v6956
    %v6958 = vpop.f32.mrb[0].mxu0
    %6959 = vmatprep.mubr.f32.mxu0 0.0
    %6960 = vmatmul.mubr.f32.gmra.mrb[0].mxu0 %v6618
    %v6961 = vpop.f32.mrb[0].mxu0
    %v6962 = vadd.f32 0.0, %v6961
    %v6963 = vpop.f32.mrb[0].mxu0
    %6964 = vmatprep.mubr.f32.mxu0 0.0
    %6965 = vmatmul.mubr.f32.gmra.mrb[0].mxu0 %v6621
    %v6966 = vpop.f32.mrb[0].mxu0
    %v6967 = vadd.f32 0.0, %v6966
    %v6968 = vpop.f32.mrb[0].mxu0
    %6969 = vmatprep.mubr.f32.mxu0 0.0
    %6970 = vmatmul.mubr.f32.gmra.mrb[0].mxu0 %v6624
    %v6971 = vpop.f32.mrb[0].mxu0
    %v6972 = vadd.f32 0.0, %v6971
    %v6973 = vpop.f32.mrb[0].mxu0
    %6974 = vmatprep.mubr.f32.mxu0 0.0
    %6975 = vmatmul.mubr.f32.gmra.mrb[0].mxu0 %v6627
    %v6976 = vpop.f32.mrb[0].mxu0
    %v6977 = vadd.f32 0.0, %v6976
    %v6978 = vpop.f32.mrb[0].mxu0
    %6979 = vmatprep.mubr.f32.mxu0 0.0
    %6980 = vmatmul.mubr.f32.gmra.mrb[0].mxu0 %v6630
    %v6981 = vpop.f32.mrb[0].mxu0
    %v6982 = vadd.f32 0.0, %v6981
    %v6983 = vpop.f32.mrb[0].mxu0
    %6984 = vmatprep.mubr.f32.mxu0 0.0
    %6985 = vmatmul.mubr.f32.gmra.mrb[0].mxu0 %v6633
    %v6986 = vpop.f32.mrb[0].mxu0
    %v6987 = vadd.f32 0.0, %v6986
    %v6988 = vpop.f32.mrb[0].mxu0
    %6989 = vmatprep.mubr.f32.mxu0 0.0
    %6990 = vmatmul.mubr.f32.gmra.mrb[0].mxu0 %v6636
    %v6991 = vpop.f32.mrb[0].mxu0
    %v6992 = vadd.f32 0.0, %v6991
    %v6993 = vpop.f32.mrb[0].mxu0
    %6994 = vmatprep.mubr.f32.mxu0 0.0
    %6995 = vmatmul.mubr.f32.gmra.mrb[0].mxu0 %v6639
    %v6996 = vpop.f32.mrb[0].mxu0
    %v6997 = vadd.f32 0.0, %v6996
    %v6998 = vpop.f32.mrb[0].mxu0
    %6999 = vmatprep.mubr.f32.mxu0 0.0
    %7000 = vmatmul.mubr.f32.gmra.mrb[0].mxu0 %v6642
    %v7001 = vpop.f32.mrb[0].mxu0
    %v7002 = vadd.f32 0.0, %v7001
    %v7003 = vpop.f32.mrb[0].mxu0
    %7004 = vmatprep.mubr.f32.mxu0 0.0
    %7005 = vmatmul.mubr.f32.gmra.mrb[0].mxu0 %v6645
    %v7006 = vpop.f32.mrb[0].mxu0
    %v7007 = vadd.f32 0.0, %v7006
    %v7008 = vpop.f32.mrb[0].mxu0
    %7009 = vmatprep.mubr.f32.mxu0 0.0
    %7010 = vmatmul.mubr.f32.gmra.mrb[0].mxu0 %v6648
    %v7011 = vpop.f32.mrb[0].mxu0
    %v7012 = vadd.f32 0.0, %v7011
    %v7013 = vpop.f32.mrb[0].mxu0
    %7014 = vmatprep.mubr.f32.mxu0 0.0
    %7015 = vmatmul.mubr.f32.gmra.mrb[0].mxu0 %v6651
    %v7016 = vpop.f32.mrb[0].mxu0
    %v7017 = vadd.f32 0.0, %v7016
    %v7018 = vpop.f32.mrb[0].mxu0
    %7019 = vmatprep.mubr.f32.mxu0 0.0
    %7020 = vmatmul.mubr.f32.gmra.mrb[0].mxu0 %v6654
    %v7021 = vpop.f32.mrb[0].mxu0
    %v7022 = vadd.f32 0.0, %v7021
    %v7023 = vpop.f32.mrb[0].mxu0
    %7024 = vmatprep.mubr.f32.mxu0 0.0
    %7025 = vmatmul.mubr.f32.gmra.mrb[0].mxu0 %v6657
    %v7026 = vpop.f32.mrb[0].mxu0
    %v7027 = vadd.f32 0.0, %v7026
    %v7028 = vpop.f32.mrb[0].mxu0
    %7029 = vmatprep.mubr.f32.mxu0 0.0
    %7030 = vmatmul.mubr.f32.gmra.mrb[0].mxu0 %v6660
    %v7031 = vpop.f32.mrb[0].mxu0
    %v7032 = vadd.f32 0.0, %v7031
    %v7033 = vpop.f32.mrb[0].mxu0
    %7034 = vmatprep.mubr.f32.mxu0 0.0
    %7035 = vmatmul.mubr.f32.gmra.mrb[0].mxu0 %v6663
    %v7036 = vpop.f32.mrb[0].mxu0
    %v7037 = vadd.f32 0.0, %v7036
    %v7038 = vpop.f32.mrb[0].mxu0
    %7039 = vmatprep.mubr.f32.mxu0 0.0
    %7040 = vmatmul.mubr.f32.gmra.mrb[0].mxu0 %v6666
    %v7041 = vpop.f32.mrb[0].mxu0
    %v7042 = vadd.f32 0.0, %v7041
    %v7043 = vpop.f32.mrb[0].mxu0
    %7044 = vmatprep.mubr.f32.mxu0 0.0
    %7045 = vmatmul.mubr.f32.gmra.mrb[0].mxu0 %v6669
    %v7046 = vpop.f32.mrb[0].mxu0
    %v7047 = vadd.f32 0.0, %v7046
    %v7048 = vpop.f32.mrb[0].mxu0
    %7049 = vmatprep.mubr.f32.mxu0 0.0
    %7050 = vmatmul.mubr.f32.gmra.mrb[0].mxu0 %v6672
    %v7051 = vpop.f32.mrb[0].mxu0
    %v7052 = vadd.f32 0.0, %v7051
    %v7053 = vpop.f32.mrb[0].mxu0
    %7054 = vmatprep.mubr.f32.mxu0 0.0
    %7055 = vmatmul.mubr.f32.gmra.mrb[0].mxu0 %v6675
    %v7056 = vpop.f32.mrb[0].mxu0
    %v7057 = vadd.f32 0.0, %v7056
    %v7058 = vpop.f32.mrb[0].mxu0
    %7059 = vmatprep.mubr.f32.mxu0 0.0
    %7060 = vmatmul.mubr.f32.gmra.mrb[0].mxu0 %v6678
    %v7061 = vpop.f32.mrb[0].mxu0
    %v7062 = vadd.f32 0.0, %v7061
    %v7063 = vpop.f32.mrb[0].mxu0
    %7064 = vdwg.mxu0
    %v7065 = vadd.f32 %v6354, %v6747
    %v7066 = vadd.f32 %v6355, %v6752
    %v7067 = vadd.f32 %v6356, %v6757
    %v7068 = vadd.f32 %v6357, %v6762
    %v7069 = vadd.f32 %v6358, %v6767
    %v7070 = vadd.f32 %v6359, %v6772
    %v7071 = vadd.f32 %v6360, %v6777
    %v7072 = vadd.f32 %v6361, %v6782
    %v7073 = vadd.f32 %v6362, %v6787
    %v7074 = vadd.f32 %v6363, %v6792
    %v7075 = vadd.f32 %v6364, %v6797
    %v7076 = vadd.f32 %v6365, %v6802
    %v7077 = vadd.f32 %v6366, %v6807
    %v7078 = vadd.f32 %v6367, %v6812
    %v7079 = vadd.f32 %v6368, %v6817
    %v7080 = vadd.f32 %v6369, %v6822
    %v7081 = vadd.f32 %v6370, %v6827
    %v7082 = vadd.f32 %v6371, %v6832
    %v7083 = vadd.f32 %v6372, %v6837
    %v7084 = vadd.f32 %v6373, %v6842
    %v7085 = vadd.f32 %v6374, %v6847
    %v7086 = vadd.f32 %v6375, %v6852
    %v7087 = vadd.f32 %v6376, %v6857
    %v7088 = vadd.f32 %v6377, %v6862
    %v7089 = vadd.f32 %v6378, %v6867
    %v7090 = vadd.f32 %v6379, %v6872
    %v7091 = vadd.f32 %v6380, %v6877
    %v7092 = vadd.f32 %v6381, %v6882
    %v7093 = vadd.f32 %v6382, %v6887
    %v7094 = vadd.f32 %v6383, %v6892
    %v7095 = vadd.f32 %v6384, %v6897
    %v7096 = vadd.f32 %v6385, %v6902
    %v7097 = vadd.f32 %v6386, %v6907
    %v7098 = vadd.f32 %v6387, %v6912
    %v7099 = vadd.f32 %v6388, %v6917
    %v7100 = vadd.f32 %v6389, %v6922
    %v7101 = vadd.f32 %v6390, %v6927
    %v7102 = vadd.f32 %v6391, %v6932
    %v7103 = vadd.f32 %v6392, %v6937
    %v7104 = vadd.f32 %v6393, %v6942
    %v7105 = vadd.f32 %v6394, %v6947
    %v7106 = vadd.f32 %v6395, %v6952
    %v7107 = vadd.f32 %v6396, %v6957
    %v7108 = vadd.f32 %v6397, %v6962
    %v7109 = vadd.f32 %v6398, %v6967
    %v7110 = vadd.f32 %v6399, %v6972
    %v7111 = vadd.f32 %v6400, %v6977
    %v7112 = vadd.f32 %v6401, %v6982
    %v7113 = vadd.f32 %v6402, %v6987
    %v7114 = vadd.f32 %v6403, %v6992
    %v7115 = vadd.f32 %v6404, %v6997
    %v7116 = vadd.f32 %v6405, %v7002
    %v7117 = vadd.f32 %v6406, %v7007
    %v7118 = vadd.f32 %v6407, %v7012
    %v7119 = vadd.f32 %v6408, %v7017
    %v7120 = vadd.f32 %v6409, %v7022
    %v7121 = vadd.f32 %v6410, %v7027
    %v7122 = vadd.f32 %v6411, %v7032
    %v7123 = vadd.f32 %v6412, %v7037
    %v7124 = vadd.f32 %v6413, %v7042
    %v7125 = vadd.f32 %v6414, %v7047
    %v7126 = vadd.f32 %v6415, %v7052
    %v7127 = vadd.f32 %v6416, %v7057
    %v7128 = vadd.f32 %v6417, %v7062
    %v7129 = vld [vmem:[%s6418 + $0x1] sm:$0xff]
    %v7130 = vld [vmem:[%s6418 + $0x9] sm:$0xff]
    %v7131 = vld [vmem:[%s6418 + $0x19] sm:$0xff]
    %v7132 = vld [vmem:[%s6418 + $0x21] sm:$0xff]
    %v7133 = vld [vmem:[%s6418 + $0x31] sm:$0xff]
    %v7134 = vld [vmem:[%s6418 + $0x39] sm:$0xff]
    %v7135 = vld [vmem:[%s6418 + $0x49] sm:$0xff]
    %v7136 = vld [vmem:[%s6418 + $0x51] sm:$0xff]
    %v7137 = vld [vmem:[%s6418 + $0x61] sm:$0xff]
    %v7138 = vld [vmem:[%s6418 + $0x69] sm:$0xff]
    %v7139 = vld [vmem:[%s6418 + $0x79] sm:$0xff]
    %v7140 = vld [vmem:[%s6418 + $0x81] sm:$0xff]
    %v7141 = vld [vmem:[%s6418 + $0x91] sm:$0xff]
    %v7142 = vld [vmem:[%s6418 + $0x99] sm:$0xff]
    %v7143 = vld [vmem:[%s6418 + $0xa9] sm:$0xff]
    %v7144 = vld [vmem:[%s6418 + $0xb1] sm:$0xff]
    %v7145 = vld [vmem:[%s6418 + $0xc1] sm:$0xff]
    %v7146 = vld [vmem:[%s6418 + $0xc9] sm:$0xff]
    %v7147 = vld [vmem:[%s6418 + $0xd9] sm:$0xff]
    %v7148 = vld [vmem:[%s6418 + $0xe1] sm:$0xff]
    %v7149 = vld [vmem:[%s6418 + $0xf1] sm:$0xff]
    %v7150 = vld [vmem:[%s6418 + $0xf9] sm:$0xff]
    %v7151 = vld [vmem:[%s6418 + $0x109] sm:$0xff]
    %v7152 = vld [vmem:[%s6418 + $0x111] sm:$0xff]
    %v7153 = vld [vmem:[%s6418 + $0x121] sm:$0xff]
    %v7154 = vld [vmem:[%s6418 + $0x129] sm:$0xff]
    %v7155 = vld [vmem:[%s6418 + $0x139] sm:$0xff]
    %v7156 = vld [vmem:[%s6418 + $0x141] sm:$0xff]
    %v7157 = vld [vmem:[%s6418 + $0x151] sm:$0xff]
    %v7158 = vld [vmem:[%s6418 + $0x159] sm:$0xff]
    %v7159 = vld [vmem:[%s6418 + $0x169] sm:$0xff]
    %v7160 = vld [vmem:[%s6418 + $0x171] sm:$0xff]
    %v7161 = vld [vmem:[%s6418 + $0x1b1] sm:$0xff]
    %v7162 = vld [vmem:[%s6418 + $0x1b9] sm:$0xff]
    %v7163 = vld [vmem:[%s6418 + $0x1c9] sm:$0xff]
    %v7164 = vld [vmem:[%s6418 + $0x1d1] sm:$0xff]
    %v7165 = vld [vmem:[%s6418 + $0x1e1] sm:$0xff]
    %v7166 = vld [vmem:[%s6418 + $0x1e9] sm:$0xff]
    %v7167 = vld [vmem:[%s6418 + $0x1f9] sm:$0xff]
    %v7168 = vld [vmem:[%s6418 + $0x201] sm:$0xff]
    %v7169 = vld [vmem:[%s6418 + $0x211] sm:$0xff]
    %v7170 = vld [vmem:[%s6418 + $0x219] sm:$0xff]
    %v7171 = vld [vmem:[%s6418 + $0x229] sm:$0xff]
    %v7172 = vld [vmem:[%s6418 + $0x231] sm:$0xff]
    %v7173 = vld [vmem:[%s6418 + $0x241] sm:$0xff]
    %v7174 = vld [vmem:[%s6418 + $0x249] sm:$0xff]
    %v7175 = vld [vmem:[%s6418 + $0x259] sm:$0xff]
    %v7176 = vld [vmem:[%s6418 + $0x261] sm:$0xff]
    %v7177 = vld [vmem:[%s6418 + $0x271] sm:$0xff]
    %v7178 = vld [vmem:[%s6418 + $0x279] sm:$0xff]
    %v7179 = vld [vmem:[%s6418 + $0x289] sm:$0xff]
    %v7180 = vld [vmem:[%s6418 + $0x291] sm:$0xff]
    %v7181 = vld [vmem:[%s6418 + $0x2a1] sm:$0xff]
    %v7182 = vld [vmem:[%s6418 + $0x2a9] sm:$0xff]
    %v7183 = vld [vmem:[%s6418 + $0x2b9] sm:$0xff]
    %v7184 = vld [vmem:[%s6418 + $0x2c1] sm:$0xff]
    %v7185 = vld [vmem:[%s6418 + $0x2d1] sm:$0xff]
    %v7186 = vld [vmem:[%s6418 + $0x2d9] sm:$0xff]
    %v7187 = vld [vmem:[%s6418 + $0x2e9] sm:$0xff]
    %v7188 = vld [vmem:[%s6418 + $0x2f1] sm:$0xff]
    %v7189 = vld [vmem:[%s6418 + $0x301] sm:$0xff]
    %v7190 = vld [vmem:[%s6418 + $0x309] sm:$0xff]
    %v7191 = vld [vmem:[%s6418 + $0x319] sm:$0xff]
    %v7192 = vld [vmem:[%s6418 + $0x321] sm:$0xff]
    %s7193 = scalar_lea.vmem [#allocation3], 224
    %v7194 = vld [vmem:[%s7193] sm:$0xff]
    %v7195 = vld [vmem:[%s7193 + $0x8] sm:$0xff]
    %v7196 = vld [vmem:[%s7193 + $0x10] sm:$0xff]
    %v7197 = vld [vmem:[%s7193 + $0x18] sm:$0xff]
    %v7199 = vsel %vm354, %v7129, 0
    %v7202 = vsel %vm354, %v7130, 0
    %v7205 = vsel %vm354, %v7131, 0
    %v7208 = vsel %vm354, %v7132, 0
    %v7211 = vsel %vm354, %v7133, 0
    %v7214 = vsel %vm354, %v7134, 0
    %v7217 = vsel %vm354, %v7135, 0
    %v7220 = vsel %vm354, %v7136, 0
    %v7223 = vsel %vm354, %v7137, 0
    %v7226 = vsel %vm354, %v7138, 0
    %v7229 = vsel %vm354, %v7139, 0
    %v7232 = vsel %vm354, %v7140, 0
    %v7235 = vsel %vm354, %v7141, 0
    %v7238 = vsel %vm354, %v7142, 0
    %v7241 = vsel %vm354, %v7143, 0
    %v7244 = vsel %vm354, %v7144, 0
    %v7247 = vsel %vm354, %v7145, 0
    %v7250 = vsel %vm354, %v7146, 0
    %v7253 = vsel %vm354, %v7147, 0
    %v7256 = vsel %vm354, %v7148, 0
    %v7259 = vsel %vm354, %v7149, 0
    %v7262 = vsel %vm354, %v7150, 0
    %v7265 = vsel %vm354, %v7151, 0
    %v7268 = vsel %vm354, %v7152, 0
    %v7271 = vsel %vm354, %v7153, 0
    %v7274 = vsel %vm354, %v7154, 0
    %v7277 = vsel %vm354, %v7155, 0
    %v7280 = vsel %vm354, %v7156, 0
    %v7283 = vsel %vm354, %v7157, 0
    %v7286 = vsel %vm354, %v7158, 0
    %v7289 = vsel %vm354, %v7159, 0
    %v7292 = vsel %vm354, %v7160, 0
    %v7295 = vsel %vm354, %v7161, 0
    %v7298 = vsel %vm354, %v7162, 0
    %v7301 = vsel %vm354, %v7163, 0
    %v7304 = vsel %vm354, %v7164, 0
    %v7307 = vsel %vm354, %v7165, 0
    %v7310 = vsel %vm354, %v7166, 0
    %v7313 = vsel %vm354, %v7167, 0
    %v7316 = vsel %vm354, %v7168, 0
    %v7319 = vsel %vm354, %v7169, 0
    %v7322 = vsel %vm354, %v7170, 0
    %v7325 = vsel %vm354, %v7171, 0
    %v7328 = vsel %vm354, %v7172, 0
    %v7331 = vsel %vm354, %v7173, 0
    %v7334 = vsel %vm354, %v7174, 0
    %v7337 = vsel %vm354, %v7175, 0
    %v7340 = vsel %vm354, %v7176, 0
    %v7343 = vsel %vm354, %v7177, 0
    %v7346 = vsel %vm354, %v7178, 0
    %v7349 = vsel %vm354, %v7179, 0
    %v7352 = vsel %vm354, %v7180, 0
    %v7355 = vsel %vm354, %v7181, 0
    %v7358 = vsel %vm354, %v7182, 0
    %v7361 = vsel %vm354, %v7183, 0
    %v7364 = vsel %vm354, %v7184, 0
    %v7367 = vsel %vm354, %v7185, 0
    %v7370 = vsel %vm354, %v7186, 0
    %v7373 = vsel %vm354, %v7187, 0
    %v7376 = vsel %vm354, %v7188, 0
    %v7379 = vsel %vm354, %v7189, 0
    %v7382 = vsel %vm354, %v7190, 0
    %v7385 = vsel %vm354, %v7191, 0
    %v7388 = vsel %vm354, %v7192, 0
    %7390 = vmatprep.subr.mxu0 0.0
    %7391 = vmatpush1.msra.mxu0 %v7194
    %7392 = vmatprep.subr.mxu0 0.0
    %7393 = vmatpush1.msra.mxu0 %v7195
    %7394 = vmatprep.subr.mxu0 0.0
    %7395 = vmatpush1.msra.mxu0 %v7196
    %7396 = vmatprep.subr.mxu0 0.0
    %7397 = vmatpush1.msra.mxu0 %v7197
    %7398 = vmatprep.subr.mxu0 0.0
    %7399 = vmatpush1.msra.mxu0 0.0
    %7400 = vmatprep.subr.mxu0 0.0
    %7401 = vmatpush1.msra.mxu0 0.0
    %7402 = vmatprep.subr.mxu0 0.0
    %7403 = vmatpush1.msra.mxu0 0.0
    %7404 = vmatprep.subr.mxu0 0.0
    %7405 = vmatpush1.msra.mxu0 0.0
    %7406 = vmatprep.subr.mxu0 0.0
    %7407 = vmatpush1.msra.mxu0 0.0
    %7408 = vmatprep.subr.mxu0 0.0
    %7409 = vmatpush1.msra.mxu0 0.0
    %7410 = vmatprep.subr.mxu0 0.0
    %7411 = vmatpush1.msra.mxu0 0.0
    %7412 = vmatprep.subr.mxu0 0.0
    %7413 = vmatpush1.msra.mxu0 0.0
    %7414 = vmatprep.subr.mxu0 0.0
    %7415 = vmatpush1.msra.mxu0 0.0
    %7416 = vmatprep.subr.mxu0 0.0
    %7417 = vmatpush1.msra.mxu0 0.0
    %7418 = vmatprep.subr.mxu0 0.0
    %7419 = vmatpush1.msra.mxu0 0.0
    %7420 = vmatprep.subr.mxu0 0.0
    %7421 = vmatpush1.msra.mxu0 0.0
    %7422 = vmatprep.subr.mxu0 0.0
    %7423 = vmatpush1.msra.mxu0 0.0
    %7424 = vmatprep.subr.mxu0 0.0
    %7425 = vmatpush1.msra.mxu0 0.0
    %7426 = vmatprep.subr.mxu0 0.0
    %7427 = vmatpush1.msra.mxu0 0.0
    %7428 = vmatprep.subr.mxu0 0.0
    %7429 = vmatpush1.msra.mxu0 0.0
    %7430 = vmatprep.subr.mxu0 0.0
    %7431 = vmatpush1.msra.mxu0 0.0
    %7432 = vmatprep.subr.mxu0 0.0
    %7433 = vmatpush1.msra.mxu0 0.0
    %7434 = vmatprep.subr.mxu0 0.0
    %7435 = vmatpush1.msra.mxu0 0.0
    %7436 = vmatprep.subr.mxu0 0.0
    %7437 = vmatpush1.msra.mxu0 0.0
    %7438 = vmatprep.subr.mxu0 0.0
    %7439 = vmatpush1.msra.mxu0 0.0
    %7440 = vmatprep.subr.mxu0 0.0
    %7441 = vmatpush1.msra.mxu0 0.0
    %7442 = vmatprep.subr.mxu0 0.0
    %7443 = vmatpush1.msra.mxu0 0.0
    %7444 = vmatprep.subr.mxu0 0.0
    %7445 = vmatpush1.msra.mxu0 0.0
    %7446 = vmatprep.subr.mxu0 0.0
    %7447 = vmatpush1.msra.mxu0 0.0
    %7448 = vmatprep.subr.mxu0 0.0
    %7449 = vmatpush1.msra.mxu0 0.0
    %7450 = vmatprep.subr.mxu0 0.0
    %7451 = vmatpush1.msra.mxu0 0.0
    %7452 = vmatprep.subr.mxu0 0.0
    %7453 = vmatpush1.msra.mxu0 0.0
    %7454 = vmatprep.mubr.f32.mxu0 0.0
    %7455 = vmatmul.mubr.f32.gmra.mrb[0].mxu0 %v7199
    %v7456 = vpop.f32.mrb[0].mxu0
    %v7457 = vadd.f32 0.0, %v7456
    %v7458 = vpop.f32.mrb[0].mxu0
    %7459 = vmatprep.mubr.f32.mxu0 0.0
    %7460 = vmatmul.mubr.f32.gmra.mrb[0].mxu0 %v7202
    %v7461 = vpop.f32.mrb[0].mxu0
    %v7462 = vadd.f32 0.0, %v7461
    %v7463 = vpop.f32.mrb[0].mxu0
    %7464 = vmatprep.mubr.f32.mxu0 0.0
    %7465 = vmatmul.mubr.f32.gmra.mrb[0].mxu0 %v7205
    %v7466 = vpop.f32.mrb[0].mxu0
    %v7467 = vadd.f32 0.0, %v7466
    %v7468 = vpop.f32.mrb[0].mxu0
    %7469 = vmatprep.mubr.f32.mxu0 0.0
    %7470 = vmatmul.mubr.f32.gmra.mrb[0].mxu0 %v7208
    %v7471 = vpop.f32.mrb[0].mxu0
    %v7472 = vadd.f32 0.0, %v7471
    %v7473 = vpop.f32.mrb[0].mxu0
    %7474 = vmatprep.mubr.f32.mxu0 0.0
    %7475 = vmatmul.mubr.f32.gmra.mrb[0].mxu0 %v7211
    %v7476 = vpop.f32.mrb[0].mxu0
    %v7477 = vadd.f32 0.0, %v7476
    %v7478 = vpop.f32.mrb[0].mxu0
    %7479 = vmatprep.mubr.f32.mxu0 0.0
    %7480 = vmatmul.mubr.f32.gmra.mrb[0].mxu0 %v7214
    %v7481 = vpop.f32.mrb[0].mxu0
    %v7482 = vadd.f32 0.0, %v7481
    %v7483 = vpop.f32.mrb[0].mxu0
    %7484 = vmatprep.mubr.f32.mxu0 0.0
    %7485 = vmatmul.mubr.f32.gmra.mrb[0].mxu0 %v7217
    %v7486 = vpop.f32.mrb[0].mxu0
    %v7487 = vadd.f32 0.0, %v7486
    %v7488 = vpop.f32.mrb[0].mxu0
    %7489 = vmatprep.mubr.f32.mxu0 0.0
    %7490 = vmatmul.mubr.f32.gmra.mrb[0].mxu0 %v7220
    %v7491 = vpop.f32.mrb[0].mxu0
    %v7492 = vadd.f32 0.0, %v7491
    %v7493 = vpop.f32.mrb[0].mxu0
    %7494 = vmatprep.mubr.f32.mxu0 0.0
    %7495 = vmatmul.mubr.f32.gmra.mrb[0].mxu0 %v7223
    %v7496 = vpop.f32.mrb[0].mxu0
    %v7497 = vadd.f32 0.0, %v7496
    %v7498 = vpop.f32.mrb[0].mxu0
    %7499 = vmatprep.mubr.f32.mxu0 0.0
    %7500 = vmatmul.mubr.f32.gmra.mrb[0].mxu0 %v7226
    %v7501 = vpop.f32.mrb[0].mxu0
    %v7502 = vadd.f32 0.0, %v7501
    %v7503 = vpop.f32.mrb[0].mxu0
    %7504 = vmatprep.mubr.f32.mxu0 0.0
    %7505 = vmatmul.mubr.f32.gmra.mrb[0].mxu0 %v7229
    %v7506 = vpop.f32.mrb[0].mxu0
    %v7507 = vadd.f32 0.0, %v7506
    %v7508 = vpop.f32.mrb[0].mxu0
    %7509 = vmatprep.mubr.f32.mxu0 0.0
    %7510 = vmatmul.mubr.f32.gmra.mrb[0].mxu0 %v7232
    %v7511 = vpop.f32.mrb[0].mxu0
    %v7512 = vadd.f32 0.0, %v7511
    %v7513 = vpop.f32.mrb[0].mxu0
    %7514 = vmatprep.mubr.f32.mxu0 0.0
    %7515 = vmatmul.mubr.f32.gmra.mrb[0].mxu0 %v7235
    %v7516 = vpop.f32.mrb[0].mxu0
    %v7517 = vadd.f32 0.0, %v7516
    %v7518 = vpop.f32.mrb[0].mxu0
    %7519 = vmatprep.mubr.f32.mxu0 0.0
    %7520 = vmatmul.mubr.f32.gmra.mrb[0].mxu0 %v7238
    %v7521 = vpop.f32.mrb[0].mxu0
    %v7522 = vadd.f32 0.0, %v7521
    %v7523 = vpop.f32.mrb[0].mxu0
    %7524 = vmatprep.mubr.f32.mxu0 0.0
    %7525 = vmatmul.mubr.f32.gmra.mrb[0].mxu0 %v7241
    %v7526 = vpop.f32.mrb[0].mxu0
    %v7527 = vadd.f32 0.0, %v7526
    %v7528 = vpop.f32.mrb[0].mxu0
    %7529 = vmatprep.mubr.f32.mxu0 0.0
    %7530 = vmatmul.mubr.f32.gmra.mrb[0].mxu0 %v7244
    %v7531 = vpop.f32.mrb[0].mxu0
    %v7532 = vadd.f32 0.0, %v7531
    %v7533 = vpop.f32.mrb[0].mxu0
    %7534 = vmatprep.mubr.f32.mxu0 0.0
    %7535 = vmatmul.mubr.f32.gmra.mrb[0].mxu0 %v7247
    %v7536 = vpop.f32.mrb[0].mxu0
    %v7537 = vadd.f32 0.0, %v7536
    %v7538 = vpop.f32.mrb[0].mxu0
    %7539 = vmatprep.mubr.f32.mxu0 0.0
    %7540 = vmatmul.mubr.f32.gmra.mrb[0].mxu0 %v7250
    %v7541 = vpop.f32.mrb[0].mxu0
    %v7542 = vadd.f32 0.0, %v7541
    %v7543 = vpop.f32.mrb[0].mxu0
    %7544 = vmatprep.mubr.f32.mxu0 0.0
    %7545 = vmatmul.mubr.f32.gmra.mrb[0].mxu0 %v7253
    %v7546 = vpop.f32.mrb[0].mxu0
    %v7547 = vadd.f32 0.0, %v7546
    %v7548 = vpop.f32.mrb[0].mxu0
    %7549 = vmatprep.mubr.f32.mxu0 0.0
    %7550 = vmatmul.mubr.f32.gmra.mrb[0].mxu0 %v7256
    %v7551 = vpop.f32.mrb[0].mxu0
    %v7552 = vadd.f32 0.0, %v7551
    %v7553 = vpop.f32.mrb[0].mxu0
    %7554 = vmatprep.mubr.f32.mxu0 0.0
    %7555 = vmatmul.mubr.f32.gmra.mrb[0].mxu0 %v7259
    %v7556 = vpop.f32.mrb[0].mxu0
    %v7557 = vadd.f32 0.0, %v7556
    %v7558 = vpop.f32.mrb[0].mxu0
    %7559 = vmatprep.mubr.f32.mxu0 0.0
    %7560 = vmatmul.mubr.f32.gmra.mrb[0].mxu0 %v7262
    %v7561 = vpop.f32.mrb[0].mxu0
    %v7562 = vadd.f32 0.0, %v7561
    %v7563 = vpop.f32.mrb[0].mxu0
    %7564 = vmatprep.mubr.f32.mxu0 0.0
    %7565 = vmatmul.mubr.f32.gmra.mrb[0].mxu0 %v7265
    %v7566 = vpop.f32.mrb[0].mxu0
    %v7567 = vadd.f32 0.0, %v7566
    %v7568 = vpop.f32.mrb[0].mxu0
    %7569 = vmatprep.mubr.f32.mxu0 0.0
    %7570 = vmatmul.mubr.f32.gmra.mrb[0].mxu0 %v7268
    %v7571 = vpop.f32.mrb[0].mxu0
    %v7572 = vadd.f32 0.0, %v7571
    %v7573 = vpop.f32.mrb[0].mxu0
    %7574 = vmatprep.mubr.f32.mxu0 0.0
    %7575 = vmatmul.mubr.f32.gmra.mrb[0].mxu0 %v7271
    %v7576 = vpop.f32.mrb[0].mxu0
    %v7577 = vadd.f32 0.0, %v7576
    %v7578 = vpop.f32.mrb[0].mxu0
    %7579 = vmatprep.mubr.f32.mxu0 0.0
    %7580 = vmatmul.mubr.f32.gmra.mrb[0].mxu0 %v7274
    %v7581 = vpop.f32.mrb[0].mxu0
    %v7582 = vadd.f32 0.0, %v7581
    %v7583 = vpop.f32.mrb[0].mxu0
    %7584 = vmatprep.mubr.f32.mxu0 0.0
    %7585 = vmatmul.mubr.f32.gmra.mrb[0].mxu0 %v7277
    %v7586 = vpop.f32.mrb[0].mxu0
    %v7587 = vadd.f32 0.0, %v7586
    %v7588 = vpop.f32.mrb[0].mxu0
    %7589 = vmatprep.mubr.f32.mxu0 0.0
    %7590 = vmatmul.mubr.f32.gmra.mrb[0].mxu0 %v7280
    %v7591 = vpop.f32.mrb[0].mxu0
    %v7592 = vadd.f32 0.0, %v7591
    %v7593 = vpop.f32.mrb[0].mxu0
    %7594 = vmatprep.mubr.f32.mxu0 0.0
    %7595 = vmatmul.mubr.f32.gmra.mrb[0].mxu0 %v7283
    %v7596 = vpop.f32.mrb[0].mxu0
    %v7597 = vadd.f32 0.0, %v7596
    %v7598 = vpop.f32.mrb[0].mxu0
    %7599 = vmatprep.mubr.f32.mxu0 0.0
    %7600 = vmatmul.mubr.f32.gmra.mrb[0].mxu0 %v7286
    %v7601 = vpop.f32.mrb[0].mxu0
    %v7602 = vadd.f32 0.0, %v7601
    %v7603 = vpop.f32.mrb[0].mxu0
    %7604 = vmatprep.mubr.f32.mxu0 0.0
    %7605 = vmatmul.mubr.f32.gmra.mrb[0].mxu0 %v7289
    %v7606 = vpop.f32.mrb[0].mxu0
    %v7607 = vadd.f32 0.0, %v7606
    %v7608 = vpop.f32.mrb[0].mxu0
    %7609 = vmatprep.mubr.f32.mxu0 0.0
    %7610 = vmatmul.mubr.f32.gmra.mrb[0].mxu0 %v7292
    %v7611 = vpop.f32.mrb[0].mxu0
    %v7612 = vadd.f32 0.0, %v7611
    %v7613 = vpop.f32.mrb[0].mxu0
    %7614 = vmatprep.mubr.f32.mxu0 0.0
    %7615 = vmatmul.mubr.f32.gmra.mrb[0].mxu0 %v7295
    %v7616 = vpop.f32.mrb[0].mxu0
    %v7617 = vadd.f32 0.0, %v7616
    %v7618 = vpop.f32.mrb[0].mxu0
    %7619 = vmatprep.mubr.f32.mxu0 0.0
    %7620 = vmatmul.mubr.f32.gmra.mrb[0].mxu0 %v7298
    %v7621 = vpop.f32.mrb[0].mxu0
    %v7622 = vadd.f32 0.0, %v7621
    %v7623 = vpop.f32.mrb[0].mxu0
    %7624 = vmatprep.mubr.f32.mxu0 0.0
    %7625 = vmatmul.mubr.f32.gmra.mrb[0].mxu0 %v7301
    %v7626 = vpop.f32.mrb[0].mxu0
    %v7627 = vadd.f32 0.0, %v7626
    %v7628 = vpop.f32.mrb[0].mxu0
    %7629 = vmatprep.mubr.f32.mxu0 0.0
    %7630 = vmatmul.mubr.f32.gmra.mrb[0].mxu0 %v7304
    %v7631 = vpop.f32.mrb[0].mxu0
    %v7632 = vadd.f32 0.0, %v7631
    %v7633 = vpop.f32.mrb[0].mxu0
    %7634 = vmatprep.mubr.f32.mxu0 0.0
    %7635 = vmatmul.mubr.f32.gmra.mrb[0].mxu0 %v7307
    %v7636 = vpop.f32.mrb[0].mxu0
    %v7637 = vadd.f32 0.0, %v7636
    %v7638 = vpop.f32.mrb[0].mxu0
    %7639 = vmatprep.mubr.f32.mxu0 0.0
    %7640 = vmatmul.mubr.f32.gmra.mrb[0].mxu0 %v7310
    %v7641 = vpop.f32.mrb[0].mxu0
    %v7642 = vadd.f32 0.0, %v7641
    %v7643 = vpop.f32.mrb[0].mxu0
    %7644 = vmatprep.mubr.f32.mxu0 0.0
    %7645 = vmatmul.mubr.f32.gmra.mrb[0].mxu0 %v7313
    %v7646 = vpop.f32.mrb[0].mxu0
    %v7647 = vadd.f32 0.0, %v7646
    %v7648 = vpop.f32.mrb[0].mxu0
    %7649 = vmatprep.mubr.f32.mxu0 0.0
    %7650 = vmatmul.mubr.f32.gmra.mrb[0].mxu0 %v7316
    %v7651 = vpop.f32.mrb[0].mxu0
    %v7652 = vadd.f32 0.0, %v7651
    %v7653 = vpop.f32.mrb[0].mxu0
    %7654 = vmatprep.mubr.f32.mxu0 0.0
    %7655 = vmatmul.mubr.f32.gmra.mrb[0].mxu0 %v7319
    %v7656 = vpop.f32.mrb[0].mxu0
    %v7657 = vadd.f32 0.0, %v7656
    %v7658 = vpop.f32.mrb[0].mxu0
    %7659 = vmatprep.mubr.f32.mxu0 0.0
    %7660 = vmatmul.mubr.f32.gmra.mrb[0].mxu0 %v7322
    %v7661 = vpop.f32.mrb[0].mxu0
    %v7662 = vadd.f32 0.0, %v7661
    %v7663 = vpop.f32.mrb[0].mxu0
    %7664 = vmatprep.mubr.f32.mxu0 0.0
    %7665 = vmatmul.mubr.f32.gmra.mrb[0].mxu0 %v7325
    %v7666 = vpop.f32.mrb[0].mxu0
    %v7667 = vadd.f32 0.0, %v7666
    %v7668 = vpop.f32.mrb[0].mxu0
    %7669 = vmatprep.mubr.f32.mxu0 0.0
    %7670 = vmatmul.mubr.f32.gmra.mrb[0].mxu0 %v7328
    %v7671 = vpop.f32.mrb[0].mxu0
    %v7672 = vadd.f32 0.0, %v7671
    %v7673 = vpop.f32.mrb[0].mxu0
    %7674 = vmatprep.mubr.f32.mxu0 0.0
    %7675 = vmatmul.mubr.f32.gmra.mrb[0].mxu0 %v7331
    %v7676 = vpop.f32.mrb[0].mxu0
    %v7677 = vadd.f32 0.0, %v7676
    %v7678 = vpop.f32.mrb[0].mxu0
    %7679 = vmatprep.mubr.f32.mxu0 0.0
    %7680 = vmatmul.mubr.f32.gmra.mrb[0].mxu0 %v7334
    %v7681 = vpop.f32.mrb[0].mxu0
    %v7682 = vadd.f32 0.0, %v7681
    %v7683 = vpop.f32.mrb[0].mxu0
    %7684 = vmatprep.mubr.f32.mxu0 0.0
    %7685 = vmatmul.mubr.f32.gmra.mrb[0].mxu0 %v7337
    %v7686 = vpop.f32.mrb[0].mxu0
    %v7687 = vadd.f32 0.0, %v7686
    %v7688 = vpop.f32.mrb[0].mxu0
    %7689 = vmatprep.mubr.f32.mxu0 0.0
    %7690 = vmatmul.mubr.f32.gmra.mrb[0].mxu0 %v7340
    %v7691 = vpop.f32.mrb[0].mxu0
    %v7692 = vadd.f32 0.0, %v7691
    %v7693 = vpop.f32.mrb[0].mxu0
    %7694 = vmatprep.mubr.f32.mxu0 0.0
    %7695 = vmatmul.mubr.f32.gmra.mrb[0].mxu0 %v7343
    %v7696 = vpop.f32.mrb[0].mxu0
    %v7697 = vadd.f32 0.0, %v7696
    %v7698 = vpop.f32.mrb[0].mxu0
    %7699 = vmatprep.mubr.f32.mxu0 0.0
    %7700 = vmatmul.mubr.f32.gmra.mrb[0].mxu0 %v7346
    %v7701 = vpop.f32.mrb[0].mxu0
    %v7702 = vadd.f32 0.0, %v7701
    %v7703 = vpop.f32.mrb[0].mxu0
    %7704 = vmatprep.mubr.f32.mxu0 0.0
    %7705 = vmatmul.mubr.f32.gmra.mrb[0].mxu0 %v7349
    %v7706 = vpop.f32.mrb[0].mxu0
    %v7707 = vadd.f32 0.0, %v7706
    %v7708 = vpop.f32.mrb[0].mxu0
    %7709 = vmatprep.mubr.f32.mxu0 0.0
    %7710 = vmatmul.mubr.f32.gmra.mrb[0].mxu0 %v7352
    %v7711 = vpop.f32.mrb[0].mxu0
    %v7712 = vadd.f32 0.0, %v7711
    %v7713 = vpop.f32.mrb[0].mxu0
    %7714 = vmatprep.mubr.f32.mxu0 0.0
    %7715 = vmatmul.mubr.f32.gmra.mrb[0].mxu0 %v7355
    %v7716 = vpop.f32.mrb[0].mxu0
    %v7717 = vadd.f32 0.0, %v7716
    %v7718 = vpop.f32.mrb[0].mxu0
    %7719 = vmatprep.mubr.f32.mxu0 0.0
    %7720 = vmatmul.mubr.f32.gmra.mrb[0].mxu0 %v7358
    %v7721 = vpop.f32.mrb[0].mxu0
    %v7722 = vadd.f32 0.0, %v7721
    %v7723 = vpop.f32.mrb[0].mxu0
    %7724 = vmatprep.mubr.f32.mxu0 0.0
    %7725 = vmatmul.mubr.f32.gmra.mrb[0].mxu0 %v7361
    %v7726 = vpop.f32.mrb[0].mxu0
    %v7727 = vadd.f32 0.0, %v7726
    %v7728 = vpop.f32.mrb[0].mxu0
    %7729 = vmatprep.mubr.f32.mxu0 0.0
    %7730 = vmatmul.mubr.f32.gmra.mrb[0].mxu0 %v7364
    %v7731 = vpop.f32.mrb[0].mxu0
    %v7732 = vadd.f32 0.0, %v7731
    %v7733 = vpop.f32.mrb[0].mxu0
    %7734 = vmatprep.mubr.f32.mxu0 0.0
    %7735 = vmatmul.mubr.f32.gmra.mrb[0].mxu0 %v7367
    %v7736 = vpop.f32.mrb[0].mxu0
    %v7737 = vadd.f32 0.0, %v7736
    %v7738 = vpop.f32.mrb[0].mxu0
    %7739 = vmatprep.mubr.f32.mxu0 0.0
    %7740 = vmatmul.mubr.f32.gmra.mrb[0].mxu0 %v7370
    %v7741 = vpop.f32.mrb[0].mxu0
    %v7742 = vadd.f32 0.0, %v7741
    %v7743 = vpop.f32.mrb[0].mxu0
    %7744 = vmatprep.mubr.f32.mxu0 0.0
    %7745 = vmatmul.mubr.f32.gmra.mrb[0].mxu0 %v7373
    %v7746 = vpop.f32.mrb[0].mxu0
    %v7747 = vadd.f32 0.0, %v7746
    %v7748 = vpop.f32.mrb[0].mxu0
    %7749 = vmatprep.mubr.f32.mxu0 0.0
    %7750 = vmatmul.mubr.f32.gmra.mrb[0].mxu0 %v7376
    %v7751 = vpop.f32.mrb[0].mxu0
    %v7752 = vadd.f32 0.0, %v7751
    %v7753 = vpop.f32.mrb[0].mxu0
    %7754 = vmatprep.mubr.f32.mxu0 0.0
    %7755 = vmatmul.mubr.f32.gmra.mrb[0].mxu0 %v7379
    %v7756 = vpop.f32.mrb[0].mxu0
    %v7757 = vadd.f32 0.0, %v7756
    %v7758 = vpop.f32.mrb[0].mxu0
    %7759 = vmatprep.mubr.f32.mxu0 0.0
    %7760 = vmatmul.mubr.f32.gmra.mrb[0].mxu0 %v7382
    %v7761 = vpop.f32.mrb[0].mxu0
    %v7762 = vadd.f32 0.0, %v7761
    %v7763 = vpop.f32.mrb[0].mxu0
    %7764 = vmatprep.mubr.f32.mxu0 0.0
    %7765 = vmatmul.mubr.f32.gmra.mrb[0].mxu0 %v7385
    %v7766 = vpop.f32.mrb[0].mxu0
    %v7767 = vadd.f32 0.0, %v7766
    %v7768 = vpop.f32.mrb[0].mxu0
    %7769 = vmatprep.mubr.f32.mxu0 0.0
    %7770 = vmatmul.mubr.f32.gmra.mrb[0].mxu0 %v7388
    %v7771 = vpop.f32.mrb[0].mxu0
    %v7772 = vadd.f32 0.0, %v7771
    %v7773 = vpop.f32.mrb[0].mxu0
    %7774 = vdwg.mxu0
    %v7775 = vadd.f32 %v7065, %v7457
    %v7776 = vadd.f32 %v7066, %v7462
    %v7777 = vadd.f32 %v7067, %v7467
    %v7778 = vadd.f32 %v7068, %v7472
    %v7779 = vadd.f32 %v7069, %v7477
    %v7780 = vadd.f32 %v7070, %v7482
    %v7781 = vadd.f32 %v7071, %v7487
    %v7782 = vadd.f32 %v7072, %v7492
    %v7783 = vadd.f32 %v7073, %v7497
    %v7784 = vadd.f32 %v7074, %v7502
    %v7785 = vadd.f32 %v7075, %v7507
    %v7786 = vadd.f32 %v7076, %v7512
    %v7787 = vadd.f32 %v7077, %v7517
    %v7788 = vadd.f32 %v7078, %v7522
    %v7789 = vadd.f32 %v7079, %v7527
    %v7790 = vadd.f32 %v7080, %v7532
    %v7791 = vadd.f32 %v7081, %v7537
    %v7792 = vadd.f32 %v7082, %v7542
    %v7793 = vadd.f32 %v7083, %v7547
    %v7794 = vadd.f32 %v7084, %v7552
    %v7795 = vadd.f32 %v7085, %v7557
    %v7796 = vadd.f32 %v7086, %v7562
    %v7797 = vadd.f32 %v7087, %v7567
    %v7798 = vadd.f32 %v7088, %v7572
    %v7799 = vadd.f32 %v7089, %v7577
    %v7800 = vadd.f32 %v7090, %v7582
    %v7801 = vadd.f32 %v7091, %v7587
    %v7802 = vadd.f32 %v7092, %v7592
    %v7803 = vadd.f32 %v7093, %v7597
    %v7804 = vadd.f32 %v7094, %v7602
    %v7805 = vadd.f32 %v7095, %v7607
    %v7806 = vadd.f32 %v7096, %v7612
    %v7807 = vadd.f32 %v7097, %v7617
    %v7808 = vadd.f32 %v7098, %v7622
    %v7809 = vadd.f32 %v7099, %v7627
    %v7810 = vadd.f32 %v7100, %v7632
    %v7811 = vadd.f32 %v7101, %v7637
    %v7812 = vadd.f32 %v7102, %v7642
    %v7813 = vadd.f32 %v7103, %v7647
    %v7814 = vadd.f32 %v7104, %v7652
    %v7815 = vadd.f32 %v7105, %v7657
    %v7816 = vadd.f32 %v7106, %v7662
    %v7817 = vadd.f32 %v7107, %v7667
    %v7818 = vadd.f32 %v7108, %v7672
    %v7819 = vadd.f32 %v7109, %v7677
    %v7820 = vadd.f32 %v7110, %v7682
    %v7821 = vadd.f32 %v7111, %v7687
    %v7822 = vadd.f32 %v7112, %v7692
    %v7823 = vadd.f32 %v7113, %v7697
    %v7824 = vadd.f32 %v7114, %v7702
    %v7825 = vadd.f32 %v7115, %v7707
    %v7826 = vadd.f32 %v7116, %v7712
    %v7827 = vadd.f32 %v7117, %v7717
    %v7828 = vadd.f32 %v7118, %v7722
    %v7829 = vadd.f32 %v7119, %v7727
    %v7830 = vadd.f32 %v7120, %v7732
    %v7831 = vadd.f32 %v7121, %v7737
    %v7832 = vadd.f32 %v7122, %v7742
    %v7833 = vadd.f32 %v7123, %v7747
    %v7834 = vadd.f32 %v7124, %v7752
    %v7835 = vadd.f32 %v7125, %v7757
    %v7836 = vadd.f32 %v7126, %v7762
    %v7837 = vadd.f32 %v7127, %v7767
    %v7838 = vadd.f32 %v7128, %v7772
    %v7839 = vld [vmem:[%s6418 + $0x2] sm:$0xff]
    %v7840 = vld [vmem:[%s6418 + $0xa] sm:$0xff]
    %v7841 = vld [vmem:[%s6418 + $0x1a] sm:$0xff]
    %v7842 = vld [vmem:[%s6418 + $0x22] sm:$0xff]
    %v7843 = vld [vmem:[%s6418 + $0x32] sm:$0xff]
    %v7844 = vld [vmem:[%s6418 + $0x3a] sm:$0xff]
    %v7845 = vld [vmem:[%s6418 + $0x4a] sm:$0xff]
    %v7846 = vld [vmem:[%s6418 + $0x52] sm:$0xff]
    %v7847 = vld [vmem:[%s6418 + $0x62] sm:$0xff]
    %v7848 = vld [vmem:[%s6418 + $0x6a] sm:$0xff]
    %v7849 = vld [vmem:[%s6418 + $0x7a] sm:$0xff]
    %v7850 = vld [vmem:[%s6418 + $0x82] sm:$0xff]
    %v7851 = vld [vmem:[%s6418 + $0x92] sm:$0xff]
    %v7852 = vld [vmem:[%s6418 + $0x9a] sm:$0xff]
    %v7853 = vld [vmem:[%s6418 + $0xaa] sm:$0xff]
    %v7854 = vld [vmem:[%s6418 + $0xb2] sm:$0xff]
    %v7855 = vld [vmem:[%s6418 + $0xc2] sm:$0xff]
    %v7856 = vld [vmem:[%s6418 + $0xca] sm:$0xff]
    %v7857 = vld [vmem:[%s6418 + $0xda] sm:$0xff]
    %v7858 = vld [vmem:[%s6418 + $0xe2] sm:$0xff]
    %v7859 = vld [vmem:[%s6418 + $0xf2] sm:$0xff]
    %v7860 = vld [vmem:[%s6418 + $0xfa] sm:$0xff]
    %v7861 = vld [vmem:[%s6418 + $0x10a] sm:$0xff]
    %v7862 = vld [vmem:[%s6418 + $0x112] sm:$0xff]
    %v7863 = vld [vmem:[%s6418 + $0x122] sm:$0xff]
    %v7864 = vld [vmem:[%s6418 + $0x12a] sm:$0xff]
    %v7865 = vld [vmem:[%s6418 + $0x13a] sm:$0xff]
    %v7866 = vld [vmem:[%s6418 + $0x142] sm:$0xff]
    %v7867 = vld [vmem:[%s6418 + $0x152] sm:$0xff]
    %v7868 = vld [vmem:[%s6418 + $0x15a] sm:$0xff]
    %v7869 = vld [vmem:[%s6418 + $0x16a] sm:$0xff]
    %v7870 = vld [vmem:[%s6418 + $0x172] sm:$0xff]
    %v7871 = vld [vmem:[%s6418 + $0x1b2] sm:$0xff]
    %v7872 = vld [vmem:[%s6418 + $0x1ba] sm:$0xff]
    %v7873 = vld [vmem:[%s6418 + $0x1ca] sm:$0xff]
    %v7874 = vld [vmem:[%s6418 + $0x1d2] sm:$0xff]
    %v7875 = vld [vmem:[%s6418 + $0x1e2] sm:$0xff]
    %v7876 = vld [vmem:[%s6418 + $0x1ea] sm:$0xff]
    %v7877 = vld [vmem:[%s6418 + $0x1fa] sm:$0xff]
    %v7878 = vld [vmem:[%s6418 + $0x202] sm:$0xff]
    %v7879 = vld [vmem:[%s6418 + $0x212] sm:$0xff]
    %v7880 = vld [vmem:[%s6418 + $0x21a] sm:$0xff]
    %v7881 = vld [vmem:[%s6418 + $0x22a] sm:$0xff]
    %v7882 = vld [vmem:[%s6418 + $0x232] sm:$0xff]
    %v7883 = vld [vmem:[%s6418 + $0x242] sm:$0xff]
    %v7884 = vld [vmem:[%s6418 + $0x24a] sm:$0xff]
    %v7885 = vld [vmem:[%s6418 + $0x25a] sm:$0xff]
    %v7886 = vld [vmem:[%s6418 + $0x262] sm:$0xff]
    %v7887 = vld [vmem:[%s6418 + $0x272] sm:$0xff]
    %v7888 = vld [vmem:[%s6418 + $0x27a] sm:$0xff]
    %v7889 = vld [vmem:[%s6418 + $0x28a] sm:$0xff]
    %v7890 = vld [vmem:[%s6418 + $0x292] sm:$0xff]
    %v7891 = vld [vmem:[%s6418 + $0x2a2] sm:$0xff]
    %v7892 = vld [vmem:[%s6418 + $0x2aa] sm:$0xff]
    %v7893 = vld [vmem:[%s6418 + $0x2ba] sm:$0xff]
    %v7894 = vld [vmem:[%s6418 + $0x2c2] sm:$0xff]
    %v7895 = vld [vmem:[%s6418 + $0x2d2] sm:$0xff]
    %v7896 = vld [vmem:[%s6418 + $0x2da] sm:$0xff]
    %v7897 = vld [vmem:[%s6418 + $0x2ea] sm:$0xff]
    %v7898 = vld [vmem:[%s6418 + $0x2f2] sm:$0xff]
    %v7899 = vld [vmem:[%s6418 + $0x302] sm:$0xff]
    %v7900 = vld [vmem:[%s6418 + $0x30a] sm:$0xff]
    %v7901 = vld [vmem:[%s6418 + $0x31a] sm:$0xff]
    %v7902 = vld [vmem:[%s6418 + $0x322] sm:$0xff]
    %s7903 = scalar_lea.vmem [#allocation3], 256
    %v7904 = vld [vmem:[%s7903] sm:$0xff]
    %v7905 = vld [vmem:[%s7903 + $0x8] sm:$0xff]
    %v7906 = vld [vmem:[%s7903 + $0x10] sm:$0xff]
    %v7907 = vld [vmem:[%s7903 + $0x18] sm:$0xff]
    %v7909 = vsel %vm354, %v7839, 0
    %v7912 = vsel %vm354, %v7840, 0
    %v7915 = vsel %vm354, %v7841, 0
    %v7918 = vsel %vm354, %v7842, 0
    %v7921 = vsel %vm354, %v7843, 0
    %v7924 = vsel %vm354, %v7844, 0
    %v7927 = vsel %vm354, %v7845, 0
    %v7930 = vsel %vm354, %v7846, 0
    %v7933 = vsel %vm354, %v7847, 0
    %v7936 = vsel %vm354, %v7848, 0
    %v7939 = vsel %vm354, %v7849, 0
    %v7942 = vsel %vm354, %v7850, 0
    %v7945 = vsel %vm354, %v7851, 0
    %v7948 = vsel %vm354, %v7852, 0
    %v7951 = vsel %vm354, %v7853, 0
    %v7954 = vsel %vm354, %v7854, 0
    %v7957 = vsel %vm354, %v7855, 0
    %v7960 = vsel %vm354, %v7856, 0
    %v7963 = vsel %vm354, %v7857, 0
    %v7966 = vsel %vm354, %v7858, 0
    %v7969 = vsel %vm354, %v7859, 0
    %v7972 = vsel %vm354, %v7860, 0
    %v7975 = vsel %vm354, %v7861, 0
    %v7978 = vsel %vm354, %v7862, 0
    %v7981 = vsel %vm354, %v7863, 0
    %v7984 = vsel %vm354, %v7864, 0
    %v7987 = vsel %vm354, %v7865, 0
    %v7990 = vsel %vm354, %v7866, 0
    %v7993 = vsel %vm354, %v7867, 0
    %v7996 = vsel %vm354, %v7868, 0
    %v7999 = vsel %vm354, %v7869, 0
    %v8002 = vsel %vm354, %v7870, 0
    %v8005 = vsel %vm354, %v7871, 0
    %v8008 = vsel %vm354, %v7872, 0
    %v8011 = vsel %vm354, %v7873, 0
    %v8014 = vsel %vm354, %v7874, 0
    %v8017 = vsel %vm354, %v7875, 0
    %v8020 = vsel %vm354, %v7876, 0
    %v8023 = vsel %vm354, %v7877, 0
    %v8026 = vsel %vm354, %v7878, 0
    %v8029 = vsel %vm354, %v7879, 0
    %v8032 = vsel %vm354, %v7880, 0
    %v8035 = vsel %vm354, %v7881, 0
    %v8038 = vsel %vm354, %v7882, 0
    %v8041 = vsel %vm354, %v7883, 0
    %v8044 = vsel %vm354, %v7884, 0
    %v8047 = vsel %vm354, %v7885, 0
    %v8050 = vsel %vm354, %v7886, 0
    %v8053 = vsel %vm354, %v7887, 0
    %v8056 = vsel %vm354, %v7888, 0
    %v8059 = vsel %vm354, %v7889, 0
    %v8062 = vsel %vm354, %v7890, 0
    %v8065 = vsel %vm354, %v7891, 0
    %v8068 = vsel %vm354, %v7892, 0
    %v8071 = vsel %vm354, %v7893, 0
    %v8074 = vsel %vm354, %v7894, 0
    %v8077 = vsel %vm354, %v7895, 0
    %v8080 = vsel %vm354, %v7896, 0
    %v8083 = vsel %vm354, %v7897, 0
    %v8086 = vsel %vm354, %v7898, 0
    %v8089 = vsel %vm354, %v7899, 0
    %v8092 = vsel %vm354, %v7900, 0
    %v8095 = vsel %vm354, %v7901, 0
    %v8098 = vsel %vm354, %v7902, 0
    %8100 = vmatprep.subr.mxu0 0.0
    %8101 = vmatpush1.msra.mxu0 %v7904
    %8102 = vmatprep.subr.mxu0 0.0
    %8103 = vmatpush1.msra.mxu0 %v7905
    %8104 = vmatprep.subr.mxu0 0.0
    %8105 = vmatpush1.msra.mxu0 %v7906
    %8106 = vmatprep.subr.mxu0 0.0
    %8107 = vmatpush1.msra.mxu0 %v7907
    %8108 = vmatprep.subr.mxu0 0.0
    %8109 = vmatpush1.msra.mxu0 0.0
    %8110 = vmatprep.subr.mxu0 0.0
    %8111 = vmatpush1.msra.mxu0 0.0
    %8112 = vmatprep.subr.mxu0 0.0
    %8113 = vmatpush1.msra.mxu0 0.0
    %8114 = vmatprep.subr.mxu0 0.0
    %8115 = vmatpush1.msra.mxu0 0.0
    %8116 = vmatprep.subr.mxu0 0.0
    %8117 = vmatpush1.msra.mxu0 0.0
    %8118 = vmatprep.subr.mxu0 0.0
    %8119 = vmatpush1.msra.mxu0 0.0
    %8120 = vmatprep.subr.mxu0 0.0
    %8121 = vmatpush1.msra.mxu0 0.0
    %8122 = vmatprep.subr.mxu0 0.0
    %8123 = vmatpush1.msra.mxu0 0.0
    %8124 = vmatprep.subr.mxu0 0.0
    %8125 = vmatpush1.msra.mxu0 0.0
    %8126 = vmatprep.subr.mxu0 0.0
    %8127 = vmatpush1.msra.mxu0 0.0
    %8128 = vmatprep.subr.mxu0 0.0
    %8129 = vmatpush1.msra.mxu0 0.0
    %8130 = vmatprep.subr.mxu0 0.0
    %8131 = vmatpush1.msra.mxu0 0.0
    %8132 = vmatprep.subr.mxu0 0.0
    %8133 = vmatpush1.msra.mxu0 0.0
    %8134 = vmatprep.subr.mxu0 0.0
    %8135 = vmatpush1.msra.mxu0 0.0
    %8136 = vmatprep.subr.mxu0 0.0
    %8137 = vmatpush1.msra.mxu0 0.0
    %8138 = vmatprep.subr.mxu0 0.0
    %8139 = vmatpush1.msra.mxu0 0.0
    %8140 = vmatprep.subr.mxu0 0.0
    %8141 = vmatpush1.msra.mxu0 0.0
    %8142 = vmatprep.subr.mxu0 0.0
    %8143 = vmatpush1.msra.mxu0 0.0
    %8144 = vmatprep.subr.mxu0 0.0
    %8145 = vmatpush1.msra.mxu0 0.0
    %8146 = vmatprep.subr.mxu0 0.0
    %8147 = vmatpush1.msra.mxu0 0.0
    %8148 = vmatprep.subr.mxu0 0.0
    %8149 = vmatpush1.msra.mxu0 0.0
    %8150 = vmatprep.subr.mxu0 0.0
    %8151 = vmatpush1.msra.mxu0 0.0
    %8152 = vmatprep.subr.mxu0 0.0
    %8153 = vmatpush1.msra.mxu0 0.0
    %8154 = vmatprep.subr.mxu0 0.0
    %8155 = vmatpush1.msra.mxu0 0.0
    %8156 = vmatprep.subr.mxu0 0.0
    %8157 = vmatpush1.msra.mxu0 0.0
    %8158 = vmatprep.subr.mxu0 0.0
    %8159 = vmatpush1.msra.mxu0 0.0
    %8160 = vmatprep.subr.mxu0 0.0
    %8161 = vmatpush1.msra.mxu0 0.0
    %8162 = vmatprep.subr.mxu0 0.0
    %8163 = vmatpush1.msra.mxu0 0.0
    %8164 = vmatprep.mubr.f32.mxu0 0.0
    %8165 = vmatmul.mubr.f32.gmra.mrb[0].mxu0 %v7909
    %v8166 = vpop.f32.mrb[0].mxu0
    %v8167 = vadd.f32 0.0, %v8166
    %v8168 = vpop.f32.mrb[0].mxu0
    %8169 = vmatprep.mubr.f32.mxu0 0.0
    %8170 = vmatmul.mubr.f32.gmra.mrb[0].mxu0 %v7912
    %v8171 = vpop.f32.mrb[0].mxu0
    %v8172 = vadd.f32 0.0, %v8171
    %v8173 = vpop.f32.mrb[0].mxu0
    %8174 = vmatprep.mubr.f32.mxu0 0.0
    %8175 = vmatmul.mubr.f32.gmra.mrb[0].mxu0 %v7915
    %v8176 = vpop.f32.mrb[0].mxu0
    %v8177 = vadd.f32 0.0, %v8176
    %v8178 = vpop.f32.mrb[0].mxu0
    %8179 = vmatprep.mubr.f32.mxu0 0.0
    %8180 = vmatmul.mubr.f32.gmra.mrb[0].mxu0 %v7918
    %v8181 = vpop.f32.mrb[0].mxu0
    %v8182 = vadd.f32 0.0, %v8181
    %v8183 = vpop.f32.mrb[0].mxu0
    %8184 = vmatprep.mubr.f32.mxu0 0.0
    %8185 = vmatmul.mubr.f32.gmra.mrb[0].mxu0 %v7921
    %v8186 = vpop.f32.mrb[0].mxu0
    %v8187 = vadd.f32 0.0, %v8186
    %v8188 = vpop.f32.mrb[0].mxu0
    %8189 = vmatprep.mubr.f32.mxu0 0.0
    %8190 = vmatmul.mubr.f32.gmra.mrb[0].mxu0 %v7924
    %v8191 = vpop.f32.mrb[0].mxu0
    %v8192 = vadd.f32 0.0, %v8191
    %v8193 = vpop.f32.mrb[0].mxu0
    %8194 = vmatprep.mubr.f32.mxu0 0.0
    %8195 = vmatmul.mubr.f32.gmra.mrb[0].mxu0 %v7927
    %v8196 = vpop.f32.mrb[0].mxu0
    %v8197 = vadd.f32 0.0, %v8196
    %v8198 = vpop.f32.mrb[0].mxu0
    %8199 = vmatprep.mubr.f32.mxu0 0.0
    %8200 = vmatmul.mubr.f32.gmra.mrb[0].mxu0 %v7930
    %v8201 = vpop.f32.mrb[0].mxu0
    %v8202 = vadd.f32 0.0, %v8201
    %v8203 = vpop.f32.mrb[0].mxu0
    %8204 = vmatprep.mubr.f32.mxu0 0.0
    %8205 = vmatmul.mubr.f32.gmra.mrb[0].mxu0 %v7933
    %v8206 = vpop.f32.mrb[0].mxu0
    %v8207 = vadd.f32 0.0, %v8206
    %v8208 = vpop.f32.mrb[0].mxu0
    %8209 = vmatprep.mubr.f32.mxu0 0.0
    %8210 = vmatmul.mubr.f32.gmra.mrb[0].mxu0 %v7936
    %v8211 = vpop.f32.mrb[0].mxu0
    %v8212 = vadd.f32 0.0, %v8211
    %v8213 = vpop.f32.mrb[0].mxu0
    %8214 = vmatprep.mubr.f32.mxu0 0.0
    %8215 = vmatmul.mubr.f32.gmra.mrb[0].mxu0 %v7939
    %v8216 = vpop.f32.mrb[0].mxu0
    %v8217 = vadd.f32 0.0, %v8216
    %v8218 = vpop.f32.mrb[0].mxu0
    %8219 = vmatprep.mubr.f32.mxu0 0.0
    %8220 = vmatmul.mubr.f32.gmra.mrb[0].mxu0 %v7942
    %v8221 = vpop.f32.mrb[0].mxu0
    %v8222 = vadd.f32 0.0, %v8221
    %v8223 = vpop.f32.mrb[0].mxu0
    %8224 = vmatprep.mubr.f32.mxu0 0.0
    %8225 = vmatmul.mubr.f32.gmra.mrb[0].mxu0 %v7945
    %v8226 = vpop.f32.mrb[0].mxu0
    %v8227 = vadd.f32 0.0, %v8226
    %v8228 = vpop.f32.mrb[0].mxu0
    %8229 = vmatprep.mubr.f32.mxu0 0.0
    %8230 = vmatmul.mubr.f32.gmra.mrb[0].mxu0 %v7948
    %v8231 = vpop.f32.mrb[0].mxu0
    %v8232 = vadd.f32 0.0, %v8231
    %v8233 = vpop.f32.mrb[0].mxu0
    %8234 = vmatprep.mubr.f32.mxu0 0.0
    %8235 = vmatmul.mubr.f32.gmra.mrb[0].mxu0 %v7951
    %v8236 = vpop.f32.mrb[0].mxu0
    %v8237 = vadd.f32 0.0, %v8236
    %v8238 = vpop.f32.mrb[0].mxu0
    %8239 = vmatprep.mubr.f32.mxu0 0.0
    %8240 = vmatmul.mubr.f32.gmra.mrb[0].mxu0 %v7954
    %v8241 = vpop.f32.mrb[0].mxu0
    %v8242 = vadd.f32 0.0, %v8241
    %v8243 = vpop.f32.mrb[0].mxu0
    %8244 = vmatprep.mubr.f32.mxu0 0.0
    %8245 = vmatmul.mubr.f32.gmra.mrb[0].mxu0 %v7957
    %v8246 = vpop.f32.mrb[0].mxu0
    %v8247 = vadd.f32 0.0, %v8246
    %v8248 = vpop.f32.mrb[0].mxu0
    %8249 = vmatprep.mubr.f32.mxu0 0.0
    %8250 = vmatmul.mubr.f32.gmra.mrb[0].mxu0 %v7960
    %v8251 = vpop.f32.mrb[0].mxu0
    %v8252 = vadd.f32 0.0, %v8251
    %v8253 = vpop.f32.mrb[0].mxu0
    %8254 = vmatprep.mubr.f32.mxu0 0.0
    %8255 = vmatmul.mubr.f32.gmra.mrb[0].mxu0 %v7963
    %v8256 = vpop.f32.mrb[0].mxu0
    %v8257 = vadd.f32 0.0, %v8256
    %v8258 = vpop.f32.mrb[0].mxu0
    %8259 = vmatprep.mubr.f32.mxu0 0.0
    %8260 = vmatmul.mubr.f32.gmra.mrb[0].mxu0 %v7966
    %v8261 = vpop.f32.mrb[0].mxu0
    %v8262 = vadd.f32 0.0, %v8261
    %v8263 = vpop.f32.mrb[0].mxu0
    %8264 = vmatprep.mubr.f32.mxu0 0.0
    %8265 = vmatmul.mubr.f32.gmra.mrb[0].mxu0 %v7969
    %v8266 = vpop.f32.mrb[0].mxu0
    %v8267 = vadd.f32 0.0, %v8266
    %v8268 = vpop.f32.mrb[0].mxu0
    %8269 = vmatprep.mubr.f32.mxu0 0.0
    %8270 = vmatmul.mubr.f32.gmra.mrb[0].mxu0 %v7972
    %v8271 = vpop.f32.mrb[0].mxu0
    %v8272 = vadd.f32 0.0, %v8271
    %v8273 = vpop.f32.mrb[0].mxu0
    %8274 = vmatprep.mubr.f32.mxu0 0.0
    %8275 = vmatmul.mubr.f32.gmra.mrb[0].mxu0 %v7975
    %v8276 = vpop.f32.mrb[0].mxu0
    %v8277 = vadd.f32 0.0, %v8276
    %v8278 = vpop.f32.mrb[0].mxu0
    %8279 = vmatprep.mubr.f32.mxu0 0.0
    %8280 = vmatmul.mubr.f32.gmra.mrb[0].mxu0 %v7978
    %v8281 = vpop.f32.mrb[0].mxu0
    %v8282 = vadd.f32 0.0, %v8281
    %v8283 = vpop.f32.mrb[0].mxu0
    %8284 = vmatprep.mubr.f32.mxu0 0.0
    %8285 = vmatmul.mubr.f32.gmra.mrb[0].mxu0 %v7981
    %v8286 = vpop.f32.mrb[0].mxu0
    %v8287 = vadd.f32 0.0, %v8286
    %v8288 = vpop.f32.mrb[0].mxu0
    %8289 = vmatprep.mubr.f32.mxu0 0.0
    %8290 = vmatmul.mubr.f32.gmra.mrb[0].mxu0 %v7984
    %v8291 = vpop.f32.mrb[0].mxu0
    %v8292 = vadd.f32 0.0, %v8291
    %v8293 = vpop.f32.mrb[0].mxu0
    %8294 = vmatprep.mubr.f32.mxu0 0.0
    %8295 = vmatmul.mubr.f32.gmra.mrb[0].mxu0 %v7987
    %v8296 = vpop.f32.mrb[0].mxu0
    %v8297 = vadd.f32 0.0, %v8296
    %v8298 = vpop.f32.mrb[0].mxu0
    %8299 = vmatprep.mubr.f32.mxu0 0.0
    %8300 = vmatmul.mubr.f32.gmra.mrb[0].mxu0 %v7990
    %v8301 = vpop.f32.mrb[0].mxu0
    %v8302 = vadd.f32 0.0, %v8301
    %v8303 = vpop.f32.mrb[0].mxu0
    %8304 = vmatprep.mubr.f32.mxu0 0.0
    %8305 = vmatmul.mubr.f32.gmra.mrb[0].mxu0 %v7993
    %v8306 = vpop.f32.mrb[0].mxu0
    %v8307 = vadd.f32 0.0, %v8306
    %v8308 = vpop.f32.mrb[0].mxu0
    %8309 = vmatprep.mubr.f32.mxu0 0.0
    %8310 = vmatmul.mubr.f32.gmra.mrb[0].mxu0 %v7996
    %v8311 = vpop.f32.mrb[0].mxu0
    %v8312 = vadd.f32 0.0, %v8311
    %v8313 = vpop.f32.mrb[0].mxu0
    %8314 = vmatprep.mubr.f32.mxu0 0.0
    %8315 = vmatmul.mubr.f32.gmra.mrb[0].mxu0 %v7999
    %v8316 = vpop.f32.mrb[0].mxu0
    %v8317 = vadd.f32 0.0, %v8316
    %v8318 = vpop.f32.mrb[0].mxu0
    %8319 = vmatprep.mubr.f32.mxu0 0.0
    %8320 = vmatmul.mubr.f32.gmra.mrb[0].mxu0 %v8002
    %v8321 = vpop.f32.mrb[0].mxu0
    %v8322 = vadd.f32 0.0, %v8321
    %v8323 = vpop.f32.mrb[0].mxu0
    %8324 = vmatprep.mubr.f32.mxu0 0.0
    %8325 = vmatmul.mubr.f32.gmra.mrb[0].mxu0 %v8005
    %v8326 = vpop.f32.mrb[0].mxu0
    %v8327 = vadd.f32 0.0, %v8326
    %v8328 = vpop.f32.mrb[0].mxu0
    %8329 = vmatprep.mubr.f32.mxu0 0.0
    %8330 = vmatmul.mubr.f32.gmra.mrb[0].mxu0 %v8008
    %v8331 = vpop.f32.mrb[0].mxu0
    %v8332 = vadd.f32 0.0, %v8331
    %v8333 = vpop.f32.mrb[0].mxu0
    %8334 = vmatprep.mubr.f32.mxu0 0.0
    %8335 = vmatmul.mubr.f32.gmra.mrb[0].mxu0 %v8011
    %v8336 = vpop.f32.mrb[0].mxu0
    %v8337 = vadd.f32 0.0, %v8336
    %v8338 = vpop.f32.mrb[0].mxu0
    %8339 = vmatprep.mubr.f32.mxu0 0.0
    %8340 = vmatmul.mubr.f32.gmra.mrb[0].mxu0 %v8014
    %v8341 = vpop.f32.mrb[0].mxu0
    %v8342 = vadd.f32 0.0, %v8341
    %v8343 = vpop.f32.mrb[0].mxu0
    %8344 = vmatprep.mubr.f32.mxu0 0.0
    %8345 = vmatmul.mubr.f32.gmra.mrb[0].mxu0 %v8017
    %v8346 = vpop.f32.mrb[0].mxu0
    %v8347 = vadd.f32 0.0, %v8346
    %v8348 = vpop.f32.mrb[0].mxu0
    %8349 = vmatprep.mubr.f32.mxu0 0.0
    %8350 = vmatmul.mubr.f32.gmra.mrb[0].mxu0 %v8020
    %v8351 = vpop.f32.mrb[0].mxu0
    %v8352 = vadd.f32 0.0, %v8351
    %v8353 = vpop.f32.mrb[0].mxu0
    %8354 = vmatprep.mubr.f32.mxu0 0.0
    %8355 = vmatmul.mubr.f32.gmra.mrb[0].mxu0 %v8023
    %v8356 = vpop.f32.mrb[0].mxu0
    %v8357 = vadd.f32 0.0, %v8356
    %v8358 = vpop.f32.mrb[0].mxu0
    %8359 = vmatprep.mubr.f32.mxu0 0.0
    %8360 = vmatmul.mubr.f32.gmra.mrb[0].mxu0 %v8026
    %v8361 = vpop.f32.mrb[0].mxu0
    %v8362 = vadd.f32 0.0, %v8361
    %v8363 = vpop.f32.mrb[0].mxu0
    %8364 = vmatprep.mubr.f32.mxu0 0.0
    %8365 = vmatmul.mubr.f32.gmra.mrb[0].mxu0 %v8029
    %v8366 = vpop.f32.mrb[0].mxu0
    %v8367 = vadd.f32 0.0, %v8366
    %v8368 = vpop.f32.mrb[0].mxu0
    %8369 = vmatprep.mubr.f32.mxu0 0.0
    %8370 = vmatmul.mubr.f32.gmra.mrb[0].mxu0 %v8032
    %v8371 = vpop.f32.mrb[0].mxu0
    %v8372 = vadd.f32 0.0, %v8371
    %v8373 = vpop.f32.mrb[0].mxu0
    %8374 = vmatprep.mubr.f32.mxu0 0.0
    %8375 = vmatmul.mubr.f32.gmra.mrb[0].mxu0 %v8035
    %v8376 = vpop.f32.mrb[0].mxu0
    %v8377 = vadd.f32 0.0, %v8376
    %v8378 = vpop.f32.mrb[0].mxu0
    %8379 = vmatprep.mubr.f32.mxu0 0.0
    %8380 = vmatmul.mubr.f32.gmra.mrb[0].mxu0 %v8038
    %v8381 = vpop.f32.mrb[0].mxu0
    %v8382 = vadd.f32 0.0, %v8381
    %v8383 = vpop.f32.mrb[0].mxu0
    %8384 = vmatprep.mubr.f32.mxu0 0.0
    %8385 = vmatmul.mubr.f32.gmra.mrb[0].mxu0 %v8041
    %v8386 = vpop.f32.mrb[0].mxu0
    %v8387 = vadd.f32 0.0, %v8386
    %v8388 = vpop.f32.mrb[0].mxu0
    %8389 = vmatprep.mubr.f32.mxu0 0.0
    %8390 = vmatmul.mubr.f32.gmra.mrb[0].mxu0 %v8044
    %v8391 = vpop.f32.mrb[0].mxu0
    %v8392 = vadd.f32 0.0, %v8391
    %v8393 = vpop.f32.mrb[0].mxu0
    %8394 = vmatprep.mubr.f32.mxu0 0.0
    %8395 = vmatmul.mubr.f32.gmra.mrb[0].mxu0 %v8047
    %v8396 = vpop.f32.mrb[0].mxu0
    %v8397 = vadd.f32 0.0, %v8396
    %v8398 = vpop.f32.mrb[0].mxu0
    %8399 = vmatprep.mubr.f32.mxu0 0.0
    %8400 = vmatmul.mubr.f32.gmra.mrb[0].mxu0 %v8050
    %v8401 = vpop.f32.mrb[0].mxu0
    %v8402 = vadd.f32 0.0, %v8401
    %v8403 = vpop.f32.mrb[0].mxu0
    %8404 = vmatprep.mubr.f32.mxu0 0.0
    %8405 = vmatmul.mubr.f32.gmra.mrb[0].mxu0 %v8053
    %v8406 = vpop.f32.mrb[0].mxu0
    %v8407 = vadd.f32 0.0, %v8406
    %v8408 = vpop.f32.mrb[0].mxu0
    %8409 = vmatprep.mubr.f32.mxu0 0.0
    %8410 = vmatmul.mubr.f32.gmra.mrb[0].mxu0 %v8056
    %v8411 = vpop.f32.mrb[0].mxu0
    %v8412 = vadd.f32 0.0, %v8411
    %v8413 = vpop.f32.mrb[0].mxu0
    %8414 = vmatprep.mubr.f32.mxu0 0.0
    %8415 = vmatmul.mubr.f32.gmra.mrb[0].mxu0 %v8059
    %v8416 = vpop.f32.mrb[0].mxu0
    %v8417 = vadd.f32 0.0, %v8416
    %v8418 = vpop.f32.mrb[0].mxu0
    %8419 = vmatprep.mubr.f32.mxu0 0.0
    %8420 = vmatmul.mubr.f32.gmra.mrb[0].mxu0 %v8062
    %v8421 = vpop.f32.mrb[0].mxu0
    %v8422 = vadd.f32 0.0, %v8421
    %v8423 = vpop.f32.mrb[0].mxu0
    %8424 = vmatprep.mubr.f32.mxu0 0.0
    %8425 = vmatmul.mubr.f32.gmra.mrb[0].mxu0 %v8065
    %v8426 = vpop.f32.mrb[0].mxu0
    %v8427 = vadd.f32 0.0, %v8426
    %v8428 = vpop.f32.mrb[0].mxu0
    %8429 = vmatprep.mubr.f32.mxu0 0.0
    %8430 = vmatmul.mubr.f32.gmra.mrb[0].mxu0 %v8068
    %v8431 = vpop.f32.mrb[0].mxu0
    %v8432 = vadd.f32 0.0, %v8431
    %v8433 = vpop.f32.mrb[0].mxu0
    %8434 = vmatprep.mubr.f32.mxu0 0.0
    %8435 = vmatmul.mubr.f32.gmra.mrb[0].mxu0 %v8071
    %v8436 = vpop.f32.mrb[0].mxu0
    %v8437 = vadd.f32 0.0, %v8436
    %v8438 = vpop.f32.mrb[0].mxu0
    %8439 = vmatprep.mubr.f32.mxu0 0.0
    %8440 = vmatmul.mubr.f32.gmra.mrb[0].mxu0 %v8074
    %v8441 = vpop.f32.mrb[0].mxu0
    %v8442 = vadd.f32 0.0, %v8441
    %v8443 = vpop.f32.mrb[0].mxu0
    %8444 = vmatprep.mubr.f32.mxu0 0.0
    %8445 = vmatmul.mubr.f32.gmra.mrb[0].mxu0 %v8077
    %v8446 = vpop.f32.mrb[0].mxu0
    %v8447 = vadd.f32 0.0, %v8446
    %v8448 = vpop.f32.mrb[0].mxu0
    %8449 = vmatprep.mubr.f32.mxu0 0.0
    %8450 = vmatmul.mubr.f32.gmra.mrb[0].mxu0 %v8080
    %v8451 = vpop.f32.mrb[0].mxu0
    %v8452 = vadd.f32 0.0, %v8451
    %v8453 = vpop.f32.mrb[0].mxu0
    %8454 = vmatprep.mubr.f32.mxu0 0.0
    %8455 = vmatmul.mubr.f32.gmra.mrb[0].mxu0 %v8083
    %v8456 = vpop.f32.mrb[0].mxu0
    %v8457 = vadd.f32 0.0, %v8456
    %v8458 = vpop.f32.mrb[0].mxu0
    %8459 = vmatprep.mubr.f32.mxu0 0.0
    %8460 = vmatmul.mubr.f32.gmra.mrb[0].mxu0 %v8086
    %v8461 = vpop.f32.mrb[0].mxu0
    %v8462 = vadd.f32 0.0, %v8461
    %v8463 = vpop.f32.mrb[0].mxu0
    %8464 = vmatprep.mubr.f32.mxu0 0.0
    %8465 = vmatmul.mubr.f32.gmra.mrb[0].mxu0 %v8089
    %v8466 = vpop.f32.mrb[0].mxu0
    %v8467 = vadd.f32 0.0, %v8466
    %v8468 = vpop.f32.mrb[0].mxu0
    %8469 = vmatprep.mubr.f32.mxu0 0.0
    %8470 = vmatmul.mubr.f32.gmra.mrb[0].mxu0 %v8092
    %v8471 = vpop.f32.mrb[0].mxu0
    %v8472 = vadd.f32 0.0, %v8471
    %v8473 = vpop.f32.mrb[0].mxu0
    %8474 = vmatprep.mubr.f32.mxu0 0.0
    %8475 = vmatmul.mubr.f32.gmra.mrb[0].mxu0 %v8095
    %v8476 = vpop.f32.mrb[0].mxu0
    %v8477 = vadd.f32 0.0, %v8476
    %v8478 = vpop.f32.mrb[0].mxu0
    %8479 = vmatprep.mubr.f32.mxu0 0.0
    %8480 = vmatmul.mubr.f32.gmra.mrb[0].mxu0 %v8098
    %v8481 = vpop.f32.mrb[0].mxu0
    %v8482 = vadd.f32 0.0, %v8481
    %v8483 = vpop.f32.mrb[0].mxu0
    %8484 = vdwg.mxu0
    %v8485 = vadd.f32 %v7775, %v8167
    %v8486 = vadd.f32 %v7776, %v8172
    %v8487 = vadd.f32 %v7777, %v8177
    %v8488 = vadd.f32 %v7778, %v8182
    %v8489 = vadd.f32 %v7779, %v8187
    %v8490 = vadd.f32 %v7780, %v8192
    %v8491 = vadd.f32 %v7781, %v8197
    %v8492 = vadd.f32 %v7782, %v8202
    %v8493 = vadd.f32 %v7783, %v8207
    %v8494 = vadd.f32 %v7784, %v8212
    %v8495 = vadd.f32 %v7785, %v8217
    %v8496 = vadd.f32 %v7786, %v8222
    %v8497 = vadd.f32 %v7787, %v8227
    %v8498 = vadd.f32 %v7788, %v8232
    %v8499 = vadd.f32 %v7789, %v8237
    %v8500 = vadd.f32 %v7790, %v8242
    %v8501 = vadd.f32 %v7791, %v8247
    %v8502 = vadd.f32 %v7792, %v8252
    %v8503 = vadd.f32 %v7793, %v8257
    %v8504 = vadd.f32 %v7794, %v8262
    %v8505 = vadd.f32 %v7795, %v8267
    %v8506 = vadd.f32 %v7796, %v8272
    %v8507 = vadd.f32 %v7797, %v8277
    %v8508 = vadd.f32 %v7798, %v8282
    %v8509 = vadd.f32 %v7799, %v8287
    %v8510 = vadd.f32 %v7800, %v8292
    %v8511 = vadd.f32 %v7801, %v8297
    %v8512 = vadd.f32 %v7802, %v8302
    %v8513 = vadd.f32 %v7803, %v8307
    %v8514 = vadd.f32 %v7804, %v8312
    %v8515 = vadd.f32 %v7805, %v8317
    %v8516 = vadd.f32 %v7806, %v8322
    %v8517 = vadd.f32 %v7807, %v8327
    %v8518 = vadd.f32 %v7808, %v8332
    %v8519 = vadd.f32 %v7809, %v8337
    %v8520 = vadd.f32 %v7810, %v8342
    %v8521 = vadd.f32 %v7811, %v8347
    %v8522 = vadd.f32 %v7812, %v8352
    %v8523 = vadd.f32 %v7813, %v8357
    %v8524 = vadd.f32 %v7814, %v8362
    %v8525 = vadd.f32 %v7815, %v8367
    %v8526 = vadd.f32 %v7816, %v8372
    %v8527 = vadd.f32 %v7817, %v8377
    %v8528 = vadd.f32 %v7818, %v8382
    %v8529 = vadd.f32 %v7819, %v8387
    %v8530 = vadd.f32 %v7820, %v8392
    %v8531 = vadd.f32 %v7821, %v8397
    %v8532 = vadd.f32 %v7822, %v8402
    %v8533 = vadd.f32 %v7823, %v8407
    %v8534 = vadd.f32 %v7824, %v8412
    %v8535 = vadd.f32 %v7825, %v8417
    %v8536 = vadd.f32 %v7826, %v8422
    %v8537 = vadd.f32 %v7827, %v8427
    %v8538 = vadd.f32 %v7828, %v8432
    %v8539 = vadd.f32 %v7829, %v8437
    %v8540 = vadd.f32 %v7830, %v8442
    %v8541 = vadd.f32 %v7831, %v8447
    %v8542 = vadd.f32 %v7832, %v8452
    %v8543 = vadd.f32 %v7833, %v8457
    %v8544 = vadd.f32 %v7834, %v8462
    %v8545 = vadd.f32 %v7835, %v8467
    %v8546 = vadd.f32 %v7836, %v8472
    %v8547 = vadd.f32 %v7837, %v8477
    %v8548 = vadd.f32 %v7838, %v8482
    %v8549 = vld [vmem:[%s7] sm:$0x1]
    %v8551 = vlaneseq
    %v8552 = vshrl.u32 %v8551, 7
    %v8553 = vsub.s32 0, %v8552
    %v8554 = vrot.slane %v8549, %v8553
    %v8556 = vadd.f32 %v8485, %v8554
    %v8557 = vadd.f32 %v8486, %v8554
    %v8558 = vadd.f32 %v8487, %v8554
    %v8559 = vadd.f32 %v8488, %v8554
    %v8560 = vadd.f32 %v8489, %v8554
    %v8561 = vadd.f32 %v8490, %v8554
    %v8562 = vadd.f32 %v8491, %v8554
    %v8563 = vadd.f32 %v8492, %v8554
    %v8564 = vadd.f32 %v8493, %v8554
    %v8565 = vadd.f32 %v8494, %v8554
    %v8566 = vadd.f32 %v8495, %v8554
    %v8567 = vadd.f32 %v8496, %v8554
    %v8568 = vadd.f32 %v8497, %v8554
    %v8569 = vadd.f32 %v8498, %v8554
    %v8570 = vadd.f32 %v8499, %v8554
    %v8571 = vadd.f32 %v8500, %v8554
    %v8572 = vadd.f32 %v8501, %v8554
    %v8573 = vadd.f32 %v8502, %v8554
    %v8574 = vadd.f32 %v8503, %v8554
    %v8575 = vadd.f32 %v8504, %v8554
    %v8576 = vadd.f32 %v8505, %v8554
    %v8577 = vadd.f32 %v8506, %v8554
    %v8578 = vadd.f32 %v8507, %v8554
    %v8579 = vadd.f32 %v8508, %v8554
    %v8580 = vadd.f32 %v8509, %v8554
    %v8581 = vadd.f32 %v8510, %v8554
    %v8582 = vadd.f32 %v8511, %v8554
    %v8583 = vadd.f32 %v8512, %v8554
    %v8584 = vadd.f32 %v8513, %v8554
    %v8585 = vadd.f32 %v8514, %v8554
    %v8586 = vadd.f32 %v8515, %v8554
    %v8587 = vadd.f32 %v8516, %v8554
    %v8588 = vadd.f32 %v8517, %v8554
    %v8589 = vadd.f32 %v8518, %v8554
    %v8590 = vadd.f32 %v8519, %v8554
    %v8591 = vadd.f32 %v8520, %v8554
    %v8592 = vadd.f32 %v8521, %v8554
    %v8593 = vadd.f32 %v8522, %v8554
    %v8594 = vadd.f32 %v8523, %v8554
    %v8595 = vadd.f32 %v8524, %v8554
    %v8596 = vadd.f32 %v8525, %v8554
    %v8597 = vadd.f32 %v8526, %v8554
    %v8598 = vadd.f32 %v8527, %v8554
    %v8599 = vadd.f32 %v8528, %v8554
    %v8600 = vadd.f32 %v8529, %v8554
    %v8601 = vadd.f32 %v8530, %v8554
    %v8602 = vadd.f32 %v8531, %v8554
    %v8603 = vadd.f32 %v8532, %v8554
    %v8604 = vadd.f32 %v8533, %v8554
    %v8605 = vadd.f32 %v8534, %v8554
    %v8606 = vadd.f32 %v8535, %v8554
    %v8607 = vadd.f32 %v8536, %v8554
    %v8608 = vadd.f32 %v8537, %v8554
    %v8609 = vadd.f32 %v8538, %v8554
    %v8610 = vadd.f32 %v8539, %v8554
    %v8611 = vadd.f32 %v8540, %v8554
    %v8612 = vadd.f32 %v8541, %v8554
    %v8613 = vadd.f32 %v8542, %v8554
    %v8614 = vadd.f32 %v8543, %v8554
    %v8615 = vadd.f32 %v8544, %v8554
    %v8616 = vadd.f32 %v8545, %v8554
    %v8617 = vadd.f32 %v8546, %v8554
    %v8618 = vadd.f32 %v8547, %v8554
    %v8619 = vadd.f32 %v8548, %v8554
    %v8620 = vld [vmem:[%s8] sm:$0x1]
    %v8621 = vld [vmem:[%s9] sm:$0x1]
    %v8622 = vmul.f32 %v8556, %v937
    %v8623 = vmul.f32 %v8557, %v942
    %v8624 = vmul.f32 %v8558, %v947
    %v8625 = vmul.f32 %v8559, %v952
    %v8626 = vmul.f32 %v8560, %v957
    %v8627 = vmul.f32 %v8561, %v962
    %v8628 = vmul.f32 %v8562, %v967
    %v8629 = vmul.f32 %v8563, %v972
    %v8630 = vmul.f32 %v8564, %v977
    %v8631 = vmul.f32 %v8565, %v982
    %v8632 = vmul.f32 %v8566, %v987
    %v8633 = vmul.f32 %v8567, %v992
    %v8634 = vmul.f32 %v8568, %v997
    %v8635 = vmul.f32 %v8569, %v1002
    %v8636 = vmul.f32 %v8570, %v1007
    %v8637 = vmul.f32 %v8571, %v1012
    %v8638 = vmul.f32 %v8572, %v1017
    %v8639 = vmul.f32 %v8573, %v1022
    %v8640 = vmul.f32 %v8574, %v1027
    %v8641 = vmul.f32 %v8575, %v1032
    %v8642 = vmul.f32 %v8576, %v1037
    %v8643 = vmul.f32 %v8577, %v1042
    %v8644 = vmul.f32 %v8578, %v1047
    %v8645 = vmul.f32 %v8579, %v1052
    %v8646 = vmul.f32 %v8580, %v1057
    %v8647 = vmul.f32 %v8581, %v1062
    %v8648 = vmul.f32 %v8582, %v1067
    %v8649 = vmul.f32 %v8583, %v1072
    %v8650 = vmul.f32 %v8584, %v1077
    %v8651 = vmul.f32 %v8585, %v1082
    %v8652 = vmul.f32 %v8586, %v1087
    %v8653 = vmul.f32 %v8587, %v1092
    %v8654 = vmul.f32 %v8588, %v1097
    %v8655 = vmul.f32 %v8589, %v1102
    %v8656 = vmul.f32 %v8590, %v1107
    %v8657 = vmul.f32 %v8591, %v1112
    %v8658 = vmul.f32 %v8592, %v1117
    %v8659 = vmul.f32 %v8593, %v1122
    %v8660 = vmul.f32 %v8594, %v1127
    %v8661 = vmul.f32 %v8595, %v1132
    %v8662 = vmul.f32 %v8596, %v1137
    %v8663 = vmul.f32 %v8597, %v1142
    %v8664 = vmul.f32 %v8598, %v1147
    %v8665 = vmul.f32 %v8599, %v1152
    %v8666 = vmul.f32 %v8600, %v1157
    %v8667 = vmul.f32 %v8601, %v1162
    %v8668 = vmul.f32 %v8602, %v1167
    %v8669 = vmul.f32 %v8603, %v1172
    %v8670 = vmul.f32 %v8604, %v1177
    %v8671 = vmul.f32 %v8605, %v1182
    %v8672 = vmul.f32 %v8606, %v1187
    %v8673 = vmul.f32 %v8607, %v1192
    %v8674 = vmul.f32 %v8608, %v1197
    %v8675 = vmul.f32 %v8609, %v1202
    %v8676 = vmul.f32 %v8610, %v1207
    %v8677 = vmul.f32 %v8611, %v1212
    %v8678 = vmul.f32 %v8612, %v1217
    %v8679 = vmul.f32 %v8613, %v1222
    %v8680 = vmul.f32 %v8614, %v1227
    %v8681 = vmul.f32 %v8615, %v1232
    %v8682 = vmul.f32 %v8616, %v1237
    %v8683 = vmul.f32 %v8617, %v1242
    %v8684 = vmul.f32 %v8618, %v1247
    %v8685 = vmul.f32 %v8619, %v1252
    %v8686 = vsel %vm354, %v8622, 0.0
    %v8687 = vsel %vm354, %v8623, 0.0
    %v8688 = vadd.f32 %v8686, %v8687
    %v8689 = vsel %vm354, %v8624, 0.0
    %v8690 = vadd.f32 %v8688, %v8689
    %v8691 = vsel %vm354, %v8625, 0.0
    %v8692 = vadd.f32 %v8690, %v8691
    %v8693 = vsel %vm354, %v8626, 0.0
    %v8694 = vadd.f32 %v8692, %v8693
    %v8695 = vsel %vm354, %v8627, 0.0
    %v8696 = vadd.f32 %v8694, %v8695
    %v8697 = vsel %vm354, %v8628, 0.0
    %v8698 = vadd.f32 %v8696, %v8697
    %v8699 = vsel %vm354, %v8629, 0.0
    %v8700 = vadd.f32 %v8698, %v8699
    %v8701 = vsel %vm354, %v8630, 0.0
    %v8702 = vadd.f32 %v8700, %v8701
    %v8703 = vsel %vm354, %v8631, 0.0
    %v8704 = vadd.f32 %v8702, %v8703
    %v8705 = vsel %vm354, %v8632, 0.0
    %v8706 = vadd.f32 %v8704, %v8705
    %v8707 = vsel %vm354, %v8633, 0.0
    %v8708 = vadd.f32 %v8706, %v8707
    %v8709 = vsel %vm354, %v8634, 0.0
    %v8710 = vadd.f32 %v8708, %v8709
    %v8711 = vsel %vm354, %v8635, 0.0
    %v8712 = vadd.f32 %v8710, %v8711
    %v8713 = vsel %vm354, %v8636, 0.0
    %v8714 = vadd.f32 %v8712, %v8713
    %v8715 = vsel %vm354, %v8637, 0.0
    %v8716 = vadd.f32 %v8714, %v8715
    %v8717 = vsel %vm354, %v8638, 0.0
    %v8718 = vadd.f32 %v8716, %v8717
    %v8719 = vsel %vm354, %v8639, 0.0
    %v8720 = vadd.f32 %v8718, %v8719
    %v8721 = vsel %vm354, %v8640, 0.0
    %v8722 = vadd.f32 %v8720, %v8721
    %v8723 = vsel %vm354, %v8641, 0.0
    %v8724 = vadd.f32 %v8722, %v8723
    %v8725 = vsel %vm354, %v8642, 0.0
    %v8726 = vadd.f32 %v8724, %v8725
    %v8727 = vsel %vm354, %v8643, 0.0
    %v8728 = vadd.f32 %v8726, %v8727
    %v8729 = vsel %vm354, %v8644, 0.0
    %v8730 = vadd.f32 %v8728, %v8729
    %v8731 = vsel %vm354, %v8645, 0.0
    %v8732 = vadd.f32 %v8730, %v8731
    %v8733 = vsel %vm354, %v8646, 0.0
    %v8734 = vadd.f32 %v8732, %v8733
    %v8735 = vsel %vm354, %v8647, 0.0
    %v8736 = vadd.f32 %v8734, %v8735
    %v8737 = vsel %vm354, %v8648, 0.0
    %v8738 = vadd.f32 %v8736, %v8737
    %v8739 = vsel %vm354, %v8649, 0.0
    %v8740 = vadd.f32 %v8738, %v8739
    %v8741 = vsel %vm354, %v8650, 0.0
    %v8742 = vadd.f32 %v8740, %v8741
    %v8743 = vsel %vm354, %v8651, 0.0
    %v8744 = vadd.f32 %v8742, %v8743
    %v8745 = vsel %vm354, %v8652, 0.0
    %v8746 = vadd.f32 %v8744, %v8745
    %v8747 = vsel %vm354, %v8653, 0.0
    %v8748 = vadd.f32 %v8746, %v8747
    %v8749 = vsel %vm354, %v8654, 0.0
    %v8750 = vadd.f32 %v8748, %v8749
    %v8751 = vsel %vm354, %v8655, 0.0
    %v8752 = vadd.f32 %v8750, %v8751
    %v8753 = vsel %vm354, %v8656, 0.0
    %v8754 = vadd.f32 %v8752, %v8753
    %v8755 = vsel %vm354, %v8657, 0.0
    %v8756 = vadd.f32 %v8754, %v8755
    %v8757 = vsel %vm354, %v8658, 0.0
    %v8758 = vadd.f32 %v8756, %v8757
    %v8759 = vsel %vm354, %v8659, 0.0
    %v8760 = vadd.f32 %v8758, %v8759
    %v8761 = vsel %vm354, %v8660, 0.0
    %v8762 = vadd.f32 %v8760, %v8761
    %v8763 = vsel %vm354, %v8661, 0.0
    %v8764 = vadd.f32 %v8762, %v8763
    %v8765 = vsel %vm354, %v8662, 0.0
    %v8766 = vadd.f32 %v8764, %v8765
    %v8767 = vsel %vm354, %v8663, 0.0
    %v8768 = vadd.f32 %v8766, %v8767
    %v8769 = vsel %vm354, %v8664, 0.0
    %v8770 = vadd.f32 %v8768, %v8769
    %v8771 = vsel %vm354, %v8665, 0.0
    %v8772 = vadd.f32 %v8770, %v8771
    %v8773 = vsel %vm354, %v8666, 0.0
    %v8774 = vadd.f32 %v8772, %v8773
    %v8775 = vsel %vm354, %v8667, 0.0
    %v8776 = vadd.f32 %v8774, %v8775
    %v8777 = vsel %vm354, %v8668, 0.0
    %v8778 = vadd.f32 %v8776, %v8777
    %v8779 = vsel %vm354, %v8669, 0.0
    %v8780 = vadd.f32 %v8778, %v8779
    %v8781 = vsel %vm354, %v8670, 0.0
    %v8782 = vadd.f32 %v8780, %v8781
    %v8783 = vsel %vm354, %v8671, 0.0
    %v8784 = vadd.f32 %v8782, %v8783
    %v8785 = vsel %vm354, %v8672, 0.0
    %v8786 = vadd.f32 %v8784, %v8785
    %v8787 = vsel %vm354, %v8673, 0.0
    %v8788 = vadd.f32 %v8786, %v8787
    %v8789 = vsel %vm354, %v8674, 0.0
    %v8790 = vadd.f32 %v8788, %v8789
    %v8791 = vsel %vm354, %v8675, 0.0
    %v8792 = vadd.f32 %v8790, %v8791
    %v8793 = vsel %vm354, %v8676, 0.0
    %v8794 = vadd.f32 %v8792, %v8793
    %v8795 = vsel %vm354, %v8677, 0.0
    %v8796 = vadd.f32 %v8794, %v8795
    %v8797 = vsel %vm354, %v8678, 0.0
    %v8798 = vadd.f32 %v8796, %v8797
    %v8799 = vsel %vm354, %v8679, 0.0
    %v8800 = vadd.f32 %v8798, %v8799
    %v8801 = vsel %vm354, %v8680, 0.0
    %v8802 = vadd.f32 %v8800, %v8801
    %v8803 = vsel %vm354, %v8681, 0.0
    %v8804 = vadd.f32 %v8802, %v8803
    %v8805 = vsel %vm354, %v8682, 0.0
    %v8806 = vadd.f32 %v8804, %v8805
    %v8807 = vsel %vm354, %v8683, 0.0
    %v8808 = vadd.f32 %v8806, %v8807
    %v8809 = vsel %vm354, %v8684, 0.0
    %v8810 = vadd.f32 %v8808, %v8809
    %v8811 = vsel %vm354, %v8685, 0.0
    %v8812 = vadd.f32 %v8810, %v8811
    %v8813 = vrot.slane %v8812, 4
    %v8814 = vadd.f32 %v8812, %v8813
    %v8815 = vrot.slane %v8814, 2
    %v8816 = vadd.f32 %v8814, %v8815
    %v8817 = vrot.slane %v8816, 1
    %v8818 = vadd.f32 %v8816, %v8817
    %v8819 = vmul.f32 %v8818, %v1451
    %v8820 = vsub.f32 %v8556, %v8819
    %v8821 = vsub.f32 %v8557, %v8819
    %v8822 = vsub.f32 %v8558, %v8819
    %v8823 = vsub.f32 %v8559, %v8819
    %v8824 = vsub.f32 %v8560, %v8819
    %v8825 = vsub.f32 %v8561, %v8819
    %v8826 = vsub.f32 %v8562, %v8819
    %v8827 = vsub.f32 %v8563, %v8819
    %v8828 = vsub.f32 %v8564, %v8819
    %v8829 = vsub.f32 %v8565, %v8819
    %v8830 = vsub.f32 %v8566, %v8819
    %v8831 = vsub.f32 %v8567, %v8819
    %v8832 = vsub.f32 %v8568, %v8819
    %v8833 = vsub.f32 %v8569, %v8819
    %v8834 = vsub.f32 %v8570, %v8819
    %v8835 = vsub.f32 %v8571, %v8819
    %v8836 = vsub.f32 %v8572, %v8819
    %v8837 = vsub.f32 %v8573, %v8819
    %v8838 = vsub.f32 %v8574, %v8819
    %v8839 = vsub.f32 %v8575, %v8819
    %v8840 = vsub.f32 %v8576, %v8819
    %v8841 = vsub.f32 %v8577, %v8819
    %v8842 = vsub.f32 %v8578, %v8819
    %v8843 = vsub.f32 %v8579, %v8819
    %v8844 = vsub.f32 %v8580, %v8819
    %v8845 = vsub.f32 %v8581, %v8819
    %v8846 = vsub.f32 %v8582, %v8819
    %v8847 = vsub.f32 %v8583, %v8819
    %v8848 = vsub.f32 %v8584, %v8819
    %v8849 = vsub.f32 %v8585, %v8819
    %v8850 = vsub.f32 %v8586, %v8819
    %v8851 = vsub.f32 %v8587, %v8819
    %v8852 = vsub.f32 %v8588, %v8819
    %v8853 = vsub.f32 %v8589, %v8819
    %v8854 = vsub.f32 %v8590, %v8819
    %v8855 = vsub.f32 %v8591, %v8819
    %v8856 = vsub.f32 %v8592, %v8819
    %v8857 = vsub.f32 %v8593, %v8819
    %v8858 = vsub.f32 %v8594, %v8819
    %v8859 = vsub.f32 %v8595, %v8819
    %v8860 = vsub.f32 %v8596, %v8819
    %v8861 = vsub.f32 %v8597, %v8819
    %v8862 = vsub.f32 %v8598, %v8819
    %v8863 = vsub.f32 %v8599, %v8819
    %v8864 = vsub.f32 %v8600, %v8819
    %v8865 = vsub.f32 %v8601, %v8819
    %v8866 = vsub.f32 %v8602, %v8819
    %v8867 = vsub.f32 %v8603, %v8819
    %v8868 = vsub.f32 %v8604, %v8819
    %v8869 = vsub.f32 %v8605, %v8819
    %v8870 = vsub.f32 %v8606, %v8819
    %v8871 = vsub.f32 %v8607, %v8819
    %v8872 = vsub.f32 %v8608, %v8819
    %v8873 = vsub.f32 %v8609, %v8819
    %v8874 = vsub.f32 %v8610, %v8819
    %v8875 = vsub.f32 %v8611, %v8819
    %v8876 = vsub.f32 %v8612, %v8819
    %v8877 = vsub.f32 %v8613, %v8819
    %v8878 = vsub.f32 %v8614, %v8819
    %v8879 = vsub.f32 %v8615, %v8819
    %v8880 = vsub.f32 %v8616, %v8819
    %v8881 = vsub.f32 %v8617, %v8819
    %v8882 = vsub.f32 %v8618, %v8819
    %v8883 = vsub.f32 %v8619, %v8819
    %v8884 = vmul.f32 %v8820, %v8820
    %v8885 = vmul.f32 %v8821, %v8821
    %v8886 = vmul.f32 %v8822, %v8822
    %v8887 = vmul.f32 %v8823, %v8823
    %v8888 = vmul.f32 %v8824, %v8824
    %v8889 = vmul.f32 %v8825, %v8825
    %v8890 = vmul.f32 %v8826, %v8826
    %v8891 = vmul.f32 %v8827, %v8827
    %v8892 = vmul.f32 %v8828, %v8828
    %v8893 = vmul.f32 %v8829, %v8829
    %v8894 = vmul.f32 %v8830, %v8830
    %v8895 = vmul.f32 %v8831, %v8831
    %v8896 = vmul.f32 %v8832, %v8832
    %v8897 = vmul.f32 %v8833, %v8833
    %v8898 = vmul.f32 %v8834, %v8834
    %v8899 = vmul.f32 %v8835, %v8835
    %v8900 = vmul.f32 %v8836, %v8836
    %v8901 = vmul.f32 %v8837, %v8837
    %v8902 = vmul.f32 %v8838, %v8838
    %v8903 = vmul.f32 %v8839, %v8839
    %v8904 = vmul.f32 %v8840, %v8840
    %v8905 = vmul.f32 %v8841, %v8841
    %v8906 = vmul.f32 %v8842, %v8842
    %v8907 = vmul.f32 %v8843, %v8843
    %v8908 = vmul.f32 %v8844, %v8844
    %v8909 = vmul.f32 %v8845, %v8845
    %v8910 = vmul.f32 %v8846, %v8846
    %v8911 = vmul.f32 %v8847, %v8847
    %v8912 = vmul.f32 %v8848, %v8848
    %v8913 = vmul.f32 %v8849, %v8849
    %v8914 = vmul.f32 %v8850, %v8850
    %v8915 = vmul.f32 %v8851, %v8851
    %v8916 = vmul.f32 %v8852, %v8852
    %v8917 = vmul.f32 %v8853, %v8853
    %v8918 = vmul.f32 %v8854, %v8854
    %v8919 = vmul.f32 %v8855, %v8855
    %v8920 = vmul.f32 %v8856, %v8856
    %v8921 = vmul.f32 %v8857, %v8857
    %v8922 = vmul.f32 %v8858, %v8858
    %v8923 = vmul.f32 %v8859, %v8859
    %v8924 = vmul.f32 %v8860, %v8860
    %v8925 = vmul.f32 %v8861, %v8861
    %v8926 = vmul.f32 %v8862, %v8862
    %v8927 = vmul.f32 %v8863, %v8863
    %v8928 = vmul.f32 %v8864, %v8864
    %v8929 = vmul.f32 %v8865, %v8865
    %v8930 = vmul.f32 %v8866, %v8866
    %v8931 = vmul.f32 %v8867, %v8867
    %v8932 = vmul.f32 %v8868, %v8868
    %v8933 = vmul.f32 %v8869, %v8869
    %v8934 = vmul.f32 %v8870, %v8870
    %v8935 = vmul.f32 %v8871, %v8871
    %v8936 = vmul.f32 %v8872, %v8872
    %v8937 = vmul.f32 %v8873, %v8873
    %v8938 = vmul.f32 %v8874, %v8874
    %v8939 = vmul.f32 %v8875, %v8875
    %v8940 = vmul.f32 %v8876, %v8876
    %v8941 = vmul.f32 %v8877, %v8877
    %v8942 = vmul.f32 %v8878, %v8878
    %v8943 = vmul.f32 %v8879, %v8879
    %v8944 = vmul.f32 %v8880, %v8880
    %v8945 = vmul.f32 %v8881, %v8881
    %v8946 = vmul.f32 %v8882, %v8882
    %v8947 = vmul.f32 %v8883, %v8883
    %v8948 = vmul.f32 %v8884, %v937
    %v8949 = vmul.f32 %v8885, %v942
    %v8950 = vmul.f32 %v8886, %v947
    %v8951 = vmul.f32 %v8887, %v952
    %v8952 = vmul.f32 %v8888, %v957
    %v8953 = vmul.f32 %v8889, %v962
    %v8954 = vmul.f32 %v8890, %v967
    %v8955 = vmul.f32 %v8891, %v972
    %v8956 = vmul.f32 %v8892, %v977
    %v8957 = vmul.f32 %v8893, %v982
    %v8958 = vmul.f32 %v8894, %v987
    %v8959 = vmul.f32 %v8895, %v992
    %v8960 = vmul.f32 %v8896, %v997
    %v8961 = vmul.f32 %v8897, %v1002
    %v8962 = vmul.f32 %v8898, %v1007
    %v8963 = vmul.f32 %v8899, %v1012
    %v8964 = vmul.f32 %v8900, %v1017
    %v8965 = vmul.f32 %v8901, %v1022
    %v8966 = vmul.f32 %v8902, %v1027
    %v8967 = vmul.f32 %v8903, %v1032
    %v8968 = vmul.f32 %v8904, %v1037
    %v8969 = vmul.f32 %v8905, %v1042
    %v8970 = vmul.f32 %v8906, %v1047
    %v8971 = vmul.f32 %v8907, %v1052
    %v8972 = vmul.f32 %v8908, %v1057
    %v8973 = vmul.f32 %v8909, %v1062
    %v8974 = vmul.f32 %v8910, %v1067
    %v8975 = vmul.f32 %v8911, %v1072
    %v8976 = vmul.f32 %v8912, %v1077
    %v8977 = vmul.f32 %v8913, %v1082
    %v8978 = vmul.f32 %v8914, %v1087
    %v8979 = vmul.f32 %v8915, %v1092
    %v8980 = vmul.f32 %v8916, %v1097
    %v8981 = vmul.f32 %v8917, %v1102
    %v8982 = vmul.f32 %v8918, %v1107
    %v8983 = vmul.f32 %v8919, %v1112
    %v8984 = vmul.f32 %v8920, %v1117
    %v8985 = vmul.f32 %v8921, %v1122
    %v8986 = vmul.f32 %v8922, %v1127
    %v8987 = vmul.f32 %v8923, %v1132
    %v8988 = vmul.f32 %v8924, %v1137
    %v8989 = vmul.f32 %v8925, %v1142
    %v8990 = vmul.f32 %v8926, %v1147
    %v8991 = vmul.f32 %v8927, %v1152
    %v8992 = vmul.f32 %v8928, %v1157
    %v8993 = vmul.f32 %v8929, %v1162
    %v8994 = vmul.f32 %v8930, %v1167
    %v8995 = vmul.f32 %v8931, %v1172
    %v8996 = vmul.f32 %v8932, %v1177
    %v8997 = vmul.f32 %v8933, %v1182
    %v8998 = vmul.f32 %v8934, %v1187
    %v8999 = vmul.f32 %v8935, %v1192
    %v9000 = vmul.f32 %v8936, %v1197
    %v9001 = vmul.f32 %v8937, %v1202
    %v9002 = vmul.f32 %v8938, %v1207
    %v9003 = vmul.f32 %v8939, %v1212
    %v9004 = vmul.f32 %v8940, %v1217
    %v9005 = vmul.f32 %v8941, %v1222
    %v9006 = vmul.f32 %v8942, %v1227
    %v9007 = vmul.f32 %v8943, %v1232
    %v9008 = vmul.f32 %v8944, %v1237
    %v9009 = vmul.f32 %v8945, %v1242
    %v9010 = vmul.f32 %v8946, %v1247
    %v9011 = vmul.f32 %v8947, %v1252
    %v9012 = vsel %vm354, %v8948, 0.0
    %v9013 = vsel %vm354, %v8949, 0.0
    %v9014 = vadd.f32 %v9012, %v9013
    %v9015 = vsel %vm354, %v8950, 0.0
    %v9016 = vadd.f32 %v9014, %v9015
    %v9017 = vsel %vm354, %v8951, 0.0
    %v9018 = vadd.f32 %v9016, %v9017
    %v9019 = vsel %vm354, %v8952, 0.0
    %v9020 = vadd.f32 %v9018, %v9019
    %v9021 = vsel %vm354, %v8953, 0.0
    %v9022 = vadd.f32 %v9020, %v9021
    %v9023 = vsel %vm354, %v8954, 0.0
    %v9024 = vadd.f32 %v9022, %v9023
    %v9025 = vsel %vm354, %v8955, 0.0
    %v9026 = vadd.f32 %v9024, %v9025
    %v9027 = vsel %vm354, %v8956, 0.0
    %v9028 = vadd.f32 %v9026, %v9027
    %v9029 = vsel %vm354, %v8957, 0.0
    %v9030 = vadd.f32 %v9028, %v9029
    %v9031 = vsel %vm354, %v8958, 0.0
    %v9032 = vadd.f32 %v9030, %v9031
    %v9033 = vsel %vm354, %v8959, 0.0
    %v9034 = vadd.f32 %v9032, %v9033
    %v9035 = vsel %vm354, %v8960, 0.0
    %v9036 = vadd.f32 %v9034, %v9035
    %v9037 = vsel %vm354, %v8961, 0.0
    %v9038 = vadd.f32 %v9036, %v9037
    %v9039 = vsel %vm354, %v8962, 0.0
    %v9040 = vadd.f32 %v9038, %v9039
    %v9041 = vsel %vm354, %v8963, 0.0
    %v9042 = vadd.f32 %v9040, %v9041
    %v9043 = vsel %vm354, %v8964, 0.0
    %v9044 = vadd.f32 %v9042, %v9043
    %v9045 = vsel %vm354, %v8965, 0.0
    %v9046 = vadd.f32 %v9044, %v9045
    %v9047 = vsel %vm354, %v8966, 0.0
    %v9048 = vadd.f32 %v9046, %v9047
    %v9049 = vsel %vm354, %v8967, 0.0
    %v9050 = vadd.f32 %v9048, %v9049
    %v9051 = vsel %vm354, %v8968, 0.0
    %v9052 = vadd.f32 %v9050, %v9051
    %v9053 = vsel %vm354, %v8969, 0.0
    %v9054 = vadd.f32 %v9052, %v9053
    %v9055 = vsel %vm354, %v8970, 0.0
    %v9056 = vadd.f32 %v9054, %v9055
    %v9057 = vsel %vm354, %v8971, 0.0
    %v9058 = vadd.f32 %v9056, %v9057
    %v9059 = vsel %vm354, %v8972, 0.0
    %v9060 = vadd.f32 %v9058, %v9059
    %v9061 = vsel %vm354, %v8973, 0.0
    %v9062 = vadd.f32 %v9060, %v9061
    %v9063 = vsel %vm354, %v8974, 0.0
    %v9064 = vadd.f32 %v9062, %v9063
    %v9065 = vsel %vm354, %v8975, 0.0
    %v9066 = vadd.f32 %v9064, %v9065
    %v9067 = vsel %vm354, %v8976, 0.0
    %v9068 = vadd.f32 %v9066, %v9067
    %v9069 = vsel %vm354, %v8977, 0.0
    %v9070 = vadd.f32 %v9068, %v9069
    %v9071 = vsel %vm354, %v8978, 0.0
    %v9072 = vadd.f32 %v9070, %v9071
    %v9073 = vsel %vm354, %v8979, 0.0
    %v9074 = vadd.f32 %v9072, %v9073
    %v9075 = vsel %vm354, %v8980, 0.0
    %v9076 = vadd.f32 %v9074, %v9075
    %v9077 = vsel %vm354, %v8981, 0.0
    %v9078 = vadd.f32 %v9076, %v9077
    %v9079 = vsel %vm354, %v8982, 0.0
    %v9080 = vadd.f32 %v9078, %v9079
    %v9081 = vsel %vm354, %v8983, 0.0
    %v9082 = vadd.f32 %v9080, %v9081
    %v9083 = vsel %vm354, %v8984, 0.0
    %v9084 = vadd.f32 %v9082, %v9083
    %v9085 = vsel %vm354, %v8985, 0.0
    %v9086 = vadd.f32 %v9084, %v9085
    %v9087 = vsel %vm354, %v8986, 0.0
    %v9088 = vadd.f32 %v9086, %v9087
    %v9089 = vsel %vm354, %v8987, 0.0
    %v9090 = vadd.f32 %v9088, %v9089
    %v9091 = vsel %vm354, %v8988, 0.0
    %v9092 = vadd.f32 %v9090, %v9091
    %v9093 = vsel %vm354, %v8989, 0.0
    %v9094 = vadd.f32 %v9092, %v9093
    %v9095 = vsel %vm354, %v8990, 0.0
    %v9096 = vadd.f32 %v9094, %v9095
    %v9097 = vsel %vm354, %v8991, 0.0
    %v9098 = vadd.f32 %v9096, %v9097
    %v9099 = vsel %vm354, %v8992, 0.0
    %v9100 = vadd.f32 %v9098, %v9099
    %v9101 = vsel %vm354, %v8993, 0.0
    %v9102 = vadd.f32 %v9100, %v9101
    %v9103 = vsel %vm354, %v8994, 0.0
    %v9104 = vadd.f32 %v9102, %v9103
    %v9105 = vsel %vm354, %v8995, 0.0
    %v9106 = vadd.f32 %v9104, %v9105
    %v9107 = vsel %vm354, %v8996, 0.0
    %v9108 = vadd.f32 %v9106, %v9107
    %v9109 = vsel %vm354, %v8997, 0.0
    %v9110 = vadd.f32 %v9108, %v9109
    %v9111 = vsel %vm354, %v8998, 0.0
    %v9112 = vadd.f32 %v9110, %v9111
    %v9113 = vsel %vm354, %v8999, 0.0
    %v9114 = vadd.f32 %v9112, %v9113
    %v9115 = vsel %vm354, %v9000, 0.0
    %v9116 = vadd.f32 %v9114, %v9115
    %v9117 = vsel %vm354, %v9001, 0.0
    %v9118 = vadd.f32 %v9116, %v9117
    %v9119 = vsel %vm354, %v9002, 0.0
    %v9120 = vadd.f32 %v9118, %v9119
    %v9121 = vsel %vm354, %v9003, 0.0
    %v9122 = vadd.f32 %v9120, %v9121
    %v9123 = vsel %vm354, %v9004, 0.0
    %v9124 = vadd.f32 %v9122, %v9123
    %v9125 = vsel %vm354, %v9005, 0.0
    %v9126 = vadd.f32 %v9124, %v9125
    %v9127 = vsel %vm354, %v9006, 0.0
    %v9128 = vadd.f32 %v9126, %v9127
    %v9129 = vsel %vm354, %v9007, 0.0
    %v9130 = vadd.f32 %v9128, %v9129
    %v9131 = vsel %vm354, %v9008, 0.0
    %v9132 = vadd.f32 %v9130, %v9131
    %v9133 = vsel %vm354, %v9009, 0.0
    %v9134 = vadd.f32 %v9132, %v9133
    %v9135 = vsel %vm354, %v9010, 0.0
    %v9136 = vadd.f32 %v9134, %v9135
    %v9137 = vsel %vm354, %v9011, 0.0
    %v9138 = vadd.f32 %v9136, %v9137
    %v9139 = vrot.slane %v9138, 4
    %v9140 = vadd.f32 %v9138, %v9139
    %v9141 = vrot.slane %v9140, 2
    %v9142 = vadd.f32 %v9140, %v9141
    %v9143 = vrot.slane %v9142, 1
    %v9144 = vadd.f32 %v9142, %v9143
    %v9145 = vmul.f32 %v9144, %v1451
    %v9146 = vadd.f32 %v9145, 1e-05
    %v9147 = vrsqrt.pop %v9146
    %v9148 = vmul.f32 %v8820, %v9147
    %v9149 = vmul.f32 %v8821, %v9147
    %v9150 = vmul.f32 %v8822, %v9147
    %v9151 = vmul.f32 %v8823, %v9147
    %v9152 = vmul.f32 %v8824, %v9147
    %v9153 = vmul.f32 %v8825, %v9147
    %v9154 = vmul.f32 %v8826, %v9147
    %v9155 = vmul.f32 %v8827, %v9147
    %v9156 = vmul.f32 %v8828, %v9147
    %v9157 = vmul.f32 %v8829, %v9147
    %v9158 = vmul.f32 %v8830, %v9147
    %v9159 = vmul.f32 %v8831, %v9147
    %v9160 = vmul.f32 %v8832, %v9147
    %v9161 = vmul.f32 %v8833, %v9147
    %v9162 = vmul.f32 %v8834, %v9147
    %v9163 = vmul.f32 %v8835, %v9147
    %v9164 = vmul.f32 %v8836, %v9147
    %v9165 = vmul.f32 %v8837, %v9147
    %v9166 = vmul.f32 %v8838, %v9147
    %v9167 = vmul.f32 %v8839, %v9147
    %v9168 = vmul.f32 %v8840, %v9147
    %v9169 = vmul.f32 %v8841, %v9147
    %v9170 = vmul.f32 %v8842, %v9147
    %v9171 = vmul.f32 %v8843, %v9147
    %v9172 = vmul.f32 %v8844, %v9147
    %v9173 = vmul.f32 %v8845, %v9147
    %v9174 = vmul.f32 %v8846, %v9147
    %v9175 = vmul.f32 %v8847, %v9147
    %v9176 = vmul.f32 %v8848, %v9147
    %v9177 = vmul.f32 %v8849, %v9147
    %v9178 = vmul.f32 %v8850, %v9147
    %v9179 = vmul.f32 %v8851, %v9147
    %v9180 = vmul.f32 %v8852, %v9147
    %v9181 = vmul.f32 %v8853, %v9147
    %v9182 = vmul.f32 %v8854, %v9147
    %v9183 = vmul.f32 %v8855, %v9147
    %v9184 = vmul.f32 %v8856, %v9147
    %v9185 = vmul.f32 %v8857, %v9147
    %v9186 = vmul.f32 %v8858, %v9147
    %v9187 = vmul.f32 %v8859, %v9147
    %v9188 = vmul.f32 %v8860, %v9147
    %v9189 = vmul.f32 %v8861, %v9147
    %v9190 = vmul.f32 %v8862, %v9147
    %v9191 = vmul.f32 %v8863, %v9147
    %v9192 = vmul.f32 %v8864, %v9147
    %v9193 = vmul.f32 %v8865, %v9147
    %v9194 = vmul.f32 %v8866, %v9147
    %v9195 = vmul.f32 %v8867, %v9147
    %v9196 = vmul.f32 %v8868, %v9147
    %v9197 = vmul.f32 %v8869, %v9147
    %v9198 = vmul.f32 %v8870, %v9147
    %v9199 = vmul.f32 %v8871, %v9147
    %v9200 = vmul.f32 %v8872, %v9147
    %v9201 = vmul.f32 %v8873, %v9147
    %v9202 = vmul.f32 %v8874, %v9147
    %v9203 = vmul.f32 %v8875, %v9147
    %v9204 = vmul.f32 %v8876, %v9147
    %v9205 = vmul.f32 %v8877, %v9147
    %v9206 = vmul.f32 %v8878, %v9147
    %v9207 = vmul.f32 %v8879, %v9147
    %v9208 = vmul.f32 %v8880, %v9147
    %v9209 = vmul.f32 %v8881, %v9147
    %v9210 = vmul.f32 %v8882, %v9147
    %v9211 = vmul.f32 %v8883, %v9147
    %v9213 = vlaneseq
    %v9214 = vshrl.u32 %v9213, 7
    %v9215 = vsub.s32 0, %v9214
    %v9216 = vrot.slane %v8620, %v9215
    %v9218 = vmul.f32 %v9148, %v9216
    %v9219 = vmul.f32 %v9149, %v9216
    %v9220 = vmul.f32 %v9150, %v9216
    %v9221 = vmul.f32 %v9151, %v9216
    %v9222 = vmul.f32 %v9152, %v9216
    %v9223 = vmul.f32 %v9153, %v9216
    %v9224 = vmul.f32 %v9154, %v9216
    %v9225 = vmul.f32 %v9155, %v9216
    %v9226 = vmul.f32 %v9156, %v9216
    %v9227 = vmul.f32 %v9157, %v9216
    %v9228 = vmul.f32 %v9158, %v9216
    %v9229 = vmul.f32 %v9159, %v9216
    %v9230 = vmul.f32 %v9160, %v9216
    %v9231 = vmul.f32 %v9161, %v9216
    %v9232 = vmul.f32 %v9162, %v9216
    %v9233 = vmul.f32 %v9163, %v9216
    %v9234 = vmul.f32 %v9164, %v9216
    %v9235 = vmul.f32 %v9165, %v9216
    %v9236 = vmul.f32 %v9166, %v9216
    %v9237 = vmul.f32 %v9167, %v9216
    %v9238 = vmul.f32 %v9168, %v9216
    %v9239 = vmul.f32 %v9169, %v9216
    %v9240 = vmul.f32 %v9170, %v9216
    %v9241 = vmul.f32 %v9171, %v9216
    %v9242 = vmul.f32 %v9172, %v9216
    %v9243 = vmul.f32 %v9173, %v9216
    %v9244 = vmul.f32 %v9174, %v9216
    %v9245 = vmul.f32 %v9175, %v9216
    %v9246 = vmul.f32 %v9176, %v9216
    %v9247 = vmul.f32 %v9177, %v9216
    %v9248 = vmul.f32 %v9178, %v9216
    %v9249 = vmul.f32 %v9179, %v9216
    %v9250 = vmul.f32 %v9180, %v9216
    %v9251 = vmul.f32 %v9181, %v9216
    %v9252 = vmul.f32 %v9182, %v9216
    %v9253 = vmul.f32 %v9183, %v9216
    %v9254 = vmul.f32 %v9184, %v9216
    %v9255 = vmul.f32 %v9185, %v9216
    %v9256 = vmul.f32 %v9186, %v9216
    %v9257 = vmul.f32 %v9187, %v9216
    %v9258 = vmul.f32 %v9188, %v9216
    %v9259 = vmul.f32 %v9189, %v9216
    %v9260 = vmul.f32 %v9190, %v9216
    %v9261 = vmul.f32 %v9191, %v9216
    %v9262 = vmul.f32 %v9192, %v9216
    %v9263 = vmul.f32 %v9193, %v9216
    %v9264 = vmul.f32 %v9194, %v9216
    %v9265 = vmul.f32 %v9195, %v9216
    %v9266 = vmul.f32 %v9196, %v9216
    %v9267 = vmul.f32 %v9197, %v9216
    %v9268 = vmul.f32 %v9198, %v9216
    %v9269 = vmul.f32 %v9199, %v9216
    %v9270 = vmul.f32 %v9200, %v9216
    %v9271 = vmul.f32 %v9201, %v9216
    %v9272 = vmul.f32 %v9202, %v9216
    %v9273 = vmul.f32 %v9203, %v9216
    %v9274 = vmul.f32 %v9204, %v9216
    %v9275 = vmul.f32 %v9205, %v9216
    %v9276 = vmul.f32 %v9206, %v9216
    %v9277 = vmul.f32 %v9207, %v9216
    %v9278 = vmul.f32 %v9208, %v9216
    %v9279 = vmul.f32 %v9209, %v9216
    %v9280 = vmul.f32 %v9210, %v9216
    %v9281 = vmul.f32 %v9211, %v9216
    %v9283 = vlaneseq
    %v9284 = vshrl.u32 %v9283, 7
    %v9285 = vsub.s32 0, %v9284
    %v9286 = vrot.slane %v8621, %v9285
    %v9288 = vadd.f32 %v9218, %v9286
    %v9289 = vadd.f32 %v9219, %v9286
    %v9290 = vadd.f32 %v9220, %v9286
    %v9291 = vadd.f32 %v9221, %v9286
    %v9292 = vadd.f32 %v9222, %v9286
    %v9293 = vadd.f32 %v9223, %v9286
    %v9294 = vadd.f32 %v9224, %v9286
    %v9295 = vadd.f32 %v9225, %v9286
    %v9296 = vadd.f32 %v9226, %v9286
    %v9297 = vadd.f32 %v9227, %v9286
    %v9298 = vadd.f32 %v9228, %v9286
    %v9299 = vadd.f32 %v9229, %v9286
    %v9300 = vadd.f32 %v9230, %v9286
    %v9301 = vadd.f32 %v9231, %v9286
    %v9302 = vadd.f32 %v9232, %v9286
    %v9303 = vadd.f32 %v9233, %v9286
    %v9304 = vadd.f32 %v9234, %v9286
    %v9305 = vadd.f32 %v9235, %v9286
    %v9306 = vadd.f32 %v9236, %v9286
    %v9307 = vadd.f32 %v9237, %v9286
    %v9308 = vadd.f32 %v9238, %v9286
    %v9309 = vadd.f32 %v9239, %v9286
    %v9310 = vadd.f32 %v9240, %v9286
    %v9311 = vadd.f32 %v9241, %v9286
    %v9312 = vadd.f32 %v9242, %v9286
    %v9313 = vadd.f32 %v9243, %v9286
    %v9314 = vadd.f32 %v9244, %v9286
    %v9315 = vadd.f32 %v9245, %v9286
    %v9316 = vadd.f32 %v9246, %v9286
    %v9317 = vadd.f32 %v9247, %v9286
    %v9318 = vadd.f32 %v9248, %v9286
    %v9319 = vadd.f32 %v9249, %v9286
    %v9320 = vadd.f32 %v9250, %v9286
    %v9321 = vadd.f32 %v9251, %v9286
    %v9322 = vadd.f32 %v9252, %v9286
    %v9323 = vadd.f32 %v9253, %v9286
    %v9324 = vadd.f32 %v9254, %v9286
    %v9325 = vadd.f32 %v9255, %v9286
    %v9326 = vadd.f32 %v9256, %v9286
    %v9327 = vadd.f32 %v9257, %v9286
    %v9328 = vadd.f32 %v9258, %v9286
    %v9329 = vadd.f32 %v9259, %v9286
    %v9330 = vadd.f32 %v9260, %v9286
    %v9331 = vadd.f32 %v9261, %v9286
    %v9332 = vadd.f32 %v9262, %v9286
    %v9333 = vadd.f32 %v9263, %v9286
    %v9334 = vadd.f32 %v9264, %v9286
    %v9335 = vadd.f32 %v9265, %v9286
    %v9336 = vadd.f32 %v9266, %v9286
    %v9337 = vadd.f32 %v9267, %v9286
    %v9338 = vadd.f32 %v9268, %v9286
    %v9339 = vadd.f32 %v9269, %v9286
    %v9340 = vadd.f32 %v9270, %v9286
    %v9341 = vadd.f32 %v9271, %v9286
    %v9342 = vadd.f32 %v9272, %v9286
    %v9343 = vadd.f32 %v9273, %v9286
    %v9344 = vadd.f32 %v9274, %v9286
    %v9345 = vadd.f32 %v9275, %v9286
    %v9346 = vadd.f32 %v9276, %v9286
    %v9347 = vadd.f32 %v9277, %v9286
    %v9348 = vadd.f32 %v9278, %v9286
    %v9349 = vadd.f32 %v9279, %v9286
    %v9350 = vadd.f32 %v9280, %v9286
    %v9351 = vadd.f32 %v9281, %v9286
    %v9352 = vmax.f32 %v9288, 0.0
    %v9353 = vmax.f32 %v9289, 0.0
    %v9354 = vmax.f32 %v9290, 0.0
    %v9355 = vmax.f32 %v9291, 0.0
    %v9356 = vmax.f32 %v9292, 0.0
    %v9357 = vmax.f32 %v9293, 0.0
    %v9358 = vmax.f32 %v9294, 0.0
    %v9359 = vmax.f32 %v9295, 0.0
    %v9360 = vmax.f32 %v9296, 0.0
    %v9361 = vmax.f32 %v9297, 0.0
    %v9362 = vmax.f32 %v9298, 0.0
    %v9363 = vmax.f32 %v9299, 0.0
    %v9364 = vmax.f32 %v9300, 0.0
    %v9365 = vmax.f32 %v9301, 0.0
    %v9366 = vmax.f32 %v9302, 0.0
    %v9367 = vmax.f32 %v9303, 0.0
    %v9368 = vmax.f32 %v9304, 0.0
    %v9369 = vmax.f32 %v9305, 0.0
    %v9370 = vmax.f32 %v9306, 0.0
    %v9371 = vmax.f32 %v9307, 0.0
    %v9372 = vmax.f32 %v9308, 0.0
    %v9373 = vmax.f32 %v9309, 0.0
    %v9374 = vmax.f32 %v9310, 0.0
    %v9375 = vmax.f32 %v9311, 0.0
    %v9376 = vmax.f32 %v9312, 0.0
    %v9377 = vmax.f32 %v9313, 0.0
    %v9378 = vmax.f32 %v9314, 0.0
    %v9379 = vmax.f32 %v9315, 0.0
    %v9380 = vmax.f32 %v9316, 0.0
    %v9381 = vmax.f32 %v9317, 0.0
    %v9382 = vmax.f32 %v9318, 0.0
    %v9383 = vmax.f32 %v9319, 0.0
    %v9384 = vmax.f32 %v9320, 0.0
    %v9385 = vmax.f32 %v9321, 0.0
    %v9386 = vmax.f32 %v9322, 0.0
    %v9387 = vmax.f32 %v9323, 0.0
    %v9388 = vmax.f32 %v9324, 0.0
    %v9389 = vmax.f32 %v9325, 0.0
    %v9390 = vmax.f32 %v9326, 0.0
    %v9391 = vmax.f32 %v9327, 0.0
    %v9392 = vmax.f32 %v9328, 0.0
    %v9393 = vmax.f32 %v9329, 0.0
    %v9394 = vmax.f32 %v9330, 0.0
    %v9395 = vmax.f32 %v9331, 0.0
    %v9396 = vmax.f32 %v9332, 0.0
    %v9397 = vmax.f32 %v9333, 0.0
    %v9398 = vmax.f32 %v9334, 0.0
    %v9399 = vmax.f32 %v9335, 0.0
    %v9400 = vmax.f32 %v9336, 0.0
    %v9401 = vmax.f32 %v9337, 0.0
    %v9402 = vmax.f32 %v9338, 0.0
    %v9403 = vmax.f32 %v9339, 0.0
    %v9404 = vmax.f32 %v9340, 0.0
    %v9405 = vmax.f32 %v9341, 0.0
    %v9406 = vmax.f32 %v9342, 0.0
    %v9407 = vmax.f32 %v9343, 0.0
    %v9408 = vmax.f32 %v9344, 0.0
    %v9409 = vmax.f32 %v9345, 0.0
    %v9410 = vmax.f32 %v9346, 0.0
    %v9411 = vmax.f32 %v9347, 0.0
    %v9412 = vmax.f32 %v9348, 0.0
    %v9413 = vmax.f32 %v9349, 0.0
    %v9414 = vmax.f32 %v9350, 0.0
    %v9415 = vmax.f32 %v9351, 0.0
    %v9416 = vmul.f32 %v9352, %v937
    %v9417 = vmul.f32 %v9353, %v942
    %v9418 = vmul.f32 %v9354, %v947
    %v9419 = vmul.f32 %v9355, %v952
    %v9420 = vmul.f32 %v9356, %v957
    %v9421 = vmul.f32 %v9357, %v962
    %v9422 = vmul.f32 %v9358, %v967
    %v9423 = vmul.f32 %v9359, %v972
    %v9424 = vmul.f32 %v9360, %v977
    %v9425 = vmul.f32 %v9361, %v982
    %v9426 = vmul.f32 %v9362, %v987
    %v9427 = vmul.f32 %v9363, %v992
    %v9428 = vmul.f32 %v9364, %v997
    %v9429 = vmul.f32 %v9365, %v1002
    %v9430 = vmul.f32 %v9366, %v1007
    %v9431 = vmul.f32 %v9367, %v1012
    %v9432 = vmul.f32 %v9368, %v1017
    %v9433 = vmul.f32 %v9369, %v1022
    %v9434 = vmul.f32 %v9370, %v1027
    %v9435 = vmul.f32 %v9371, %v1032
    %v9436 = vmul.f32 %v9372, %v1037
    %v9437 = vmul.f32 %v9373, %v1042
    %v9438 = vmul.f32 %v9374, %v1047
    %v9439 = vmul.f32 %v9375, %v1052
    %v9440 = vmul.f32 %v9376, %v1057
    %v9441 = vmul.f32 %v9377, %v1062
    %v9442 = vmul.f32 %v9378, %v1067
    %v9443 = vmul.f32 %v9379, %v1072
    %v9444 = vmul.f32 %v9380, %v1077
    %v9445 = vmul.f32 %v9381, %v1082
    %v9446 = vmul.f32 %v9382, %v1087
    %v9447 = vmul.f32 %v9383, %v1092
    %v9448 = vmul.f32 %v9384, %v1097
    %v9449 = vmul.f32 %v9385, %v1102
    %v9450 = vmul.f32 %v9386, %v1107
    %v9451 = vmul.f32 %v9387, %v1112
    %v9452 = vmul.f32 %v9388, %v1117
    %v9453 = vmul.f32 %v9389, %v1122
    %v9454 = vmul.f32 %v9390, %v1127
    %v9455 = vmul.f32 %v9391, %v1132
    %v9456 = vmul.f32 %v9392, %v1137
    %v9457 = vmul.f32 %v9393, %v1142
    %v9458 = vmul.f32 %v9394, %v1147
    %v9459 = vmul.f32 %v9395, %v1152
    %v9460 = vmul.f32 %v9396, %v1157
    %v9461 = vmul.f32 %v9397, %v1162
    %v9462 = vmul.f32 %v9398, %v1167
    %v9463 = vmul.f32 %v9399, %v1172
    %v9464 = vmul.f32 %v9400, %v1177
    %v9465 = vmul.f32 %v9401, %v1182
    %v9466 = vmul.f32 %v9402, %v1187
    %v9467 = vmul.f32 %v9403, %v1192
    %v9468 = vmul.f32 %v9404, %v1197
    %v9469 = vmul.f32 %v9405, %v1202
    %v9470 = vmul.f32 %v9406, %v1207
    %v9471 = vmul.f32 %v9407, %v1212
    %v9472 = vmul.f32 %v9408, %v1217
    %v9473 = vmul.f32 %v9409, %v1222
    %v9474 = vmul.f32 %v9410, %v1227
    %v9475 = vmul.f32 %v9411, %v1232
    %v9476 = vmul.f32 %v9412, %v1237
    %v9477 = vmul.f32 %v9413, %v1242
    %v9478 = vmul.f32 %v9414, %v1247
    %v9479 = vmul.f32 %v9415, %v1252
    %v9480 = vld [vmem:[%s10] sm:$0xff]
    %v9481 = vld [vmem:[%s10 + $0x8] sm:$0xff]
    %v9482 = vld [vmem:[%s10 + $0x10] sm:$0xff]
    %v9483 = vld [vmem:[%s10 + $0x18] sm:$0xff]
    %v9484 = vld [vmem:[%s11] sm:$0x1]
    %v9486 = vlaneseq
    %v9487 = vshrl.u32 %v9486, 7
    %v9488 = vsub.s32 0, %v9487
    %v9489 = vrot.slane %v9484, %v9488
    %v9492 = vsel %vm354, %v9416, 0
    %v9495 = vsel %vm354, %v9417, 0
    %v9498 = vsel %vm354, %v9418, 0
    %v9501 = vsel %vm354, %v9419, 0
    %v9504 = vsel %vm354, %v9420, 0
    %v9507 = vsel %vm354, %v9421, 0
    %v9510 = vsel %vm354, %v9422, 0
    %v9513 = vsel %vm354, %v9423, 0
    %v9516 = vsel %vm354, %v9424, 0
    %v9519 = vsel %vm354, %v9425, 0
    %v9522 = vsel %vm354, %v9426, 0
    %v9525 = vsel %vm354, %v9427, 0
    %v9528 = vsel %vm354, %v9428, 0
    %v9531 = vsel %vm354, %v9429, 0
    %v9534 = vsel %vm354, %v9430, 0
    %v9537 = vsel %vm354, %v9431, 0
    %v9540 = vsel %vm354, %v9432, 0
    %v9543 = vsel %vm354, %v9433, 0
    %v9546 = vsel %vm354, %v9434, 0
    %v9549 = vsel %vm354, %v9435, 0
    %v9552 = vsel %vm354, %v9436, 0
    %v9555 = vsel %vm354, %v9437, 0
    %v9558 = vsel %vm354, %v9438, 0
    %v9561 = vsel %vm354, %v9439, 0
    %v9564 = vsel %vm354, %v9440, 0
    %v9567 = vsel %vm354, %v9441, 0
    %v9570 = vsel %vm354, %v9442, 0
    %v9573 = vsel %vm354, %v9443, 0
    %v9576 = vsel %vm354, %v9444, 0
    %v9579 = vsel %vm354, %v9445, 0
    %v9582 = vsel %vm354, %v9446, 0
    %v9585 = vsel %vm354, %v9447, 0
    %v9588 = vsel %vm354, %v9448, 0
    %v9591 = vsel %vm354, %v9449, 0
    %v9594 = vsel %vm354, %v9450, 0
    %v9597 = vsel %vm354, %v9451, 0
    %v9600 = vsel %vm354, %v9452, 0
    %v9603 = vsel %vm354, %v9453, 0
    %v9606 = vsel %vm354, %v9454, 0
    %v9609 = vsel %vm354, %v9455, 0
    %v9612 = vsel %vm354, %v9456, 0
    %v9615 = vsel %vm354, %v9457, 0
    %v9618 = vsel %vm354, %v9458, 0
    %v9621 = vsel %vm354, %v9459, 0
    %v9624 = vsel %vm354, %v9460, 0
    %v9627 = vsel %vm354, %v9461, 0
    %v9630 = vsel %vm354, %v9462, 0
    %v9633 = vsel %vm354, %v9463, 0
    %v9636 = vsel %vm354, %v9464, 0
    %v9639 = vsel %vm354, %v9465, 0
    %v9642 = vsel %vm354, %v9466, 0
    %v9645 = vsel %vm354, %v9467, 0
    %v9648 = vsel %vm354, %v9468, 0
    %v9651 = vsel %vm354, %v9469, 0
    %v9654 = vsel %vm354, %v9470, 0
    %v9657 = vsel %vm354, %v9471, 0
    %v9660 = vsel %vm354, %v9472, 0
    %v9663 = vsel %vm354, %v9473, 0
    %v9666 = vsel %vm354, %v9474, 0
    %v9669 = vsel %vm354, %v9475, 0
    %v9672 = vsel %vm354, %v9476, 0
    %v9675 = vsel %vm354, %v9477, 0
    %v9678 = vsel %vm354, %v9478, 0
    %v9681 = vsel %vm354, %v9479, 0
    %9683 = vmatprep.subr.mxu0 0.0
    %9684 = vmatpush1.msra.mxu0 %v9480
    %9685 = vmatprep.subr.mxu0 0.0
    %9686 = vmatpush1.msra.mxu0 %v9481
    %9687 = vmatprep.subr.mxu0 0.0
    %9688 = vmatpush1.msra.mxu0 %v9482
    %9689 = vmatprep.subr.mxu0 0.0
    %9690 = vmatpush1.msra.mxu0 %v9483
    %9691 = vmatprep.subr.mxu0 0.0
    %9692 = vmatpush1.msra.mxu0 0.0
    %9693 = vmatprep.subr.mxu0 0.0
    %9694 = vmatpush1.msra.mxu0 0.0
    %9695 = vmatprep.subr.mxu0 0.0
    %9696 = vmatpush1.msra.mxu0 0.0
    %9697 = vmatprep.subr.mxu0 0.0
    %9698 = vmatpush1.msra.mxu0 0.0
    %9699 = vmatprep.subr.mxu0 0.0
    %9700 = vmatpush1.msra.mxu0 0.0
    %9701 = vmatprep.subr.mxu0 0.0
    %9702 = vmatpush1.msra.mxu0 0.0
    %9703 = vmatprep.subr.mxu0 0.0
    %9704 = vmatpush1.msra.mxu0 0.0
    %9705 = vmatprep.subr.mxu0 0.0
    %9706 = vmatpush1.msra.mxu0 0.0
    %9707 = vmatprep.subr.mxu0 0.0
    %9708 = vmatpush1.msra.mxu0 0.0
    %9709 = vmatprep.subr.mxu0 0.0
    %9710 = vmatpush1.msra.mxu0 0.0
    %9711 = vmatprep.subr.mxu0 0.0
    %9712 = vmatpush1.msra.mxu0 0.0
    %9713 = vmatprep.subr.mxu0 0.0
    %9714 = vmatpush1.msra.mxu0 0.0
    %9715 = vmatprep.subr.mxu0 0.0
    %9716 = vmatpush1.msra.mxu0 0.0
    %9717 = vmatprep.subr.mxu0 0.0
    %9718 = vmatpush1.msra.mxu0 0.0
    %9719 = vmatprep.subr.mxu0 0.0
    %9720 = vmatpush1.msra.mxu0 0.0
    %9721 = vmatprep.subr.mxu0 0.0
    %9722 = vmatpush1.msra.mxu0 0.0
    %9723 = vmatprep.subr.mxu0 0.0
    %9724 = vmatpush1.msra.mxu0 0.0
    %9725 = vmatprep.subr.mxu0 0.0
    %9726 = vmatpush1.msra.mxu0 0.0
    %9727 = vmatprep.subr.mxu0 0.0
    %9728 = vmatpush1.msra.mxu0 0.0
    %9729 = vmatprep.subr.mxu0 0.0
    %9730 = vmatpush1.msra.mxu0 0.0
    %9731 = vmatprep.subr.mxu0 0.0
    %9732 = vmatpush1.msra.mxu0 0.0
    %9733 = vmatprep.subr.mxu0 0.0
    %9734 = vmatpush1.msra.mxu0 0.0
    %9735 = vmatprep.subr.mxu0 0.0
    %9736 = vmatpush1.msra.mxu0 0.0
    %9737 = vmatprep.subr.mxu0 0.0
    %9738 = vmatpush1.msra.mxu0 0.0
    %9739 = vmatprep.subr.mxu0 0.0
    %9740 = vmatpush1.msra.mxu0 0.0
    %9741 = vmatprep.subr.mxu0 0.0
    %9742 = vmatpush1.msra.mxu0 0.0
    %9743 = vmatprep.subr.mxu0 0.0
    %9744 = vmatpush1.msra.mxu0 0.0
    %9745 = vmatprep.subr.mxu0 0.0
    %9746 = vmatpush1.msra.mxu0 0.0
    %9747 = vmatprep.mubr.f32.mxu0 0.0
    %9748 = vmatmul.mubr.f32.gmra.mrb[0].mxu0 %v9492
    %v9749 = vpop.f32.mrb[0].mxu0
    %v9750 = vadd.f32 %v9489, %v9749
    %v9751 = vpop.f32.mrb[0].mxu0
    %9752 = vmatprep.mubr.f32.mxu0 0.0
    %9753 = vmatmul.mubr.f32.gmra.mrb[0].mxu0 %v9495
    %v9754 = vpop.f32.mrb[0].mxu0
    %v9755 = vadd.f32 %v9489, %v9754
    %v9756 = vpop.f32.mrb[0].mxu0
    %9757 = vmatprep.mubr.f32.mxu0 0.0
    %9758 = vmatmul.mubr.f32.gmra.mrb[0].mxu0 %v9498
    %v9759 = vpop.f32.mrb[0].mxu0
    %v9760 = vadd.f32 %v9489, %v9759
    %v9761 = vpop.f32.mrb[0].mxu0
    %9762 = vmatprep.mubr.f32.mxu0 0.0
    %9763 = vmatmul.mubr.f32.gmra.mrb[0].mxu0 %v9501
    %v9764 = vpop.f32.mrb[0].mxu0
    %v9765 = vadd.f32 %v9489, %v9764
    %v9766 = vpop.f32.mrb[0].mxu0
    %9767 = vmatprep.mubr.f32.mxu0 0.0
    %9768 = vmatmul.mubr.f32.gmra.mrb[0].mxu0 %v9504
    %v9769 = vpop.f32.mrb[0].mxu0
    %v9770 = vadd.f32 %v9489, %v9769
    %v9771 = vpop.f32.mrb[0].mxu0
    %9772 = vmatprep.mubr.f32.mxu0 0.0
    %9773 = vmatmul.mubr.f32.gmra.mrb[0].mxu0 %v9507
    %v9774 = vpop.f32.mrb[0].mxu0
    %v9775 = vadd.f32 %v9489, %v9774
    %v9776 = vpop.f32.mrb[0].mxu0
    %9777 = vmatprep.mubr.f32.mxu0 0.0
    %9778 = vmatmul.mubr.f32.gmra.mrb[0].mxu0 %v9510
    %v9779 = vpop.f32.mrb[0].mxu0
    %v9780 = vadd.f32 %v9489, %v9779
    %v9781 = vpop.f32.mrb[0].mxu0
    %9782 = vmatprep.mubr.f32.mxu0 0.0
    %9783 = vmatmul.mubr.f32.gmra.mrb[0].mxu0 %v9513
    %v9784 = vpop.f32.mrb[0].mxu0
    %v9785 = vadd.f32 %v9489, %v9784
    %v9786 = vpop.f32.mrb[0].mxu0
    %9787 = vmatprep.mubr.f32.mxu0 0.0
    %9788 = vmatmul.mubr.f32.gmra.mrb[0].mxu0 %v9516
    %v9789 = vpop.f32.mrb[0].mxu0
    %v9790 = vadd.f32 %v9489, %v9789
    %v9791 = vpop.f32.mrb[0].mxu0
    %9792 = vmatprep.mubr.f32.mxu0 0.0
    %9793 = vmatmul.mubr.f32.gmra.mrb[0].mxu0 %v9519
    %v9794 = vpop.f32.mrb[0].mxu0
    %v9795 = vadd.f32 %v9489, %v9794
    %v9796 = vpop.f32.mrb[0].mxu0
    %9797 = vmatprep.mubr.f32.mxu0 0.0
    %9798 = vmatmul.mubr.f32.gmra.mrb[0].mxu0 %v9522
    %v9799 = vpop.f32.mrb[0].mxu0
    %v9800 = vadd.f32 %v9489, %v9799
    %v9801 = vpop.f32.mrb[0].mxu0
    %9802 = vmatprep.mubr.f32.mxu0 0.0
    %9803 = vmatmul.mubr.f32.gmra.mrb[0].mxu0 %v9525
    %v9804 = vpop.f32.mrb[0].mxu0
    %v9805 = vadd.f32 %v9489, %v9804
    %v9806 = vpop.f32.mrb[0].mxu0
    %9807 = vmatprep.mubr.f32.mxu0 0.0
    %9808 = vmatmul.mubr.f32.gmra.mrb[0].mxu0 %v9528
    %v9809 = vpop.f32.mrb[0].mxu0
    %v9810 = vadd.f32 %v9489, %v9809
    %v9811 = vpop.f32.mrb[0].mxu0
    %9812 = vmatprep.mubr.f32.mxu0 0.0
    %9813 = vmatmul.mubr.f32.gmra.mrb[0].mxu0 %v9531
    %v9814 = vpop.f32.mrb[0].mxu0
    %v9815 = vadd.f32 %v9489, %v9814
    %v9816 = vpop.f32.mrb[0].mxu0
    %9817 = vmatprep.mubr.f32.mxu0 0.0
    %9818 = vmatmul.mubr.f32.gmra.mrb[0].mxu0 %v9534
    %v9819 = vpop.f32.mrb[0].mxu0
    %v9820 = vadd.f32 %v9489, %v9819
    %v9821 = vpop.f32.mrb[0].mxu0
    %9822 = vmatprep.mubr.f32.mxu0 0.0
    %9823 = vmatmul.mubr.f32.gmra.mrb[0].mxu0 %v9537
    %v9824 = vpop.f32.mrb[0].mxu0
    %v9825 = vadd.f32 %v9489, %v9824
    %v9826 = vpop.f32.mrb[0].mxu0
    %9827 = vmatprep.mubr.f32.mxu0 0.0
    %9828 = vmatmul.mubr.f32.gmra.mrb[0].mxu0 %v9540
    %v9829 = vpop.f32.mrb[0].mxu0
    %v9830 = vadd.f32 %v9489, %v9829
    %v9831 = vpop.f32.mrb[0].mxu0
    %9832 = vmatprep.mubr.f32.mxu0 0.0
    %9833 = vmatmul.mubr.f32.gmra.mrb[0].mxu0 %v9543
    %v9834 = vpop.f32.mrb[0].mxu0
    %v9835 = vadd.f32 %v9489, %v9834
    %v9836 = vpop.f32.mrb[0].mxu0
    %9837 = vmatprep.mubr.f32.mxu0 0.0
    %9838 = vmatmul.mubr.f32.gmra.mrb[0].mxu0 %v9546
    %v9839 = vpop.f32.mrb[0].mxu0
    %v9840 = vadd.f32 %v9489, %v9839
    %v9841 = vpop.f32.mrb[0].mxu0
    %9842 = vmatprep.mubr.f32.mxu0 0.0
    %9843 = vmatmul.mubr.f32.gmra.mrb[0].mxu0 %v9549
    %v9844 = vpop.f32.mrb[0].mxu0
    %v9845 = vadd.f32 %v9489, %v9844
    %v9846 = vpop.f32.mrb[0].mxu0
    %9847 = vmatprep.mubr.f32.mxu0 0.0
    %9848 = vmatmul.mubr.f32.gmra.mrb[0].mxu0 %v9552
    %v9849 = vpop.f32.mrb[0].mxu0
    %v9850 = vadd.f32 %v9489, %v9849
    %v9851 = vpop.f32.mrb[0].mxu0
    %9852 = vmatprep.mubr.f32.mxu0 0.0
    %9853 = vmatmul.mubr.f32.gmra.mrb[0].mxu0 %v9555
    %v9854 = vpop.f32.mrb[0].mxu0
    %v9855 = vadd.f32 %v9489, %v9854
    %v9856 = vpop.f32.mrb[0].mxu0
    %9857 = vmatprep.mubr.f32.mxu0 0.0
    %9858 = vmatmul.mubr.f32.gmra.mrb[0].mxu0 %v9558
    %v9859 = vpop.f32.mrb[0].mxu0
    %v9860 = vadd.f32 %v9489, %v9859
    %v9861 = vpop.f32.mrb[0].mxu0
    %9862 = vmatprep.mubr.f32.mxu0 0.0
    %9863 = vmatmul.mubr.f32.gmra.mrb[0].mxu0 %v9561
    %v9864 = vpop.f32.mrb[0].mxu0
    %v9865 = vadd.f32 %v9489, %v9864
    %v9866 = vpop.f32.mrb[0].mxu0
    %9867 = vmatprep.mubr.f32.mxu0 0.0
    %9868 = vmatmul.mubr.f32.gmra.mrb[0].mxu0 %v9564
    %v9869 = vpop.f32.mrb[0].mxu0
    %v9870 = vadd.f32 %v9489, %v9869
    %v9871 = vpop.f32.mrb[0].mxu0
    %9872 = vmatprep.mubr.f32.mxu0 0.0
    %9873 = vmatmul.mubr.f32.gmra.mrb[0].mxu0 %v9567
    %v9874 = vpop.f32.mrb[0].mxu0
    %v9875 = vadd.f32 %v9489, %v9874
    %v9876 = vpop.f32.mrb[0].mxu0
    %9877 = vmatprep.mubr.f32.mxu0 0.0
    %9878 = vmatmul.mubr.f32.gmra.mrb[0].mxu0 %v9570
    %v9879 = vpop.f32.mrb[0].mxu0
    %v9880 = vadd.f32 %v9489, %v9879
    %v9881 = vpop.f32.mrb[0].mxu0
    %9882 = vmatprep.mubr.f32.mxu0 0.0
    %9883 = vmatmul.mubr.f32.gmra.mrb[0].mxu0 %v9573
    %v9884 = vpop.f32.mrb[0].mxu0
    %v9885 = vadd.f32 %v9489, %v9884
    %v9886 = vpop.f32.mrb[0].mxu0
    %9887 = vmatprep.mubr.f32.mxu0 0.0
    %9888 = vmatmul.mubr.f32.gmra.mrb[0].mxu0 %v9576
    %v9889 = vpop.f32.mrb[0].mxu0
    %v9890 = vadd.f32 %v9489, %v9889
    %v9891 = vpop.f32.mrb[0].mxu0
    %9892 = vmatprep.mubr.f32.mxu0 0.0
    %9893 = vmatmul.mubr.f32.gmra.mrb[0].mxu0 %v9579
    %v9894 = vpop.f32.mrb[0].mxu0
    %v9895 = vadd.f32 %v9489, %v9894
    %v9896 = vpop.f32.mrb[0].mxu0
    %9897 = vmatprep.mubr.f32.mxu0 0.0
    %9898 = vmatmul.mubr.f32.gmra.mrb[0].mxu0 %v9582
    %v9899 = vpop.f32.mrb[0].mxu0
    %v9900 = vadd.f32 %v9489, %v9899
    %v9901 = vpop.f32.mrb[0].mxu0
    %9902 = vmatprep.mubr.f32.mxu0 0.0
    %9903 = vmatmul.mubr.f32.gmra.mrb[0].mxu0 %v9585
    %v9904 = vpop.f32.mrb[0].mxu0
    %v9905 = vadd.f32 %v9489, %v9904
    %v9906 = vpop.f32.mrb[0].mxu0
    %9907 = vmatprep.mubr.f32.mxu0 0.0
    %9908 = vmatmul.mubr.f32.gmra.mrb[0].mxu0 %v9588
    %v9909 = vpop.f32.mrb[0].mxu0
    %v9910 = vadd.f32 %v9489, %v9909
    %v9911 = vpop.f32.mrb[0].mxu0
    %9912 = vmatprep.mubr.f32.mxu0 0.0
    %9913 = vmatmul.mubr.f32.gmra.mrb[0].mxu0 %v9591
    %v9914 = vpop.f32.mrb[0].mxu0
    %v9915 = vadd.f32 %v9489, %v9914
    %v9916 = vpop.f32.mrb[0].mxu0
    %9917 = vmatprep.mubr.f32.mxu0 0.0
    %9918 = vmatmul.mubr.f32.gmra.mrb[0].mxu0 %v9594
    %v9919 = vpop.f32.mrb[0].mxu0
    %v9920 = vadd.f32 %v9489, %v9919
    %v9921 = vpop.f32.mrb[0].mxu0
    %9922 = vmatprep.mubr.f32.mxu0 0.0
    %9923 = vmatmul.mubr.f32.gmra.mrb[0].mxu0 %v9597
    %v9924 = vpop.f32.mrb[0].mxu0
    %v9925 = vadd.f32 %v9489, %v9924
    %v9926 = vpop.f32.mrb[0].mxu0
    %9927 = vmatprep.mubr.f32.mxu0 0.0
    %9928 = vmatmul.mubr.f32.gmra.mrb[0].mxu0 %v9600
    %v9929 = vpop.f32.mrb[0].mxu0
    %v9930 = vadd.f32 %v9489, %v9929
    %v9931 = vpop.f32.mrb[0].mxu0
    %9932 = vmatprep.mubr.f32.mxu0 0.0
    %9933 = vmatmul.mubr.f32.gmra.mrb[0].mxu0 %v9603
    %v9934 = vpop.f32.mrb[0].mxu0
    %v9935 = vadd.f32 %v9489, %v9934
    %v9936 = vpop.f32.mrb[0].mxu0
    %9937 = vmatprep.mubr.f32.mxu0 0.0
    %9938 = vmatmul.mubr.f32.gmra.mrb[0].mxu0 %v9606
    %v9939 = vpop.f32.mrb[0].mxu0
    %v9940 = vadd.f32 %v9489, %v9939
    %v9941 = vpop.f32.mrb[0].mxu0
    %9942 = vmatprep.mubr.f32.mxu0 0.0
    %9943 = vmatmul.mubr.f32.gmra.mrb[0].mxu0 %v9609
    %v9944 = vpop.f32.mrb[0].mxu0
    %v9945 = vadd.f32 %v9489, %v9944
    %v9946 = vpop.f32.mrb[0].mxu0
    %9947 = vmatprep.mubr.f32.mxu0 0.0
    %9948 = vmatmul.mubr.f32.gmra.mrb[0].mxu0 %v9612
    %v9949 = vpop.f32.mrb[0].mxu0
    %v9950 = vadd.f32 %v9489, %v9949
    %v9951 = vpop.f32.mrb[0].mxu0
    %9952 = vmatprep.mubr.f32.mxu0 0.0
    %9953 = vmatmul.mubr.f32.gmra.mrb[0].mxu0 %v9615
    %v9954 = vpop.f32.mrb[0].mxu0
    %v9955 = vadd.f32 %v9489, %v9954
    %v9956 = vpop.f32.mrb[0].mxu0
    %9957 = vmatprep.mubr.f32.mxu0 0.0
    %9958 = vmatmul.mubr.f32.gmra.mrb[0].mxu0 %v9618
    %v9959 = vpop.f32.mrb[0].mxu0
    %v9960 = vadd.f32 %v9489, %v9959
    %v9961 = vpop.f32.mrb[0].mxu0
    %9962 = vmatprep.mubr.f32.mxu0 0.0
    %9963 = vmatmul.mubr.f32.gmra.mrb[0].mxu0 %v9621
    %v9964 = vpop.f32.mrb[0].mxu0
    %v9965 = vadd.f32 %v9489, %v9964
    %v9966 = vpop.f32.mrb[0].mxu0
    %9967 = vmatprep.mubr.f32.mxu0 0.0
    %9968 = vmatmul.mubr.f32.gmra.mrb[0].mxu0 %v9624
    %v9969 = vpop.f32.mrb[0].mxu0
    %v9970 = vadd.f32 %v9489, %v9969
    %v9971 = vpop.f32.mrb[0].mxu0
    %9972 = vmatprep.mubr.f32.mxu0 0.0
    %9973 = vmatmul.mubr.f32.gmra.mrb[0].mxu0 %v9627
    %v9974 = vpop.f32.mrb[0].mxu0
    %v9975 = vadd.f32 %v9489, %v9974
    %v9976 = vpop.f32.mrb[0].mxu0
    %9977 = vmatprep.mubr.f32.mxu0 0.0
    %9978 = vmatmul.mubr.f32.gmra.mrb[0].mxu0 %v9630
    %v9979 = vpop.f32.mrb[0].mxu0
    %v9980 = vadd.f32 %v9489, %v9979
    %v9981 = vpop.f32.mrb[0].mxu0
    %9982 = vmatprep.mubr.f32.mxu0 0.0
    %9983 = vmatmul.mubr.f32.gmra.mrb[0].mxu0 %v9633
    %v9984 = vpop.f32.mrb[0].mxu0
    %v9985 = vadd.f32 %v9489, %v9984
    %v9986 = vpop.f32.mrb[0].mxu0
    %9987 = vmatprep.mubr.f32.mxu0 0.0
    %9988 = vmatmul.mubr.f32.gmra.mrb[0].mxu0 %v9636
    %v9989 = vpop.f32.mrb[0].mxu0
    %v9990 = vadd.f32 %v9489, %v9989
    %v9991 = vpop.f32.mrb[0].mxu0
    %9992 = vmatprep.mubr.f32.mxu0 0.0
    %9993 = vmatmul.mubr.f32.gmra.mrb[0].mxu0 %v9639
    %v9994 = vpop.f32.mrb[0].mxu0
    %v9995 = vadd.f32 %v9489, %v9994
    %v9996 = vpop.f32.mrb[0].mxu0
    %9997 = vmatprep.mubr.f32.mxu0 0.0
    %9998 = vmatmul.mubr.f32.gmra.mrb[0].mxu0 %v9642
    %v9999 = vpop.f32.mrb[0].mxu0
    %v10000 = vadd.f32 %v9489, %v9999
    %v10001 = vpop.f32.mrb[0].mxu0
    %10002 = vmatprep.mubr.f32.mxu0 0.0
    %10003 = vmatmul.mubr.f32.gmra.mrb[0].mxu0 %v9645
    %v10004 = vpop.f32.mrb[0].mxu0
    %v10005 = vadd.f32 %v9489, %v10004
    %v10006 = vpop.f32.mrb[0].mxu0
    %10007 = vmatprep.mubr.f32.mxu0 0.0
    %10008 = vmatmul.mubr.f32.gmra.mrb[0].mxu0 %v9648
    %v10009 = vpop.f32.mrb[0].mxu0
    %v10010 = vadd.f32 %v9489, %v10009
    %v10011 = vpop.f32.mrb[0].mxu0
    %10012 = vmatprep.mubr.f32.mxu0 0.0
    %10013 = vmatmul.mubr.f32.gmra.mrb[0].mxu0 %v9651
    %v10014 = vpop.f32.mrb[0].mxu0
    %v10015 = vadd.f32 %v9489, %v10014
    %v10016 = vpop.f32.mrb[0].mxu0
    %10017 = vmatprep.mubr.f32.mxu0 0.0
    %10018 = vmatmul.mubr.f32.gmra.mrb[0].mxu0 %v9654
    %v10019 = vpop.f32.mrb[0].mxu0
    %v10020 = vadd.f32 %v9489, %v10019
    %v10021 = vpop.f32.mrb[0].mxu0
    %10022 = vmatprep.mubr.f32.mxu0 0.0
    %10023 = vmatmul.mubr.f32.gmra.mrb[0].mxu0 %v9657
    %v10024 = vpop.f32.mrb[0].mxu0
    %v10025 = vadd.f32 %v9489, %v10024
    %v10026 = vpop.f32.mrb[0].mxu0
    %10027 = vmatprep.mubr.f32.mxu0 0.0
    %10028 = vmatmul.mubr.f32.gmra.mrb[0].mxu0 %v9660
    %v10029 = vpop.f32.mrb[0].mxu0
    %v10030 = vadd.f32 %v9489, %v10029
    %v10031 = vpop.f32.mrb[0].mxu0
    %10032 = vmatprep.mubr.f32.mxu0 0.0
    %10033 = vmatmul.mubr.f32.gmra.mrb[0].mxu0 %v9663
    %v10034 = vpop.f32.mrb[0].mxu0
    %v10035 = vadd.f32 %v9489, %v10034
    %v10036 = vpop.f32.mrb[0].mxu0
    %10037 = vmatprep.mubr.f32.mxu0 0.0
    %10038 = vmatmul.mubr.f32.gmra.mrb[0].mxu0 %v9666
    %v10039 = vpop.f32.mrb[0].mxu0
    %v10040 = vadd.f32 %v9489, %v10039
    %v10041 = vpop.f32.mrb[0].mxu0
    %10042 = vmatprep.mubr.f32.mxu0 0.0
    %10043 = vmatmul.mubr.f32.gmra.mrb[0].mxu0 %v9669
    %v10044 = vpop.f32.mrb[0].mxu0
    %v10045 = vadd.f32 %v9489, %v10044
    %v10046 = vpop.f32.mrb[0].mxu0
    %10047 = vmatprep.mubr.f32.mxu0 0.0
    %10048 = vmatmul.mubr.f32.gmra.mrb[0].mxu0 %v9672
    %v10049 = vpop.f32.mrb[0].mxu0
    %v10050 = vadd.f32 %v9489, %v10049
    %v10051 = vpop.f32.mrb[0].mxu0
    %10052 = vmatprep.mubr.f32.mxu0 0.0
    %10053 = vmatmul.mubr.f32.gmra.mrb[0].mxu0 %v9675
    %v10054 = vpop.f32.mrb[0].mxu0
    %v10055 = vadd.f32 %v9489, %v10054
    %v10056 = vpop.f32.mrb[0].mxu0
    %10057 = vmatprep.mubr.f32.mxu0 0.0
    %10058 = vmatmul.mubr.f32.gmra.mrb[0].mxu0 %v9678
    %v10059 = vpop.f32.mrb[0].mxu0
    %v10060 = vadd.f32 %v9489, %v10059
    %v10061 = vpop.f32.mrb[0].mxu0
    %10062 = vmatprep.mubr.f32.mxu0 0.0
    %10063 = vmatmul.mubr.f32.gmra.mrb[0].mxu0 %v9681
    %v10064 = vpop.f32.mrb[0].mxu0
    %v10065 = vadd.f32 %v9489, %v10064
    %v10066 = vpop.f32.mrb[0].mxu0
    %10067 = vdwg.mxu0
    %v10068 = vld [vmem:[%s12] sm:$0x1]
    %v10069 = vld [vmem:[%s13] sm:$0x1]
    %v10070 = vmul.f32 %v9750, %v937
    %v10071 = vmul.f32 %v9755, %v942
    %v10072 = vmul.f32 %v9760, %v947
    %v10073 = vmul.f32 %v9765, %v952
    %v10074 = vmul.f32 %v9770, %v957
    %v10075 = vmul.f32 %v9775, %v962
    %v10076 = vmul.f32 %v9780, %v967
    %v10077 = vmul.f32 %v9785, %v972
    %v10078 = vmul.f32 %v9790, %v977
    %v10079 = vmul.f32 %v9795, %v982
    %v10080 = vmul.f32 %v9800, %v987
    %v10081 = vmul.f32 %v9805, %v992
    %v10082 = vmul.f32 %v9810, %v997
    %v10083 = vmul.f32 %v9815, %v1002
    %v10084 = vmul.f32 %v9820, %v1007
    %v10085 = vmul.f32 %v9825, %v1012
    %v10086 = vmul.f32 %v9830, %v1017
    %v10087 = vmul.f32 %v9835, %v1022
    %v10088 = vmul.f32 %v9840, %v1027
    %v10089 = vmul.f32 %v9845, %v1032
    %v10090 = vmul.f32 %v9850, %v1037
    %v10091 = vmul.f32 %v9855, %v1042
    %v10092 = vmul.f32 %v9860, %v1047
    %v10093 = vmul.f32 %v9865, %v1052
    %v10094 = vmul.f32 %v9870, %v1057
    %v10095 = vmul.f32 %v9875, %v1062
    %v10096 = vmul.f32 %v9880, %v1067
    %v10097 = vmul.f32 %v9885, %v1072
    %v10098 = vmul.f32 %v9890, %v1077
    %v10099 = vmul.f32 %v9895, %v1082
    %v10100 = vmul.f32 %v9900, %v1087
    %v10101 = vmul.f32 %v9905, %v1092
    %v10102 = vmul.f32 %v9910, %v1097
    %v10103 = vmul.f32 %v9915, %v1102
    %v10104 = vmul.f32 %v9920, %v1107
    %v10105 = vmul.f32 %v9925, %v1112
    %v10106 = vmul.f32 %v9930, %v1117
    %v10107 = vmul.f32 %v9935, %v1122
    %v10108 = vmul.f32 %v9940, %v1127
    %v10109 = vmul.f32 %v9945, %v1132
    %v10110 = vmul.f32 %v9950, %v1137
    %v10111 = vmul.f32 %v9955, %v1142
    %v10112 = vmul.f32 %v9960, %v1147
    %v10113 = vmul.f32 %v9965, %v1152
    %v10114 = vmul.f32 %v9970, %v1157
    %v10115 = vmul.f32 %v9975, %v1162
    %v10116 = vmul.f32 %v9980, %v1167
    %v10117 = vmul.f32 %v9985, %v1172
    %v10118 = vmul.f32 %v9990, %v1177
    %v10119 = vmul.f32 %v9995, %v1182
    %v10120 = vmul.f32 %v10000, %v1187
    %v10121 = vmul.f32 %v10005, %v1192
    %v10122 = vmul.f32 %v10010, %v1197
    %v10123 = vmul.f32 %v10015, %v1202
    %v10124 = vmul.f32 %v10020, %v1207
    %v10125 = vmul.f32 %v10025, %v1212
    %v10126 = vmul.f32 %v10030, %v1217
    %v10127 = vmul.f32 %v10035, %v1222
    %v10128 = vmul.f32 %v10040, %v1227
    %v10129 = vmul.f32 %v10045, %v1232
    %v10130 = vmul.f32 %v10050, %v1237
    %v10131 = vmul.f32 %v10055, %v1242
    %v10132 = vmul.f32 %v10060, %v1247
    %v10133 = vmul.f32 %v10065, %v1252
    %v10134 = vadd.f32 %v10070, %v10071
    %v10135 = vadd.f32 %v10134, %v10072
    %v10136 = vadd.f32 %v10135, %v10073
    %v10137 = vadd.f32 %v10136, %v10074
    %v10138 = vadd.f32 %v10137, %v10075
    %v10139 = vadd.f32 %v10138, %v10076
    %v10140 = vadd.f32 %v10139, %v10077
    %v10141 = vadd.f32 %v10140, %v10078
    %v10142 = vadd.f32 %v10141, %v10079
    %v10143 = vadd.f32 %v10142, %v10080
    %v10144 = vadd.f32 %v10143, %v10081
    %v10145 = vadd.f32 %v10144, %v10082
    %v10146 = vadd.f32 %v10145, %v10083
    %v10147 = vadd.f32 %v10146, %v10084
    %v10148 = vadd.f32 %v10147, %v10085
    %v10149 = vadd.f32 %v10148, %v10086
    %v10150 = vadd.f32 %v10149, %v10087
    %v10151 = vadd.f32 %v10150, %v10088
    %v10152 = vadd.f32 %v10151, %v10089
    %v10153 = vadd.f32 %v10152, %v10090
    %v10154 = vadd.f32 %v10153, %v10091
    %v10155 = vadd.f32 %v10154, %v10092
    %v10156 = vadd.f32 %v10155, %v10093
    %v10157 = vadd.f32 %v10156, %v10094
    %v10158 = vadd.f32 %v10157, %v10095
    %v10159 = vadd.f32 %v10158, %v10096
    %v10160 = vadd.f32 %v10159, %v10097
    %v10161 = vadd.f32 %v10160, %v10098
    %v10162 = vadd.f32 %v10161, %v10099
    %v10163 = vadd.f32 %v10162, %v10100
    %v10164 = vadd.f32 %v10163, %v10101
    %v10165 = vadd.f32 %v10164, %v10102
    %v10166 = vadd.f32 %v10165, %v10103
    %v10167 = vadd.f32 %v10166, %v10104
    %v10168 = vadd.f32 %v10167, %v10105
    %v10169 = vadd.f32 %v10168, %v10106
    %v10170 = vadd.f32 %v10169, %v10107
    %v10171 = vadd.f32 %v10170, %v10108
    %v10172 = vadd.f32 %v10171, %v10109
    %v10173 = vadd.f32 %v10172, %v10110
    %v10174 = vadd.f32 %v10173, %v10111
    %v10175 = vadd.f32 %v10174, %v10112
    %v10176 = vadd.f32 %v10175, %v10113
    %v10177 = vadd.f32 %v10176, %v10114
    %v10178 = vadd.f32 %v10177, %v10115
    %v10179 = vadd.f32 %v10178, %v10116
    %v10180 = vadd.f32 %v10179, %v10117
    %v10181 = vadd.f32 %v10180, %v10118
    %v10182 = vadd.f32 %v10181, %v10119
    %v10183 = vadd.f32 %v10182, %v10120
    %v10184 = vadd.f32 %v10183, %v10121
    %v10185 = vadd.f32 %v10184, %v10122
    %v10186 = vadd.f32 %v10185, %v10123
    %v10187 = vadd.f32 %v10186, %v10124
    %v10188 = vadd.f32 %v10187, %v10125
    %v10189 = vadd.f32 %v10188, %v10126
    %v10190 = vadd.f32 %v10189, %v10127
    %v10191 = vadd.f32 %v10190, %v10128
    %v10192 = vadd.f32 %v10191, %v10129
    %v10193 = vadd.f32 %v10192, %v10130
    %v10194 = vadd.f32 %v10193, %v10131
    %v10195 = vadd.f32 %v10194, %v10132
    %v10196 = vadd.f32 %v10195, %v10133
    %v10197 = vrot.slane %v10196, 4
    %v10198 = vadd.f32 %v10196, %v10197
    %v10199 = vrot.slane %v10198, 2
    %v10200 = vadd.f32 %v10198, %v10199
    %v10201 = vrot.slane %v10200, 1
    %v10202 = vadd.f32 %v10200, %v10201
    %v10203 = vmul.f32 %v10202, %v1451
    %v10204 = vsub.f32 %v9750, %v10203
    %v10205 = vsub.f32 %v9755, %v10203
    %v10206 = vsub.f32 %v9760, %v10203
    %v10207 = vsub.f32 %v9765, %v10203
    %v10208 = vsub.f32 %v9770, %v10203
    %v10209 = vsub.f32 %v9775, %v10203
    %v10210 = vsub.f32 %v9780, %v10203
    %v10211 = vsub.f32 %v9785, %v10203
    %v10212 = vsub.f32 %v9790, %v10203
    %v10213 = vsub.f32 %v9795, %v10203
    %v10214 = vsub.f32 %v9800, %v10203
    %v10215 = vsub.f32 %v9805, %v10203
    %v10216 = vsub.f32 %v9810, %v10203
    %v10217 = vsub.f32 %v9815, %v10203
    %v10218 = vsub.f32 %v9820, %v10203
    %v10219 = vsub.f32 %v9825, %v10203
    %v10220 = vsub.f32 %v9830, %v10203
    %v10221 = vsub.f32 %v9835, %v10203
    %v10222 = vsub.f32 %v9840, %v10203
    %v10223 = vsub.f32 %v9845, %v10203
    %v10224 = vsub.f32 %v9850, %v10203
    %v10225 = vsub.f32 %v9855, %v10203
    %v10226 = vsub.f32 %v9860, %v10203
    %v10227 = vsub.f32 %v9865, %v10203
    %v10228 = vsub.f32 %v9870, %v10203
    %v10229 = vsub.f32 %v9875, %v10203
    %v10230 = vsub.f32 %v9880, %v10203
    %v10231 = vsub.f32 %v9885, %v10203
    %v10232 = vsub.f32 %v9890, %v10203
    %v10233 = vsub.f32 %v9895, %v10203
    %v10234 = vsub.f32 %v9900, %v10203
    %v10235 = vsub.f32 %v9905, %v10203
    %v10236 = vsub.f32 %v9910, %v10203
    %v10237 = vsub.f32 %v9915, %v10203
    %v10238 = vsub.f32 %v9920, %v10203
    %v10239 = vsub.f32 %v9925, %v10203
    %v10240 = vsub.f32 %v9930, %v10203
    %v10241 = vsub.f32 %v9935, %v10203
    %v10242 = vsub.f32 %v9940, %v10203
    %v10243 = vsub.f32 %v9945, %v10203
    %v10244 = vsub.f32 %v9950, %v10203
    %v10245 = vsub.f32 %v9955, %v10203
    %v10246 = vsub.f32 %v9960, %v10203
    %v10247 = vsub.f32 %v9965, %v10203
    %v10248 = vsub.f32 %v9970, %v10203
    %v10249 = vsub.f32 %v9975, %v10203
    %v10250 = vsub.f32 %v9980, %v10203
    %v10251 = vsub.f32 %v9985, %v10203
    %v10252 = vsub.f32 %v9990, %v10203
    %v10253 = vsub.f32 %v9995, %v10203
    %v10254 = vsub.f32 %v10000, %v10203
    %v10255 = vsub.f32 %v10005, %v10203
    %v10256 = vsub.f32 %v10010, %v10203
    %v10257 = vsub.f32 %v10015, %v10203
    %v10258 = vsub.f32 %v10020, %v10203
    %v10259 = vsub.f32 %v10025, %v10203
    %v10260 = vsub.f32 %v10030, %v10203
    %v10261 = vsub.f32 %v10035, %v10203
    %v10262 = vsub.f32 %v10040, %v10203
    %v10263 = vsub.f32 %v10045, %v10203
    %v10264 = vsub.f32 %v10050, %v10203
    %v10265 = vsub.f32 %v10055, %v10203
    %v10266 = vsub.f32 %v10060, %v10203
    %v10267 = vsub.f32 %v10065, %v10203
    %v10268 = vmul.f32 %v10204, %v10204
    %v10269 = vmul.f32 %v10205, %v10205
    %v10270 = vmul.f32 %v10206, %v10206
    %v10271 = vmul.f32 %v10207, %v10207
    %v10272 = vmul.f32 %v10208, %v10208
    %v10273 = vmul.f32 %v10209, %v10209
    %v10274 = vmul.f32 %v10210, %v10210
    %v10275 = vmul.f32 %v10211, %v10211
    %v10276 = vmul.f32 %v10212, %v10212
    %v10277 = vmul.f32 %v10213, %v10213
    %v10278 = vmul.f32 %v10214, %v10214
    %v10279 = vmul.f32 %v10215, %v10215
    %v10280 = vmul.f32 %v10216, %v10216
    %v10281 = vmul.f32 %v10217, %v10217
    %v10282 = vmul.f32 %v10218, %v10218
    %v10283 = vmul.f32 %v10219, %v10219
    %v10284 = vmul.f32 %v10220, %v10220
    %v10285 = vmul.f32 %v10221, %v10221
    %v10286 = vmul.f32 %v10222, %v10222
    %v10287 = vmul.f32 %v10223, %v10223
    %v10288 = vmul.f32 %v10224, %v10224
    %v10289 = vmul.f32 %v10225, %v10225
    %v10290 = vmul.f32 %v10226, %v10226
    %v10291 = vmul.f32 %v10227, %v10227
    %v10292 = vmul.f32 %v10228, %v10228
    %v10293 = vmul.f32 %v10229, %v10229
    %v10294 = vmul.f32 %v10230, %v10230
    %v10295 = vmul.f32 %v10231, %v10231
    %v10296 = vmul.f32 %v10232, %v10232
    %v10297 = vmul.f32 %v10233, %v10233
    %v10298 = vmul.f32 %v10234, %v10234
    %v10299 = vmul.f32 %v10235, %v10235
    %v10300 = vmul.f32 %v10236, %v10236
    %v10301 = vmul.f32 %v10237, %v10237
    %v10302 = vmul.f32 %v10238, %v10238
    %v10303 = vmul.f32 %v10239, %v10239
    %v10304 = vmul.f32 %v10240, %v10240
    %v10305 = vmul.f32 %v10241, %v10241
    %v10306 = vmul.f32 %v10242, %v10242
    %v10307 = vmul.f32 %v10243, %v10243
    %v10308 = vmul.f32 %v10244, %v10244
    %v10309 = vmul.f32 %v10245, %v10245
    %v10310 = vmul.f32 %v10246, %v10246
    %v10311 = vmul.f32 %v10247, %v10247
    %v10312 = vmul.f32 %v10248, %v10248
    %v10313 = vmul.f32 %v10249, %v10249
    %v10314 = vmul.f32 %v10250, %v10250
    %v10315 = vmul.f32 %v10251, %v10251
    %v10316 = vmul.f32 %v10252, %v10252
    %v10317 = vmul.f32 %v10253, %v10253
    %v10318 = vmul.f32 %v10254, %v10254
    %v10319 = vmul.f32 %v10255, %v10255
    %v10320 = vmul.f32 %v10256, %v10256
    %v10321 = vmul.f32 %v10257, %v10257
    %v10322 = vmul.f32 %v10258, %v10258
    %v10323 = vmul.f32 %v10259, %v10259
    %v10324 = vmul.f32 %v10260, %v10260
    %v10325 = vmul.f32 %v10261, %v10261
    %v10326 = vmul.f32 %v10262, %v10262
    %v10327 = vmul.f32 %v10263, %v10263
    %v10328 = vmul.f32 %v10264, %v10264
    %v10329 = vmul.f32 %v10265, %v10265
    %v10330 = vmul.f32 %v10266, %v10266
    %v10331 = vmul.f32 %v10267, %v10267
    %v10332 = vmul.f32 %v10268, %v937
    %v10333 = vmul.f32 %v10269, %v942
    %v10334 = vmul.f32 %v10270, %v947
    %v10335 = vmul.f32 %v10271, %v952
    %v10336 = vmul.f32 %v10272, %v957
    %v10337 = vmul.f32 %v10273, %v962
    %v10338 = vmul.f32 %v10274, %v967
    %v10339 = vmul.f32 %v10275, %v972
    %v10340 = vmul.f32 %v10276, %v977
    %v10341 = vmul.f32 %v10277, %v982
    %v10342 = vmul.f32 %v10278, %v987
    %v10343 = vmul.f32 %v10279, %v992
    %v10344 = vmul.f32 %v10280, %v997
    %v10345 = vmul.f32 %v10281, %v1002
    %v10346 = vmul.f32 %v10282, %v1007
    %v10347 = vmul.f32 %v10283, %v1012
    %v10348 = vmul.f32 %v10284, %v1017
    %v10349 = vmul.f32 %v10285, %v1022
    %v10350 = vmul.f32 %v10286, %v1027
    %v10351 = vmul.f32 %v10287, %v1032
    %v10352 = vmul.f32 %v10288, %v1037
    %v10353 = vmul.f32 %v10289, %v1042
    %v10354 = vmul.f32 %v10290, %v1047
    %v10355 = vmul.f32 %v10291, %v1052
    %v10356 = vmul.f32 %v10292, %v1057
    %v10357 = vmul.f32 %v10293, %v1062
    %v10358 = vmul.f32 %v10294, %v1067
    %v10359 = vmul.f32 %v10295, %v1072
    %v10360 = vmul.f32 %v10296, %v1077
    %v10361 = vmul.f32 %v10297, %v1082
    %v10362 = vmul.f32 %v10298, %v1087
    %v10363 = vmul.f32 %v10299, %v1092
    %v10364 = vmul.f32 %v10300, %v1097
    %v10365 = vmul.f32 %v10301, %v1102
    %v10366 = vmul.f32 %v10302, %v1107
    %v10367 = vmul.f32 %v10303, %v1112
    %v10368 = vmul.f32 %v10304, %v1117
    %v10369 = vmul.f32 %v10305, %v1122
    %v10370 = vmul.f32 %v10306, %v1127
    %v10371 = vmul.f32 %v10307, %v1132
    %v10372 = vmul.f32 %v10308, %v1137
    %v10373 = vmul.f32 %v10309, %v1142
    %v10374 = vmul.f32 %v10310, %v1147
    %v10375 = vmul.f32 %v10311, %v1152
    %v10376 = vmul.f32 %v10312, %v1157
    %v10377 = vmul.f32 %v10313, %v1162
    %v10378 = vmul.f32 %v10314, %v1167
    %v10379 = vmul.f32 %v10315, %v1172
    %v10380 = vmul.f32 %v10316, %v1177
    %v10381 = vmul.f32 %v10317, %v1182
    %v10382 = vmul.f32 %v10318, %v1187
    %v10383 = vmul.f32 %v10319, %v1192
    %v10384 = vmul.f32 %v10320, %v1197
    %v10385 = vmul.f32 %v10321, %v1202
    %v10386 = vmul.f32 %v10322, %v1207
    %v10387 = vmul.f32 %v10323, %v1212
    %v10388 = vmul.f32 %v10324, %v1217
    %v10389 = vmul.f32 %v10325, %v1222
    %v10390 = vmul.f32 %v10326, %v1227
    %v10391 = vmul.f32 %v10327, %v1232
    %v10392 = vmul.f32 %v10328, %v1237
    %v10393 = vmul.f32 %v10329, %v1242
    %v10394 = vmul.f32 %v10330, %v1247
    %v10395 = vmul.f32 %v10331, %v1252
    %v10396 = vadd.f32 %v10332, %v10333
    %v10397 = vadd.f32 %v10396, %v10334
    %v10398 = vadd.f32 %v10397, %v10335
    %v10399 = vadd.f32 %v10398, %v10336
    %v10400 = vadd.f32 %v10399, %v10337
    %v10401 = vadd.f32 %v10400, %v10338
    %v10402 = vadd.f32 %v10401, %v10339
    %v10403 = vadd.f32 %v10402, %v10340
    %v10404 = vadd.f32 %v10403, %v10341
    %v10405 = vadd.f32 %v10404, %v10342
    %v10406 = vadd.f32 %v10405, %v10343
    %v10407 = vadd.f32 %v10406, %v10344
    %v10408 = vadd.f32 %v10407, %v10345
    %v10409 = vadd.f32 %v10408, %v10346
    %v10410 = vadd.f32 %v10409, %v10347
    %v10411 = vadd.f32 %v10410, %v10348
    %v10412 = vadd.f32 %v10411, %v10349
    %v10413 = vadd.f32 %v10412, %v10350
    %v10414 = vadd.f32 %v10413, %v10351
    %v10415 = vadd.f32 %v10414, %v10352
    %v10416 = vadd.f32 %v10415, %v10353
    %v10417 = vadd.f32 %v10416, %v10354
    %v10418 = vadd.f32 %v10417, %v10355
    %v10419 = vadd.f32 %v10418, %v10356
    %v10420 = vadd.f32 %v10419, %v10357
    %v10421 = vadd.f32 %v10420, %v10358
    %v10422 = vadd.f32 %v10421, %v10359
    %v10423 = vadd.f32 %v10422, %v10360
    %v10424 = vadd.f32 %v10423, %v10361
    %v10425 = vadd.f32 %v10424, %v10362
    %v10426 = vadd.f32 %v10425, %v10363
    %v10427 = vadd.f32 %v10426, %v10364
    %v10428 = vadd.f32 %v10427, %v10365
    %v10429 = vadd.f32 %v10428, %v10366
    %v10430 = vadd.f32 %v10429, %v10367
    %v10431 = vadd.f32 %v10430, %v10368
    %v10432 = vadd.f32 %v10431, %v10369
    %v10433 = vadd.f32 %v10432, %v10370
    %v10434 = vadd.f32 %v10433, %v10371
    %v10435 = vadd.f32 %v10434, %v10372
    %v10436 = vadd.f32 %v10435, %v10373
    %v10437 = vadd.f32 %v10436, %v10374
    %v10438 = vadd.f32 %v10437, %v10375
    %v10439 = vadd.f32 %v10438, %v10376
    %v10440 = vadd.f32 %v10439, %v10377
    %v10441 = vadd.f32 %v10440, %v10378
    %v10442 = vadd.f32 %v10441, %v10379
    %v10443 = vadd.f32 %v10442, %v10380
    %v10444 = vadd.f32 %v10443, %v10381
    %v10445 = vadd.f32 %v10444, %v10382
    %v10446 = vadd.f32 %v10445, %v10383
    %v10447 = vadd.f32 %v10446, %v10384
    %v10448 = vadd.f32 %v10447, %v10385
    %v10449 = vadd.f32 %v10448, %v10386
    %v10450 = vadd.f32 %v10449, %v10387
    %v10451 = vadd.f32 %v10450, %v10388
    %v10452 = vadd.f32 %v10451, %v10389
    %v10453 = vadd.f32 %v10452, %v10390
    %v10454 = vadd.f32 %v10453, %v10391
    %v10455 = vadd.f32 %v10454, %v10392
    %v10456 = vadd.f32 %v10455, %v10393
    %v10457 = vadd.f32 %v10456, %v10394
    %v10458 = vadd.f32 %v10457, %v10395
    %v10459 = vrot.slane %v10458, 4
    %v10460 = vadd.f32 %v10458, %v10459
    %v10461 = vrot.slane %v10460, 2
    %v10462 = vadd.f32 %v10460, %v10461
    %v10463 = vrot.slane %v10462, 1
    %v10464 = vadd.f32 %v10462, %v10463
    %v10465 = vmul.f32 %v10464, %v1451
    %v10466 = vadd.f32 %v10465, 1e-05
    %v10467 = vrsqrt.pop %v10466
    %v10468 = vmul.f32 %v10204, %v10467
    %v10469 = vmul.f32 %v10205, %v10467
    %v10470 = vmul.f32 %v10206, %v10467
    %v10471 = vmul.f32 %v10207, %v10467
    %v10472 = vmul.f32 %v10208, %v10467
    %v10473 = vmul.f32 %v10209, %v10467
    %v10474 = vmul.f32 %v10210, %v10467
    %v10475 = vmul.f32 %v10211, %v10467
    %v10476 = vmul.f32 %v10212, %v10467
    %v10477 = vmul.f32 %v10213, %v10467
    %v10478 = vmul.f32 %v10214, %v10467
    %v10479 = vmul.f32 %v10215, %v10467
    %v10480 = vmul.f32 %v10216, %v10467
    %v10481 = vmul.f32 %v10217, %v10467
    %v10482 = vmul.f32 %v10218, %v10467
    %v10483 = vmul.f32 %v10219, %v10467
    %v10484 = vmul.f32 %v10220, %v10467
    %v10485 = vmul.f32 %v10221, %v10467
    %v10486 = vmul.f32 %v10222, %v10467
    %v10487 = vmul.f32 %v10223, %v10467
    %v10488 = vmul.f32 %v10224, %v10467
    %v10489 = vmul.f32 %v10225, %v10467
    %v10490 = vmul.f32 %v10226, %v10467
    %v10491 = vmul.f32 %v10227, %v10467
    %v10492 = vmul.f32 %v10228, %v10467
    %v10493 = vmul.f32 %v10229, %v10467
    %v10494 = vmul.f32 %v10230, %v10467
    %v10495 = vmul.f32 %v10231, %v10467
    %v10496 = vmul.f32 %v10232, %v10467
    %v10497 = vmul.f32 %v10233, %v10467
    %v10498 = vmul.f32 %v10234, %v10467
    %v10499 = vmul.f32 %v10235, %v10467
    %v10500 = vmul.f32 %v10236, %v10467
    %v10501 = vmul.f32 %v10237, %v10467
    %v10502 = vmul.f32 %v10238, %v10467
    %v10503 = vmul.f32 %v10239, %v10467
    %v10504 = vmul.f32 %v10240, %v10467
    %v10505 = vmul.f32 %v10241, %v10467
    %v10506 = vmul.f32 %v10242, %v10467
    %v10507 = vmul.f32 %v10243, %v10467
    %v10508 = vmul.f32 %v10244, %v10467
    %v10509 = vmul.f32 %v10245, %v10467
    %v10510 = vmul.f32 %v10246, %v10467
    %v10511 = vmul.f32 %v10247, %v10467
    %v10512 = vmul.f32 %v10248, %v10467
    %v10513 = vmul.f32 %v10249, %v10467
    %v10514 = vmul.f32 %v10250, %v10467
    %v10515 = vmul.f32 %v10251, %v10467
    %v10516 = vmul.f32 %v10252, %v10467
    %v10517 = vmul.f32 %v10253, %v10467
    %v10518 = vmul.f32 %v10254, %v10467
    %v10519 = vmul.f32 %v10255, %v10467
    %v10520 = vmul.f32 %v10256, %v10467
    %v10521 = vmul.f32 %v10257, %v10467
    %v10522 = vmul.f32 %v10258, %v10467
    %v10523 = vmul.f32 %v10259, %v10467
    %v10524 = vmul.f32 %v10260, %v10467
    %v10525 = vmul.f32 %v10261, %v10467
    %v10526 = vmul.f32 %v10262, %v10467
    %v10527 = vmul.f32 %v10263, %v10467
    %v10528 = vmul.f32 %v10264, %v10467
    %v10529 = vmul.f32 %v10265, %v10467
    %v10530 = vmul.f32 %v10266, %v10467
    %v10531 = vmul.f32 %v10267, %v10467
    %v10533 = vlaneseq
    %v10534 = vshrl.u32 %v10533, 7
    %v10535 = vsub.s32 0, %v10534
    %v10536 = vrot.slane %v10068, %v10535
    %v10538 = vmul.f32 %v10468, %v10536
    %v10539 = vmul.f32 %v10469, %v10536
    %v10540 = vmul.f32 %v10470, %v10536
    %v10541 = vmul.f32 %v10471, %v10536
    %v10542 = vmul.f32 %v10472, %v10536
    %v10543 = vmul.f32 %v10473, %v10536
    %v10544 = vmul.f32 %v10474, %v10536
    %v10545 = vmul.f32 %v10475, %v10536
    %v10546 = vmul.f32 %v10476, %v10536
    %v10547 = vmul.f32 %v10477, %v10536
    %v10548 = vmul.f32 %v10478, %v10536
    %v10549 = vmul.f32 %v10479, %v10536
    %v10550 = vmul.f32 %v10480, %v10536
    %v10551 = vmul.f32 %v10481, %v10536
    %v10552 = vmul.f32 %v10482, %v10536
    %v10553 = vmul.f32 %v10483, %v10536
    %v10554 = vmul.f32 %v10484, %v10536
    %v10555 = vmul.f32 %v10485, %v10536
    %v10556 = vmul.f32 %v10486, %v10536
    %v10557 = vmul.f32 %v10487, %v10536
    %v10558 = vmul.f32 %v10488, %v10536
    %v10559 = vmul.f32 %v10489, %v10536
    %v10560 = vmul.f32 %v10490, %v10536
    %v10561 = vmul.f32 %v10491, %v10536
    %v10562 = vmul.f32 %v10492, %v10536
    %v10563 = vmul.f32 %v10493, %v10536
    %v10564 = vmul.f32 %v10494, %v10536
    %v10565 = vmul.f32 %v10495, %v10536
    %v10566 = vmul.f32 %v10496, %v10536
    %v10567 = vmul.f32 %v10497, %v10536
    %v10568 = vmul.f32 %v10498, %v10536
    %v10569 = vmul.f32 %v10499, %v10536
    %v10570 = vmul.f32 %v10500, %v10536
    %v10571 = vmul.f32 %v10501, %v10536
    %v10572 = vmul.f32 %v10502, %v10536
    %v10573 = vmul.f32 %v10503, %v10536
    %v10574 = vmul.f32 %v10504, %v10536
    %v10575 = vmul.f32 %v10505, %v10536
    %v10576 = vmul.f32 %v10506, %v10536
    %v10577 = vmul.f32 %v10507, %v10536
    %v10578 = vmul.f32 %v10508, %v10536
    %v10579 = vmul.f32 %v10509, %v10536
    %v10580 = vmul.f32 %v10510, %v10536
    %v10581 = vmul.f32 %v10511, %v10536
    %v10582 = vmul.f32 %v10512, %v10536
    %v10583 = vmul.f32 %v10513, %v10536
    %v10584 = vmul.f32 %v10514, %v10536
    %v10585 = vmul.f32 %v10515, %v10536
    %v10586 = vmul.f32 %v10516, %v10536
    %v10587 = vmul.f32 %v10517, %v10536
    %v10588 = vmul.f32 %v10518, %v10536
    %v10589 = vmul.f32 %v10519, %v10536
    %v10590 = vmul.f32 %v10520, %v10536
    %v10591 = vmul.f32 %v10521, %v10536
    %v10592 = vmul.f32 %v10522, %v10536
    %v10593 = vmul.f32 %v10523, %v10536
    %v10594 = vmul.f32 %v10524, %v10536
    %v10595 = vmul.f32 %v10525, %v10536
    %v10596 = vmul.f32 %v10526, %v10536
    %v10597 = vmul.f32 %v10527, %v10536
    %v10598 = vmul.f32 %v10528, %v10536
    %v10599 = vmul.f32 %v10529, %v10536
    %v10600 = vmul.f32 %v10530, %v10536
    %v10601 = vmul.f32 %v10531, %v10536
    %v10603 = vlaneseq
    %v10604 = vshrl.u32 %v10603, 7
    %v10605 = vsub.s32 0, %v10604
    %v10606 = vrot.slane %v10069, %v10605
    %v10608 = vadd.f32 %v10538, %v10606
    %v10609 = vadd.f32 %v10539, %v10606
    %v10610 = vadd.f32 %v10540, %v10606
    %v10611 = vadd.f32 %v10541, %v10606
    %v10612 = vadd.f32 %v10542, %v10606
    %v10613 = vadd.f32 %v10543, %v10606
    %v10614 = vadd.f32 %v10544, %v10606
    %v10615 = vadd.f32 %v10545, %v10606
    %v10616 = vadd.f32 %v10546, %v10606
    %v10617 = vadd.f32 %v10547, %v10606
    %v10618 = vadd.f32 %v10548, %v10606
    %v10619 = vadd.f32 %v10549, %v10606
    %v10620 = vadd.f32 %v10550, %v10606
    %v10621 = vadd.f32 %v10551, %v10606
    %v10622 = vadd.f32 %v10552, %v10606
    %v10623 = vadd.f32 %v10553, %v10606
    %v10624 = vadd.f32 %v10554, %v10606
    %v10625 = vadd.f32 %v10555, %v10606
    %v10626 = vadd.f32 %v10556, %v10606
    %v10627 = vadd.f32 %v10557, %v10606
    %v10628 = vadd.f32 %v10558, %v10606
    %v10629 = vadd.f32 %v10559, %v10606
    %v10630 = vadd.f32 %v10560, %v10606
    %v10631 = vadd.f32 %v10561, %v10606
    %v10632 = vadd.f32 %v10562, %v10606
    %v10633 = vadd.f32 %v10563, %v10606
    %v10634 = vadd.f32 %v10564, %v10606
    %v10635 = vadd.f32 %v10565, %v10606
    %v10636 = vadd.f32 %v10566, %v10606
    %v10637 = vadd.f32 %v10567, %v10606
    %v10638 = vadd.f32 %v10568, %v10606
    %v10639 = vadd.f32 %v10569, %v10606
    %v10640 = vadd.f32 %v10570, %v10606
    %v10641 = vadd.f32 %v10571, %v10606
    %v10642 = vadd.f32 %v10572, %v10606
    %v10643 = vadd.f32 %v10573, %v10606
    %v10644 = vadd.f32 %v10574, %v10606
    %v10645 = vadd.f32 %v10575, %v10606
    %v10646 = vadd.f32 %v10576, %v10606
    %v10647 = vadd.f32 %v10577, %v10606
    %v10648 = vadd.f32 %v10578, %v10606
    %v10649 = vadd.f32 %v10579, %v10606
    %v10650 = vadd.f32 %v10580, %v10606
    %v10651 = vadd.f32 %v10581, %v10606
    %v10652 = vadd.f32 %v10582, %v10606
    %v10653 = vadd.f32 %v10583, %v10606
    %v10654 = vadd.f32 %v10584, %v10606
    %v10655 = vadd.f32 %v10585, %v10606
    %v10656 = vadd.f32 %v10586, %v10606
    %v10657 = vadd.f32 %v10587, %v10606
    %v10658 = vadd.f32 %v10588, %v10606
    %v10659 = vadd.f32 %v10589, %v10606
    %v10660 = vadd.f32 %v10590, %v10606
    %v10661 = vadd.f32 %v10591, %v10606
    %v10662 = vadd.f32 %v10592, %v10606
    %v10663 = vadd.f32 %v10593, %v10606
    %v10664 = vadd.f32 %v10594, %v10606
    %v10665 = vadd.f32 %v10595, %v10606
    %v10666 = vadd.f32 %v10596, %v10606
    %v10667 = vadd.f32 %v10597, %v10606
    %v10668 = vadd.f32 %v10598, %v10606
    %v10669 = vadd.f32 %v10599, %v10606
    %v10670 = vadd.f32 %v10600, %v10606
    %v10671 = vadd.f32 %v10601, %v10606
    %v10672 = vmul.f32 %v10608, %v937
    %v10673 = vmul.f32 %v10609, %v942
    %v10674 = vmul.f32 %v10610, %v947
    %v10675 = vmul.f32 %v10611, %v952
    %v10676 = vmul.f32 %v10612, %v957
    %v10677 = vmul.f32 %v10613, %v962
    %v10678 = vmul.f32 %v10614, %v967
    %v10679 = vmul.f32 %v10615, %v972
    %v10680 = vmul.f32 %v10616, %v977
    %v10681 = vmul.f32 %v10617, %v982
    %v10682 = vmul.f32 %v10618, %v987
    %v10683 = vmul.f32 %v10619, %v992
    %v10684 = vmul.f32 %v10620, %v997
    %v10685 = vmul.f32 %v10621, %v1002
    %v10686 = vmul.f32 %v10622, %v1007
    %v10687 = vmul.f32 %v10623, %v1012
    %v10688 = vmul.f32 %v10624, %v1017
    %v10689 = vmul.f32 %v10625, %v1022
    %v10690 = vmul.f32 %v10626, %v1027
    %v10691 = vmul.f32 %v10627, %v1032
    %v10692 = vmul.f32 %v10628, %v1037
    %v10693 = vmul.f32 %v10629, %v1042
    %v10694 = vmul.f32 %v10630, %v1047
    %v10695 = vmul.f32 %v10631, %v1052
    %v10696 = vmul.f32 %v10632, %v1057
    %v10697 = vmul.f32 %v10633, %v1062
    %v10698 = vmul.f32 %v10634, %v1067
    %v10699 = vmul.f32 %v10635, %v1072
    %v10700 = vmul.f32 %v10636, %v1077
    %v10701 = vmul.f32 %v10637, %v1082
    %v10702 = vmul.f32 %v10638, %v1087
    %v10703 = vmul.f32 %v10639, %v1092
    %v10704 = vmul.f32 %v10640, %v1097
    %v10705 = vmul.f32 %v10641, %v1102
    %v10706 = vmul.f32 %v10642, %v1107
    %v10707 = vmul.f32 %v10643, %v1112
    %v10708 = vmul.f32 %v10644, %v1117
    %v10709 = vmul.f32 %v10645, %v1122
    %v10710 = vmul.f32 %v10646, %v1127
    %v10711 = vmul.f32 %v10647, %v1132
    %v10712 = vmul.f32 %v10648, %v1137
    %v10713 = vmul.f32 %v10649, %v1142
    %v10714 = vmul.f32 %v10650, %v1147
    %v10715 = vmul.f32 %v10651, %v1152
    %v10716 = vmul.f32 %v10652, %v1157
    %v10717 = vmul.f32 %v10653, %v1162
    %v10718 = vmul.f32 %v10654, %v1167
    %v10719 = vmul.f32 %v10655, %v1172
    %v10720 = vmul.f32 %v10656, %v1177
    %v10721 = vmul.f32 %v10657, %v1182
    %v10722 = vmul.f32 %v10658, %v1187
    %v10723 = vmul.f32 %v10659, %v1192
    %v10724 = vmul.f32 %v10660, %v1197
    %v10725 = vmul.f32 %v10661, %v1202
    %v10726 = vmul.f32 %v10662, %v1207
    %v10727 = vmul.f32 %v10663, %v1212
    %v10728 = vmul.f32 %v10664, %v1217
    %v10729 = vmul.f32 %v10665, %v1222
    %v10730 = vmul.f32 %v10666, %v1227
    %v10731 = vmul.f32 %v10667, %v1232
    %v10732 = vmul.f32 %v10668, %v1237
    %v10733 = vmul.f32 %v10669, %v1242
    %v10734 = vmul.f32 %v10670, %v1247
    %v10735 = vmul.f32 %v10671, %v1252
    %v10736 = vld [vmem:[%s14] sm:$0xff]
    %v10737 = vld [vmem:[%s14 + $0x8] sm:$0xff]
    %v10738 = vld [vmem:[%s14 + $0x10] sm:$0xff]
    %v10739 = vld [vmem:[%s14 + $0x18] sm:$0xff]
    %v10740 = vld [vmem:[%s15] sm:$0x1]
    %v10742 = vlaneseq
    %v10743 = vshrl.u32 %v10742, 7
    %v10744 = vsub.s32 0, %v10743
    %v10745 = vrot.slane %v10740, %v10744
    %10747 = vmatprep.subr.mxu0 0.0
    %10748 = vmatpush1.msra.mxu0 %v10736
    %10749 = vmatprep.subr.mxu0 0.0
    %10750 = vmatpush1.msra.mxu0 %v10737
    %10751 = vmatprep.subr.mxu0 0.0
    %10752 = vmatpush1.msra.mxu0 %v10738
    %10753 = vmatprep.subr.mxu0 0.0
    %10754 = vmatpush1.msra.mxu0 %v10739
    %10755 = vmatprep.subr.mxu0 0.0
    %10756 = vmatpush1.msra.mxu0 0.0
    %10757 = vmatprep.subr.mxu0 0.0
    %10758 = vmatpush1.msra.mxu0 0.0
    %10759 = vmatprep.subr.mxu0 0.0
    %10760 = vmatpush1.msra.mxu0 0.0
    %10761 = vmatprep.subr.mxu0 0.0
    %10762 = vmatpush1.msra.mxu0 0.0
    %10763 = vmatprep.subr.mxu0 0.0
    %10764 = vmatpush1.msra.mxu0 0.0
    %10765 = vmatprep.subr.mxu0 0.0
    %10766 = vmatpush1.msra.mxu0 0.0
    %10767 = vmatprep.subr.mxu0 0.0
    %10768 = vmatpush1.msra.mxu0 0.0
    %10769 = vmatprep.subr.mxu0 0.0
    %10770 = vmatpush1.msra.mxu0 0.0
    %10771 = vmatprep.subr.mxu0 0.0
    %10772 = vmatpush1.msra.mxu0 0.0
    %10773 = vmatprep.subr.mxu0 0.0
    %10774 = vmatpush1.msra.mxu0 0.0
    %10775 = vmatprep.subr.mxu0 0.0
    %10776 = vmatpush1.msra.mxu0 0.0
    %10777 = vmatprep.subr.mxu0 0.0
    %10778 = vmatpush1.msra.mxu0 0.0
    %10779 = vmatprep.subr.mxu0 0.0
    %10780 = vmatpush1.msra.mxu0 0.0
    %10781 = vmatprep.subr.mxu0 0.0
    %10782 = vmatpush1.msra.mxu0 0.0
    %10783 = vmatprep.subr.mxu0 0.0
    %10784 = vmatpush1.msra.mxu0 0.0
    %10785 = vmatprep.subr.mxu0 0.0
    %10786 = vmatpush1.msra.mxu0 0.0
    %10787 = vmatprep.subr.mxu0 0.0
    %10788 = vmatpush1.msra.mxu0 0.0
    %10789 = vmatprep.subr.mxu0 0.0
    %10790 = vmatpush1.msra.mxu0 0.0
    %10791 = vmatprep.subr.mxu0 0.0
    %10792 = vmatpush1.msra.mxu0 0.0
    %10793 = vmatprep.subr.mxu0 0.0
    %10794 = vmatpush1.msra.mxu0 0.0
    %10795 = vmatprep.subr.mxu0 0.0
    %10796 = vmatpush1.msra.mxu0 0.0
    %10797 = vmatprep.subr.mxu0 0.0
    %10798 = vmatpush1.msra.mxu0 0.0
    %10799 = vmatprep.subr.mxu0 0.0
    %10800 = vmatpush1.msra.mxu0 0.0
    %10801 = vmatprep.subr.mxu0 0.0
    %10802 = vmatpush1.msra.mxu0 0.0
    %10803 = vmatprep.subr.mxu0 0.0
    %10804 = vmatpush1.msra.mxu0 0.0
    %10805 = vmatprep.subr.mxu0 0.0
    %10806 = vmatpush1.msra.mxu0 0.0
    %10807 = vmatprep.subr.mxu0 0.0
    %10808 = vmatpush1.msra.mxu0 0.0
    %10809 = vmatprep.subr.mxu0 0.0
    %10810 = vmatpush1.msra.mxu0 0.0
    %10811 = vmatprep.mubr.f32.mxu0 0.0
    %10812 = vmatmul.mubr.f32.gmra.mrb[0].mxu0 %v356
    %v10813 = vpop.f32.mrb[0].mxu0
    %v10814 = vadd.f32 %v10745, %v10813
    %v10815 = vpop.f32.mrb[0].mxu0
    %10816 = vmatprep.mubr.f32.mxu0 0.0
    %10817 = vmatmul.mubr.f32.gmra.mrb[0].mxu0 %v359
    %v10818 = vpop.f32.mrb[0].mxu0
    %v10819 = vadd.f32 %v10745, %v10818
    %v10820 = vpop.f32.mrb[0].mxu0
    %10821 = vmatprep.mubr.f32.mxu0 0.0
    %10822 = vmatmul.mubr.f32.gmra.mrb[0].mxu0 %v362
    %v10823 = vpop.f32.mrb[0].mxu0
    %v10824 = vadd.f32 %v10745, %v10823
    %v10825 = vpop.f32.mrb[0].mxu0
    %10826 = vmatprep.mubr.f32.mxu0 0.0
    %10827 = vmatmul.mubr.f32.gmra.mrb[0].mxu0 %v365
    %v10828 = vpop.f32.mrb[0].mxu0
    %v10829 = vadd.f32 %v10745, %v10828
    %v10830 = vpop.f32.mrb[0].mxu0
    %10831 = vmatprep.mubr.f32.mxu0 0.0
    %10832 = vmatmul.mubr.f32.gmra.mrb[0].mxu0 %v368
    %v10833 = vpop.f32.mrb[0].mxu0
    %v10834 = vadd.f32 %v10745, %v10833
    %v10835 = vpop.f32.mrb[0].mxu0
    %10836 = vmatprep.mubr.f32.mxu0 0.0
    %10837 = vmatmul.mubr.f32.gmra.mrb[0].mxu0 %v371
    %v10838 = vpop.f32.mrb[0].mxu0
    %v10839 = vadd.f32 %v10745, %v10838
    %v10840 = vpop.f32.mrb[0].mxu0
    %10841 = vmatprep.mubr.f32.mxu0 0.0
    %10842 = vmatmul.mubr.f32.gmra.mrb[0].mxu0 %v374
    %v10843 = vpop.f32.mrb[0].mxu0
    %v10844 = vadd.f32 %v10745, %v10843
    %v10845 = vpop.f32.mrb[0].mxu0
    %10846 = vmatprep.mubr.f32.mxu0 0.0
    %10847 = vmatmul.mubr.f32.gmra.mrb[0].mxu0 %v377
    %v10848 = vpop.f32.mrb[0].mxu0
    %v10849 = vadd.f32 %v10745, %v10848
    %v10850 = vpop.f32.mrb[0].mxu0
    %10851 = vmatprep.mubr.f32.mxu0 0.0
    %10852 = vmatmul.mubr.f32.gmra.mrb[0].mxu0 %v380
    %v10853 = vpop.f32.mrb[0].mxu0
    %v10854 = vadd.f32 %v10745, %v10853
    %v10855 = vpop.f32.mrb[0].mxu0
    %10856 = vmatprep.mubr.f32.mxu0 0.0
    %10857 = vmatmul.mubr.f32.gmra.mrb[0].mxu0 %v383
    %v10858 = vpop.f32.mrb[0].mxu0
    %v10859 = vadd.f32 %v10745, %v10858
    %v10860 = vpop.f32.mrb[0].mxu0
    %10861 = vmatprep.mubr.f32.mxu0 0.0
    %10862 = vmatmul.mubr.f32.gmra.mrb[0].mxu0 %v386
    %v10863 = vpop.f32.mrb[0].mxu0
    %v10864 = vadd.f32 %v10745, %v10863
    %v10865 = vpop.f32.mrb[0].mxu0
    %10866 = vmatprep.mubr.f32.mxu0 0.0
    %10867 = vmatmul.mubr.f32.gmra.mrb[0].mxu0 %v389
    %v10868 = vpop.f32.mrb[0].mxu0
    %v10869 = vadd.f32 %v10745, %v10868
    %v10870 = vpop.f32.mrb[0].mxu0
    %10871 = vmatprep.mubr.f32.mxu0 0.0
    %10872 = vmatmul.mubr.f32.gmra.mrb[0].mxu0 %v392
    %v10873 = vpop.f32.mrb[0].mxu0
    %v10874 = vadd.f32 %v10745, %v10873
    %v10875 = vpop.f32.mrb[0].mxu0
    %10876 = vmatprep.mubr.f32.mxu0 0.0
    %10877 = vmatmul.mubr.f32.gmra.mrb[0].mxu0 %v395
    %v10878 = vpop.f32.mrb[0].mxu0
    %v10879 = vadd.f32 %v10745, %v10878
    %v10880 = vpop.f32.mrb[0].mxu0
    %10881 = vmatprep.mubr.f32.mxu0 0.0
    %10882 = vmatmul.mubr.f32.gmra.mrb[0].mxu0 %v398
    %v10883 = vpop.f32.mrb[0].mxu0
    %v10884 = vadd.f32 %v10745, %v10883
    %v10885 = vpop.f32.mrb[0].mxu0
    %10886 = vmatprep.mubr.f32.mxu0 0.0
    %10887 = vmatmul.mubr.f32.gmra.mrb[0].mxu0 %v401
    %v10888 = vpop.f32.mrb[0].mxu0
    %v10889 = vadd.f32 %v10745, %v10888
    %v10890 = vpop.f32.mrb[0].mxu0
    %10891 = vmatprep.mubr.f32.mxu0 0.0
    %10892 = vmatmul.mubr.f32.gmra.mrb[0].mxu0 %v404
    %v10893 = vpop.f32.mrb[0].mxu0
    %v10894 = vadd.f32 %v10745, %v10893
    %v10895 = vpop.f32.mrb[0].mxu0
    %10896 = vmatprep.mubr.f32.mxu0 0.0
    %10897 = vmatmul.mubr.f32.gmra.mrb[0].mxu0 %v407
    %v10898 = vpop.f32.mrb[0].mxu0
    %v10899 = vadd.f32 %v10745, %v10898
    %v10900 = vpop.f32.mrb[0].mxu0
    %10901 = vmatprep.mubr.f32.mxu0 0.0
    %10902 = vmatmul.mubr.f32.gmra.mrb[0].mxu0 %v410
    %v10903 = vpop.f32.mrb[0].mxu0
    %v10904 = vadd.f32 %v10745, %v10903
    %v10905 = vpop.f32.mrb[0].mxu0
    %10906 = vmatprep.mubr.f32.mxu0 0.0
    %10907 = vmatmul.mubr.f32.gmra.mrb[0].mxu0 %v413
    %v10908 = vpop.f32.mrb[0].mxu0
    %v10909 = vadd.f32 %v10745, %v10908
    %v10910 = vpop.f32.mrb[0].mxu0
    %10911 = vmatprep.mubr.f32.mxu0 0.0
    %10912 = vmatmul.mubr.f32.gmra.mrb[0].mxu0 %v416
    %v10913 = vpop.f32.mrb[0].mxu0
    %v10914 = vadd.f32 %v10745, %v10913
    %v10915 = vpop.f32.mrb[0].mxu0
    %10916 = vmatprep.mubr.f32.mxu0 0.0
    %10917 = vmatmul.mubr.f32.gmra.mrb[0].mxu0 %v419
    %v10918 = vpop.f32.mrb[0].mxu0
    %v10919 = vadd.f32 %v10745, %v10918
    %v10920 = vpop.f32.mrb[0].mxu0
    %10921 = vmatprep.mubr.f32.mxu0 0.0
    %10922 = vmatmul.mubr.f32.gmra.mrb[0].mxu0 %v422
    %v10923 = vpop.f32.mrb[0].mxu0
    %v10924 = vadd.f32 %v10745, %v10923
    %v10925 = vpop.f32.mrb[0].mxu0
    %10926 = vmatprep.mubr.f32.mxu0 0.0
    %10927 = vmatmul.mubr.f32.gmra.mrb[0].mxu0 %v425
    %v10928 = vpop.f32.mrb[0].mxu0
    %v10929 = vadd.f32 %v10745, %v10928
    %v10930 = vpop.f32.mrb[0].mxu0
    %10931 = vmatprep.mubr.f32.mxu0 0.0
    %10932 = vmatmul.mubr.f32.gmra.mrb[0].mxu0 %v428
    %v10933 = vpop.f32.mrb[0].mxu0
    %v10934 = vadd.f32 %v10745, %v10933
    %v10935 = vpop.f32.mrb[0].mxu0
    %10936 = vmatprep.mubr.f32.mxu0 0.0
    %10937 = vmatmul.mubr.f32.gmra.mrb[0].mxu0 %v431
    %v10938 = vpop.f32.mrb[0].mxu0
    %v10939 = vadd.f32 %v10745, %v10938
    %v10940 = vpop.f32.mrb[0].mxu0
    %10941 = vmatprep.mubr.f32.mxu0 0.0
    %10942 = vmatmul.mubr.f32.gmra.mrb[0].mxu0 %v434
    %v10943 = vpop.f32.mrb[0].mxu0
    %v10944 = vadd.f32 %v10745, %v10943
    %v10945 = vpop.f32.mrb[0].mxu0
    %10946 = vmatprep.mubr.f32.mxu0 0.0
    %10947 = vmatmul.mubr.f32.gmra.mrb[0].mxu0 %v437
    %v10948 = vpop.f32.mrb[0].mxu0
    %v10949 = vadd.f32 %v10745, %v10948
    %v10950 = vpop.f32.mrb[0].mxu0
    %10951 = vmatprep.mubr.f32.mxu0 0.0
    %10952 = vmatmul.mubr.f32.gmra.mrb[0].mxu0 %v440
    %v10953 = vpop.f32.mrb[0].mxu0
    %v10954 = vadd.f32 %v10745, %v10953
    %v10955 = vpop.f32.mrb[0].mxu0
    %10956 = vmatprep.mubr.f32.mxu0 0.0
    %10957 = vmatmul.mubr.f32.gmra.mrb[0].mxu0 %v443
    %v10958 = vpop.f32.mrb[0].mxu0
    %v10959 = vadd.f32 %v10745, %v10958
    %v10960 = vpop.f32.mrb[0].mxu0
    %10961 = vmatprep.mubr.f32.mxu0 0.0
    %10962 = vmatmul.mubr.f32.gmra.mrb[0].mxu0 %v446
    %v10963 = vpop.f32.mrb[0].mxu0
    %v10964 = vadd.f32 %v10745, %v10963
    %v10965 = vpop.f32.mrb[0].mxu0
    %10966 = vmatprep.mubr.f32.mxu0 0.0
    %10967 = vmatmul.mubr.f32.gmra.mrb[0].mxu0 %v449
    %v10968 = vpop.f32.mrb[0].mxu0
    %v10969 = vadd.f32 %v10745, %v10968
    %v10970 = vpop.f32.mrb[0].mxu0
    %10971 = vmatprep.mubr.f32.mxu0 0.0
    %10972 = vmatmul.mubr.f32.gmra.mrb[0].mxu0 %v452
    %v10973 = vpop.f32.mrb[0].mxu0
    %v10974 = vadd.f32 %v10745, %v10973
    %v10975 = vpop.f32.mrb[0].mxu0
    %10976 = vmatprep.mubr.f32.mxu0 0.0
    %10977 = vmatmul.mubr.f32.gmra.mrb[0].mxu0 %v455
    %v10978 = vpop.f32.mrb[0].mxu0
    %v10979 = vadd.f32 %v10745, %v10978
    %v10980 = vpop.f32.mrb[0].mxu0
    %10981 = vmatprep.mubr.f32.mxu0 0.0
    %10982 = vmatmul.mubr.f32.gmra.mrb[0].mxu0 %v458
    %v10983 = vpop.f32.mrb[0].mxu0
    %v10984 = vadd.f32 %v10745, %v10983
    %v10985 = vpop.f32.mrb[0].mxu0
    %10986 = vmatprep.mubr.f32.mxu0 0.0
    %10987 = vmatmul.mubr.f32.gmra.mrb[0].mxu0 %v461
    %v10988 = vpop.f32.mrb[0].mxu0
    %v10989 = vadd.f32 %v10745, %v10988
    %v10990 = vpop.f32.mrb[0].mxu0
    %10991 = vmatprep.mubr.f32.mxu0 0.0
    %10992 = vmatmul.mubr.f32.gmra.mrb[0].mxu0 %v464
    %v10993 = vpop.f32.mrb[0].mxu0
    %v10994 = vadd.f32 %v10745, %v10993
    %v10995 = vpop.f32.mrb[0].mxu0
    %10996 = vmatprep.mubr.f32.mxu0 0.0
    %10997 = vmatmul.mubr.f32.gmra.mrb[0].mxu0 %v467
    %v10998 = vpop.f32.mrb[0].mxu0
    %v10999 = vadd.f32 %v10745, %v10998
    %v11000 = vpop.f32.mrb[0].mxu0
    %11001 = vmatprep.mubr.f32.mxu0 0.0
    %11002 = vmatmul.mubr.f32.gmra.mrb[0].mxu0 %v470
    %v11003 = vpop.f32.mrb[0].mxu0
    %v11004 = vadd.f32 %v10745, %v11003
    %v11005 = vpop.f32.mrb[0].mxu0
    %11006 = vmatprep.mubr.f32.mxu0 0.0
    %11007 = vmatmul.mubr.f32.gmra.mrb[0].mxu0 %v473
    %v11008 = vpop.f32.mrb[0].mxu0
    %v11009 = vadd.f32 %v10745, %v11008
    %v11010 = vpop.f32.mrb[0].mxu0
    %11011 = vmatprep.mubr.f32.mxu0 0.0
    %11012 = vmatmul.mubr.f32.gmra.mrb[0].mxu0 %v476
    %v11013 = vpop.f32.mrb[0].mxu0
    %v11014 = vadd.f32 %v10745, %v11013
    %v11015 = vpop.f32.mrb[0].mxu0
    %11016 = vmatprep.mubr.f32.mxu0 0.0
    %11017 = vmatmul.mubr.f32.gmra.mrb[0].mxu0 %v479
    %v11018 = vpop.f32.mrb[0].mxu0
    %v11019 = vadd.f32 %v10745, %v11018
    %v11020 = vpop.f32.mrb[0].mxu0
    %11021 = vmatprep.mubr.f32.mxu0 0.0
    %11022 = vmatmul.mubr.f32.gmra.mrb[0].mxu0 %v482
    %v11023 = vpop.f32.mrb[0].mxu0
    %v11024 = vadd.f32 %v10745, %v11023
    %v11025 = vpop.f32.mrb[0].mxu0
    %11026 = vmatprep.mubr.f32.mxu0 0.0
    %11027 = vmatmul.mubr.f32.gmra.mrb[0].mxu0 %v485
    %v11028 = vpop.f32.mrb[0].mxu0
    %v11029 = vadd.f32 %v10745, %v11028
    %v11030 = vpop.f32.mrb[0].mxu0
    %11031 = vmatprep.mubr.f32.mxu0 0.0
    %11032 = vmatmul.mubr.f32.gmra.mrb[0].mxu0 %v488
    %v11033 = vpop.f32.mrb[0].mxu0
    %v11034 = vadd.f32 %v10745, %v11033
    %v11035 = vpop.f32.mrb[0].mxu0
    %11036 = vmatprep.mubr.f32.mxu0 0.0
    %11037 = vmatmul.mubr.f32.gmra.mrb[0].mxu0 %v491
    %v11038 = vpop.f32.mrb[0].mxu0
    %v11039 = vadd.f32 %v10745, %v11038
    %v11040 = vpop.f32.mrb[0].mxu0
    %11041 = vmatprep.mubr.f32.mxu0 0.0
    %11042 = vmatmul.mubr.f32.gmra.mrb[0].mxu0 %v494
    %v11043 = vpop.f32.mrb[0].mxu0
    %v11044 = vadd.f32 %v10745, %v11043
    %v11045 = vpop.f32.mrb[0].mxu0
    %11046 = vmatprep.mubr.f32.mxu0 0.0
    %11047 = vmatmul.mubr.f32.gmra.mrb[0].mxu0 %v497
    %v11048 = vpop.f32.mrb[0].mxu0
    %v11049 = vadd.f32 %v10745, %v11048
    %v11050 = vpop.f32.mrb[0].mxu0
    %11051 = vmatprep.mubr.f32.mxu0 0.0
    %11052 = vmatmul.mubr.f32.gmra.mrb[0].mxu0 %v500
    %v11053 = vpop.f32.mrb[0].mxu0
    %v11054 = vadd.f32 %v10745, %v11053
    %v11055 = vpop.f32.mrb[0].mxu0
    %11056 = vmatprep.mubr.f32.mxu0 0.0
    %11057 = vmatmul.mubr.f32.gmra.mrb[0].mxu0 %v503
    %v11058 = vpop.f32.mrb[0].mxu0
    %v11059 = vadd.f32 %v10745, %v11058
    %v11060 = vpop.f32.mrb[0].mxu0
    %11061 = vmatprep.mubr.f32.mxu0 0.0
    %11062 = vmatmul.mubr.f32.gmra.mrb[0].mxu0 %v506
    %v11063 = vpop.f32.mrb[0].mxu0
    %v11064 = vadd.f32 %v10745, %v11063
    %v11065 = vpop.f32.mrb[0].mxu0
    %11066 = vmatprep.mubr.f32.mxu0 0.0
    %11067 = vmatmul.mubr.f32.gmra.mrb[0].mxu0 %v509
    %v11068 = vpop.f32.mrb[0].mxu0
    %v11069 = vadd.f32 %v10745, %v11068
    %v11070 = vpop.f32.mrb[0].mxu0
    %11071 = vmatprep.mubr.f32.mxu0 0.0
    %11072 = vmatmul.mubr.f32.gmra.mrb[0].mxu0 %v512
    %v11073 = vpop.f32.mrb[0].mxu0
    %v11074 = vadd.f32 %v10745, %v11073
    %v11075 = vpop.f32.mrb[0].mxu0
    %11076 = vmatprep.mubr.f32.mxu0 0.0
    %11077 = vmatmul.mubr.f32.gmra.mrb[0].mxu0 %v515
    %v11078 = vpop.f32.mrb[0].mxu0
    %v11079 = vadd.f32 %v10745, %v11078
    %v11080 = vpop.f32.mrb[0].mxu0
    %11081 = vmatprep.mubr.f32.mxu0 0.0
    %11082 = vmatmul.mubr.f32.gmra.mrb[0].mxu0 %v518
    %v11083 = vpop.f32.mrb[0].mxu0
    %v11084 = vadd.f32 %v10745, %v11083
    %v11085 = vpop.f32.mrb[0].mxu0
    %11086 = vmatprep.mubr.f32.mxu0 0.0
    %11087 = vmatmul.mubr.f32.gmra.mrb[0].mxu0 %v521
    %v11088 = vpop.f32.mrb[0].mxu0
    %v11089 = vadd.f32 %v10745, %v11088
    %v11090 = vpop.f32.mrb[0].mxu0
    %11091 = vmatprep.mubr.f32.mxu0 0.0
    %11092 = vmatmul.mubr.f32.gmra.mrb[0].mxu0 %v524
    %v11093 = vpop.f32.mrb[0].mxu0
    %v11094 = vadd.f32 %v10745, %v11093
    %v11095 = vpop.f32.mrb[0].mxu0
    %11096 = vmatprep.mubr.f32.mxu0 0.0
    %11097 = vmatmul.mubr.f32.gmra.mrb[0].mxu0 %v527
    %v11098 = vpop.f32.mrb[0].mxu0
    %v11099 = vadd.f32 %v10745, %v11098
    %v11100 = vpop.f32.mrb[0].mxu0
    %11101 = vmatprep.mubr.f32.mxu0 0.0
    %11102 = vmatmul.mubr.f32.gmra.mrb[0].mxu0 %v530
    %v11103 = vpop.f32.mrb[0].mxu0
    %v11104 = vadd.f32 %v10745, %v11103
    %v11105 = vpop.f32.mrb[0].mxu0
    %11106 = vmatprep.mubr.f32.mxu0 0.0
    %11107 = vmatmul.mubr.f32.gmra.mrb[0].mxu0 %v533
    %v11108 = vpop.f32.mrb[0].mxu0
    %v11109 = vadd.f32 %v10745, %v11108
    %v11110 = vpop.f32.mrb[0].mxu0
    %11111 = vmatprep.mubr.f32.mxu0 0.0
    %11112 = vmatmul.mubr.f32.gmra.mrb[0].mxu0 %v536
    %v11113 = vpop.f32.mrb[0].mxu0
    %v11114 = vadd.f32 %v10745, %v11113
    %v11115 = vpop.f32.mrb[0].mxu0
    %11116 = vmatprep.mubr.f32.mxu0 0.0
    %11117 = vmatmul.mubr.f32.gmra.mrb[0].mxu0 %v539
    %v11118 = vpop.f32.mrb[0].mxu0
    %v11119 = vadd.f32 %v10745, %v11118
    %v11120 = vpop.f32.mrb[0].mxu0
    %11121 = vmatprep.mubr.f32.mxu0 0.0
    %11122 = vmatmul.mubr.f32.gmra.mrb[0].mxu0 %v542
    %v11123 = vpop.f32.mrb[0].mxu0
    %v11124 = vadd.f32 %v10745, %v11123
    %v11125 = vpop.f32.mrb[0].mxu0
    %11126 = vmatprep.mubr.f32.mxu0 0.0
    %11127 = vmatmul.mubr.f32.gmra.mrb[0].mxu0 %v545
    %v11128 = vpop.f32.mrb[0].mxu0
    %v11129 = vadd.f32 %v10745, %v11128
    %v11130 = vpop.f32.mrb[0].mxu0
    %11131 = vdwg.mxu0
    %v11132 = vld [vmem:[%s16] sm:$0x1]
    %v11133 = vld [vmem:[%s17] sm:$0x1]
    %v11134 = vmul.f32 %v10814, %v937
    %v11135 = vmul.f32 %v10819, %v942
    %v11136 = vmul.f32 %v10824, %v947
    %v11137 = vmul.f32 %v10829, %v952
    %v11138 = vmul.f32 %v10834, %v957
    %v11139 = vmul.f32 %v10839, %v962
    %v11140 = vmul.f32 %v10844, %v967
    %v11141 = vmul.f32 %v10849, %v972
    %v11142 = vmul.f32 %v10854, %v977
    %v11143 = vmul.f32 %v10859, %v982
    %v11144 = vmul.f32 %v10864, %v987
    %v11145 = vmul.f32 %v10869, %v992
    %v11146 = vmul.f32 %v10874, %v997
    %v11147 = vmul.f32 %v10879, %v1002
    %v11148 = vmul.f32 %v10884, %v1007
    %v11149 = vmul.f32 %v10889, %v1012
    %v11150 = vmul.f32 %v10894, %v1017
    %v11151 = vmul.f32 %v10899, %v1022
    %v11152 = vmul.f32 %v10904, %v1027
    %v11153 = vmul.f32 %v10909, %v1032
    %v11154 = vmul.f32 %v10914, %v1037
    %v11155 = vmul.f32 %v10919, %v1042
    %v11156 = vmul.f32 %v10924, %v1047
    %v11157 = vmul.f32 %v10929, %v1052
    %v11158 = vmul.f32 %v10934, %v1057
    %v11159 = vmul.f32 %v10939, %v1062
    %v11160 = vmul.f32 %v10944, %v1067
    %v11161 = vmul.f32 %v10949, %v1072
    %v11162 = vmul.f32 %v10954, %v1077
    %v11163 = vmul.f32 %v10959, %v1082
    %v11164 = vmul.f32 %v10964, %v1087
    %v11165 = vmul.f32 %v10969, %v1092
    %v11166 = vmul.f32 %v10974, %v1097
    %v11167 = vmul.f32 %v10979, %v1102
    %v11168 = vmul.f32 %v10984, %v1107
    %v11169 = vmul.f32 %v10989, %v1112
    %v11170 = vmul.f32 %v10994, %v1117
    %v11171 = vmul.f32 %v10999, %v1122
    %v11172 = vmul.f32 %v11004, %v1127
    %v11173 = vmul.f32 %v11009, %v1132
    %v11174 = vmul.f32 %v11014, %v1137
    %v11175 = vmul.f32 %v11019, %v1142
    %v11176 = vmul.f32 %v11024, %v1147
    %v11177 = vmul.f32 %v11029, %v1152
    %v11178 = vmul.f32 %v11034, %v1157
    %v11179 = vmul.f32 %v11039, %v1162
    %v11180 = vmul.f32 %v11044, %v1167
    %v11181 = vmul.f32 %v11049, %v1172
    %v11182 = vmul.f32 %v11054, %v1177
    %v11183 = vmul.f32 %v11059, %v1182
    %v11184 = vmul.f32 %v11064, %v1187
    %v11185 = vmul.f32 %v11069, %v1192
    %v11186 = vmul.f32 %v11074, %v1197
    %v11187 = vmul.f32 %v11079, %v1202
    %v11188 = vmul.f32 %v11084, %v1207
    %v11189 = vmul.f32 %v11089, %v1212
    %v11190 = vmul.f32 %v11094, %v1217
    %v11191 = vmul.f32 %v11099, %v1222
    %v11192 = vmul.f32 %v11104, %v1227
    %v11193 = vmul.f32 %v11109, %v1232
    %v11194 = vmul.f32 %v11114, %v1237
    %v11195 = vmul.f32 %v11119, %v1242
    %v11196 = vmul.f32 %v11124, %v1247
    %v11197 = vmul.f32 %v11129, %v1252
    %v11198 = vadd.f32 %v11134, %v11135
    %v11199 = vadd.f32 %v11198, %v11136
    %v11200 = vadd.f32 %v11199, %v11137
    %v11201 = vadd.f32 %v11200, %v11138
    %v11202 = vadd.f32 %v11201, %v11139
    %v11203 = vadd.f32 %v11202, %v11140
    %v11204 = vadd.f32 %v11203, %v11141
    %v11205 = vadd.f32 %v11204, %v11142
    %v11206 = vadd.f32 %v11205, %v11143
    %v11207 = vadd.f32 %v11206, %v11144
    %v11208 = vadd.f32 %v11207, %v11145
    %v11209 = vadd.f32 %v11208, %v11146
    %v11210 = vadd.f32 %v11209, %v11147
    %v11211 = vadd.f32 %v11210, %v11148
    %v11212 = vadd.f32 %v11211, %v11149
    %v11213 = vadd.f32 %v11212, %v11150
    %v11214 = vadd.f32 %v11213, %v11151
    %v11215 = vadd.f32 %v11214, %v11152
    %v11216 = vadd.f32 %v11215, %v11153
    %v11217 = vadd.f32 %v11216, %v11154
    %v11218 = vadd.f32 %v11217, %v11155
    %v11219 = vadd.f32 %v11218, %v11156
    %v11220 = vadd.f32 %v11219, %v11157
    %v11221 = vadd.f32 %v11220, %v11158
    %v11222 = vadd.f32 %v11221, %v11159
    %v11223 = vadd.f32 %v11222, %v11160
    %v11224 = vadd.f32 %v11223, %v11161
    %v11225 = vadd.f32 %v11224, %v11162
    %v11226 = vadd.f32 %v11225, %v11163
    %v11227 = vadd.f32 %v11226, %v11164
    %v11228 = vadd.f32 %v11227, %v11165
    %v11229 = vadd.f32 %v11228, %v11166
    %v11230 = vadd.f32 %v11229, %v11167
    %v11231 = vadd.f32 %v11230, %v11168
    %v11232 = vadd.f32 %v11231, %v11169
    %v11233 = vadd.f32 %v11232, %v11170
    %v11234 = vadd.f32 %v11233, %v11171
    %v11235 = vadd.f32 %v11234, %v11172
    %v11236 = vadd.f32 %v11235, %v11173
    %v11237 = vadd.f32 %v11236, %v11174
    %v11238 = vadd.f32 %v11237, %v11175
    %v11239 = vadd.f32 %v11238, %v11176
    %v11240 = vadd.f32 %v11239, %v11177
    %v11241 = vadd.f32 %v11240, %v11178
    %v11242 = vadd.f32 %v11241, %v11179
    %v11243 = vadd.f32 %v11242, %v11180
    %v11244 = vadd.f32 %v11243, %v11181
    %v11245 = vadd.f32 %v11244, %v11182
    %v11246 = vadd.f32 %v11245, %v11183
    %v11247 = vadd.f32 %v11246, %v11184
    %v11248 = vadd.f32 %v11247, %v11185
    %v11249 = vadd.f32 %v11248, %v11186
    %v11250 = vadd.f32 %v11249, %v11187
    %v11251 = vadd.f32 %v11250, %v11188
    %v11252 = vadd.f32 %v11251, %v11189
    %v11253 = vadd.f32 %v11252, %v11190
    %v11254 = vadd.f32 %v11253, %v11191
    %v11255 = vadd.f32 %v11254, %v11192
    %v11256 = vadd.f32 %v11255, %v11193
    %v11257 = vadd.f32 %v11256, %v11194
    %v11258 = vadd.f32 %v11257, %v11195
    %v11259 = vadd.f32 %v11258, %v11196
    %v11260 = vadd.f32 %v11259, %v11197
    %v11261 = vrot.slane %v11260, 4
    %v11262 = vadd.f32 %v11260, %v11261
    %v11263 = vrot.slane %v11262, 2
    %v11264 = vadd.f32 %v11262, %v11263
    %v11265 = vrot.slane %v11264, 1
    %v11266 = vadd.f32 %v11264, %v11265
    %v11267 = vmul.f32 %v11266, %v1451
    %v11268 = vsub.f32 %v10814, %v11267
    %v11269 = vsub.f32 %v10819, %v11267
    %v11270 = vsub.f32 %v10824, %v11267
    %v11271 = vsub.f32 %v10829, %v11267
    %v11272 = vsub.f32 %v10834, %v11267
    %v11273 = vsub.f32 %v10839, %v11267
    %v11274 = vsub.f32 %v10844, %v11267
    %v11275 = vsub.f32 %v10849, %v11267
    %v11276 = vsub.f32 %v10854, %v11267
    %v11277 = vsub.f32 %v10859, %v11267
    %v11278 = vsub.f32 %v10864, %v11267
    %v11279 = vsub.f32 %v10869, %v11267
    %v11280 = vsub.f32 %v10874, %v11267
    %v11281 = vsub.f32 %v10879, %v11267
    %v11282 = vsub.f32 %v10884, %v11267
    %v11283 = vsub.f32 %v10889, %v11267
    %v11284 = vsub.f32 %v10894, %v11267
    %v11285 = vsub.f32 %v10899, %v11267
    %v11286 = vsub.f32 %v10904, %v11267
    %v11287 = vsub.f32 %v10909, %v11267
    %v11288 = vsub.f32 %v10914, %v11267
    %v11289 = vsub.f32 %v10919, %v11267
    %v11290 = vsub.f32 %v10924, %v11267
    %v11291 = vsub.f32 %v10929, %v11267
    %v11292 = vsub.f32 %v10934, %v11267
    %v11293 = vsub.f32 %v10939, %v11267
    %v11294 = vsub.f32 %v10944, %v11267
    %v11295 = vsub.f32 %v10949, %v11267
    %v11296 = vsub.f32 %v10954, %v11267
    %v11297 = vsub.f32 %v10959, %v11267
    %v11298 = vsub.f32 %v10964, %v11267
    %v11299 = vsub.f32 %v10969, %v11267
    %v11300 = vsub.f32 %v10974, %v11267
    %v11301 = vsub.f32 %v10979, %v11267
    %v11302 = vsub.f32 %v10984, %v11267
    %v11303 = vsub.f32 %v10989, %v11267
    %v11304 = vsub.f32 %v10994, %v11267
    %v11305 = vsub.f32 %v10999, %v11267
    %v11306 = vsub.f32 %v11004, %v11267
    %v11307 = vsub.f32 %v11009, %v11267
    %v11308 = vsub.f32 %v11014, %v11267
    %v11309 = vsub.f32 %v11019, %v11267
    %v11310 = vsub.f32 %v11024, %v11267
    %v11311 = vsub.f32 %v11029, %v11267
    %v11312 = vsub.f32 %v11034, %v11267
    %v11313 = vsub.f32 %v11039, %v11267
    %v11314 = vsub.f32 %v11044, %v11267
    %v11315 = vsub.f32 %v11049, %v11267
    %v11316 = vsub.f32 %v11054, %v11267
    %v11317 = vsub.f32 %v11059, %v11267
    %v11318 = vsub.f32 %v11064, %v11267
    %v11319 = vsub.f32 %v11069, %v11267
    %v11320 = vsub.f32 %v11074, %v11267
    %v11321 = vsub.f32 %v11079, %v11267
    %v11322 = vsub.f32 %v11084, %v11267
    %v11323 = vsub.f32 %v11089, %v11267
    %v11324 = vsub.f32 %v11094, %v11267
    %v11325 = vsub.f32 %v11099, %v11267
    %v11326 = vsub.f32 %v11104, %v11267
    %v11327 = vsub.f32 %v11109, %v11267
    %v11328 = vsub.f32 %v11114, %v11267
    %v11329 = vsub.f32 %v11119, %v11267
    %v11330 = vsub.f32 %v11124, %v11267
    %v11331 = vsub.f32 %v11129, %v11267
    %v11332 = vmul.f32 %v11268, %v11268
    %v11333 = vmul.f32 %v11269, %v11269
    %v11334 = vmul.f32 %v11270, %v11270
    %v11335 = vmul.f32 %v11271, %v11271
    %v11336 = vmul.f32 %v11272, %v11272
    %v11337 = vmul.f32 %v11273, %v11273
    %v11338 = vmul.f32 %v11274, %v11274
    %v11339 = vmul.f32 %v11275, %v11275
    %v11340 = vmul.f32 %v11276, %v11276
    %v11341 = vmul.f32 %v11277, %v11277
    %v11342 = vmul.f32 %v11278, %v11278
    %v11343 = vmul.f32 %v11279, %v11279
    %v11344 = vmul.f32 %v11280, %v11280
    %v11345 = vmul.f32 %v11281, %v11281
    %v11346 = vmul.f32 %v11282, %v11282
    %v11347 = vmul.f32 %v11283, %v11283
    %v11348 = vmul.f32 %v11284, %v11284
    %v11349 = vmul.f32 %v11285, %v11285
    %v11350 = vmul.f32 %v11286, %v11286
    %v11351 = vmul.f32 %v11287, %v11287
    %v11352 = vmul.f32 %v11288, %v11288
    %v11353 = vmul.f32 %v11289, %v11289
    %v11354 = vmul.f32 %v11290, %v11290
    %v11355 = vmul.f32 %v11291, %v11291
    %v11356 = vmul.f32 %v11292, %v11292
    %v11357 = vmul.f32 %v11293, %v11293
    %v11358 = vmul.f32 %v11294, %v11294
    %v11359 = vmul.f32 %v11295, %v11295
    %v11360 = vmul.f32 %v11296, %v11296
    %v11361 = vmul.f32 %v11297, %v11297
    %v11362 = vmul.f32 %v11298, %v11298
    %v11363 = vmul.f32 %v11299, %v11299
    %v11364 = vmul.f32 %v11300, %v11300
    %v11365 = vmul.f32 %v11301, %v11301
    %v11366 = vmul.f32 %v11302, %v11302
    %v11367 = vmul.f32 %v11303, %v11303
    %v11368 = vmul.f32 %v11304, %v11304
    %v11369 = vmul.f32 %v11305, %v11305
    %v11370 = vmul.f32 %v11306, %v11306
    %v11371 = vmul.f32 %v11307, %v11307
    %v11372 = vmul.f32 %v11308, %v11308
    %v11373 = vmul.f32 %v11309, %v11309
    %v11374 = vmul.f32 %v11310, %v11310
    %v11375 = vmul.f32 %v11311, %v11311
    %v11376 = vmul.f32 %v11312, %v11312
    %v11377 = vmul.f32 %v11313, %v11313
    %v11378 = vmul.f32 %v11314, %v11314
    %v11379 = vmul.f32 %v11315, %v11315
    %v11380 = vmul.f32 %v11316, %v11316
    %v11381 = vmul.f32 %v11317, %v11317
    %v11382 = vmul.f32 %v11318, %v11318
    %v11383 = vmul.f32 %v11319, %v11319
    %v11384 = vmul.f32 %v11320, %v11320
    %v11385 = vmul.f32 %v11321, %v11321
    %v11386 = vmul.f32 %v11322, %v11322
    %v11387 = vmul.f32 %v11323, %v11323
    %v11388 = vmul.f32 %v11324, %v11324
    %v11389 = vmul.f32 %v11325, %v11325
    %v11390 = vmul.f32 %v11326, %v11326
    %v11391 = vmul.f32 %v11327, %v11327
    %v11392 = vmul.f32 %v11328, %v11328
    %v11393 = vmul.f32 %v11329, %v11329
    %v11394 = vmul.f32 %v11330, %v11330
    %v11395 = vmul.f32 %v11331, %v11331
    %v11396 = vmul.f32 %v11332, %v937
    %v11397 = vmul.f32 %v11333, %v942
    %v11398 = vmul.f32 %v11334, %v947
    %v11399 = vmul.f32 %v11335, %v952
    %v11400 = vmul.f32 %v11336, %v957
    %v11401 = vmul.f32 %v11337, %v962
    %v11402 = vmul.f32 %v11338, %v967
    %v11403 = vmul.f32 %v11339, %v972
    %v11404 = vmul.f32 %v11340, %v977
    %v11405 = vmul.f32 %v11341, %v982
    %v11406 = vmul.f32 %v11342, %v987
    %v11407 = vmul.f32 %v11343, %v992
    %v11408 = vmul.f32 %v11344, %v997
    %v11409 = vmul.f32 %v11345, %v1002
    %v11410 = vmul.f32 %v11346, %v1007
    %v11411 = vmul.f32 %v11347, %v1012
    %v11412 = vmul.f32 %v11348, %v1017
    %v11413 = vmul.f32 %v11349, %v1022
    %v11414 = vmul.f32 %v11350, %v1027
    %v11415 = vmul.f32 %v11351, %v1032
    %v11416 = vmul.f32 %v11352, %v1037
    %v11417 = vmul.f32 %v11353, %v1042
    %v11418 = vmul.f32 %v11354, %v1047
    %v11419 = vmul.f32 %v11355, %v1052
    %v11420 = vmul.f32 %v11356, %v1057
    %v11421 = vmul.f32 %v11357, %v1062
    %v11422 = vmul.f32 %v11358, %v1067
    %v11423 = vmul.f32 %v11359, %v1072
    %v11424 = vmul.f32 %v11360, %v1077
    %v11425 = vmul.f32 %v11361, %v1082
    %v11426 = vmul.f32 %v11362, %v1087
    %v11427 = vmul.f32 %v11363, %v1092
    %v11428 = vmul.f32 %v11364, %v1097
    %v11429 = vmul.f32 %v11365, %v1102
    %v11430 = vmul.f32 %v11366, %v1107
    %v11431 = vmul.f32 %v11367, %v1112
    %v11432 = vmul.f32 %v11368, %v1117
    %v11433 = vmul.f32 %v11369, %v1122
    %v11434 = vmul.f32 %v11370, %v1127
    %v11435 = vmul.f32 %v11371, %v1132
    %v11436 = vmul.f32 %v11372, %v1137
    %v11437 = vmul.f32 %v11373, %v1142
    %v11438 = vmul.f32 %v11374, %v1147
    %v11439 = vmul.f32 %v11375, %v1152
    %v11440 = vmul.f32 %v11376, %v1157
    %v11441 = vmul.f32 %v11377, %v1162
    %v11442 = vmul.f32 %v11378, %v1167
    %v11443 = vmul.f32 %v11379, %v1172
    %v11444 = vmul.f32 %v11380, %v1177
    %v11445 = vmul.f32 %v11381, %v1182
    %v11446 = vmul.f32 %v11382, %v1187
    %v11447 = vmul.f32 %v11383, %v1192
    %v11448 = vmul.f32 %v11384, %v1197
    %v11449 = vmul.f32 %v11385, %v1202
    %v11450 = vmul.f32 %v11386, %v1207
    %v11451 = vmul.f32 %v11387, %v1212
    %v11452 = vmul.f32 %v11388, %v1217
    %v11453 = vmul.f32 %v11389, %v1222
    %v11454 = vmul.f32 %v11390, %v1227
    %v11455 = vmul.f32 %v11391, %v1232
    %v11456 = vmul.f32 %v11392, %v1237
    %v11457 = vmul.f32 %v11393, %v1242
    %v11458 = vmul.f32 %v11394, %v1247
    %v11459 = vmul.f32 %v11395, %v1252
    %v11460 = vadd.f32 %v11396, %v11397
    %v11461 = vadd.f32 %v11460, %v11398
    %v11462 = vadd.f32 %v11461, %v11399
    %v11463 = vadd.f32 %v11462, %v11400
    %v11464 = vadd.f32 %v11463, %v11401
    %v11465 = vadd.f32 %v11464, %v11402
    %v11466 = vadd.f32 %v11465, %v11403
    %v11467 = vadd.f32 %v11466, %v11404
    %v11468 = vadd.f32 %v11467, %v11405
    %v11469 = vadd.f32 %v11468, %v11406
    %v11470 = vadd.f32 %v11469, %v11407
    %v11471 = vadd.f32 %v11470, %v11408
    %v11472 = vadd.f32 %v11471, %v11409
    %v11473 = vadd.f32 %v11472, %v11410
    %v11474 = vadd.f32 %v11473, %v11411
    %v11475 = vadd.f32 %v11474, %v11412
    %v11476 = vadd.f32 %v11475, %v11413
    %v11477 = vadd.f32 %v11476, %v11414
    %v11478 = vadd.f32 %v11477, %v11415
    %v11479 = vadd.f32 %v11478, %v11416
    %v11480 = vadd.f32 %v11479, %v11417
    %v11481 = vadd.f32 %v11480, %v11418
    %v11482 = vadd.f32 %v11481, %v11419
    %v11483 = vadd.f32 %v11482, %v11420
    %v11484 = vadd.f32 %v11483, %v11421
    %v11485 = vadd.f32 %v11484, %v11422
    %v11486 = vadd.f32 %v11485, %v11423
    %v11487 = vadd.f32 %v11486, %v11424
    %v11488 = vadd.f32 %v11487, %v11425
    %v11489 = vadd.f32 %v11488, %v11426
    %v11490 = vadd.f32 %v11489, %v11427
    %v11491 = vadd.f32 %v11490, %v11428
    %v11492 = vadd.f32 %v11491, %v11429
    %v11493 = vadd.f32 %v11492, %v11430
    %v11494 = vadd.f32 %v11493, %v11431
    %v11495 = vadd.f32 %v11494, %v11432
    %v11496 = vadd.f32 %v11495, %v11433
    %v11497 = vadd.f32 %v11496, %v11434
    %v11498 = vadd.f32 %v11497, %v11435
    %v11499 = vadd.f32 %v11498, %v11436
    %v11500 = vadd.f32 %v11499, %v11437
    %v11501 = vadd.f32 %v11500, %v11438
    %v11502 = vadd.f32 %v11501, %v11439
    %v11503 = vadd.f32 %v11502, %v11440
    %v11504 = vadd.f32 %v11503, %v11441
    %v11505 = vadd.f32 %v11504, %v11442
    %v11506 = vadd.f32 %v11505, %v11443
    %v11507 = vadd.f32 %v11506, %v11444
    %v11508 = vadd.f32 %v11507, %v11445
    %v11509 = vadd.f32 %v11508, %v11446
    %v11510 = vadd.f32 %v11509, %v11447
    %v11511 = vadd.f32 %v11510, %v11448
    %v11512 = vadd.f32 %v11511, %v11449
    %v11513 = vadd.f32 %v11512, %v11450
    %v11514 = vadd.f32 %v11513, %v11451
    %v11515 = vadd.f32 %v11514, %v11452
    %v11516 = vadd.f32 %v11515, %v11453
    %v11517 = vadd.f32 %v11516, %v11454
    %v11518 = vadd.f32 %v11517, %v11455
    %v11519 = vadd.f32 %v11518, %v11456
    %v11520 = vadd.f32 %v11519, %v11457
    %v11521 = vadd.f32 %v11520, %v11458
    %v11522 = vadd.f32 %v11521, %v11459
    %v11523 = vrot.slane %v11522, 4
    %v11524 = vadd.f32 %v11522, %v11523
    %v11525 = vrot.slane %v11524, 2
    %v11526 = vadd.f32 %v11524, %v11525
    %v11527 = vrot.slane %v11526, 1
    %v11528 = vadd.f32 %v11526, %v11527
    %v11529 = vmul.f32 %v11528, %v1451
    %v11530 = vadd.f32 %v11529, 1e-05
    %v11531 = vrsqrt.pop %v11530
    %v11532 = vmul.f32 %v11268, %v11531
    %v11533 = vmul.f32 %v11269, %v11531
    %v11534 = vmul.f32 %v11270, %v11531
    %v11535 = vmul.f32 %v11271, %v11531
    %v11536 = vmul.f32 %v11272, %v11531
    %v11537 = vmul.f32 %v11273, %v11531
    %v11538 = vmul.f32 %v11274, %v11531
    %v11539 = vmul.f32 %v11275, %v11531
    %v11540 = vmul.f32 %v11276, %v11531
    %v11541 = vmul.f32 %v11277, %v11531
    %v11542 = vmul.f32 %v11278, %v11531
    %v11543 = vmul.f32 %v11279, %v11531
    %v11544 = vmul.f32 %v11280, %v11531
    %v11545 = vmul.f32 %v11281, %v11531
    %v11546 = vmul.f32 %v11282, %v11531
    %v11547 = vmul.f32 %v11283, %v11531
    %v11548 = vmul.f32 %v11284, %v11531
    %v11549 = vmul.f32 %v11285, %v11531
    %v11550 = vmul.f32 %v11286, %v11531
    %v11551 = vmul.f32 %v11287, %v11531
    %v11552 = vmul.f32 %v11288, %v11531
    %v11553 = vmul.f32 %v11289, %v11531
    %v11554 = vmul.f32 %v11290, %v11531
    %v11555 = vmul.f32 %v11291, %v11531
    %v11556 = vmul.f32 %v11292, %v11531
    %v11557 = vmul.f32 %v11293, %v11531
    %v11558 = vmul.f32 %v11294, %v11531
    %v11559 = vmul.f32 %v11295, %v11531
    %v11560 = vmul.f32 %v11296, %v11531
    %v11561 = vmul.f32 %v11297, %v11531
    %v11562 = vmul.f32 %v11298, %v11531
    %v11563 = vmul.f32 %v11299, %v11531
    %v11564 = vmul.f32 %v11300, %v11531
    %v11565 = vmul.f32 %v11301, %v11531
    %v11566 = vmul.f32 %v11302, %v11531
    %v11567 = vmul.f32 %v11303, %v11531
    %v11568 = vmul.f32 %v11304, %v11531
    %v11569 = vmul.f32 %v11305, %v11531
    %v11570 = vmul.f32 %v11306, %v11531
    %v11571 = vmul.f32 %v11307, %v11531
    %v11572 = vmul.f32 %v11308, %v11531
    %v11573 = vmul.f32 %v11309, %v11531
    %v11574 = vmul.f32 %v11310, %v11531
    %v11575 = vmul.f32 %v11311, %v11531
    %v11576 = vmul.f32 %v11312, %v11531
    %v11577 = vmul.f32 %v11313, %v11531
    %v11578 = vmul.f32 %v11314, %v11531
    %v11579 = vmul.f32 %v11315, %v11531
    %v11580 = vmul.f32 %v11316, %v11531
    %v11581 = vmul.f32 %v11317, %v11531
    %v11582 = vmul.f32 %v11318, %v11531
    %v11583 = vmul.f32 %v11319, %v11531
    %v11584 = vmul.f32 %v11320, %v11531
    %v11585 = vmul.f32 %v11321, %v11531
    %v11586 = vmul.f32 %v11322, %v11531
    %v11587 = vmul.f32 %v11323, %v11531
    %v11588 = vmul.f32 %v11324, %v11531
    %v11589 = vmul.f32 %v11325, %v11531
    %v11590 = vmul.f32 %v11326, %v11531
    %v11591 = vmul.f32 %v11327, %v11531
    %v11592 = vmul.f32 %v11328, %v11531
    %v11593 = vmul.f32 %v11329, %v11531
    %v11594 = vmul.f32 %v11330, %v11531
    %v11595 = vmul.f32 %v11331, %v11531
    %v11597 = vlaneseq
    %v11598 = vshrl.u32 %v11597, 7
    %v11599 = vsub.s32 0, %v11598
    %v11600 = vrot.slane %v11132, %v11599
    %v11602 = vmul.f32 %v11532, %v11600
    %v11603 = vmul.f32 %v11533, %v11600
    %v11604 = vmul.f32 %v11534, %v11600
    %v11605 = vmul.f32 %v11535, %v11600
    %v11606 = vmul.f32 %v11536, %v11600
    %v11607 = vmul.f32 %v11537, %v11600
    %v11608 = vmul.f32 %v11538, %v11600
    %v11609 = vmul.f32 %v11539, %v11600
    %v11610 = vmul.f32 %v11540, %v11600
    %v11611 = vmul.f32 %v11541, %v11600
    %v11612 = vmul.f32 %v11542, %v11600
    %v11613 = vmul.f32 %v11543, %v11600
    %v11614 = vmul.f32 %v11544, %v11600
    %v11615 = vmul.f32 %v11545, %v11600
    %v11616 = vmul.f32 %v11546, %v11600
    %v11617 = vmul.f32 %v11547, %v11600
    %v11618 = vmul.f32 %v11548, %v11600
    %v11619 = vmul.f32 %v11549, %v11600
    %v11620 = vmul.f32 %v11550, %v11600
    %v11621 = vmul.f32 %v11551, %v11600
    %v11622 = vmul.f32 %v11552, %v11600
    %v11623 = vmul.f32 %v11553, %v11600
    %v11624 = vmul.f32 %v11554, %v11600
    %v11625 = vmul.f32 %v11555, %v11600
    %v11626 = vmul.f32 %v11556, %v11600
    %v11627 = vmul.f32 %v11557, %v11600
    %v11628 = vmul.f32 %v11558, %v11600
    %v11629 = vmul.f32 %v11559, %v11600
    %v11630 = vmul.f32 %v11560, %v11600
    %v11631 = vmul.f32 %v11561, %v11600
    %v11632 = vmul.f32 %v11562, %v11600
    %v11633 = vmul.f32 %v11563, %v11600
    %v11634 = vmul.f32 %v11564, %v11600
    %v11635 = vmul.f32 %v11565, %v11600
    %v11636 = vmul.f32 %v11566, %v11600
    %v11637 = vmul.f32 %v11567, %v11600
    %v11638 = vmul.f32 %v11568, %v11600
    %v11639 = vmul.f32 %v11569, %v11600
    %v11640 = vmul.f32 %v11570, %v11600
    %v11641 = vmul.f32 %v11571, %v11600
    %v11642 = vmul.f32 %v11572, %v11600
    %v11643 = vmul.f32 %v11573, %v11600
    %v11644 = vmul.f32 %v11574, %v11600
    %v11645 = vmul.f32 %v11575, %v11600
    %v11646 = vmul.f32 %v11576, %v11600
    %v11647 = vmul.f32 %v11577, %v11600
    %v11648 = vmul.f32 %v11578, %v11600
    %v11649 = vmul.f32 %v11579, %v11600
    %v11650 = vmul.f32 %v11580, %v11600
    %v11651 = vmul.f32 %v11581, %v11600
    %v11652 = vmul.f32 %v11582, %v11600
    %v11653 = vmul.f32 %v11583, %v11600
    %v11654 = vmul.f32 %v11584, %v11600
    %v11655 = vmul.f32 %v11585, %v11600
    %v11656 = vmul.f32 %v11586, %v11600
    %v11657 = vmul.f32 %v11587, %v11600
    %v11658 = vmul.f32 %v11588, %v11600
    %v11659 = vmul.f32 %v11589, %v11600
    %v11660 = vmul.f32 %v11590, %v11600
    %v11661 = vmul.f32 %v11591, %v11600
    %v11662 = vmul.f32 %v11592, %v11600
    %v11663 = vmul.f32 %v11593, %v11600
    %v11664 = vmul.f32 %v11594, %v11600
    %v11665 = vmul.f32 %v11595, %v11600
    %v11667 = vlaneseq
    %v11668 = vshrl.u32 %v11667, 7
    %v11669 = vsub.s32 0, %v11668
    %v11670 = vrot.slane %v11133, %v11669
    %v11672 = vadd.f32 %v11602, %v11670
    %v11673 = vadd.f32 %v11603, %v11670
    %v11674 = vadd.f32 %v11604, %v11670
    %v11675 = vadd.f32 %v11605, %v11670
    %v11676 = vadd.f32 %v11606, %v11670
    %v11677 = vadd.f32 %v11607, %v11670
    %v11678 = vadd.f32 %v11608, %v11670
    %v11679 = vadd.f32 %v11609, %v11670
    %v11680 = vadd.f32 %v11610, %v11670
    %v11681 = vadd.f32 %v11611, %v11670
    %v11682 = vadd.f32 %v11612, %v11670
    %v11683 = vadd.f32 %v11613, %v11670
    %v11684 = vadd.f32 %v11614, %v11670
    %v11685 = vadd.f32 %v11615, %v11670
    %v11686 = vadd.f32 %v11616, %v11670
    %v11687 = vadd.f32 %v11617, %v11670
    %v11688 = vadd.f32 %v11618, %v11670
    %v11689 = vadd.f32 %v11619, %v11670
    %v11690 = vadd.f32 %v11620, %v11670
    %v11691 = vadd.f32 %v11621, %v11670
    %v11692 = vadd.f32 %v11622, %v11670
    %v11693 = vadd.f32 %v11623, %v11670
    %v11694 = vadd.f32 %v11624, %v11670
    %v11695 = vadd.f32 %v11625, %v11670
    %v11696 = vadd.f32 %v11626, %v11670
    %v11697 = vadd.f32 %v11627, %v11670
    %v11698 = vadd.f32 %v11628, %v11670
    %v11699 = vadd.f32 %v11629, %v11670
    %v11700 = vadd.f32 %v11630, %v11670
    %v11701 = vadd.f32 %v11631, %v11670
    %v11702 = vadd.f32 %v11632, %v11670
    %v11703 = vadd.f32 %v11633, %v11670
    %v11704 = vadd.f32 %v11634, %v11670
    %v11705 = vadd.f32 %v11635, %v11670
    %v11706 = vadd.f32 %v11636, %v11670
    %v11707 = vadd.f32 %v11637, %v11670
    %v11708 = vadd.f32 %v11638, %v11670
    %v11709 = vadd.f32 %v11639, %v11670
    %v11710 = vadd.f32 %v11640, %v11670
    %v11711 = vadd.f32 %v11641, %v11670
    %v11712 = vadd.f32 %v11642, %v11670
    %v11713 = vadd.f32 %v11643, %v11670
    %v11714 = vadd.f32 %v11644, %v11670
    %v11715 = vadd.f32 %v11645, %v11670
    %v11716 = vadd.f32 %v11646, %v11670
    %v11717 = vadd.f32 %v11647, %v11670
    %v11718 = vadd.f32 %v11648, %v11670
    %v11719 = vadd.f32 %v11649, %v11670
    %v11720 = vadd.f32 %v11650, %v11670
    %v11721 = vadd.f32 %v11651, %v11670
    %v11722 = vadd.f32 %v11652, %v11670
    %v11723 = vadd.f32 %v11653, %v11670
    %v11724 = vadd.f32 %v11654, %v11670
    %v11725 = vadd.f32 %v11655, %v11670
    %v11726 = vadd.f32 %v11656, %v11670
    %v11727 = vadd.f32 %v11657, %v11670
    %v11728 = vadd.f32 %v11658, %v11670
    %v11729 = vadd.f32 %v11659, %v11670
    %v11730 = vadd.f32 %v11660, %v11670
    %v11731 = vadd.f32 %v11661, %v11670
    %v11732 = vadd.f32 %v11662, %v11670
    %v11733 = vadd.f32 %v11663, %v11670
    %v11734 = vadd.f32 %v11664, %v11670
    %v11735 = vadd.f32 %v11665, %v11670
    %v11736 = vmul.f32 %v11672, %v937
    %v11737 = vmul.f32 %v11673, %v942
    %v11738 = vmul.f32 %v11674, %v947
    %v11739 = vmul.f32 %v11675, %v952
    %v11740 = vmul.f32 %v11676, %v957
    %v11741 = vmul.f32 %v11677, %v962
    %v11742 = vmul.f32 %v11678, %v967
    %v11743 = vmul.f32 %v11679, %v972
    %v11744 = vmul.f32 %v11680, %v977
    %v11745 = vmul.f32 %v11681, %v982
    %v11746 = vmul.f32 %v11682, %v987
    %v11747 = vmul.f32 %v11683, %v992
    %v11748 = vmul.f32 %v11684, %v997
    %v11749 = vmul.f32 %v11685, %v1002
    %v11750 = vmul.f32 %v11686, %v1007
    %v11751 = vmul.f32 %v11687, %v1012
    %v11752 = vmul.f32 %v11688, %v1017
    %v11753 = vmul.f32 %v11689, %v1022
    %v11754 = vmul.f32 %v11690, %v1027
    %v11755 = vmul.f32 %v11691, %v1032
    %v11756 = vmul.f32 %v11692, %v1037
    %v11757 = vmul.f32 %v11693, %v1042
    %v11758 = vmul.f32 %v11694, %v1047
    %v11759 = vmul.f32 %v11695, %v1052
    %v11760 = vmul.f32 %v11696, %v1057
    %v11761 = vmul.f32 %v11697, %v1062
    %v11762 = vmul.f32 %v11698, %v1067
    %v11763 = vmul.f32 %v11699, %v1072
    %v11764 = vmul.f32 %v11700, %v1077
    %v11765 = vmul.f32 %v11701, %v1082
    %v11766 = vmul.f32 %v11702, %v1087
    %v11767 = vmul.f32 %v11703, %v1092
    %v11768 = vmul.f32 %v11704, %v1097
    %v11769 = vmul.f32 %v11705, %v1102
    %v11770 = vmul.f32 %v11706, %v1107
    %v11771 = vmul.f32 %v11707, %v1112
    %v11772 = vmul.f32 %v11708, %v1117
    %v11773 = vmul.f32 %v11709, %v1122
    %v11774 = vmul.f32 %v11710, %v1127
    %v11775 = vmul.f32 %v11711, %v1132
    %v11776 = vmul.f32 %v11712, %v1137
    %v11777 = vmul.f32 %v11713, %v1142
    %v11778 = vmul.f32 %v11714, %v1147
    %v11779 = vmul.f32 %v11715, %v1152
    %v11780 = vmul.f32 %v11716, %v1157
    %v11781 = vmul.f32 %v11717, %v1162
    %v11782 = vmul.f32 %v11718, %v1167
    %v11783 = vmul.f32 %v11719, %v1172
    %v11784 = vmul.f32 %v11720, %v1177
    %v11785 = vmul.f32 %v11721, %v1182
    %v11786 = vmul.f32 %v11722, %v1187
    %v11787 = vmul.f32 %v11723, %v1192
    %v11788 = vmul.f32 %v11724, %v1197
    %v11789 = vmul.f32 %v11725, %v1202
    %v11790 = vmul.f32 %v11726, %v1207
    %v11791 = vmul.f32 %v11727, %v1212
    %v11792 = vmul.f32 %v11728, %v1217
    %v11793 = vmul.f32 %v11729, %v1222
    %v11794 = vmul.f32 %v11730, %v1227
    %v11795 = vmul.f32 %v11731, %v1232
    %v11796 = vmul.f32 %v11732, %v1237
    %v11797 = vmul.f32 %v11733, %v1242
    %v11798 = vmul.f32 %v11734, %v1247
    %v11799 = vmul.f32 %v11735, %v1252
    %v11800 = vadd.f32 %v10672, %v11736
    %v11801 = vadd.f32 %v10673, %v11737
    %v11802 = vadd.f32 %v10674, %v11738
    %v11803 = vadd.f32 %v10675, %v11739
    %v11804 = vadd.f32 %v10676, %v11740
    %v11805 = vadd.f32 %v10677, %v11741
    %v11806 = vadd.f32 %v10678, %v11742
    %v11807 = vadd.f32 %v10679, %v11743
    %v11808 = vadd.f32 %v10680, %v11744
    %v11809 = vadd.f32 %v10681, %v11745
    %v11810 = vadd.f32 %v10682, %v11746
    %v11811 = vadd.f32 %v10683, %v11747
    %v11812 = vadd.f32 %v10684, %v11748
    %v11813 = vadd.f32 %v10685, %v11749
    %v11814 = vadd.f32 %v10686, %v11750
    %v11815 = vadd.f32 %v10687, %v11751
    %v11816 = vadd.f32 %v10688, %v11752
    %v11817 = vadd.f32 %v10689, %v11753
    %v11818 = vadd.f32 %v10690, %v11754
    %v11819 = vadd.f32 %v10691, %v11755
    %v11820 = vadd.f32 %v10692, %v11756
    %v11821 = vadd.f32 %v10693, %v11757
    %v11822 = vadd.f32 %v10694, %v11758
    %v11823 = vadd.f32 %v10695, %v11759
    %v11824 = vadd.f32 %v10696, %v11760
    %v11825 = vadd.f32 %v10697, %v11761
    %v11826 = vadd.f32 %v10698, %v11762
    %v11827 = vadd.f32 %v10699, %v11763
    %v11828 = vadd.f32 %v10700, %v11764
    %v11829 = vadd.f32 %v10701, %v11765
    %v11830 = vadd.f32 %v10702, %v11766
    %v11831 = vadd.f32 %v10703, %v11767
    %v11832 = vadd.f32 %v10704, %v11768
    %v11833 = vadd.f32 %v10705, %v11769
    %v11834 = vadd.f32 %v10706, %v11770
    %v11835 = vadd.f32 %v10707, %v11771
    %v11836 = vadd.f32 %v10708, %v11772
    %v11837 = vadd.f32 %v10709, %v11773
    %v11838 = vadd.f32 %v10710, %v11774
    %v11839 = vadd.f32 %v10711, %v11775
    %v11840 = vadd.f32 %v10712, %v11776
    %v11841 = vadd.f32 %v10713, %v11777
    %v11842 = vadd.f32 %v10714, %v11778
    %v11843 = vadd.f32 %v10715, %v11779
    %v11844 = vadd.f32 %v10716, %v11780
    %v11845 = vadd.f32 %v10717, %v11781
    %v11846 = vadd.f32 %v10718, %v11782
    %v11847 = vadd.f32 %v10719, %v11783
    %v11848 = vadd.f32 %v10720, %v11784
    %v11849 = vadd.f32 %v10721, %v11785
    %v11850 = vadd.f32 %v10722, %v11786
    %v11851 = vadd.f32 %v10723, %v11787
    %v11852 = vadd.f32 %v10724, %v11788
    %v11853 = vadd.f32 %v10725, %v11789
    %v11854 = vadd.f32 %v10726, %v11790
    %v11855 = vadd.f32 %v10727, %v11791
    %v11856 = vadd.f32 %v10728, %v11792
    %v11857 = vadd.f32 %v10729, %v11793
    %v11858 = vadd.f32 %v10730, %v11794
    %v11859 = vadd.f32 %v10731, %v11795
    %v11860 = vadd.f32 %v10732, %v11796
    %v11861 = vadd.f32 %v10733, %v11797
    %v11862 = vadd.f32 %v10734, %v11798
    %v11863 = vadd.f32 %v10735, %v11799
    %v11864 = vmax.f32 %v11800, 0.0
    %v11865 = vmax.f32 %v11801, 0.0
    %v11866 = vmax.f32 %v11802, 0.0
    %v11867 = vmax.f32 %v11803, 0.0
    %v11868 = vmax.f32 %v11804, 0.0
    %v11869 = vmax.f32 %v11805, 0.0
    %v11870 = vmax.f32 %v11806, 0.0
    %v11871 = vmax.f32 %v11807, 0.0
    %v11872 = vmax.f32 %v11808, 0.0
    %v11873 = vmax.f32 %v11809, 0.0
    %v11874 = vmax.f32 %v11810, 0.0
    %v11875 = vmax.f32 %v11811, 0.0
    %v11876 = vmax.f32 %v11812, 0.0
    %v11877 = vmax.f32 %v11813, 0.0
    %v11878 = vmax.f32 %v11814, 0.0
    %v11879 = vmax.f32 %v11815, 0.0
    %v11880 = vmax.f32 %v11816, 0.0
    %v11881 = vmax.f32 %v11817, 0.0
    %v11882 = vmax.f32 %v11818, 0.0
    %v11883 = vmax.f32 %v11819, 0.0
    %v11884 = vmax.f32 %v11820, 0.0
    %v11885 = vmax.f32 %v11821, 0.0
    %v11886 = vmax.f32 %v11822, 0.0
    %v11887 = vmax.f32 %v11823, 0.0
    %v11888 = vmax.f32 %v11824, 0.0
    %v11889 = vmax.f32 %v11825, 0.0
    %v11890 = vmax.f32 %v11826, 0.0
    %v11891 = vmax.f32 %v11827, 0.0
    %v11892 = vmax.f32 %v11828, 0.0
    %v11893 = vmax.f32 %v11829, 0.0
    %v11894 = vmax.f32 %v11830, 0.0
    %v11895 = vmax.f32 %v11831, 0.0
    %v11896 = vmax.f32 %v11832, 0.0
    %v11897 = vmax.f32 %v11833, 0.0
    %v11898 = vmax.f32 %v11834, 0.0
    %v11899 = vmax.f32 %v11835, 0.0
    %v11900 = vmax.f32 %v11836, 0.0
    %v11901 = vmax.f32 %v11837, 0.0
    %v11902 = vmax.f32 %v11838, 0.0
    %v11903 = vmax.f32 %v11839, 0.0
    %v11904 = vmax.f32 %v11840, 0.0
    %v11905 = vmax.f32 %v11841, 0.0
    %v11906 = vmax.f32 %v11842, 0.0
    %v11907 = vmax.f32 %v11843, 0.0
    %v11908 = vmax.f32 %v11844, 0.0
    %v11909 = vmax.f32 %v11845, 0.0
    %v11910 = vmax.f32 %v11846, 0.0
    %v11911 = vmax.f32 %v11847, 0.0
    %v11912 = vmax.f32 %v11848, 0.0
    %v11913 = vmax.f32 %v11849, 0.0
    %v11914 = vmax.f32 %v11850, 0.0
    %v11915 = vmax.f32 %v11851, 0.0
    %v11916 = vmax.f32 %v11852, 0.0
    %v11917 = vmax.f32 %v11853, 0.0
    %v11918 = vmax.f32 %v11854, 0.0
    %v11919 = vmax.f32 %v11855, 0.0
    %v11920 = vmax.f32 %v11856, 0.0
    %v11921 = vmax.f32 %v11857, 0.0
    %v11922 = vmax.f32 %v11858, 0.0
    %v11923 = vmax.f32 %v11859, 0.0
    %v11924 = vmax.f32 %v11860, 0.0
    %v11925 = vmax.f32 %v11861, 0.0
    %v11926 = vmax.f32 %v11862, 0.0
    %v11927 = vmax.f32 %v11863, 0.0
    %11928 = vst [vmem:[#allocation6] sm:$0xff] %v11864
    %11929 = vst [vmem:[#allocation6 + $0x8] sm:$0xff] %v11865
    %11930 = vst [vmem:[#allocation6 + $0x10] sm:$0xff] %v11866
    %11931 = vst [vmem:[#allocation6 + $0x18] sm:$0xff] %v11867
    %11932 = vst [vmem:[#allocation6 + $0x20] sm:$0xff] %v11868
    %11933 = vst [vmem:[#allocation6 + $0x28] sm:$0xff] %v11869
    %11934 = vst [vmem:[#allocation6 + $0x30] sm:$0xff] %v11870
    %11935 = vst [vmem:[#allocation6 + $0x38] sm:$0xff] %v11871
    %11936 = vst [vmem:[#allocation6 + $0x40] sm:$0xff] %v11872
    %11937 = vst [vmem:[#allocation6 + $0x48] sm:$0xff] %v11873
    %11938 = vst [vmem:[#allocation6 + $0x50] sm:$0xff] %v11874
    %11939 = vst [vmem:[#allocation6 + $0x58] sm:$0xff] %v11875
    %11940 = vst [vmem:[#allocation6 + $0x60] sm:$0xff] %v11876
    %11941 = vst [vmem:[#allocation6 + $0x68] sm:$0xff] %v11877
    %11942 = vst [vmem:[#allocation6 + $0x70] sm:$0xff] %v11878
    %11943 = vst [vmem:[#allocation6 + $0x78] sm:$0xff] %v11879
    %11944 = vst [vmem:[#allocation6 + $0x80] sm:$0xff] %v11880
    %11945 = vst [vmem:[#allocation6 + $0x88] sm:$0xff] %v11881
    %11946 = vst [vmem:[#allocation6 + $0x90] sm:$0xff] %v11882
    %11947 = vst [vmem:[#allocation6 + $0x98] sm:$0xff] %v11883
    %11948 = vst [vmem:[#allocation6 + $0xa0] sm:$0xff] %v11884
    %11949 = vst [vmem:[#allocation6 + $0xa8] sm:$0xff] %v11885
    %11950 = vst [vmem:[#allocation6 + $0xb0] sm:$0xff] %v11886
    %11951 = vst [vmem:[#allocation6 + $0xb8] sm:$0xff] %v11887
    %11952 = vst [vmem:[#allocation6 + $0xc0] sm:$0xff] %v11888
    %11953 = vst [vmem:[#allocation6 + $0xc8] sm:$0xff] %v11889
    %11954 = vst [vmem:[#allocation6 + $0xd0] sm:$0xff] %v11890
    %11955 = vst [vmem:[#allocation6 + $0xd8] sm:$0xff] %v11891
    %11956 = vst [vmem:[#allocation6 + $0xe0] sm:$0xff] %v11892
    %11957 = vst [vmem:[#allocation6 + $0xe8] sm:$0xff] %v11893
    %11958 = vst [vmem:[#allocation6 + $0xf0] sm:$0xff] %v11894
    %11959 = vst [vmem:[#allocation6 + $0xf8] sm:$0xff] %v11895
    %11960 = vst [vmem:[#allocation6 + $0x100] sm:$0xff] %v11896
    %11961 = vst [vmem:[#allocation6 + $0x108] sm:$0xff] %v11897
    %11962 = vst [vmem:[#allocation6 + $0x110] sm:$0xff] %v11898
    %11963 = vst [vmem:[#allocation6 + $0x118] sm:$0xff] %v11899
    %11964 = vst [vmem:[#allocation6 + $0x120] sm:$0xff] %v11900
    %11965 = vst [vmem:[#allocation6 + $0x128] sm:$0xff] %v11901
    %11966 = vst [vmem:[#allocation6 + $0x130] sm:$0xff] %v11902
    %11967 = vst [vmem:[#allocation6 + $0x138] sm:$0xff] %v11903
    %11968 = vst [vmem:[#allocation6 + $0x140] sm:$0xff] %v11904
    %11969 = vst [vmem:[#allocation6 + $0x148] sm:$0xff] %v11905
    %11970 = vst [vmem:[#allocation6 + $0x150] sm:$0xff] %v11906
    %11971 = vst [vmem:[#allocation6 + $0x158] sm:$0xff] %v11907
    %11972 = vst [vmem:[#allocation6 + $0x160] sm:$0xff] %v11908
    %11973 = vst [vmem:[#allocation6 + $0x168] sm:$0xff] %v11909
    %11974 = vst [vmem:[#allocation6 + $0x170] sm:$0xff] %v11910
    %11975 = vst [vmem:[#allocation6 + $0x178] sm:$0xff] %v11911
    %11976 = vst [vmem:[#allocation6 + $0x180] sm:$0xff] %v11912
    %11977 = vst [vmem:[#allocation6 + $0x188] sm:$0xff] %v11913
    %11978 = vst [vmem:[#allocation6 + $0x190] sm:$0xff] %v11914
    %11979 = vst [vmem:[#allocation6 + $0x198] sm:$0xff] %v11915
    %11980 = vst [vmem:[#allocation6 + $0x1a0] sm:$0xff] %v11916
    %11981 = vst [vmem:[#allocation6 + $0x1a8] sm:$0xff] %v11917
    %11982 = vst [vmem:[#allocation6 + $0x1b0] sm:$0xff] %v11918
    %11983 = vst [vmem:[#allocation6 + $0x1b8] sm:$0xff] %v11919
    %11984 = vst [vmem:[#allocation6 + $0x1c0] sm:$0xff] %v11920
    %11985 = vst [vmem:[#allocation6 + $0x1c8] sm:$0xff] %v11921
    %11986 = vst [vmem:[#allocation6 + $0x1d0] sm:$0xff] %v11922
    %11987 = vst [vmem:[#allocation6 + $0x1d8] sm:$0xff] %v11923
    %11988 = vst [vmem:[#allocation6 + $0x1e0] sm:$0xff] %v11924
    %11989 = vst [vmem:[#allocation6 + $0x1e8] sm:$0xff] %v11925
    %11990 = vst [vmem:[#allocation6 + $0x1f0] sm:$0xff] %v11926
    %11991 = vst [vmem:[#allocation6 + $0x1f8] sm:$0xff] %v11927
    // Predicated region
    $region78: #{bottleneck_sparse2d.1} parent=1 // pred_check
      _
    $region79: #{bottleneck_sparse2d.1} parent=1 // pred_check_branch
      %11993 = sbr.rel (0) target = $region81
    $region80: #{bottleneck_sparse2d.1} parent=1 // pred_region
      %s11995 = ssub.s32 8192, 8192
      %11996 = vsyncadd [#allocation5], %s11995
      %s11997 = sshll.u32 [#allocation6], 4
      %s11998 = int_to_ptr.vmem [resolvable:$true] %s11997
      %12003 = dma.vmem_to_hbm [thread:$0]  %s11998, 8192, %s18, [#allocation5], 128, 128, 8
    $region81: #{bottleneck_sparse2d.1} parent=1 // pred_fallthru
      _
    // Predicated region
    $region82: #{bottleneck_sparse2d.1} parent=1 // pred_check
      _
    $region83: #{bottleneck_sparse2d.1} parent=1 // pred_check_branch
      %12005 = sbr.rel (0) target = $region85
    $region84: #{bottleneck_sparse2d.1} parent=1 // pred_region
      %12006 = dma.done [#allocation5], 8192
    $region85: #{bottleneck_sparse2d.1} parent=1 // pred_fallthru
      _
    %12007 = vsyncpa [#allocation4], 1
    %12008 = vsyncpa [#allocation5], 1

</llo_original>
